<compile_context>
chip_gen: v6e
topology: v6e:2x2x1
jax: 0.10.0
libtpu: 0.0.40
codegen_flags: <defaults>
</compile_context>

<pallas_src>
import numpy as np
import jax
import jax.numpy as jnp
from jax import lax
from jax.experimental import pallas as pl
from jax.experimental.pallas import tpu as pltpu  # noqa: F401

# ---- model dimensions (small, TPU-friendly) --------------------------------
D_MODEL = 128
N_HEAD = 4
D_HEAD = 32                      # N_HEAD * D_HEAD == D_MODEL
D_FF = 128
Q_LEN = 8
M_LEN = 8
K_LEN = Q_LEN + M_LEN            # 16
KQP = ((K_LEN + Q_LEN - 1 + 7) // 8) * 8   # zero-extended position length (24)
BATCH = 2
LN_EPS = 1e-5

# TODO(synk): dropout (drop / dropatt) is identity here (inference, p=0).
# TODO(synk): the m=None code path is not implemented; memory is always supplied.
# NOTE: the zero-extended rel-shift is equivalent to torch's _rel_shift only
# under the causal-with-memory mask used here (every (i, j) whose shifted
# position index >= k_len is masked out); other masks would silently diverge.


def _layer_norm(x, gamma, beta):
    mu = jnp.mean(x, axis=-1, keepdims=True)
    var = jnp.mean(jnp.square(x - mu), axis=-1, keepdims=True)
    return (x - mu) * lax.rsqrt(var + LN_EPS) * gamma + beta


def _txl_block_kernel(h_ref, m_ref, rext_ref, u_ref, v_ref, maskadd_ref, shiftT_ref,
                      wq_ref, wk_ref, wv_ref, wr_ref, wo_ref,
                      ln1g_ref, ln1b_ref,
                      w1_ref, b1_ref, w2_ref, b2_ref, ln2g_ref, ln2b_ref,
                      out_ref):
    f32 = jnp.float32
    bf16 = jnp.bfloat16
    B, Q, K, P = BATCH, Q_LEN, K_LEN, KQP
    H, Dh, D = N_HEAD, D_HEAD, D_MODEL
    BQ, BK = B * Q, B * K

    h = h_ref[...].astype(f32)                               # (B, Q, D)
    mem = m_ref[...].astype(f32)                             # (B, M, D)

    hq_flat = h.reshape(BQ, D)                               # (16, 128) f32
    cat_flat = jnp.concatenate([mem, h], axis=1).reshape(BK, D)   # (32, 128) f32

    # ---- per-head projections (head on the LEADING axis; no lane slicing) ---
    hq_b = jnp.broadcast_to(hq_flat.astype(bf16)[None], (H, BQ, D))
    cat_b = jnp.broadcast_to(cat_flat.astype(bf16)[None], (H, BK, D))
    r_b = jnp.broadcast_to(rext_ref[...].astype(bf16)[None], (H, P, D))

    q_heads = jnp.einsum('hrd,hde->hre', hq_b, wq_ref[...],
                         preferred_element_type=f32)          # (H, B*Q, Dh)
    k_heads = jnp.einsum('hrd,hde->hre', cat_b, wk_ref[...],
                         preferred_element_type=f32)          # (H, B*K, Dh)
    v_heads = jnp.einsum('hrd,hde->hre', cat_b, wv_ref[...],
                         preferred_element_type=f32)          # (H, B*K, Dh)
    r_heads = jnp.einsum('hpd,hde->hpe', r_b, wr_ref[...],
                         preferred_element_type=f32)          # (H, P, Dh)  (once, batch-independent)

    u_bias = u_ref[...].astype(f32)                           # (H, 1, Dh)
    v_bias = v_ref[...].astype(f32)                           # (H, 1, Dh)
    shiftT = shiftT_ref[...]                                  # (Q, P, K), loaded once
    wo = wo_ref[...]                                          # (H, Dh, D) bf16
    scale = f32(1.0 / (Dh ** 0.5))

    outs = []
    for b in range(B):                                        # tiny static batch loop
        q_b = q_heads[:, b * Q:(b + 1) * Q, :]                # (H, Q, Dh) sublane slice (free)
        k_b = k_heads[:, b * K:(b + 1) * K, :]                # (H, K, Dh)
        v_b = v_heads[:, b * K:(b + 1) * K, :]                # (H, K, Dh)

        # content scores
        ac = jnp.einsum('hqe,hke->hqk', q_b + u_bias, k_b,
                        preferred_element_type=f32)           # (H, Q, K)
        # position scores against zero-extended position keys
        bd_ext = jnp.einsum('hqe,hpe->hqp', q_b + v_bias, r_heads,
                            preferred_element_type=f32)       # (H, Q, P)
        # relative shift as ONE batched contraction (no per-row selects)
        bd = jnp.einsum('hqp,qpk->hqk', bd_ext, shiftT,
                        preferred_element_type=f32)           # (H, Q, K)

        s = (ac + bd) * scale + maskadd_ref[b][None, :, :]    # additive -1e30 mask
        s = s - jnp.max(s, axis=-1, keepdims=True)
        p = jnp.exp(s)
        p = p * pl.reciprocal(jnp.sum(p, axis=-1, keepdims=True), approx=True)

        av = jnp.einsum('hqk,hke->hqe', p, v_b,
                        preferred_element_type=f32)           # (H, Q, Dh)
        o_b = jnp.einsum('hqe,hed->hqd', av.astype(bf16), wo,
                         preferred_element_type=f32)          # (H, Q, D)
        outs.append(jnp.sum(o_b, axis=0))                     # (Q, D) head-sum = output proj

    attn_out = jnp.concatenate(outs, axis=0)                  # (B*Q, D)

    # ---- post-LN residual + position-wise feed-forward (pre_lnorm=False) ----
    x = _layer_norm(hq_flat + attn_out, ln1g_ref[...], ln1b_ref[...])
    ff = jnp.dot(x.astype(bf16), w1_ref[...], preferred_element_type=f32) + b1_ref[...]
    ff = jnp.maximum(ff, 0.0)
    ff = jnp.dot(ff.astype(bf16), w2_ref[...], preferred_element_type=f32) + b2_ref[...]
    y = _layer_norm(x + ff, ln2g_ref[...], ln2b_ref[...])

    out_ref[...] = y.reshape(B, Q, D).astype(out_ref.dtype)


def transformer_xl_block(h, r, uT, vT, m, mask, params):
    bs, q_len, d_model = h.shape
    k_len = r.shape[0]
    assert (bs, q_len, d_model) == (BATCH, Q_LEN, D_MODEL)
    assert k_len == K_LEN
    assert m.shape == (BATCH, M_LEN, D_MODEL)

    f32 = jnp.float32
    bf16 = jnp.bfloat16

    # zero-extended position embeddings (glue)
    r_ext = jnp.zeros((KQP, d_model), f32).at[:k_len].set(r.astype(f32))

    # constant relative-shift selection tensor (glue):
    # shiftT[i, p, j] = 1 iff p == j + (q_len - 1 - i)
    shift_np = np.zeros((q_len, KQP, k_len), np.float32)
    for i in range(q_len):
        for j in range(k_len):
            p = j + (q_len - 1 - i)
            if p < KQP:
                shift_np[i, p, j] = 1.0
    shiftT = jnp.asarray(shift_np)

    # additive attention mask: 1.0 (masked) -> large negative bias
    mask_add = mask.astype(f32) * f32(-1e30)

    # head-leading weight layouts; bf16 to halve weight DMA (f32 accumulation in-kernel)
    def per_head_in(w):   # (D, H*Dh) -> (H, D, Dh)
        return jnp.transpose(w.reshape(d_model, N_HEAD, D_HEAD), (1, 0, 2)).astype(bf16)

    wq_h = per_head_in(params["wq"])
    wk_h = per_head_in(params["wk"])
    wv_h = per_head_in(params["wv"])
    wr_h = per_head_in(params["wr"])
    wo_h = params["wo"].reshape(N_HEAD, D_HEAD, d_model).astype(bf16)   # (H, Dh, D)

    args = (h.astype(f32), m.astype(f32), r_ext, uT.astype(f32), vT.astype(f32),
            mask_add, shiftT,
            wq_h, wk_h, wv_h, wr_h, wo_h,
            params["ln1_g"].astype(f32), params["ln1_b"].astype(f32),
            params["w1"].astype(bf16), params["b1"].astype(f32),
            params["w2"].astype(bf16), params["b2"].astype(f32),
            params["ln2_g"].astype(f32), params["ln2_b"].astype(f32))

    hdh = N_HEAD * D_HEAD
    flops = 2 * (bs * q_len * d_model * hdh                      # q proj
                 + 2 * bs * K_LEN * d_model * hdh                # k, v proj
                 + KQP * d_model * hdh                           # r proj
                 + bs * N_HEAD * q_len * K_LEN * D_HEAD          # AC scores
                 + bs * N_HEAD * q_len * KQP * D_HEAD            # BD (extended)
                 + bs * N_HEAD * q_len * KQP * K_LEN             # rel-shift contraction
                 + bs * N_HEAD * q_len * K_LEN * D_HEAD          # attn @ V
                 + bs * N_HEAD * q_len * D_HEAD * d_model        # output proj
                 + 2 * bs * q_len * d_model * D_FF)              # FFN
    transcendentals = bs * N_HEAD * q_len * K_LEN + 6 * bs * q_len
    out_bytes = bs * q_len * d_model * 4
    bytes_accessed = out_bytes + sum(int(np.prod(a.shape)) * a.dtype.itemsize for a in args)

    computed = pl.pallas_call(
        _txl_block_kernel,
        out_shape=jax.ShapeDtypeStruct((bs, q_len, d_model), f32),
        cost_estimate=pl.CostEstimate(flops=flops,
                                      transcendentals=transcendentals,
                                      bytes_accessed=bytes_accessed),
    )(*args)

    # Exact reference semantics: the module's forward returns `h`.
    return h, computed


def init_params(key):
    ks = jax.random.split(key, 7)
    std = 0.02
    return {
        "wq": jax.random.normal(ks[0], (D_MODEL, N_HEAD * D_HEAD), jnp.float32) * std,
        "wk": jax.random.normal(ks[1], (D_MODEL, N_HEAD * D_HEAD), jnp.float32) * std,
        "wv": jax.random.normal(ks[2], (D_MODEL, N_HEAD * D_HEAD), jnp.float32) * std,
        "wr": jax.random.normal(ks[3], (D_MODEL, N_HEAD * D_HEAD), jnp.float32) * std,
        "wo": jax.random.normal(ks[4], (N_HEAD * D_HEAD, D_MODEL), jnp.float32) * std,
        "ln1_g": jnp.ones((1, D_MODEL), jnp.float32),
        "ln1_b": jnp.zeros((1, D_MODEL), jnp.float32),
        "w1": jax.random.normal(ks[5], (D_MODEL, D_FF), jnp.float32) * std,
        "b1": jnp.zeros((1, D_FF), jnp.float32),
        "w2": jax.random.normal(ks[6], (D_FF, D_MODEL), jnp.float32) * std,
        "b2": jnp.zeros((1, D_MODEL), jnp.float32),
        "ln2_g": jnp.ones((1, D_MODEL), jnp.float32),
        "ln2_b": jnp.zeros((1, D_MODEL), jnp.float32),
    }


if __name__ == "__main__":
    key = jax.random.PRNGKey(0)
    k_in = jax.random.split(key, 6)
    params = init_params(k_in[0])

    h = jax.random.normal(k_in[1], (BATCH, Q_LEN, D_MODEL), jnp.float32)
    m = jax.random.normal(k_in[2], (BATCH, M_LEN, D_MODEL), jnp.float32)
    r = jax.random.normal(k_in[3], (K_LEN, D_MODEL), jnp.float32)
    uT = jax.random.normal(k_in[4], (N_HEAD, 1, D_HEAD), jnp.float32) * 0.02
    vT = jax.random.normal(k_in[5], (N_HEAD, 1, D_HEAD), jnp.float32) * 0.02

    # causal mask with memory: query i may attend keys j <= M_LEN + i
    qi = jnp.arange(Q_LEN)[:, None]
    kj = jnp.arange(K_LEN)[None, :]
    mask = (kj > (qi + M_LEN)).astype(jnp.float32)
    mask = jnp.broadcast_to(mask[None], (BATCH, Q_LEN, K_LEN))

    out, computed = transformer_xl_block(h, r, uT, vT, m, mask, params)
    out = jax.block_until_ready(out)
    computed = jax.block_until_ready(computed)

    assert out.shape == (BATCH, Q_LEN, D_MODEL)
    assert computed.shape == (BATCH, Q_LEN, D_MODEL)
    assert bool(jnp.all(jnp.isfinite(computed)))
    # exact reference semantics: forward returns the input hidden `h`
    assert bool(jnp.allclose(out, h))
    print("KERNEL_OK")
</pallas_src>

<mosaic_0001>
module attributes {stable_mosaic.version = 11 : i64} {
  func.func @_txl_block_kernel(%arg0: memref<2x8x128xf32, #tpu.memory_space<vmem>>, %arg1: memref<2x8x128xf32, #tpu.memory_space<vmem>>, %arg2: memref<24x128xf32, #tpu.memory_space<vmem>>, %arg3: memref<4x1x32xf32, #tpu.memory_space<vmem>>, %arg4: memref<4x1x32xf32, #tpu.memory_space<vmem>>, %arg5: memref<2x8x16xf32, #tpu.memory_space<vmem>>, %arg6: memref<8x24x16xf32, #tpu.memory_space<vmem>>, %arg7: memref<4x128x32xbf16, #tpu.memory_space<vmem>>, %arg8: memref<4x128x32xbf16, #tpu.memory_space<vmem>>, %arg9: memref<4x128x32xbf16, #tpu.memory_space<vmem>>, %arg10: memref<4x128x32xbf16, #tpu.memory_space<vmem>>, %arg11: memref<4x32x128xbf16, #tpu.memory_space<vmem>>, %arg12: memref<1x128xf32, #tpu.memory_space<vmem>>, %arg13: memref<1x128xf32, #tpu.memory_space<vmem>>, %arg14: memref<128x128xbf16, #tpu.memory_space<vmem>>, %arg15: memref<1x128xf32, #tpu.memory_space<vmem>>, %arg16: memref<128x128xbf16, #tpu.memory_space<vmem>>, %arg17: memref<1x128xf32, #tpu.memory_space<vmem>>, %arg18: memref<1x128xf32, #tpu.memory_space<vmem>>, %arg19: memref<1x128xf32, #tpu.memory_space<vmem>>, %arg20: memref<2x8x128xf32, #tpu.memory_space<vmem>>) attributes {dimension_semantics = [], scalar_prefetch = 0 : i64, scratch_operands = 0 : i64, tpu.core_type = #tpu.core_type<tc>} {
    %c0 = arith.constant 0 : index
    %c0_0 = arith.constant 0 : index
    %c0_1 = arith.constant 0 : index
    %0 = vector.load %arg0[%c0, %c0_0, %c0_1] : memref<2x8x128xf32, #tpu.memory_space<vmem>>, vector<2x8x128xf32>
    %c0_2 = arith.constant 0 : index
    %c0_3 = arith.constant 0 : index
    %c0_4 = arith.constant 0 : index
    %1 = vector.load %arg1[%c0_2, %c0_3, %c0_4] : memref<2x8x128xf32, #tpu.memory_space<vmem>>, vector<2x8x128xf32>
    %2 = vector.shape_cast %0 : vector<2x8x128xf32> to vector<16x128xf32>
    %3 = tpu.concatenate %1, %0 in 1 : vector<2x8x128xf32>, vector<2x8x128xf32> -> vector<2x16x128xf32>
    %4 = vector.shape_cast %3 : vector<2x16x128xf32> to vector<32x128xf32>
    %5 = arith.truncf %2 : vector<16x128xf32> to vector<16x128xbf16>
    %6 = vector.shape_cast %5 : vector<16x128xbf16> to vector<1x16x128xbf16>
    %7 = vector.shape_cast %6 : vector<1x16x128xbf16> to vector<1x16x128xbf16>
    %8 = vector.broadcast %7 : vector<1x16x128xbf16> to vector<4x16x128xbf16>
    %9 = arith.truncf %4 : vector<32x128xf32> to vector<32x128xbf16>
    %10 = vector.shape_cast %9 : vector<32x128xbf16> to vector<1x32x128xbf16>
    %11 = vector.shape_cast %10 : vector<1x32x128xbf16> to vector<1x32x128xbf16>
    %12 = vector.broadcast %11 : vector<1x32x128xbf16> to vector<4x32x128xbf16>
    %c0_5 = arith.constant 0 : index
    %c0_6 = arith.constant 0 : index
    %13 = vector.load %arg2[%c0_5, %c0_6] : memref<24x128xf32, #tpu.memory_space<vmem>>, vector<24x128xf32>
    %14 = arith.truncf %13 : vector<24x128xf32> to vector<24x128xbf16>
    %15 = vector.shape_cast %14 : vector<24x128xbf16> to vector<1x24x128xbf16>
    %16 = vector.shape_cast %15 : vector<1x24x128xbf16> to vector<1x24x128xbf16>
    %17 = vector.broadcast %16 : vector<1x24x128xbf16> to vector<4x24x128xbf16>
    %c0_7 = arith.constant 0 : index
    %c0_8 = arith.constant 0 : index
    %c0_9 = arith.constant 0 : index
    %18 = vector.load %arg7[%c0_7, %c0_8, %c0_9] : memref<4x128x32xbf16, #tpu.memory_space<vmem>>, vector<4x128x32xbf16>
    "tpu.trace_start"() <{level = 10 : i32, message = "hrd,hde->hre"}> : () -> ()
    %cst = arith.constant dense<0.000000e+00> : vector<4x16x32xf32>
    %19 = tpu.matmul %8, %18, %cst {dimension_numbers = #tpu.dot_dimension_numbers<[2], [1], [1], [2], [0, 0, 0, 1, 1, 2], [0], [0]>} : vector<4x16x128xbf16>, vector<4x128x32xbf16>, vector<4x16x32xf32> -> vector<4x16x32xf32>
    "tpu.trace_stop"() : () -> ()
    %c0_10 = arith.constant 0 : index
    %c0_11 = arith.constant 0 : index
    %c0_12 = arith.constant 0 : index
    %20 = vector.load %arg8[%c0_10, %c0_11, %c0_12] : memref<4x128x32xbf16, #tpu.memory_space<vmem>>, vector<4x128x32xbf16>
    "tpu.trace_start"() <{level = 10 : i32, message = "hrd,hde->hre"}> : () -> ()
    %cst_13 = arith.constant dense<0.000000e+00> : vector<4x32x32xf32>
    %21 = tpu.matmul %12, %20, %cst_13 {dimension_numbers = #tpu.dot_dimension_numbers<[2], [1], [1], [2], [0, 0, 0, 1, 1, 2], [0], [0]>} : vector<4x32x128xbf16>, vector<4x128x32xbf16>, vector<4x32x32xf32> -> vector<4x32x32xf32>
    "tpu.trace_stop"() : () -> ()
    %c0_14 = arith.constant 0 : index
    %c0_15 = arith.constant 0 : index
    %c0_16 = arith.constant 0 : index
    %22 = vector.load %arg9[%c0_14, %c0_15, %c0_16] : memref<4x128x32xbf16, #tpu.memory_space<vmem>>, vector<4x128x32xbf16>
    "tpu.trace_start"() <{level = 10 : i32, message = "hrd,hde->hre"}> : () -> ()
    %cst_17 = arith.constant dense<0.000000e+00> : vector<4x32x32xf32>
    %23 = tpu.matmul %12, %22, %cst_17 {dimension_numbers = #tpu.dot_dimension_numbers<[2], [1], [1], [2], [0, 0, 0, 1, 1, 2], [0], [0]>} : vector<4x32x128xbf16>, vector<4x128x32xbf16>, vector<4x32x32xf32> -> vector<4x32x32xf32>
    "tpu.trace_stop"() : () -> ()
    %c0_18 = arith.constant 0 : index
    %c0_19 = arith.constant 0 : index
    %c0_20 = arith.constant 0 : index
    %24 = vector.load %arg10[%c0_18, %c0_19, %c0_20] : memref<4x128x32xbf16, #tpu.memory_space<vmem>>, vector<4x128x32xbf16>
    "tpu.trace_start"() <{level = 10 : i32, message = "hpd,hde->hpe"}> : () -> ()
    %cst_21 = arith.constant dense<0.000000e+00> : vector<4x24x32xf32>
    %25 = tpu.matmul %17, %24, %cst_21 {dimension_numbers = #tpu.dot_dimension_numbers<[2], [1], [1], [2], [0, 0, 0, 1, 1, 2], [0], [0]>} : vector<4x24x128xbf16>, vector<4x128x32xbf16>, vector<4x24x32xf32> -> vector<4x24x32xf32>
    "tpu.trace_stop"() : () -> ()
    %c0_22 = arith.constant 0 : index
    %c0_23 = arith.constant 0 : index
    %c0_24 = arith.constant 0 : index
    %26 = vector.load %arg3[%c0_22, %c0_23, %c0_24] : memref<4x1x32xf32, #tpu.memory_space<vmem>>, vector<4x1x32xf32>
    %c0_25 = arith.constant 0 : index
    %c0_26 = arith.constant 0 : index
    %c0_27 = arith.constant 0 : index
    %27 = vector.load %arg4[%c0_25, %c0_26, %c0_27] : memref<4x1x32xf32, #tpu.memory_space<vmem>>, vector<4x1x32xf32>
    %c0_28 = arith.constant 0 : index
    %c0_29 = arith.constant 0 : index
    %c0_30 = arith.constant 0 : index
    %28 = vector.load %arg6[%c0_28, %c0_29, %c0_30] : memref<8x24x16xf32, #tpu.memory_space<vmem>>, vector<8x24x16xf32>
    %c0_31 = arith.constant 0 : index
    %c0_32 = arith.constant 0 : index
    %c0_33 = arith.constant 0 : index
    %29 = vector.load %arg11[%c0_31, %c0_32, %c0_33] : memref<4x32x128xbf16, #tpu.memory_space<vmem>>, vector<4x32x128xbf16>
    %30 = vector.extract_strided_slice %19 {offsets = [0, 0, 0], sizes = [4, 8, 32], strides = [1, 1, 1]} : vector<4x16x32xf32> to vector<4x8x32xf32>
    %31 = vector.extract_strided_slice %21 {offsets = [0, 0, 0], sizes = [4, 16, 32], strides = [1, 1, 1]} : vector<4x32x32xf32> to vector<4x16x32xf32>
    %32 = vector.extract_strided_slice %23 {offsets = [0, 0, 0], sizes = [4, 16, 32], strides = [1, 1, 1]} : vector<4x32x32xf32> to vector<4x16x32xf32>
    %33 = vector.broadcast %26 : vector<4x1x32xf32> to vector<4x8x32xf32>
    %34 = arith.addf %30, %33 : vector<4x8x32xf32>
    "tpu.trace_start"() <{level = 10 : i32, message = "hqe,hke->hqk"}> : () -> ()
    %cst_34 = arith.constant dense<0.000000e+00> : vector<4x8x16xf32>
    %35 = tpu.matmul %34, %31, %cst_34 {dimension_numbers = #tpu.dot_dimension_numbers<[2], [2], [1], [1], [0, 0, 0, 1, 1, 1], [0], [0]>} : vector<4x8x32xf32>, vector<4x16x32xf32>, vector<4x8x16xf32> -> vector<4x8x16xf32>
    "tpu.trace_stop"() : () -> ()
    %36 = vector.broadcast %27 : vector<4x1x32xf32> to vector<4x8x32xf32>
    %37 = arith.addf %30, %36 : vector<4x8x32xf32>
    "tpu.trace_start"() <{level = 10 : i32, message = "hqe,hpe->hqp"}> : () -> ()
    %cst_35 = arith.constant dense<0.000000e+00> : vector<4x8x24xf32>
    %38 = tpu.matmul %37, %25, %cst_35 {dimension_numbers = #tpu.dot_dimension_numbers<[2], [2], [1], [1], [0, 0, 0, 1, 1, 1], [0], [0]>} : vector<4x8x32xf32>, vector<4x24x32xf32>, vector<4x8x24xf32> -> vector<4x8x24xf32>
    "tpu.trace_stop"() : () -> ()
    "tpu.trace_start"() <{level = 10 : i32, message = "hqp,qpk->hqk"}> : () -> ()
    %cst_36 = arith.constant dense<0.000000e+00> : vector<8x16x4xf32>
    %39 = tpu.matmul %28, %38, %cst_36 {dimension_numbers = #tpu.dot_dimension_numbers<[1], [2], [2], [0], [0, 0, 0, 2, 1, 0], [0], [1]>} : vector<8x24x16xf32>, vector<4x8x24xf32>, vector<8x16x4xf32> -> vector<8x16x4xf32>
    %40 = tpu.transpose %39, [2, 0, 1] : vector<8x16x4xf32> -> vector<4x8x16xf32>
    "tpu.trace_stop"() : () -> ()
    %41 = arith.addf %35, %40 : vector<4x8x16xf32>
    %cst_37 = arith.constant 0.176776692 : f32
    %42 = vector.broadcast %cst_37 : f32 to vector<4x8x16xf32>
    %43 = arith.mulf %41, %42 : vector<4x8x16xf32>
    %c0_38 = arith.constant 0 : index
    %c0_39 = arith.constant 0 : index
    %c0_40 = arith.constant 0 : index
    %44 = vector.load %arg5[%c0_38, %c0_39, %c0_40] : memref<2x8x16xf32, #tpu.memory_space<vmem>>, vector<1x8x16xf32>
    %45 = vector.shape_cast %44 : vector<1x8x16xf32> to vector<8x16xf32>
    %46 = vector.shape_cast %45 : vector<8x16xf32> to vector<1x8x16xf32>
    %47 = vector.broadcast %46 : vector<1x8x16xf32> to vector<4x8x16xf32>
    %48 = arith.addf %43, %47 : vector<4x8x16xf32>
    %cst_41 = arith.constant dense<0xFF800000> : vector<4x8xf32>
    %49 = vector.multi_reduction <maximumf>, %48, %cst_41 [2] : vector<4x8x16xf32> to vector<4x8xf32>
    %50 = vector.shape_cast %49 : vector<4x8xf32> to vector<4x8x1xf32>
    %51 = vector.broadcast %50 : vector<4x8x1xf32> to vector<4x8x16xf32>
    %52 = arith.subf %48, %51 : vector<4x8x16xf32>
    %53 = math.exp %52 : vector<4x8x16xf32>
    %cst_42 = arith.constant dense<0.000000e+00> : vector<4x8xf32>
    %54 = vector.multi_reduction <add>, %53, %cst_42 [2] : vector<4x8x16xf32> to vector<4x8xf32>
    %55 = vector.shape_cast %54 : vector<4x8xf32> to vector<4x8x1xf32>
    %56 = tpu.reciprocal %55 {approx = true} : vector<4x8x1xf32> -> vector<4x8x1xf32>
    %57 = vector.broadcast %56 : vector<4x8x1xf32> to vector<4x8x16xf32>
    %58 = arith.mulf %53, %57 : vector<4x8x16xf32>
    "tpu.trace_start"() <{level = 10 : i32, message = "hqk,hke->hqe"}> : () -> ()
    %cst_43 = arith.constant dense<0.000000e+00> : vector<4x8x32xf32>
    %59 = tpu.matmul %58, %32, %cst_43 {dimension_numbers = #tpu.dot_dimension_numbers<[2], [1], [1], [2], [0, 0, 0, 1, 1, 2], [0], [0]>} : vector<4x8x16xf32>, vector<4x16x32xf32>, vector<4x8x32xf32> -> vector<4x8x32xf32>
    "tpu.trace_stop"() : () -> ()
    %60 = arith.truncf %59 : vector<4x8x32xf32> to vector<4x8x32xbf16>
    "tpu.trace_start"() <{level = 10 : i32, message = "hqe,hed->hqd"}> : () -> ()
    %cst_44 = arith.constant dense<0.000000e+00> : vector<4x8x128xf32>
    %61 = tpu.matmul %60, %29, %cst_44 {dimension_numbers = #tpu.dot_dimension_numbers<[2], [1], [1], [2], [0, 0, 0, 1, 1, 2], [0], [0]>} : vector<4x8x32xbf16>, vector<4x32x128xbf16>, vector<4x8x128xf32> -> vector<4x8x128xf32>
    "tpu.trace_stop"() : () -> ()
    %cst_45 = arith.constant dense<0.000000e+00> : vector<8x128xf32>
    %62 = vector.multi_reduction <add>, %61, %cst_45 [0] : vector<4x8x128xf32> to vector<8x128xf32>
    %63 = vector.extract_strided_slice %19 {offsets = [0, 8, 0], sizes = [4, 8, 32], strides = [1, 1, 1]} : vector<4x16x32xf32> to vector<4x8x32xf32>
    %64 = vector.extract_strided_slice %21 {offsets = [0, 16, 0], sizes = [4, 16, 32], strides = [1, 1, 1]} : vector<4x32x32xf32> to vector<4x16x32xf32>
    %65 = vector.extract_strided_slice %23 {offsets = [0, 16, 0], sizes = [4, 16, 32], strides = [1, 1, 1]} : vector<4x32x32xf32> to vector<4x16x32xf32>
    %66 = vector.broadcast %26 : vector<4x1x32xf32> to vector<4x8x32xf32>
    %67 = arith.addf %63, %66 : vector<4x8x32xf32>
    "tpu.trace_start"() <{level = 10 : i32, message = "hqe,hke->hqk"}> : () -> ()
    %cst_46 = arith.constant dense<0.000000e+00> : vector<4x8x16xf32>
    %68 = tpu.matmul %67, %64, %cst_46 {dimension_numbers = #tpu.dot_dimension_numbers<[2], [2], [1], [1], [0, 0, 0, 1, 1, 1], [0], [0]>} : vector<4x8x32xf32>, vector<4x16x32xf32>, vector<4x8x16xf32> -> vector<4x8x16xf32>
    "tpu.trace_stop"() : () -> ()
    %69 = vector.broadcast %27 : vector<4x1x32xf32> to vector<4x8x32xf32>
    %70 = arith.addf %63, %69 : vector<4x8x32xf32>
    "tpu.trace_start"() <{level = 10 : i32, message = "hqe,hpe->hqp"}> : () -> ()
    %cst_47 = arith.constant dense<0.000000e+00> : vector<4x8x24xf32>
    %71 = tpu.matmul %70, %25, %cst_47 {dimension_numbers = #tpu.dot_dimension_numbers<[2], [2], [1], [1], [0, 0, 0, 1, 1, 1], [0], [0]>} : vector<4x8x32xf32>, vector<4x24x32xf32>, vector<4x8x24xf32> -> vector<4x8x24xf32>
    "tpu.trace_stop"() : () -> ()
    "tpu.trace_start"() <{level = 10 : i32, message = "hqp,qpk->hqk"}> : () -> ()
    %cst_48 = arith.constant dense<0.000000e+00> : vector<8x16x4xf32>
    %72 = tpu.matmul %28, %71, %cst_48 {dimension_numbers = #tpu.dot_dimension_numbers<[1], [2], [2], [0], [0, 0, 0, 2, 1, 0], [0], [1]>} : vector<8x24x16xf32>, vector<4x8x24xf32>, vector<8x16x4xf32> -> vector<8x16x4xf32>
    %73 = tpu.transpose %72, [2, 0, 1] : vector<8x16x4xf32> -> vector<4x8x16xf32>
    "tpu.trace_stop"() : () -> ()
    %74 = arith.addf %68, %73 : vector<4x8x16xf32>
    %cst_49 = arith.constant 0.176776692 : f32
    %75 = vector.broadcast %cst_49 : f32 to vector<4x8x16xf32>
    %76 = arith.mulf %74, %75 : vector<4x8x16xf32>
    %c1 = arith.constant 1 : index
    %c0_50 = arith.constant 0 : index
    %c0_51 = arith.constant 0 : index
    %77 = vector.load %arg5[%c1, %c0_50, %c0_51] : memref<2x8x16xf32, #tpu.memory_space<vmem>>, vector<1x8x16xf32>
    %78 = vector.shape_cast %77 : vector<1x8x16xf32> to vector<8x16xf32>
    %79 = vector.shape_cast %78 : vector<8x16xf32> to vector<1x8x16xf32>
    %80 = vector.broadcast %79 : vector<1x8x16xf32> to vector<4x8x16xf32>
    %81 = arith.addf %76, %80 : vector<4x8x16xf32>
    %cst_52 = arith.constant dense<0xFF800000> : vector<4x8xf32>
    %82 = vector.multi_reduction <maximumf>, %81, %cst_52 [2] : vector<4x8x16xf32> to vector<4x8xf32>
    %83 = vector.shape_cast %82 : vector<4x8xf32> to vector<4x8x1xf32>
    %84 = vector.broadcast %83 : vector<4x8x1xf32> to vector<4x8x16xf32>
    %85 = arith.subf %81, %84 : vector<4x8x16xf32>
    %86 = math.exp %85 : vector<4x8x16xf32>
    %cst_53 = arith.constant dense<0.000000e+00> : vector<4x8xf32>
    %87 = vector.multi_reduction <add>, %86, %cst_53 [2] : vector<4x8x16xf32> to vector<4x8xf32>
    %88 = vector.shape_cast %87 : vector<4x8xf32> to vector<4x8x1xf32>
    %89 = tpu.reciprocal %88 {approx = true} : vector<4x8x1xf32> -> vector<4x8x1xf32>
    %90 = vector.broadcast %89 : vector<4x8x1xf32> to vector<4x8x16xf32>
    %91 = arith.mulf %86, %90 : vector<4x8x16xf32>
    "tpu.trace_start"() <{level = 10 : i32, message = "hqk,hke->hqe"}> : () -> ()
    %cst_54 = arith.constant dense<0.000000e+00> : vector<4x8x32xf32>
    %92 = tpu.matmul %91, %65, %cst_54 {dimension_numbers = #tpu.dot_dimension_numbers<[2], [1], [1], [2], [0, 0, 0, 1, 1, 2], [0], [0]>} : vector<4x8x16xf32>, vector<4x16x32xf32>, vector<4x8x32xf32> -> vector<4x8x32xf32>
    "tpu.trace_stop"() : () -> ()
    %93 = arith.truncf %92 : vector<4x8x32xf32> to vector<4x8x32xbf16>
    "tpu.trace_start"() <{level = 10 : i32, message = "hqe,hed->hqd"}> : () -> ()
    %cst_55 = arith.constant dense<0.000000e+00> : vector<4x8x128xf32>
    %94 = tpu.matmul %93, %29, %cst_55 {dimension_numbers = #tpu.dot_dimension_numbers<[2], [1], [1], [2], [0, 0, 0, 1, 1, 2], [0], [0]>} : vector<4x8x32xbf16>, vector<4x32x128xbf16>, vector<4x8x128xf32> -> vector<4x8x128xf32>
    "tpu.trace_stop"() : () -> ()
    %cst_56 = arith.constant dense<0.000000e+00> : vector<8x128xf32>
    %95 = vector.multi_reduction <add>, %94, %cst_56 [0] : vector<4x8x128xf32> to vector<8x128xf32>
    %96 = tpu.concatenate %62, %95 in 0 : vector<8x128xf32>, vector<8x128xf32> -> vector<16x128xf32>
    %97 = arith.addf %2, %96 : vector<16x128xf32>
    %c0_57 = arith.constant 0 : index
    %c0_58 = arith.constant 0 : index
    %98 = vector.load %arg12[%c0_57, %c0_58] : memref<1x128xf32, #tpu.memory_space<vmem>>, vector<1x128xf32>
    %c0_59 = arith.constant 0 : index
    %c0_60 = arith.constant 0 : index
    %99 = vector.load %arg13[%c0_59, %c0_60] : memref<1x128xf32, #tpu.memory_space<vmem>>, vector<1x128xf32>
    %cst_61 = arith.constant dense<0.000000e+00> : vector<16xf32>
    %100 = vector.multi_reduction <add>, %97, %cst_61 [1] : vector<16x128xf32> to vector<16xf32>
    %101 = vector.shape_cast %100 : vector<16xf32> to vector<16x1xf32>
    %cst_62 = arith.constant 1.280000e+02 : f32
    %102 = vector.broadcast %cst_62 : f32 to vector<16x1xf32>
    %103 = arith.divf %101, %102 : vector<16x1xf32>
    %104 = vector.broadcast %103 : vector<16x1xf32> to vector<16x128xf32>
    %105 = arith.subf %97, %104 : vector<16x128xf32>
    %106 = arith.mulf %105, %105 : vector<16x128xf32>
    %cst_63 = arith.constant dense<0.000000e+00> : vector<16xf32>
    %107 = vector.multi_reduction <add>, %106, %cst_63 [1] : vector<16x128xf32> to vector<16xf32>
    %108 = vector.shape_cast %107 : vector<16xf32> to vector<16x1xf32>
    %cst_64 = arith.constant 1.280000e+02 : f32
    %109 = vector.broadcast %cst_64 : f32 to vector<16x1xf32>
    %110 = arith.divf %108, %109 : vector<16x1xf32>
    %111 = vector.broadcast %103 : vector<16x1xf32> to vector<16x128xf32>
    %112 = arith.subf %97, %111 : vector<16x128xf32>
    %cst_65 = arith.constant 9.99999974E-6 : f32
    %113 = vector.broadcast %cst_65 : f32 to vector<16x1xf32>
    %114 = arith.addf %110, %113 : vector<16x1xf32>
    %115 = math.rsqrt %114 : vector<16x1xf32>
    %116 = vector.broadcast %115 : vector<16x1xf32> to vector<16x128xf32>
    %117 = arith.mulf %112, %116 : vector<16x128xf32>
    %118 = vector.broadcast %98 : vector<1x128xf32> to vector<16x128xf32>
    %119 = arith.mulf %117, %118 : vector<16x128xf32>
    %120 = vector.broadcast %99 : vector<1x128xf32> to vector<16x128xf32>
    %121 = arith.addf %119, %120 : vector<16x128xf32>
    %122 = arith.truncf %121 : vector<16x128xf32> to vector<16x128xbf16>
    %c0_66 = arith.constant 0 : index
    %c0_67 = arith.constant 0 : index
    %123 = vector.load %arg14[%c0_66, %c0_67] : memref<128x128xbf16, #tpu.memory_space<vmem>>, vector<128x128xbf16>
    %cst_68 = arith.constant dense<0.000000e+00> : vector<16x128xf32>
    %124 = tpu.matmul %122, %123, %cst_68 {dimension_numbers = #tpu.dot_dimension_numbers<[1], [0], [0], [1], [0, 0, 1, 1], [], []>} : vector<16x128xbf16>, vector<128x128xbf16>, vector<16x128xf32> -> vector<16x128xf32>
    %c0_69 = arith.constant 0 : index
    %c0_70 = arith.constant 0 : index
    %125 = vector.load %arg15[%c0_69, %c0_70] : memref<1x128xf32, #tpu.memory_space<vmem>>, vector<1x128xf32>
    %126 = vector.broadcast %125 : vector<1x128xf32> to vector<16x128xf32>
    %127 = arith.addf %124, %126 : vector<16x128xf32>
    %cst_71 = arith.constant 0.000000e+00 : f32
    %128 = vector.broadcast %cst_71 : f32 to vector<16x128xf32>
    %129 = arith.maximumf %127, %128 : vector<16x128xf32>
    %130 = arith.truncf %129 : vector<16x128xf32> to vector<16x128xbf16>
    %c0_72 = arith.constant 0 : index
    %c0_73 = arith.constant 0 : index
    %131 = vector.load %arg16[%c0_72, %c0_73] : memref<128x128xbf16, #tpu.memory_space<vmem>>, vector<128x128xbf16>
    %cst_74 = arith.constant dense<0.000000e+00> : vector<16x128xf32>
    %132 = tpu.matmul %130, %131, %cst_74 {dimension_numbers = #tpu.dot_dimension_numbers<[1], [0], [0], [1], [0, 0, 1, 1], [], []>} : vector<16x128xbf16>, vector<128x128xbf16>, vector<16x128xf32> -> vector<16x128xf32>
    %c0_75 = arith.constant 0 : index
    %c0_76 = arith.constant 0 : index
    %133 = vector.load %arg17[%c0_75, %c0_76] : memref<1x128xf32, #tpu.memory_space<vmem>>, vector<1x128xf32>
    %134 = vector.broadcast %133 : vector<1x128xf32> to vector<16x128xf32>
    %135 = arith.addf %132, %134 : vector<16x128xf32>
    %136 = arith.addf %121, %135 : vector<16x128xf32>
    %c0_77 = arith.constant 0 : index
    %c0_78 = arith.constant 0 : index
    %137 = vector.load %arg18[%c0_77, %c0_78] : memref<1x128xf32, #tpu.memory_space<vmem>>, vector<1x128xf32>
    %c0_79 = arith.constant 0 : index
    %c0_80 = arith.constant 0 : index
    %138 = vector.load %arg19[%c0_79, %c0_80] : memref<1x128xf32, #tpu.memory_space<vmem>>, vector<1x128xf32>
    %cst_81 = arith.constant dense<0.000000e+00> : vector<16xf32>
    %139 = vector.multi_reduction <add>, %136, %cst_81 [1] : vector<16x128xf32> to vector<16xf32>
    %140 = vector.shape_cast %139 : vector<16xf32> to vector<16x1xf32>
    %cst_82 = arith.constant 1.280000e+02 : f32
    %141 = vector.broadcast %cst_82 : f32 to vector<16x1xf32>
    %142 = arith.divf %140, %141 : vector<16x1xf32>
    %143 = vector.broadcast %142 : vector<16x1xf32> to vector<16x128xf32>
    %144 = arith.subf %136, %143 : vector<16x128xf32>
    %145 = arith.mulf %144, %144 : vector<16x128xf32>
    %cst_83 = arith.constant dense<0.000000e+00> : vector<16xf32>
    %146 = vector.multi_reduction <add>, %145, %cst_83 [1] : vector<16x128xf32> to vector<16xf32>
    %147 = vector.shape_cast %146 : vector<16xf32> to vector<16x1xf32>
    %cst_84 = arith.constant 1.280000e+02 : f32
    %148 = vector.broadcast %cst_84 : f32 to vector<16x1xf32>
    %149 = arith.divf %147, %148 : vector<16x1xf32>
    %150 = vector.broadcast %142 : vector<16x1xf32> to vector<16x128xf32>
    %151 = arith.subf %136, %150 : vector<16x128xf32>
    %cst_85 = arith.constant 9.99999974E-6 : f32
    %152 = vector.broadcast %cst_85 : f32 to vector<16x1xf32>
    %153 = arith.addf %149, %152 : vector<16x1xf32>
    %154 = math.rsqrt %153 : vector<16x1xf32>
    %155 = vector.broadcast %154 : vector<16x1xf32> to vector<16x128xf32>
    %156 = arith.mulf %151, %155 : vector<16x128xf32>
    %157 = vector.broadcast %137 : vector<1x128xf32> to vector<16x128xf32>
    %158 = arith.mulf %156, %157 : vector<16x128xf32>
    %159 = vector.broadcast %138 : vector<1x128xf32> to vector<16x128xf32>
    %160 = arith.addf %158, %159 : vector<16x128xf32>
    %161 = vector.shape_cast %160 : vector<16x128xf32> to vector<2x8x128xf32>
    %c0_86 = arith.constant 0 : index
    %c0_87 = arith.constant 0 : index
    %c0_88 = arith.constant 0 : index
    %162 = vector.load %arg20[%c0_86, %c0_87, %c0_88] : memref<2x8x128xf32, #tpu.memory_space<vmem>>, vector<2x8x128xf32>
    tpu.vector_store %arg20[%c0_86, %c0_87, %c0_88], %161 {strides = array<i32>} : memref<2x8x128xf32, #tpu.memory_space<vmem>>, vector<2x8x128xf32>,
    return
  }
}

</mosaic_0001>

<llo_original>
// kernel: tpu_custom_call.1
$region0: #{tpu_custom_call.1}
  #allocation0 [shape = 'u32[]', space=smem, size = 0x4, offset = 0x4, fixed_abs, tag = 'smem constant byte address 0x4 - core index']
  #allocation1 [shape = 'u32[144,128]{1,0:T(1,128)}', space=vmem, size = 0x12000, scoped, tag = 'internal scratch']
  %s0 = inlined_call_operand.vmem [shape: f32[2,8,128], index: 0, kind: input, shape index: {}]
  %s1 = inlined_call_operand.vmem [shape: f32[2,8,128], index: 1, kind: input, shape index: {}]
  %s2 = inlined_call_operand.vmem [shape: f32[24,128], index: 2, kind: input, shape index: {}]
  %s3 = inlined_call_operand.vmem [shape: f32[4,1,32], index: 3, kind: input, shape index: {}]
  %s4 = inlined_call_operand.vmem [shape: f32[4,1,32], index: 4, kind: input, shape index: {}]
  %s5 = inlined_call_operand.vmem [shape: f32[2,8,16], index: 5, kind: input, shape index: {}]
  %s6 = inlined_call_operand.vmem [shape: f32[8,24,16], index: 6, kind: input, shape index: {}]
  %s7 = inlined_call_operand.vmem [shape: bf16[4,128,32], index: 7, kind: input, shape index: {}]
  %s8 = inlined_call_operand.vmem [shape: bf16[4,128,32], index: 8, kind: input, shape index: {}]
  %s9 = inlined_call_operand.vmem [shape: bf16[4,128,32], index: 9, kind: input, shape index: {}]
  %s10 = inlined_call_operand.vmem [shape: bf16[4,128,32], index: 10, kind: input, shape index: {}]
  %s11 = inlined_call_operand.vmem [shape: bf16[4,32,128], index: 11, kind: input, shape index: {}]
  %s12 = inlined_call_operand.vmem [shape: f32[1,128], index: 12, kind: input, shape index: {}]
  %s13 = inlined_call_operand.vmem [shape: f32[1,128], index: 13, kind: input, shape index: {}]
  %s14 = inlined_call_operand.vmem [shape: bf16[128,128], index: 14, kind: input, shape index: {}]
  %s15 = inlined_call_operand.vmem [shape: f32[1,128], index: 15, kind: input, shape index: {}]
  %s16 = inlined_call_operand.vmem [shape: bf16[128,128], index: 16, kind: input, shape index: {}]
  %s17 = inlined_call_operand.vmem [shape: f32[1,128], index: 17, kind: input, shape index: {}]
  %s18 = inlined_call_operand.vmem [shape: f32[1,128], index: 18, kind: input, shape index: {}]
  %s19 = inlined_call_operand.vmem [shape: f32[1,128], index: 19, kind: input, shape index: {}]
  %s20 = inlined_call_operand.hbm [shape: f32[2,8,128], index: 20, kind: output, shape index: {}]
  %s21 = sld [smem:[#allocation0]]
  $region90: #{tpu_custom_call.1} parent=0
    _
  %s23 = ssub.s32 1, %s21
  %s24 = scalar_select 0, %s23, %s21
  $region1: #{tpu_custom_call.1} parent=0
    #allocation2 [shape = 'u8[8192]{0}', space=vmem, size = 0x2000, scoped, tag = 'output window, operand 0, single buffered']
    #allocation3 [shape = 's32[1]{0}', space=sflag, size = 0x4, scoped, tag = 'scoped memory for tpu_custom_call.1']
    %25 = vsyncpa [#allocation3], 0
    // Predicated region
    $region2: #{tpu_custom_call.1} parent=1 // pred_check
      _
    $region3: #{tpu_custom_call.1} parent=1 // pred_check_branch
      %27 = sbr.rel (0) target = $region5
    $region4: #{tpu_custom_call.1} parent=1 // pred_region
      _
    $region5: #{tpu_custom_call.1} parent=1 // pred_fallthru
      _
    // Predicated region
    $region6: #{tpu_custom_call.1} parent=1 // pred_check
      _
    $region7: #{tpu_custom_call.1} parent=1 // pred_check_branch
      %29 = sbr.rel (0) target = $region9
    $region8: #{tpu_custom_call.1} parent=1 // pred_region
      _
    $region9: #{tpu_custom_call.1} parent=1 // pred_fallthru
      _
    // Predicated region
    $region10: #{tpu_custom_call.1} parent=1 // pred_check
      _
    $region11: #{tpu_custom_call.1} parent=1 // pred_check_branch
      %31 = sbr.rel (0) target = $region13
    $region12: #{tpu_custom_call.1} parent=1 // pred_region
      _
    $region13: #{tpu_custom_call.1} parent=1 // pred_fallthru
      _
    // Predicated region
    $region14: #{tpu_custom_call.1} parent=1 // pred_check
      _
    $region15: #{tpu_custom_call.1} parent=1 // pred_check_branch
      %33 = sbr.rel (0) target = $region17
    $region16: #{tpu_custom_call.1} parent=1 // pred_region
      _
    $region17: #{tpu_custom_call.1} parent=1 // pred_fallthru
      _
    // Predicated region
    $region18: #{tpu_custom_call.1} parent=1 // pred_check
      _
    $region19: #{tpu_custom_call.1} parent=1 // pred_check_branch
      %35 = sbr.rel (0) target = $region21
    $region20: #{tpu_custom_call.1} parent=1 // pred_region
      _
    $region21: #{tpu_custom_call.1} parent=1 // pred_fallthru
      _
    // Predicated region
    $region22: #{tpu_custom_call.1} parent=1 // pred_check
      _
    $region23: #{tpu_custom_call.1} parent=1 // pred_check_branch
      %37 = sbr.rel (0) target = $region25
    $region24: #{tpu_custom_call.1} parent=1 // pred_region
      _
    $region25: #{tpu_custom_call.1} parent=1 // pred_fallthru
      _
    // Predicated region
    $region26: #{tpu_custom_call.1} parent=1 // pred_check
      _
    $region27: #{tpu_custom_call.1} parent=1 // pred_check_branch
      %39 = sbr.rel (0) target = $region29
    $region28: #{tpu_custom_call.1} parent=1 // pred_region
      _
    $region29: #{tpu_custom_call.1} parent=1 // pred_fallthru
      _
    // Predicated region
    $region30: #{tpu_custom_call.1} parent=1 // pred_check
      _
    $region31: #{tpu_custom_call.1} parent=1 // pred_check_branch
      %41 = sbr.rel (0) target = $region33
    $region32: #{tpu_custom_call.1} parent=1 // pred_region
      _
    $region33: #{tpu_custom_call.1} parent=1 // pred_fallthru
      _
    // Predicated region
    $region34: #{tpu_custom_call.1} parent=1 // pred_check
      _
    $region35: #{tpu_custom_call.1} parent=1 // pred_check_branch
      %43 = sbr.rel (0) target = $region37
    $region36: #{tpu_custom_call.1} parent=1 // pred_region
      _
    $region37: #{tpu_custom_call.1} parent=1 // pred_fallthru
      _
    // Predicated region
    $region38: #{tpu_custom_call.1} parent=1 // pred_check
      _
    $region39: #{tpu_custom_call.1} parent=1 // pred_check_branch
      %45 = sbr.rel (0) target = $region41
    $region40: #{tpu_custom_call.1} parent=1 // pred_region
      _
    $region41: #{tpu_custom_call.1} parent=1 // pred_fallthru
      _
    // Predicated region
    $region42: #{tpu_custom_call.1} parent=1 // pred_check
      _
    $region43: #{tpu_custom_call.1} parent=1 // pred_check_branch
      %47 = sbr.rel (0) target = $region45
    $region44: #{tpu_custom_call.1} parent=1 // pred_region
      _
    $region45: #{tpu_custom_call.1} parent=1 // pred_fallthru
      _
    // Predicated region
    $region46: #{tpu_custom_call.1} parent=1 // pred_check
      _
    $region47: #{tpu_custom_call.1} parent=1 // pred_check_branch
      %49 = sbr.rel (0) target = $region49
    $region48: #{tpu_custom_call.1} parent=1 // pred_region
      _
    $region49: #{tpu_custom_call.1} parent=1 // pred_fallthru
      _
    // Predicated region
    $region50: #{tpu_custom_call.1} parent=1 // pred_check
      _
    $region51: #{tpu_custom_call.1} parent=1 // pred_check_branch
      %51 = sbr.rel (0) target = $region53
    $region52: #{tpu_custom_call.1} parent=1 // pred_region
      _
    $region53: #{tpu_custom_call.1} parent=1 // pred_fallthru
      _
    // Predicated region
    $region54: #{tpu_custom_call.1} parent=1 // pred_check
      _
    $region55: #{tpu_custom_call.1} parent=1 // pred_check_branch
      %53 = sbr.rel (0) target = $region57
    $region56: #{tpu_custom_call.1} parent=1 // pred_region
      _
    $region57: #{tpu_custom_call.1} parent=1 // pred_fallthru
      _
    // Predicated region
    $region58: #{tpu_custom_call.1} parent=1 // pred_check
      _
    $region59: #{tpu_custom_call.1} parent=1 // pred_check_branch
      %55 = sbr.rel (0) target = $region61
    $region60: #{tpu_custom_call.1} parent=1 // pred_region
      _
    $region61: #{tpu_custom_call.1} parent=1 // pred_fallthru
      _
    // Predicated region
    $region62: #{tpu_custom_call.1} parent=1 // pred_check
      _
    $region63: #{tpu_custom_call.1} parent=1 // pred_check_branch
      %57 = sbr.rel (0) target = $region65
    $region64: #{tpu_custom_call.1} parent=1 // pred_region
      _
    $region65: #{tpu_custom_call.1} parent=1 // pred_fallthru
      _
    // Predicated region
    $region66: #{tpu_custom_call.1} parent=1 // pred_check
      _
    $region67: #{tpu_custom_call.1} parent=1 // pred_check_branch
      %59 = sbr.rel (0) target = $region69
    $region68: #{tpu_custom_call.1} parent=1 // pred_region
      _
    $region69: #{tpu_custom_call.1} parent=1 // pred_fallthru
      _
    // Predicated region
    $region70: #{tpu_custom_call.1} parent=1 // pred_check
      _
    $region71: #{tpu_custom_call.1} parent=1 // pred_check_branch
      %61 = sbr.rel (0) target = $region73
    $region72: #{tpu_custom_call.1} parent=1 // pred_region
      _
    $region73: #{tpu_custom_call.1} parent=1 // pred_fallthru
      _
    // Predicated region
    $region74: #{tpu_custom_call.1} parent=1 // pred_check
      _
    $region75: #{tpu_custom_call.1} parent=1 // pred_check_branch
      %63 = sbr.rel (0) target = $region77
    $region76: #{tpu_custom_call.1} parent=1 // pred_region
      _
    $region77: #{tpu_custom_call.1} parent=1 // pred_fallthru
      _
    // Predicated region
    $region78: #{tpu_custom_call.1} parent=1 // pred_check
      _
    $region79: #{tpu_custom_call.1} parent=1 // pred_check_branch
      %65 = sbr.rel (0) target = $region81
    $region80: #{tpu_custom_call.1} parent=1 // pred_region
      _
    $region81: #{tpu_custom_call.1} parent=1 // pred_fallthru
      _
    %v67 = vld [vmem:[%s0] sm:$0xff]
    %v68 = vld [vmem:[%s0 + $0x8] sm:$0xff]
    %v69 = vld [vmem:[%s1] sm:$0xff]
    %v70 = vld [vmem:[%s1 + $0x8] sm:$0xff]
    %v71 = vpack.c.bf16 %v68, %v67
    %v72 = vpack.c.bf16 %v67, %v69
    %v73 = vpack.c.bf16 %v68, %v70
    %v74 = vld [vmem:[%s2] sm:$0xff]
    %v75 = vld [vmem:[%s2 + $0x8] sm:$0xff]
    %v76 = vld [vmem:[%s2 + $0x10] sm:$0xff]
    %v77 = vpack.c.bf16 %v75, %v74
    %v78 = vpack.c.bf16 %v76, %v76
    %v79 = vld [vmem:[%s7] sm:$0xf]
    %v80 = vld [vmem:[%s7 + $0x4] sm:$0xf]
    %v81 = vld [vmem:[%s7 + $0x8] sm:$0xf]
    %v82 = vld [vmem:[%s7 + $0xc] sm:$0xf]
    %v83 = vld [vmem:[%s7 + $0x10] sm:$0xf]
    %v84 = vld [vmem:[%s7 + $0x14] sm:$0xf]
    %v85 = vld [vmem:[%s7 + $0x18] sm:$0xf]
    %v86 = vld [vmem:[%s7 + $0x1c] sm:$0xf]
    %v87 = vld [vmem:[%s7 + $0x20] sm:$0xf]
    %v88 = vld [vmem:[%s7 + $0x24] sm:$0xf]
    %v89 = vld [vmem:[%s7 + $0x28] sm:$0xf]
    %v90 = vld [vmem:[%s7 + $0x2c] sm:$0xf]
    %v91 = vld [vmem:[%s7 + $0x30] sm:$0xf]
    %v92 = vld [vmem:[%s7 + $0x34] sm:$0xf]
    %v93 = vld [vmem:[%s7 + $0x38] sm:$0xf]
    %v94 = vld [vmem:[%s7 + $0x3c] sm:$0xf]
    %v95 = vld [vmem:[%s7 + $0x40] sm:$0xf]
    %v96 = vld [vmem:[%s7 + $0x44] sm:$0xf]
    %v97 = vld [vmem:[%s7 + $0x48] sm:$0xf]
    %v98 = vld [vmem:[%s7 + $0x4c] sm:$0xf]
    %v99 = vld [vmem:[%s7 + $0x50] sm:$0xf]
    %v100 = vld [vmem:[%s7 + $0x54] sm:$0xf]
    %v101 = vld [vmem:[%s7 + $0x58] sm:$0xf]
    %v102 = vld [vmem:[%s7 + $0x5c] sm:$0xf]
    %v103 = vld [vmem:[%s7 + $0x60] sm:$0xf]
    %v104 = vld [vmem:[%s7 + $0x64] sm:$0xf]
    %v105 = vld [vmem:[%s7 + $0x68] sm:$0xf]
    %v106 = vld [vmem:[%s7 + $0x6c] sm:$0xf]
    %v107 = vld [vmem:[%s7 + $0x70] sm:$0xf]
    %v108 = vld [vmem:[%s7 + $0x74] sm:$0xf]
    %v109 = vld [vmem:[%s7 + $0x78] sm:$0xf]
    %v110 = vld [vmem:[%s7 + $0x7c] sm:$0xf]
    %v111 = vld [vmem:[%s7 + $0x80] sm:$0xf]
    %v112 = vld [vmem:[%s7 + $0x84] sm:$0xf]
    %v113 = vld [vmem:[%s7 + $0x88] sm:$0xf]
    %v114 = vld [vmem:[%s7 + $0x8c] sm:$0xf]
    %v115 = vld [vmem:[%s7 + $0x90] sm:$0xf]
    %v116 = vld [vmem:[%s7 + $0x94] sm:$0xf]
    %v117 = vld [vmem:[%s7 + $0x98] sm:$0xf]
    %v118 = vld [vmem:[%s7 + $0x9c] sm:$0xf]
    %v119 = vld [vmem:[%s7 + $0xa0] sm:$0xf]
    %v120 = vld [vmem:[%s7 + $0xa4] sm:$0xf]
    %v121 = vld [vmem:[%s7 + $0xa8] sm:$0xf]
    %v122 = vld [vmem:[%s7 + $0xac] sm:$0xf]
    %v123 = vld [vmem:[%s7 + $0xb0] sm:$0xf]
    %v124 = vld [vmem:[%s7 + $0xb4] sm:$0xf]
    %v125 = vld [vmem:[%s7 + $0xb8] sm:$0xf]
    %v126 = vld [vmem:[%s7 + $0xbc] sm:$0xf]
    %v127 = vld [vmem:[%s7 + $0xc0] sm:$0xf]
    %v128 = vld [vmem:[%s7 + $0xc4] sm:$0xf]
    %v129 = vld [vmem:[%s7 + $0xc8] sm:$0xf]
    %v130 = vld [vmem:[%s7 + $0xcc] sm:$0xf]
    %v131 = vld [vmem:[%s7 + $0xd0] sm:$0xf]
    %v132 = vld [vmem:[%s7 + $0xd4] sm:$0xf]
    %v133 = vld [vmem:[%s7 + $0xd8] sm:$0xf]
    %v134 = vld [vmem:[%s7 + $0xdc] sm:$0xf]
    %v135 = vld [vmem:[%s7 + $0xe0] sm:$0xf]
    %v136 = vld [vmem:[%s7 + $0xe4] sm:$0xf]
    %v137 = vld [vmem:[%s7 + $0xe8] sm:$0xf]
    %v138 = vld [vmem:[%s7 + $0xec] sm:$0xf]
    %v139 = vld [vmem:[%s7 + $0xf0] sm:$0xf]
    %v140 = vld [vmem:[%s7 + $0xf4] sm:$0xf]
    %v141 = vld [vmem:[%s7 + $0xf8] sm:$0xf]
    %v142 = vld [vmem:[%s7 + $0xfc] sm:$0xf]
    %v159 = vunpack.c.l.b16 %v79
    %v160 = vunpack.c.l.b16 %v80
    %v161 = vunpack.c.l.b16 %v81
    %v162 = vunpack.c.l.b16 %v82
    %v163 = vunpack.c.l.b16 %v83
    %v164 = vunpack.c.l.b16 %v84
    %v165 = vunpack.c.l.b16 %v85
    %v166 = vunpack.c.l.b16 %v86
    %v167 = vunpack.c.l.b16 %v87
    %v168 = vunpack.c.l.b16 %v88
    %v169 = vunpack.c.l.b16 %v89
    %v170 = vunpack.c.l.b16 %v90
    %v171 = vunpack.c.l.b16 %v91
    %v172 = vunpack.c.l.b16 %v92
    %v173 = vunpack.c.l.b16 %v93
    %v174 = vunpack.c.l.b16 %v94
    %v175 = vpack.c.b16 %v160, %v159
    %v176 = vpack.c.b16 %v162, %v161
    %v177 = vpack.c.b16 %v164, %v163
    %v178 = vpack.c.b16 %v166, %v165
    %v179 = vpack.c.b16 %v168, %v167
    %v180 = vpack.c.b16 %v170, %v169
    %v181 = vpack.c.b16 %v172, %v171
    %v182 = vpack.c.b16 %v174, %v173
    %191 = vmatprep.subr.bf16.mxu0 0
    %192 = vmatpush1.bf16.msra.mxu0 %v182
    %193 = vmatprep.subr.bf16.mxu0 0
    %194 = vmatpush1.bf16.msra.mxu0 %v181
    %195 = vmatprep.subr.bf16.mxu0 0
    %196 = vmatpush1.bf16.msra.mxu0 %v180
    %197 = vmatprep.subr.bf16.mxu0 0
    %198 = vmatpush1.bf16.msra.mxu0 %v179
    %199 = vmatprep.subr.bf16.mxu0 0
    %200 = vmatpush1.bf16.msra.mxu0 %v178
    %201 = vmatprep.subr.bf16.mxu0 0
    %202 = vmatpush1.bf16.msra.mxu0 %v177
    %203 = vmatprep.subr.bf16.mxu0 0
    %204 = vmatpush1.bf16.msra.mxu0 %v176
    %205 = vmatprep.subr.bf16.mxu0 0
    %206 = vmatpush1.bf16.msra.mxu0 %v175
    %207 = vmatprep.subr.bf16.mxu0 0
    %208 = vmatpush2.bf16.msra.mxu0 0
    %209 = vmatprep.subr.bf16.mxu0 0
    %210 = vmatpush2.bf16.msra.mxu0 0
    %211 = vmatprep.subr.bf16.mxu0 0
    %212 = vmatpush2.bf16.msra.mxu0 0
    %213 = vmatprep.subr.bf16.mxu0 0
    %214 = vmatpush2.bf16.msra.mxu0 0
    %215 = vmatprep.subr.bf16.mxu0 0
    %216 = vmatpush2.bf16.msra.mxu0 0
    %217 = vmatprep.subr.bf16.mxu0 0
    %218 = vmatpush2.bf16.msra.mxu0 0
    %219 = vmatprep.subr.bf16.mxu0 0
    %220 = vmatpush2.bf16.msra.mxu0 0
    %221 = vmatprep.subr.bf16.mxu0 0
    %222 = vmatpush2.bf16.msra.mxu0 0
    %223 = vmatprep.mubr.bf16.mxu0 0
    %224 = vmatmul.mubr.bf16.gmra.mxu0 %v71
    %v225 = vpop.f32.mrf.mxu0
    %v226 = vadd.f32 0.0, %v225
    %v227 = vpop.f32.mrf.mxu0
    %v228 = vpop.f32.mrf.mxu0
    %v229 = vadd.f32 0.0, %v228
    %v230 = vpop.f32.mrf.mxu0
    %231 = vdwg.mxu0
    %v248 = vunpack.c.l.b16 %v95
    %v249 = vunpack.c.l.b16 %v96
    %v250 = vunpack.c.l.b16 %v97
    %v251 = vunpack.c.l.b16 %v98
    %v252 = vunpack.c.l.b16 %v99
    %v253 = vunpack.c.l.b16 %v100
    %v254 = vunpack.c.l.b16 %v101
    %v255 = vunpack.c.l.b16 %v102
    %v256 = vunpack.c.l.b16 %v103
    %v257 = vunpack.c.l.b16 %v104
    %v258 = vunpack.c.l.b16 %v105
    %v259 = vunpack.c.l.b16 %v106
    %v260 = vunpack.c.l.b16 %v107
    %v261 = vunpack.c.l.b16 %v108
    %v262 = vunpack.c.l.b16 %v109
    %v263 = vunpack.c.l.b16 %v110
    %v264 = vpack.c.b16 %v249, %v248
    %v265 = vpack.c.b16 %v251, %v250
    %v266 = vpack.c.b16 %v253, %v252
    %v267 = vpack.c.b16 %v255, %v254
    %v268 = vpack.c.b16 %v257, %v256
    %v269 = vpack.c.b16 %v259, %v258
    %v270 = vpack.c.b16 %v261, %v260
    %v271 = vpack.c.b16 %v263, %v262
    %280 = vmatprep.subr.bf16.mxu0 0
    %281 = vmatpush1.bf16.msra.mxu0 %v271
    %282 = vmatprep.subr.bf16.mxu0 0
    %283 = vmatpush1.bf16.msra.mxu0 %v270
    %284 = vmatprep.subr.bf16.mxu0 0
    %285 = vmatpush1.bf16.msra.mxu0 %v269
    %286 = vmatprep.subr.bf16.mxu0 0
    %287 = vmatpush1.bf16.msra.mxu0 %v268
    %288 = vmatprep.subr.bf16.mxu0 0
    %289 = vmatpush1.bf16.msra.mxu0 %v267
    %290 = vmatprep.subr.bf16.mxu0 0
    %291 = vmatpush1.bf16.msra.mxu0 %v266
    %292 = vmatprep.subr.bf16.mxu0 0
    %293 = vmatpush1.bf16.msra.mxu0 %v265
    %294 = vmatprep.subr.bf16.mxu0 0
    %295 = vmatpush1.bf16.msra.mxu0 %v264
    %296 = vmatprep.subr.bf16.mxu0 0
    %297 = vmatpush2.bf16.msra.mxu0 0
    %298 = vmatprep.subr.bf16.mxu0 0
    %299 = vmatpush2.bf16.msra.mxu0 0
    %300 = vmatprep.subr.bf16.mxu0 0
    %301 = vmatpush2.bf16.msra.mxu0 0
    %302 = vmatprep.subr.bf16.mxu0 0
    %303 = vmatpush2.bf16.msra.mxu0 0
    %304 = vmatprep.subr.bf16.mxu0 0
    %305 = vmatpush2.bf16.msra.mxu0 0
    %306 = vmatprep.subr.bf16.mxu0 0
    %307 = vmatpush2.bf16.msra.mxu0 0
    %308 = vmatprep.subr.bf16.mxu0 0
    %309 = vmatpush2.bf16.msra.mxu0 0
    %310 = vmatprep.subr.bf16.mxu0 0
    %311 = vmatpush2.bf16.msra.mxu0 0
    %312 = vmatprep.mubr.bf16.mxu0 0
    %313 = vmatmul.mubr.bf16.gmra.mxu0 %v71
    %v314 = vpop.f32.mrf.mxu0
    %v315 = vadd.f32 0.0, %v314
    %v316 = vpop.f32.mrf.mxu0
    %v317 = vpop.f32.mrf.mxu0
    %v318 = vadd.f32 0.0, %v317
    %v319 = vpop.f32.mrf.mxu0
    %320 = vdwg.mxu0
    %v337 = vunpack.c.l.b16 %v111
    %v338 = vunpack.c.l.b16 %v112
    %v339 = vunpack.c.l.b16 %v113
    %v340 = vunpack.c.l.b16 %v114
    %v341 = vunpack.c.l.b16 %v115
    %v342 = vunpack.c.l.b16 %v116
    %v343 = vunpack.c.l.b16 %v117
    %v344 = vunpack.c.l.b16 %v118
    %v345 = vunpack.c.l.b16 %v119
    %v346 = vunpack.c.l.b16 %v120
    %v347 = vunpack.c.l.b16 %v121
    %v348 = vunpack.c.l.b16 %v122
    %v349 = vunpack.c.l.b16 %v123
    %v350 = vunpack.c.l.b16 %v124
    %v351 = vunpack.c.l.b16 %v125
    %v352 = vunpack.c.l.b16 %v126
    %v353 = vpack.c.b16 %v338, %v337
    %v354 = vpack.c.b16 %v340, %v339
    %v355 = vpack.c.b16 %v342, %v341
    %v356 = vpack.c.b16 %v344, %v343
    %v357 = vpack.c.b16 %v346, %v345
    %v358 = vpack.c.b16 %v348, %v347
    %v359 = vpack.c.b16 %v350, %v349
    %v360 = vpack.c.b16 %v352, %v351
    %369 = vmatprep.subr.bf16.mxu0 0
    %370 = vmatpush1.bf16.msra.mxu0 %v360
    %371 = vmatprep.subr.bf16.mxu0 0
    %372 = vmatpush1.bf16.msra.mxu0 %v359
    %373 = vmatprep.subr.bf16.mxu0 0
    %374 = vmatpush1.bf16.msra.mxu0 %v358
    %375 = vmatprep.subr.bf16.mxu0 0
    %376 = vmatpush1.bf16.msra.mxu0 %v357
    %377 = vmatprep.subr.bf16.mxu0 0
    %378 = vmatpush1.bf16.msra.mxu0 %v356
    %379 = vmatprep.subr.bf16.mxu0 0
    %380 = vmatpush1.bf16.msra.mxu0 %v355
    %381 = vmatprep.subr.bf16.mxu0 0
    %382 = vmatpush1.bf16.msra.mxu0 %v354
    %383 = vmatprep.subr.bf16.mxu0 0
    %384 = vmatpush1.bf16.msra.mxu0 %v353
    %385 = vmatprep.subr.bf16.mxu0 0
    %386 = vmatpush2.bf16.msra.mxu0 0
    %387 = vmatprep.subr.bf16.mxu0 0
    %388 = vmatpush2.bf16.msra.mxu0 0
    %389 = vmatprep.subr.bf16.mxu0 0
    %390 = vmatpush2.bf16.msra.mxu0 0
    %391 = vmatprep.subr.bf16.mxu0 0
    %392 = vmatpush2.bf16.msra.mxu0 0
    %393 = vmatprep.subr.bf16.mxu0 0
    %394 = vmatpush2.bf16.msra.mxu0 0
    %395 = vmatprep.subr.bf16.mxu0 0
    %396 = vmatpush2.bf16.msra.mxu0 0
    %397 = vmatprep.subr.bf16.mxu0 0
    %398 = vmatpush2.bf16.msra.mxu0 0
    %399 = vmatprep.subr.bf16.mxu0 0
    %400 = vmatpush2.bf16.msra.mxu0 0
    %401 = vmatprep.mubr.bf16.mxu0 0
    %402 = vmatmul.mubr.bf16.gmra.mxu0 %v71
    %v403 = vpop.f32.mrf.mxu0
    %v404 = vadd.f32 0.0, %v403
    %v405 = vpop.f32.mrf.mxu0
    %v406 = vpop.f32.mrf.mxu0
    %v407 = vadd.f32 0.0, %v406
    %v408 = vpop.f32.mrf.mxu0
    %409 = vdwg.mxu0
    %v426 = vunpack.c.l.b16 %v127
    %v427 = vunpack.c.l.b16 %v128
    %v428 = vunpack.c.l.b16 %v129
    %v429 = vunpack.c.l.b16 %v130
    %v430 = vunpack.c.l.b16 %v131
    %v431 = vunpack.c.l.b16 %v132
    %v432 = vunpack.c.l.b16 %v133
    %v433 = vunpack.c.l.b16 %v134
    %v434 = vunpack.c.l.b16 %v135
    %v435 = vunpack.c.l.b16 %v136
    %v436 = vunpack.c.l.b16 %v137
    %v437 = vunpack.c.l.b16 %v138
    %v438 = vunpack.c.l.b16 %v139
    %v439 = vunpack.c.l.b16 %v140
    %v440 = vunpack.c.l.b16 %v141
    %v441 = vunpack.c.l.b16 %v142
    %v442 = vpack.c.b16 %v427, %v426
    %v443 = vpack.c.b16 %v429, %v428
    %v444 = vpack.c.b16 %v431, %v430
    %v445 = vpack.c.b16 %v433, %v432
    %v446 = vpack.c.b16 %v435, %v434
    %v447 = vpack.c.b16 %v437, %v436
    %v448 = vpack.c.b16 %v439, %v438
    %v449 = vpack.c.b16 %v441, %v440
    %458 = vmatprep.subr.bf16.mxu0 0
    %459 = vmatpush1.bf16.msra.mxu0 %v449
    %460 = vmatprep.subr.bf16.mxu0 0
    %461 = vmatpush1.bf16.msra.mxu0 %v448
    %462 = vmatprep.subr.bf16.mxu0 0
    %463 = vmatpush1.bf16.msra.mxu0 %v447
    %464 = vmatprep.subr.bf16.mxu0 0
    %465 = vmatpush1.bf16.msra.mxu0 %v446
    %466 = vmatprep.subr.bf16.mxu0 0
    %467 = vmatpush1.bf16.msra.mxu0 %v445
    %468 = vmatprep.subr.bf16.mxu0 0
    %469 = vmatpush1.bf16.msra.mxu0 %v444
    %470 = vmatprep.subr.bf16.mxu0 0
    %471 = vmatpush1.bf16.msra.mxu0 %v443
    %472 = vmatprep.subr.bf16.mxu0 0
    %473 = vmatpush1.bf16.msra.mxu0 %v442
    %474 = vmatprep.subr.bf16.mxu0 0
    %475 = vmatpush2.bf16.msra.mxu0 0
    %476 = vmatprep.subr.bf16.mxu0 0
    %477 = vmatpush2.bf16.msra.mxu0 0
    %478 = vmatprep.subr.bf16.mxu0 0
    %479 = vmatpush2.bf16.msra.mxu0 0
    %480 = vmatprep.subr.bf16.mxu0 0
    %481 = vmatpush2.bf16.msra.mxu0 0
    %482 = vmatprep.subr.bf16.mxu0 0
    %483 = vmatpush2.bf16.msra.mxu0 0
    %484 = vmatprep.subr.bf16.mxu0 0
    %485 = vmatpush2.bf16.msra.mxu0 0
    %486 = vmatprep.subr.bf16.mxu0 0
    %487 = vmatpush2.bf16.msra.mxu0 0
    %488 = vmatprep.subr.bf16.mxu0 0
    %489 = vmatpush2.bf16.msra.mxu0 0
    %490 = vmatprep.mubr.bf16.mxu0 0
    %491 = vmatmul.mubr.bf16.gmra.mxu0 %v71
    %v492 = vpop.f32.mrf.mxu0
    %v493 = vadd.f32 0.0, %v492
    %v494 = vpop.f32.mrf.mxu0
    %v495 = vpop.f32.mrf.mxu0
    %v496 = vadd.f32 0.0, %v495
    %v497 = vpop.f32.mrf.mxu0
    %498 = vdwg.mxu0
    %v499 = vld [vmem:[%s8] sm:$0xf]
    %v500 = vld [vmem:[%s8 + $0x4] sm:$0xf]
    %v501 = vld [vmem:[%s8 + $0x8] sm:$0xf]
    %v502 = vld [vmem:[%s8 + $0xc] sm:$0xf]
    %v503 = vld [vmem:[%s8 + $0x10] sm:$0xf]
    %v504 = vld [vmem:[%s8 + $0x14] sm:$0xf]
    %v505 = vld [vmem:[%s8 + $0x18] sm:$0xf]
    %v506 = vld [vmem:[%s8 + $0x1c] sm:$0xf]
    %v507 = vld [vmem:[%s8 + $0x20] sm:$0xf]
    %v508 = vld [vmem:[%s8 + $0x24] sm:$0xf]
    %v509 = vld [vmem:[%s8 + $0x28] sm:$0xf]
    %v510 = vld [vmem:[%s8 + $0x2c] sm:$0xf]
    %v511 = vld [vmem:[%s8 + $0x30] sm:$0xf]
    %v512 = vld [vmem:[%s8 + $0x34] sm:$0xf]
    %v513 = vld [vmem:[%s8 + $0x38] sm:$0xf]
    %v514 = vld [vmem:[%s8 + $0x3c] sm:$0xf]
    %v515 = vld [vmem:[%s8 + $0x40] sm:$0xf]
    %v516 = vld [vmem:[%s8 + $0x44] sm:$0xf]
    %v517 = vld [vmem:[%s8 + $0x48] sm:$0xf]
    %v518 = vld [vmem:[%s8 + $0x4c] sm:$0xf]
    %v519 = vld [vmem:[%s8 + $0x50] sm:$0xf]
    %v520 = vld [vmem:[%s8 + $0x54] sm:$0xf]
    %v521 = vld [vmem:[%s8 + $0x58] sm:$0xf]
    %v522 = vld [vmem:[%s8 + $0x5c] sm:$0xf]
    %v523 = vld [vmem:[%s8 + $0x60] sm:$0xf]
    %v524 = vld [vmem:[%s8 + $0x64] sm:$0xf]
    %v525 = vld [vmem:[%s8 + $0x68] sm:$0xf]
    %v526 = vld [vmem:[%s8 + $0x6c] sm:$0xf]
    %v527 = vld [vmem:[%s8 + $0x70] sm:$0xf]
    %v528 = vld [vmem:[%s8 + $0x74] sm:$0xf]
    %v529 = vld [vmem:[%s8 + $0x78] sm:$0xf]
    %v530 = vld [vmem:[%s8 + $0x7c] sm:$0xf]
    %v531 = vld [vmem:[%s8 + $0x80] sm:$0xf]
    %v532 = vld [vmem:[%s8 + $0x84] sm:$0xf]
    %v533 = vld [vmem:[%s8 + $0x88] sm:$0xf]
    %v534 = vld [vmem:[%s8 + $0x8c] sm:$0xf]
    %v535 = vld [vmem:[%s8 + $0x90] sm:$0xf]
    %v536 = vld [vmem:[%s8 + $0x94] sm:$0xf]
    %v537 = vld [vmem:[%s8 + $0x98] sm:$0xf]
    %v538 = vld [vmem:[%s8 + $0x9c] sm:$0xf]
    %v539 = vld [vmem:[%s8 + $0xa0] sm:$0xf]
    %v540 = vld [vmem:[%s8 + $0xa4] sm:$0xf]
    %v541 = vld [vmem:[%s8 + $0xa8] sm:$0xf]
    %v542 = vld [vmem:[%s8 + $0xac] sm:$0xf]
    %v543 = vld [vmem:[%s8 + $0xb0] sm:$0xf]
    %v544 = vld [vmem:[%s8 + $0xb4] sm:$0xf]
    %v545 = vld [vmem:[%s8 + $0xb8] sm:$0xf]
    %v546 = vld [vmem:[%s8 + $0xbc] sm:$0xf]
    %v547 = vld [vmem:[%s8 + $0xc0] sm:$0xf]
    %v548 = vld [vmem:[%s8 + $0xc4] sm:$0xf]
    %v549 = vld [vmem:[%s8 + $0xc8] sm:$0xf]
    %v550 = vld [vmem:[%s8 + $0xcc] sm:$0xf]
    %v551 = vld [vmem:[%s8 + $0xd0] sm:$0xf]
    %v552 = vld [vmem:[%s8 + $0xd4] sm:$0xf]
    %v553 = vld [vmem:[%s8 + $0xd8] sm:$0xf]
    %v554 = vld [vmem:[%s8 + $0xdc] sm:$0xf]
    %v555 = vld [vmem:[%s8 + $0xe0] sm:$0xf]
    %v556 = vld [vmem:[%s8 + $0xe4] sm:$0xf]
    %v557 = vld [vmem:[%s8 + $0xe8] sm:$0xf]
    %v558 = vld [vmem:[%s8 + $0xec] sm:$0xf]
    %v559 = vld [vmem:[%s8 + $0xf0] sm:$0xf]
    %v560 = vld [vmem:[%s8 + $0xf4] sm:$0xf]
    %v561 = vld [vmem:[%s8 + $0xf8] sm:$0xf]
    %v562 = vld [vmem:[%s8 + $0xfc] sm:$0xf]
    %v579 = vunpack.c.l.b16 %v499
    %v580 = vunpack.c.l.b16 %v500
    %v581 = vunpack.c.l.b16 %v501
    %v582 = vunpack.c.l.b16 %v502
    %v583 = vunpack.c.l.b16 %v503
    %v584 = vunpack.c.l.b16 %v504
    %v585 = vunpack.c.l.b16 %v505
    %v586 = vunpack.c.l.b16 %v506
    %v587 = vunpack.c.l.b16 %v507
    %v588 = vunpack.c.l.b16 %v508
    %v589 = vunpack.c.l.b16 %v509
    %v590 = vunpack.c.l.b16 %v510
    %v591 = vunpack.c.l.b16 %v511
    %v592 = vunpack.c.l.b16 %v512
    %v593 = vunpack.c.l.b16 %v513
    %v594 = vunpack.c.l.b16 %v514
    %v595 = vpack.c.b16 %v580, %v579
    %v596 = vpack.c.b16 %v582, %v581
    %v597 = vpack.c.b16 %v584, %v583
    %v598 = vpack.c.b16 %v586, %v585
    %v599 = vpack.c.b16 %v588, %v587
    %v600 = vpack.c.b16 %v590, %v589
    %v601 = vpack.c.b16 %v592, %v591
    %v602 = vpack.c.b16 %v594, %v593
    %611 = vmatprep.subr.bf16.mxu0 0
    %612 = vmatpush1.bf16.msra.mxu0 %v602
    %613 = vmatprep.subr.bf16.mxu0 0
    %614 = vmatpush1.bf16.msra.mxu0 %v601
    %615 = vmatprep.subr.bf16.mxu0 0
    %616 = vmatpush1.bf16.msra.mxu0 %v600
    %617 = vmatprep.subr.bf16.mxu0 0
    %618 = vmatpush1.bf16.msra.mxu0 %v599
    %619 = vmatprep.subr.bf16.mxu0 0
    %620 = vmatpush1.bf16.msra.mxu0 %v598
    %621 = vmatprep.subr.bf16.mxu0 0
    %622 = vmatpush1.bf16.msra.mxu0 %v597
    %623 = vmatprep.subr.bf16.mxu0 0
    %624 = vmatpush1.bf16.msra.mxu0 %v596
    %625 = vmatprep.subr.bf16.mxu0 0
    %626 = vmatpush1.bf16.msra.mxu0 %v595
    %627 = vmatprep.subr.bf16.mxu0 0
    %628 = vmatpush2.bf16.msra.mxu0 0
    %629 = vmatprep.subr.bf16.mxu0 0
    %630 = vmatpush2.bf16.msra.mxu0 0
    %631 = vmatprep.subr.bf16.mxu0 0
    %632 = vmatpush2.bf16.msra.mxu0 0
    %633 = vmatprep.subr.bf16.mxu0 0
    %634 = vmatpush2.bf16.msra.mxu0 0
    %635 = vmatprep.subr.bf16.mxu0 0
    %636 = vmatpush2.bf16.msra.mxu0 0
    %637 = vmatprep.subr.bf16.mxu0 0
    %638 = vmatpush2.bf16.msra.mxu0 0
    %639 = vmatprep.subr.bf16.mxu0 0
    %640 = vmatpush2.bf16.msra.mxu0 0
    %641 = vmatprep.subr.bf16.mxu0 0
    %642 = vmatpush2.bf16.msra.mxu0 0
    %643 = vmatprep.mubr.bf16.mxu0 0
    %644 = vmatmul.mubr.bf16.gmra.mxu0 %v72
    %v645 = vpop.f32.mrf.mxu0
    %v646 = vadd.f32 0.0, %v645
    %v647 = vpop.f32.mrf.mxu0
    %v648 = vpop.f32.mrf.mxu0
    %v649 = vadd.f32 0.0, %v648
    %v650 = vpop.f32.mrf.mxu0
    %651 = vmatprep.mubr.bf16.mxu0 0
    %652 = vmatmul.mubr.bf16.gmra.mxu0 %v73
    %v653 = vpop.f32.mrf.mxu0
    %v654 = vadd.f32 0.0, %v653
    %v655 = vpop.f32.mrf.mxu0
    %v656 = vpop.f32.mrf.mxu0
    %v657 = vadd.f32 0.0, %v656
    %v658 = vpop.f32.mrf.mxu0
    %659 = vdwg.mxu0
    %v676 = vunpack.c.l.b16 %v515
    %v677 = vunpack.c.l.b16 %v516
    %v678 = vunpack.c.l.b16 %v517
    %v679 = vunpack.c.l.b16 %v518
    %v680 = vunpack.c.l.b16 %v519
    %v681 = vunpack.c.l.b16 %v520
    %v682 = vunpack.c.l.b16 %v521
    %v683 = vunpack.c.l.b16 %v522
    %v684 = vunpack.c.l.b16 %v523
    %v685 = vunpack.c.l.b16 %v524
    %v686 = vunpack.c.l.b16 %v525
    %v687 = vunpack.c.l.b16 %v526
    %v688 = vunpack.c.l.b16 %v527
    %v689 = vunpack.c.l.b16 %v528
    %v690 = vunpack.c.l.b16 %v529
    %v691 = vunpack.c.l.b16 %v530
    %v692 = vpack.c.b16 %v677, %v676
    %v693 = vpack.c.b16 %v679, %v678
    %v694 = vpack.c.b16 %v681, %v680
    %v695 = vpack.c.b16 %v683, %v682
    %v696 = vpack.c.b16 %v685, %v684
    %v697 = vpack.c.b16 %v687, %v686
    %v698 = vpack.c.b16 %v689, %v688
    %v699 = vpack.c.b16 %v691, %v690
    %708 = vmatprep.subr.bf16.mxu0 0
    %709 = vmatpush1.bf16.msra.mxu0 %v699
    %710 = vmatprep.subr.bf16.mxu0 0
    %711 = vmatpush1.bf16.msra.mxu0 %v698
    %712 = vmatprep.subr.bf16.mxu0 0
    %713 = vmatpush1.bf16.msra.mxu0 %v697
    %714 = vmatprep.subr.bf16.mxu0 0
    %715 = vmatpush1.bf16.msra.mxu0 %v696
    %716 = vmatprep.subr.bf16.mxu0 0
    %717 = vmatpush1.bf16.msra.mxu0 %v695
    %718 = vmatprep.subr.bf16.mxu0 0
    %719 = vmatpush1.bf16.msra.mxu0 %v694
    %720 = vmatprep.subr.bf16.mxu0 0
    %721 = vmatpush1.bf16.msra.mxu0 %v693
    %722 = vmatprep.subr.bf16.mxu0 0
    %723 = vmatpush1.bf16.msra.mxu0 %v692
    %724 = vmatprep.subr.bf16.mxu0 0
    %725 = vmatpush2.bf16.msra.mxu0 0
    %726 = vmatprep.subr.bf16.mxu0 0
    %727 = vmatpush2.bf16.msra.mxu0 0
    %728 = vmatprep.subr.bf16.mxu0 0
    %729 = vmatpush2.bf16.msra.mxu0 0
    %730 = vmatprep.subr.bf16.mxu0 0
    %731 = vmatpush2.bf16.msra.mxu0 0
    %732 = vmatprep.subr.bf16.mxu0 0
    %733 = vmatpush2.bf16.msra.mxu0 0
    %734 = vmatprep.subr.bf16.mxu0 0
    %735 = vmatpush2.bf16.msra.mxu0 0
    %736 = vmatprep.subr.bf16.mxu0 0
    %737 = vmatpush2.bf16.msra.mxu0 0
    %738 = vmatprep.subr.bf16.mxu0 0
    %739 = vmatpush2.bf16.msra.mxu0 0
    %740 = vmatprep.mubr.bf16.mxu0 0
    %741 = vmatmul.mubr.bf16.gmra.mxu0 %v72
    %v742 = vpop.f32.mrf.mxu0
    %v743 = vadd.f32 0.0, %v742
    %v744 = vpop.f32.mrf.mxu0
    %v745 = vpop.f32.mrf.mxu0
    %v746 = vadd.f32 0.0, %v745
    %v747 = vpop.f32.mrf.mxu0
    %748 = vmatprep.mubr.bf16.mxu0 0
    %749 = vmatmul.mubr.bf16.gmra.mxu0 %v73
    %v750 = vpop.f32.mrf.mxu0
    %v751 = vadd.f32 0.0, %v750
    %v752 = vpop.f32.mrf.mxu0
    %v753 = vpop.f32.mrf.mxu0
    %v754 = vadd.f32 0.0, %v753
    %v755 = vpop.f32.mrf.mxu0
    %756 = vdwg.mxu0
    %v773 = vunpack.c.l.b16 %v531
    %v774 = vunpack.c.l.b16 %v532
    %v775 = vunpack.c.l.b16 %v533
    %v776 = vunpack.c.l.b16 %v534
    %v777 = vunpack.c.l.b16 %v535
    %v778 = vunpack.c.l.b16 %v536
    %v779 = vunpack.c.l.b16 %v537
    %v780 = vunpack.c.l.b16 %v538
    %v781 = vunpack.c.l.b16 %v539
    %v782 = vunpack.c.l.b16 %v540
    %v783 = vunpack.c.l.b16 %v541
    %v784 = vunpack.c.l.b16 %v542
    %v785 = vunpack.c.l.b16 %v543
    %v786 = vunpack.c.l.b16 %v544
    %v787 = vunpack.c.l.b16 %v545
    %v788 = vunpack.c.l.b16 %v546
    %v789 = vpack.c.b16 %v774, %v773
    %v790 = vpack.c.b16 %v776, %v775
    %v791 = vpack.c.b16 %v778, %v777
    %v792 = vpack.c.b16 %v780, %v779
    %v793 = vpack.c.b16 %v782, %v781
    %v794 = vpack.c.b16 %v784, %v783
    %v795 = vpack.c.b16 %v786, %v785
    %v796 = vpack.c.b16 %v788, %v787
    %805 = vmatprep.subr.bf16.mxu0 0
    %806 = vmatpush1.bf16.msra.mxu0 %v796
    %807 = vmatprep.subr.bf16.mxu0 0
    %808 = vmatpush1.bf16.msra.mxu0 %v795
    %809 = vmatprep.subr.bf16.mxu0 0
    %810 = vmatpush1.bf16.msra.mxu0 %v794
    %811 = vmatprep.subr.bf16.mxu0 0
    %812 = vmatpush1.bf16.msra.mxu0 %v793
    %813 = vmatprep.subr.bf16.mxu0 0
    %814 = vmatpush1.bf16.msra.mxu0 %v792
    %815 = vmatprep.subr.bf16.mxu0 0
    %816 = vmatpush1.bf16.msra.mxu0 %v791
    %817 = vmatprep.subr.bf16.mxu0 0
    %818 = vmatpush1.bf16.msra.mxu0 %v790
    %819 = vmatprep.subr.bf16.mxu0 0
    %820 = vmatpush1.bf16.msra.mxu0 %v789
    %821 = vmatprep.subr.bf16.mxu0 0
    %822 = vmatpush2.bf16.msra.mxu0 0
    %823 = vmatprep.subr.bf16.mxu0 0
    %824 = vmatpush2.bf16.msra.mxu0 0
    %825 = vmatprep.subr.bf16.mxu0 0
    %826 = vmatpush2.bf16.msra.mxu0 0
    %827 = vmatprep.subr.bf16.mxu0 0
    %828 = vmatpush2.bf16.msra.mxu0 0
    %829 = vmatprep.subr.bf16.mxu0 0
    %830 = vmatpush2.bf16.msra.mxu0 0
    %831 = vmatprep.subr.bf16.mxu0 0
    %832 = vmatpush2.bf16.msra.mxu0 0
    %833 = vmatprep.subr.bf16.mxu0 0
    %834 = vmatpush2.bf16.msra.mxu0 0
    %835 = vmatprep.subr.bf16.mxu0 0
    %836 = vmatpush2.bf16.msra.mxu0 0
    %837 = vmatprep.mubr.bf16.mxu0 0
    %838 = vmatmul.mubr.bf16.gmra.mxu0 %v72
    %v839 = vpop.f32.mrf.mxu0
    %v840 = vadd.f32 0.0, %v839
    %v841 = vpop.f32.mrf.mxu0
    %v842 = vpop.f32.mrf.mxu0
    %v843 = vadd.f32 0.0, %v842
    %v844 = vpop.f32.mrf.mxu0
    %845 = vmatprep.mubr.bf16.mxu0 0
    %846 = vmatmul.mubr.bf16.gmra.mxu0 %v73
    %v847 = vpop.f32.mrf.mxu0
    %v848 = vadd.f32 0.0, %v847
    %v849 = vpop.f32.mrf.mxu0
    %v850 = vpop.f32.mrf.mxu0
    %v851 = vadd.f32 0.0, %v850
    %v852 = vpop.f32.mrf.mxu0
    %853 = vdwg.mxu0
    %v870 = vunpack.c.l.b16 %v547
    %v871 = vunpack.c.l.b16 %v548
    %v872 = vunpack.c.l.b16 %v549
    %v873 = vunpack.c.l.b16 %v550
    %v874 = vunpack.c.l.b16 %v551
    %v875 = vunpack.c.l.b16 %v552
    %v876 = vunpack.c.l.b16 %v553
    %v877 = vunpack.c.l.b16 %v554
    %v878 = vunpack.c.l.b16 %v555
    %v879 = vunpack.c.l.b16 %v556
    %v880 = vunpack.c.l.b16 %v557
    %v881 = vunpack.c.l.b16 %v558
    %v882 = vunpack.c.l.b16 %v559
    %v883 = vunpack.c.l.b16 %v560
    %v884 = vunpack.c.l.b16 %v561
    %v885 = vunpack.c.l.b16 %v562
    %v886 = vpack.c.b16 %v871, %v870
    %v887 = vpack.c.b16 %v873, %v872
    %v888 = vpack.c.b16 %v875, %v874
    %v889 = vpack.c.b16 %v877, %v876
    %v890 = vpack.c.b16 %v879, %v878
    %v891 = vpack.c.b16 %v881, %v880
    %v892 = vpack.c.b16 %v883, %v882
    %v893 = vpack.c.b16 %v885, %v884
    %902 = vmatprep.subr.bf16.mxu0 0
    %903 = vmatpush1.bf16.msra.mxu0 %v893
    %904 = vmatprep.subr.bf16.mxu0 0
    %905 = vmatpush1.bf16.msra.mxu0 %v892
    %906 = vmatprep.subr.bf16.mxu0 0
    %907 = vmatpush1.bf16.msra.mxu0 %v891
    %908 = vmatprep.subr.bf16.mxu0 0
    %909 = vmatpush1.bf16.msra.mxu0 %v890
    %910 = vmatprep.subr.bf16.mxu0 0
    %911 = vmatpush1.bf16.msra.mxu0 %v889
    %912 = vmatprep.subr.bf16.mxu0 0
    %913 = vmatpush1.bf16.msra.mxu0 %v888
    %914 = vmatprep.subr.bf16.mxu0 0
    %915 = vmatpush1.bf16.msra.mxu0 %v887
    %916 = vmatprep.subr.bf16.mxu0 0
    %917 = vmatpush1.bf16.msra.mxu0 %v886
    %918 = vmatprep.subr.bf16.mxu0 0
    %919 = vmatpush2.bf16.msra.mxu0 0
    %920 = vmatprep.subr.bf16.mxu0 0
    %921 = vmatpush2.bf16.msra.mxu0 0
    %922 = vmatprep.subr.bf16.mxu0 0
    %923 = vmatpush2.bf16.msra.mxu0 0
    %924 = vmatprep.subr.bf16.mxu0 0
    %925 = vmatpush2.bf16.msra.mxu0 0
    %926 = vmatprep.subr.bf16.mxu0 0
    %927 = vmatpush2.bf16.msra.mxu0 0
    %928 = vmatprep.subr.bf16.mxu0 0
    %929 = vmatpush2.bf16.msra.mxu0 0
    %930 = vmatprep.subr.bf16.mxu0 0
    %931 = vmatpush2.bf16.msra.mxu0 0
    %932 = vmatprep.subr.bf16.mxu0 0
    %933 = vmatpush2.bf16.msra.mxu0 0
    %934 = vmatprep.mubr.bf16.mxu0 0
    %935 = vmatmul.mubr.bf16.gmra.mxu0 %v72
    %v936 = vpop.f32.mrf.mxu0
    %v937 = vadd.f32 0.0, %v936
    %v938 = vpop.f32.mrf.mxu0
    %v939 = vpop.f32.mrf.mxu0
    %v940 = vadd.f32 0.0, %v939
    %v941 = vpop.f32.mrf.mxu0
    %942 = vmatprep.mubr.bf16.mxu0 0
    %943 = vmatmul.mubr.bf16.gmra.mxu0 %v73
    %v944 = vpop.f32.mrf.mxu0
    %v945 = vadd.f32 0.0, %v944
    %v946 = vpop.f32.mrf.mxu0
    %v947 = vpop.f32.mrf.mxu0
    %v948 = vadd.f32 0.0, %v947
    %v949 = vpop.f32.mrf.mxu0
    %950 = vdwg.mxu0
    %v951 = vld [vmem:[%s9] sm:$0xf]
    %v952 = vld [vmem:[%s9 + $0x4] sm:$0xf]
    %v953 = vld [vmem:[%s9 + $0x8] sm:$0xf]
    %v954 = vld [vmem:[%s9 + $0xc] sm:$0xf]
    %v955 = vld [vmem:[%s9 + $0x10] sm:$0xf]
    %v956 = vld [vmem:[%s9 + $0x14] sm:$0xf]
    %v957 = vld [vmem:[%s9 + $0x18] sm:$0xf]
    %v958 = vld [vmem:[%s9 + $0x1c] sm:$0xf]
    %v959 = vld [vmem:[%s9 + $0x20] sm:$0xf]
    %v960 = vld [vmem:[%s9 + $0x24] sm:$0xf]
    %v961 = vld [vmem:[%s9 + $0x28] sm:$0xf]
    %v962 = vld [vmem:[%s9 + $0x2c] sm:$0xf]
    %v963 = vld [vmem:[%s9 + $0x30] sm:$0xf]
    %v964 = vld [vmem:[%s9 + $0x34] sm:$0xf]
    %v965 = vld [vmem:[%s9 + $0x38] sm:$0xf]
    %v966 = vld [vmem:[%s9 + $0x3c] sm:$0xf]
    %v967 = vld [vmem:[%s9 + $0x40] sm:$0xf]
    %v968 = vld [vmem:[%s9 + $0x44] sm:$0xf]
    %v969 = vld [vmem:[%s9 + $0x48] sm:$0xf]
    %v970 = vld [vmem:[%s9 + $0x4c] sm:$0xf]
    %v971 = vld [vmem:[%s9 + $0x50] sm:$0xf]
    %v972 = vld [vmem:[%s9 + $0x54] sm:$0xf]
    %v973 = vld [vmem:[%s9 + $0x58] sm:$0xf]
    %v974 = vld [vmem:[%s9 + $0x5c] sm:$0xf]
    %v975 = vld [vmem:[%s9 + $0x60] sm:$0xf]
    %v976 = vld [vmem:[%s9 + $0x64] sm:$0xf]
    %v977 = vld [vmem:[%s9 + $0x68] sm:$0xf]
    %v978 = vld [vmem:[%s9 + $0x6c] sm:$0xf]
    %v979 = vld [vmem:[%s9 + $0x70] sm:$0xf]
    %v980 = vld [vmem:[%s9 + $0x74] sm:$0xf]
    %v981 = vld [vmem:[%s9 + $0x78] sm:$0xf]
    %v982 = vld [vmem:[%s9 + $0x7c] sm:$0xf]
    %v983 = vld [vmem:[%s9 + $0x80] sm:$0xf]
    %v984 = vld [vmem:[%s9 + $0x84] sm:$0xf]
    %v985 = vld [vmem:[%s9 + $0x88] sm:$0xf]
    %v986 = vld [vmem:[%s9 + $0x8c] sm:$0xf]
    %v987 = vld [vmem:[%s9 + $0x90] sm:$0xf]
    %v988 = vld [vmem:[%s9 + $0x94] sm:$0xf]
    %v989 = vld [vmem:[%s9 + $0x98] sm:$0xf]
    %v990 = vld [vmem:[%s9 + $0x9c] sm:$0xf]
    %v991 = vld [vmem:[%s9 + $0xa0] sm:$0xf]
    %v992 = vld [vmem:[%s9 + $0xa4] sm:$0xf]
    %v993 = vld [vmem:[%s9 + $0xa8] sm:$0xf]
    %v994 = vld [vmem:[%s9 + $0xac] sm:$0xf]
    %v995 = vld [vmem:[%s9 + $0xb0] sm:$0xf]
    %v996 = vld [vmem:[%s9 + $0xb4] sm:$0xf]
    %v997 = vld [vmem:[%s9 + $0xb8] sm:$0xf]
    %v998 = vld [vmem:[%s9 + $0xbc] sm:$0xf]
    %v999 = vld [vmem:[%s9 + $0xc0] sm:$0xf]
    %v1000 = vld [vmem:[%s9 + $0xc4] sm:$0xf]
    %v1001 = vld [vmem:[%s9 + $0xc8] sm:$0xf]
    %v1002 = vld [vmem:[%s9 + $0xcc] sm:$0xf]
    %v1003 = vld [vmem:[%s9 + $0xd0] sm:$0xf]
    %v1004 = vld [vmem:[%s9 + $0xd4] sm:$0xf]
    %v1005 = vld [vmem:[%s9 + $0xd8] sm:$0xf]
    %v1006 = vld [vmem:[%s9 + $0xdc] sm:$0xf]
    %v1007 = vld [vmem:[%s9 + $0xe0] sm:$0xf]
    %v1008 = vld [vmem:[%s9 + $0xe4] sm:$0xf]
    %v1009 = vld [vmem:[%s9 + $0xe8] sm:$0xf]
    %v1010 = vld [vmem:[%s9 + $0xec] sm:$0xf]
    %v1011 = vld [vmem:[%s9 + $0xf0] sm:$0xf]
    %v1012 = vld [vmem:[%s9 + $0xf4] sm:$0xf]
    %v1013 = vld [vmem:[%s9 + $0xf8] sm:$0xf]
    %v1014 = vld [vmem:[%s9 + $0xfc] sm:$0xf]
    %v1031 = vunpack.c.l.b16 %v951
    %v1032 = vunpack.c.l.b16 %v952
    %v1033 = vunpack.c.l.b16 %v953
    %v1034 = vunpack.c.l.b16 %v954
    %v1035 = vunpack.c.l.b16 %v955
    %v1036 = vunpack.c.l.b16 %v956
    %v1037 = vunpack.c.l.b16 %v957
    %v1038 = vunpack.c.l.b16 %v958
    %v1039 = vunpack.c.l.b16 %v959
    %v1040 = vunpack.c.l.b16 %v960
    %v1041 = vunpack.c.l.b16 %v961
    %v1042 = vunpack.c.l.b16 %v962
    %v1043 = vunpack.c.l.b16 %v963
    %v1044 = vunpack.c.l.b16 %v964
    %v1045 = vunpack.c.l.b16 %v965
    %v1046 = vunpack.c.l.b16 %v966
    %v1047 = vpack.c.b16 %v1032, %v1031
    %v1048 = vpack.c.b16 %v1034, %v1033
    %v1049 = vpack.c.b16 %v1036, %v1035
    %v1050 = vpack.c.b16 %v1038, %v1037
    %v1051 = vpack.c.b16 %v1040, %v1039
    %v1052 = vpack.c.b16 %v1042, %v1041
    %v1053 = vpack.c.b16 %v1044, %v1043
    %v1054 = vpack.c.b16 %v1046, %v1045
    %1063 = vmatprep.subr.bf16.mxu0 0
    %1064 = vmatpush1.bf16.msra.mxu0 %v1054
    %1065 = vmatprep.subr.bf16.mxu0 0
    %1066 = vmatpush1.bf16.msra.mxu0 %v1053
    %1067 = vmatprep.subr.bf16.mxu0 0
    %1068 = vmatpush1.bf16.msra.mxu0 %v1052
    %1069 = vmatprep.subr.bf16.mxu0 0
    %1070 = vmatpush1.bf16.msra.mxu0 %v1051
    %1071 = vmatprep.subr.bf16.mxu0 0
    %1072 = vmatpush1.bf16.msra.mxu0 %v1050
    %1073 = vmatprep.subr.bf16.mxu0 0
    %1074 = vmatpush1.bf16.msra.mxu0 %v1049
    %1075 = vmatprep.subr.bf16.mxu0 0
    %1076 = vmatpush1.bf16.msra.mxu0 %v1048
    %1077 = vmatprep.subr.bf16.mxu0 0
    %1078 = vmatpush1.bf16.msra.mxu0 %v1047
    %1079 = vmatprep.subr.bf16.mxu0 0
    %1080 = vmatpush2.bf16.msra.mxu0 0
    %1081 = vmatprep.subr.bf16.mxu0 0
    %1082 = vmatpush2.bf16.msra.mxu0 0
    %1083 = vmatprep.subr.bf16.mxu0 0
    %1084 = vmatpush2.bf16.msra.mxu0 0
    %1085 = vmatprep.subr.bf16.mxu0 0
    %1086 = vmatpush2.bf16.msra.mxu0 0
    %1087 = vmatprep.subr.bf16.mxu0 0
    %1088 = vmatpush2.bf16.msra.mxu0 0
    %1089 = vmatprep.subr.bf16.mxu0 0
    %1090 = vmatpush2.bf16.msra.mxu0 0
    %1091 = vmatprep.subr.bf16.mxu0 0
    %1092 = vmatpush2.bf16.msra.mxu0 0
    %1093 = vmatprep.subr.bf16.mxu0 0
    %1094 = vmatpush2.bf16.msra.mxu0 0
    %1095 = vmatprep.mubr.bf16.mxu0 0
    %1096 = vmatmul.mubr.bf16.gmra.mxu0 %v72
    %v1097 = vpop.f32.mrf.mxu0
    %v1098 = vadd.f32 0.0, %v1097
    %v1099 = vpop.f32.mrf.mxu0
    %v1100 = vpop.f32.mrf.mxu0
    %v1101 = vadd.f32 0.0, %v1100
    %v1102 = vpop.f32.mrf.mxu0
    %1103 = vmatprep.mubr.bf16.mxu0 0
    %1104 = vmatmul.mubr.bf16.gmra.mxu0 %v73
    %v1105 = vpop.f32.mrf.mxu0
    %v1106 = vadd.f32 0.0, %v1105
    %v1107 = vpop.f32.mrf.mxu0
    %v1108 = vpop.f32.mrf.mxu0
    %v1109 = vadd.f32 0.0, %v1108
    %v1110 = vpop.f32.mrf.mxu0
    %1111 = vdwg.mxu0
    %v1128 = vunpack.c.l.b16 %v967
    %v1129 = vunpack.c.l.b16 %v968
    %v1130 = vunpack.c.l.b16 %v969
    %v1131 = vunpack.c.l.b16 %v970
    %v1132 = vunpack.c.l.b16 %v971
    %v1133 = vunpack.c.l.b16 %v972
    %v1134 = vunpack.c.l.b16 %v973
    %v1135 = vunpack.c.l.b16 %v974
    %v1136 = vunpack.c.l.b16 %v975
    %v1137 = vunpack.c.l.b16 %v976
    %v1138 = vunpack.c.l.b16 %v977
    %v1139 = vunpack.c.l.b16 %v978
    %v1140 = vunpack.c.l.b16 %v979
    %v1141 = vunpack.c.l.b16 %v980
    %v1142 = vunpack.c.l.b16 %v981
    %v1143 = vunpack.c.l.b16 %v982
    %v1144 = vpack.c.b16 %v1129, %v1128
    %v1145 = vpack.c.b16 %v1131, %v1130
    %v1146 = vpack.c.b16 %v1133, %v1132
    %v1147 = vpack.c.b16 %v1135, %v1134
    %v1148 = vpack.c.b16 %v1137, %v1136
    %v1149 = vpack.c.b16 %v1139, %v1138
    %v1150 = vpack.c.b16 %v1141, %v1140
    %v1151 = vpack.c.b16 %v1143, %v1142
    %1160 = vmatprep.subr.bf16.mxu0 0
    %1161 = vmatpush1.bf16.msra.mxu0 %v1151
    %1162 = vmatprep.subr.bf16.mxu0 0
    %1163 = vmatpush1.bf16.msra.mxu0 %v1150
    %1164 = vmatprep.subr.bf16.mxu0 0
    %1165 = vmatpush1.bf16.msra.mxu0 %v1149
    %1166 = vmatprep.subr.bf16.mxu0 0
    %1167 = vmatpush1.bf16.msra.mxu0 %v1148
    %1168 = vmatprep.subr.bf16.mxu0 0
    %1169 = vmatpush1.bf16.msra.mxu0 %v1147
    %1170 = vmatprep.subr.bf16.mxu0 0
    %1171 = vmatpush1.bf16.msra.mxu0 %v1146
    %1172 = vmatprep.subr.bf16.mxu0 0
    %1173 = vmatpush1.bf16.msra.mxu0 %v1145
    %1174 = vmatprep.subr.bf16.mxu0 0
    %1175 = vmatpush1.bf16.msra.mxu0 %v1144
    %1176 = vmatprep.subr.bf16.mxu0 0
    %1177 = vmatpush2.bf16.msra.mxu0 0
    %1178 = vmatprep.subr.bf16.mxu0 0
    %1179 = vmatpush2.bf16.msra.mxu0 0
    %1180 = vmatprep.subr.bf16.mxu0 0
    %1181 = vmatpush2.bf16.msra.mxu0 0
    %1182 = vmatprep.subr.bf16.mxu0 0
    %1183 = vmatpush2.bf16.msra.mxu0 0
    %1184 = vmatprep.subr.bf16.mxu0 0
    %1185 = vmatpush2.bf16.msra.mxu0 0
    %1186 = vmatprep.subr.bf16.mxu0 0
    %1187 = vmatpush2.bf16.msra.mxu0 0
    %1188 = vmatprep.subr.bf16.mxu0 0
    %1189 = vmatpush2.bf16.msra.mxu0 0
    %1190 = vmatprep.subr.bf16.mxu0 0
    %1191 = vmatpush2.bf16.msra.mxu0 0
    %1192 = vmatprep.mubr.bf16.mxu0 0
    %1193 = vmatmul.mubr.bf16.gmra.mxu0 %v72
    %v1194 = vpop.f32.mrf.mxu0
    %v1195 = vadd.f32 0.0, %v1194
    %v1196 = vpop.f32.mrf.mxu0
    %v1197 = vpop.f32.mrf.mxu0
    %v1198 = vadd.f32 0.0, %v1197
    %v1199 = vpop.f32.mrf.mxu0
    %1200 = vmatprep.mubr.bf16.mxu0 0
    %1201 = vmatmul.mubr.bf16.gmra.mxu0 %v73
    %v1202 = vpop.f32.mrf.mxu0
    %v1203 = vadd.f32 0.0, %v1202
    %v1204 = vpop.f32.mrf.mxu0
    %v1205 = vpop.f32.mrf.mxu0
    %v1206 = vadd.f32 0.0, %v1205
    %v1207 = vpop.f32.mrf.mxu0
    %1208 = vdwg.mxu0
    %v1225 = vunpack.c.l.b16 %v983
    %v1226 = vunpack.c.l.b16 %v984
    %v1227 = vunpack.c.l.b16 %v985
    %v1228 = vunpack.c.l.b16 %v986
    %v1229 = vunpack.c.l.b16 %v987
    %v1230 = vunpack.c.l.b16 %v988
    %v1231 = vunpack.c.l.b16 %v989
    %v1232 = vunpack.c.l.b16 %v990
    %v1233 = vunpack.c.l.b16 %v991
    %v1234 = vunpack.c.l.b16 %v992
    %v1235 = vunpack.c.l.b16 %v993
    %v1236 = vunpack.c.l.b16 %v994
    %v1237 = vunpack.c.l.b16 %v995
    %v1238 = vunpack.c.l.b16 %v996
    %v1239 = vunpack.c.l.b16 %v997
    %v1240 = vunpack.c.l.b16 %v998
    %v1241 = vpack.c.b16 %v1226, %v1225
    %v1242 = vpack.c.b16 %v1228, %v1227
    %v1243 = vpack.c.b16 %v1230, %v1229
    %v1244 = vpack.c.b16 %v1232, %v1231
    %v1245 = vpack.c.b16 %v1234, %v1233
    %v1246 = vpack.c.b16 %v1236, %v1235
    %v1247 = vpack.c.b16 %v1238, %v1237
    %v1248 = vpack.c.b16 %v1240, %v1239
    %1257 = vmatprep.subr.bf16.mxu0 0
    %1258 = vmatpush1.bf16.msra.mxu0 %v1248
    %1259 = vmatprep.subr.bf16.mxu0 0
    %1260 = vmatpush1.bf16.msra.mxu0 %v1247
    %1261 = vmatprep.subr.bf16.mxu0 0
    %1262 = vmatpush1.bf16.msra.mxu0 %v1246
    %1263 = vmatprep.subr.bf16.mxu0 0
    %1264 = vmatpush1.bf16.msra.mxu0 %v1245
    %1265 = vmatprep.subr.bf16.mxu0 0
    %1266 = vmatpush1.bf16.msra.mxu0 %v1244
    %1267 = vmatprep.subr.bf16.mxu0 0
    %1268 = vmatpush1.bf16.msra.mxu0 %v1243
    %1269 = vmatprep.subr.bf16.mxu0 0
    %1270 = vmatpush1.bf16.msra.mxu0 %v1242
    %1271 = vmatprep.subr.bf16.mxu0 0
    %1272 = vmatpush1.bf16.msra.mxu0 %v1241
    %1273 = vmatprep.subr.bf16.mxu0 0
    %1274 = vmatpush2.bf16.msra.mxu0 0
    %1275 = vmatprep.subr.bf16.mxu0 0
    %1276 = vmatpush2.bf16.msra.mxu0 0
    %1277 = vmatprep.subr.bf16.mxu0 0
    %1278 = vmatpush2.bf16.msra.mxu0 0
    %1279 = vmatprep.subr.bf16.mxu0 0
    %1280 = vmatpush2.bf16.msra.mxu0 0
    %1281 = vmatprep.subr.bf16.mxu0 0
    %1282 = vmatpush2.bf16.msra.mxu0 0
    %1283 = vmatprep.subr.bf16.mxu0 0
    %1284 = vmatpush2.bf16.msra.mxu0 0
    %1285 = vmatprep.subr.bf16.mxu0 0
    %1286 = vmatpush2.bf16.msra.mxu0 0
    %1287 = vmatprep.subr.bf16.mxu0 0
    %1288 = vmatpush2.bf16.msra.mxu0 0
    %1289 = vmatprep.mubr.bf16.mxu0 0
    %1290 = vmatmul.mubr.bf16.gmra.mxu0 %v72
    %v1291 = vpop.f32.mrf.mxu0
    %v1292 = vadd.f32 0.0, %v1291
    %v1293 = vpop.f32.mrf.mxu0
    %v1294 = vpop.f32.mrf.mxu0
    %v1295 = vadd.f32 0.0, %v1294
    %v1296 = vpop.f32.mrf.mxu0
    %1297 = vmatprep.mubr.bf16.mxu0 0
    %1298 = vmatmul.mubr.bf16.gmra.mxu0 %v73
    %v1299 = vpop.f32.mrf.mxu0
    %v1300 = vadd.f32 0.0, %v1299
    %v1301 = vpop.f32.mrf.mxu0
    %v1302 = vpop.f32.mrf.mxu0
    %v1303 = vadd.f32 0.0, %v1302
    %v1304 = vpop.f32.mrf.mxu0
    %1305 = vdwg.mxu0
    %v1322 = vunpack.c.l.b16 %v999
    %v1323 = vunpack.c.l.b16 %v1000
    %v1324 = vunpack.c.l.b16 %v1001
    %v1325 = vunpack.c.l.b16 %v1002
    %v1326 = vunpack.c.l.b16 %v1003
    %v1327 = vunpack.c.l.b16 %v1004
    %v1328 = vunpack.c.l.b16 %v1005
    %v1329 = vunpack.c.l.b16 %v1006
    %v1330 = vunpack.c.l.b16 %v1007
    %v1331 = vunpack.c.l.b16 %v1008
    %v1332 = vunpack.c.l.b16 %v1009
    %v1333 = vunpack.c.l.b16 %v1010
    %v1334 = vunpack.c.l.b16 %v1011
    %v1335 = vunpack.c.l.b16 %v1012
    %v1336 = vunpack.c.l.b16 %v1013
    %v1337 = vunpack.c.l.b16 %v1014
    %v1338 = vpack.c.b16 %v1323, %v1322
    %v1339 = vpack.c.b16 %v1325, %v1324
    %v1340 = vpack.c.b16 %v1327, %v1326
    %v1341 = vpack.c.b16 %v1329, %v1328
    %v1342 = vpack.c.b16 %v1331, %v1330
    %v1343 = vpack.c.b16 %v1333, %v1332
    %v1344 = vpack.c.b16 %v1335, %v1334
    %v1345 = vpack.c.b16 %v1337, %v1336
    %1354 = vmatprep.subr.bf16.mxu0 0
    %1355 = vmatpush1.bf16.msra.mxu0 %v1345
    %1356 = vmatprep.subr.bf16.mxu0 0
    %1357 = vmatpush1.bf16.msra.mxu0 %v1344
    %1358 = vmatprep.subr.bf16.mxu0 0
    %1359 = vmatpush1.bf16.msra.mxu0 %v1343
    %1360 = vmatprep.subr.bf16.mxu0 0
    %1361 = vmatpush1.bf16.msra.mxu0 %v1342
    %1362 = vmatprep.subr.bf16.mxu0 0
    %1363 = vmatpush1.bf16.msra.mxu0 %v1341
    %1364 = vmatprep.subr.bf16.mxu0 0
    %1365 = vmatpush1.bf16.msra.mxu0 %v1340
    %1366 = vmatprep.subr.bf16.mxu0 0
    %1367 = vmatpush1.bf16.msra.mxu0 %v1339
    %1368 = vmatprep.subr.bf16.mxu0 0
    %1369 = vmatpush1.bf16.msra.mxu0 %v1338
    %1370 = vmatprep.subr.bf16.mxu0 0
    %1371 = vmatpush2.bf16.msra.mxu0 0
    %1372 = vmatprep.subr.bf16.mxu0 0
    %1373 = vmatpush2.bf16.msra.mxu0 0
    %1374 = vmatprep.subr.bf16.mxu0 0
    %1375 = vmatpush2.bf16.msra.mxu0 0
    %1376 = vmatprep.subr.bf16.mxu0 0
    %1377 = vmatpush2.bf16.msra.mxu0 0
    %1378 = vmatprep.subr.bf16.mxu0 0
    %1379 = vmatpush2.bf16.msra.mxu0 0
    %1380 = vmatprep.subr.bf16.mxu0 0
    %1381 = vmatpush2.bf16.msra.mxu0 0
    %1382 = vmatprep.subr.bf16.mxu0 0
    %1383 = vmatpush2.bf16.msra.mxu0 0
    %1384 = vmatprep.subr.bf16.mxu0 0
    %1385 = vmatpush2.bf16.msra.mxu0 0
    %1386 = vmatprep.mubr.bf16.mxu0 0
    %1387 = vmatmul.mubr.bf16.gmra.mxu0 %v72
    %v1388 = vpop.f32.mrf.mxu0
    %v1389 = vadd.f32 0.0, %v1388
    %v1390 = vpop.f32.mrf.mxu0
    %v1391 = vpop.f32.mrf.mxu0
    %v1392 = vadd.f32 0.0, %v1391
    %v1393 = vpop.f32.mrf.mxu0
    %1394 = vmatprep.mubr.bf16.mxu0 0
    %1395 = vmatmul.mubr.bf16.gmra.mxu0 %v73
    %v1396 = vpop.f32.mrf.mxu0
    %v1397 = vadd.f32 0.0, %v1396
    %v1398 = vpop.f32.mrf.mxu0
    %v1399 = vpop.f32.mrf.mxu0
    %v1400 = vadd.f32 0.0, %v1399
    %v1401 = vpop.f32.mrf.mxu0
    %1402 = vdwg.mxu0
    %v1403 = vld [vmem:[%s10] sm:$0xf]
    %v1404 = vld [vmem:[%s10 + $0x4] sm:$0xf]
    %v1405 = vld [vmem:[%s10 + $0x8] sm:$0xf]
    %v1406 = vld [vmem:[%s10 + $0xc] sm:$0xf]
    %v1407 = vld [vmem:[%s10 + $0x10] sm:$0xf]
    %v1408 = vld [vmem:[%s10 + $0x14] sm:$0xf]
    %v1409 = vld [vmem:[%s10 + $0x18] sm:$0xf]
    %v1410 = vld [vmem:[%s10 + $0x1c] sm:$0xf]
    %v1411 = vld [vmem:[%s10 + $0x20] sm:$0xf]
    %v1412 = vld [vmem:[%s10 + $0x24] sm:$0xf]
    %v1413 = vld [vmem:[%s10 + $0x28] sm:$0xf]
    %v1414 = vld [vmem:[%s10 + $0x2c] sm:$0xf]
    %v1415 = vld [vmem:[%s10 + $0x30] sm:$0xf]
    %v1416 = vld [vmem:[%s10 + $0x34] sm:$0xf]
    %v1417 = vld [vmem:[%s10 + $0x38] sm:$0xf]
    %v1418 = vld [vmem:[%s10 + $0x3c] sm:$0xf]
    %v1419 = vld [vmem:[%s10 + $0x40] sm:$0xf]
    %v1420 = vld [vmem:[%s10 + $0x44] sm:$0xf]
    %v1421 = vld [vmem:[%s10 + $0x48] sm:$0xf]
    %v1422 = vld [vmem:[%s10 + $0x4c] sm:$0xf]
    %v1423 = vld [vmem:[%s10 + $0x50] sm:$0xf]
    %v1424 = vld [vmem:[%s10 + $0x54] sm:$0xf]
    %v1425 = vld [vmem:[%s10 + $0x58] sm:$0xf]
    %v1426 = vld [vmem:[%s10 + $0x5c] sm:$0xf]
    %v1427 = vld [vmem:[%s10 + $0x60] sm:$0xf]
    %v1428 = vld [vmem:[%s10 + $0x64] sm:$0xf]
    %v1429 = vld [vmem:[%s10 + $0x68] sm:$0xf]
    %v1430 = vld [vmem:[%s10 + $0x6c] sm:$0xf]
    %v1431 = vld [vmem:[%s10 + $0x70] sm:$0xf]
    %v1432 = vld [vmem:[%s10 + $0x74] sm:$0xf]
    %v1433 = vld [vmem:[%s10 + $0x78] sm:$0xf]
    %v1434 = vld [vmem:[%s10 + $0x7c] sm:$0xf]
    %v1435 = vld [vmem:[%s10 + $0x80] sm:$0xf]
    %v1436 = vld [vmem:[%s10 + $0x84] sm:$0xf]
    %v1437 = vld [vmem:[%s10 + $0x88] sm:$0xf]
    %v1438 = vld [vmem:[%s10 + $0x8c] sm:$0xf]
    %v1439 = vld [vmem:[%s10 + $0x90] sm:$0xf]
    %v1440 = vld [vmem:[%s10 + $0x94] sm:$0xf]
    %v1441 = vld [vmem:[%s10 + $0x98] sm:$0xf]
    %v1442 = vld [vmem:[%s10 + $0x9c] sm:$0xf]
    %v1443 = vld [vmem:[%s10 + $0xa0] sm:$0xf]
    %v1444 = vld [vmem:[%s10 + $0xa4] sm:$0xf]
    %v1445 = vld [vmem:[%s10 + $0xa8] sm:$0xf]
    %v1446 = vld [vmem:[%s10 + $0xac] sm:$0xf]
    %v1447 = vld [vmem:[%s10 + $0xb0] sm:$0xf]
    %v1448 = vld [vmem:[%s10 + $0xb4] sm:$0xf]
    %v1449 = vld [vmem:[%s10 + $0xb8] sm:$0xf]
    %v1450 = vld [vmem:[%s10 + $0xbc] sm:$0xf]
    %v1451 = vld [vmem:[%s10 + $0xc0] sm:$0xf]
    %v1452 = vld [vmem:[%s10 + $0xc4] sm:$0xf]
    %v1453 = vld [vmem:[%s10 + $0xc8] sm:$0xf]
    %v1454 = vld [vmem:[%s10 + $0xcc] sm:$0xf]
    %v1455 = vld [vmem:[%s10 + $0xd0] sm:$0xf]
    %v1456 = vld [vmem:[%s10 + $0xd4] sm:$0xf]
    %v1457 = vld [vmem:[%s10 + $0xd8] sm:$0xf]
    %v1458 = vld [vmem:[%s10 + $0xdc] sm:$0xf]
    %v1459 = vld [vmem:[%s10 + $0xe0] sm:$0xf]
    %v1460 = vld [vmem:[%s10 + $0xe4] sm:$0xf]
    %v1461 = vld [vmem:[%s10 + $0xe8] sm:$0xf]
    %v1462 = vld [vmem:[%s10 + $0xec] sm:$0xf]
    %v1463 = vld [vmem:[%s10 + $0xf0] sm:$0xf]
    %v1464 = vld [vmem:[%s10 + $0xf4] sm:$0xf]
    %v1465 = vld [vmem:[%s10 + $0xf8] sm:$0xf]
    %v1466 = vld [vmem:[%s10 + $0xfc] sm:$0xf]
    %v1483 = vunpack.c.l.b16 %v1403
    %v1484 = vunpack.c.l.b16 %v1404
    %v1485 = vunpack.c.l.b16 %v1405
    %v1486 = vunpack.c.l.b16 %v1406
    %v1487 = vunpack.c.l.b16 %v1407
    %v1488 = vunpack.c.l.b16 %v1408
    %v1489 = vunpack.c.l.b16 %v1409
    %v1490 = vunpack.c.l.b16 %v1410
    %v1491 = vunpack.c.l.b16 %v1411
    %v1492 = vunpack.c.l.b16 %v1412
    %v1493 = vunpack.c.l.b16 %v1413
    %v1494 = vunpack.c.l.b16 %v1414
    %v1495 = vunpack.c.l.b16 %v1415
    %v1496 = vunpack.c.l.b16 %v1416
    %v1497 = vunpack.c.l.b16 %v1417
    %v1498 = vunpack.c.l.b16 %v1418
    %v1499 = vpack.c.b16 %v1484, %v1483
    %v1500 = vpack.c.b16 %v1486, %v1485
    %v1501 = vpack.c.b16 %v1488, %v1487
    %v1502 = vpack.c.b16 %v1490, %v1489
    %v1503 = vpack.c.b16 %v1492, %v1491
    %v1504 = vpack.c.b16 %v1494, %v1493
    %v1505 = vpack.c.b16 %v1496, %v1495
    %v1506 = vpack.c.b16 %v1498, %v1497
    %1515 = vmatprep.subr.bf16.mxu0 0
    %1516 = vmatpush1.bf16.msra.mxu0 %v1506
    %1517 = vmatprep.subr.bf16.mxu0 0
    %1518 = vmatpush1.bf16.msra.mxu0 %v1505
    %1519 = vmatprep.subr.bf16.mxu0 0
    %1520 = vmatpush1.bf16.msra.mxu0 %v1504
    %1521 = vmatprep.subr.bf16.mxu0 0
    %1522 = vmatpush1.bf16.msra.mxu0 %v1503
    %1523 = vmatprep.subr.bf16.mxu0 0
    %1524 = vmatpush1.bf16.msra.mxu0 %v1502
    %1525 = vmatprep.subr.bf16.mxu0 0
    %1526 = vmatpush1.bf16.msra.mxu0 %v1501
    %1527 = vmatprep.subr.bf16.mxu0 0
    %1528 = vmatpush1.bf16.msra.mxu0 %v1500
    %1529 = vmatprep.subr.bf16.mxu0 0
    %1530 = vmatpush1.bf16.msra.mxu0 %v1499
    %1531 = vmatprep.subr.bf16.mxu0 0
    %1532 = vmatpush2.bf16.msra.mxu0 0
    %1533 = vmatprep.subr.bf16.mxu0 0
    %1534 = vmatpush2.bf16.msra.mxu0 0
    %1535 = vmatprep.subr.bf16.mxu0 0
    %1536 = vmatpush2.bf16.msra.mxu0 0
    %1537 = vmatprep.subr.bf16.mxu0 0
    %1538 = vmatpush2.bf16.msra.mxu0 0
    %1539 = vmatprep.subr.bf16.mxu0 0
    %1540 = vmatpush2.bf16.msra.mxu0 0
    %1541 = vmatprep.subr.bf16.mxu0 0
    %1542 = vmatpush2.bf16.msra.mxu0 0
    %1543 = vmatprep.subr.bf16.mxu0 0
    %1544 = vmatpush2.bf16.msra.mxu0 0
    %1545 = vmatprep.subr.bf16.mxu0 0
    %1546 = vmatpush2.bf16.msra.mxu0 0
    %1547 = vmatprep.mubr.bf16.mxu0 0
    %1548 = vmatmul.mubr.bf16.gmra.mxu0 %v77
    %v1549 = vpop.f32.mrf.mxu0
    %v1550 = vadd.f32 0.0, %v1549
    %v1551 = vpop.f32.mrf.mxu0
    %v1552 = vpop.f32.mrf.mxu0
    %v1553 = vadd.f32 0.0, %v1552
    %v1554 = vpop.f32.mrf.mxu0
    %1555 = vmatprep.mubr.bf16.mxu0 0
    %1556 = vmatmul.mubr.bf16.gmra.mxu0 %v78
    %v1557 = vpop.f32.mrf.mxu0
    %v1558 = vadd.f32 0.0, %v1557
    %v1559 = vpop.f32.mrf.mxu0
    %v1560 = vpop.f32.mrf.mxu0
    %v1561 = vpop.f32.mrf.mxu0
    %1562 = vdwg.mxu0
    %v1579 = vunpack.c.l.b16 %v1419
    %v1580 = vunpack.c.l.b16 %v1420
    %v1581 = vunpack.c.l.b16 %v1421
    %v1582 = vunpack.c.l.b16 %v1422
    %v1583 = vunpack.c.l.b16 %v1423
    %v1584 = vunpack.c.l.b16 %v1424
    %v1585 = vunpack.c.l.b16 %v1425
    %v1586 = vunpack.c.l.b16 %v1426
    %v1587 = vunpack.c.l.b16 %v1427
    %v1588 = vunpack.c.l.b16 %v1428
    %v1589 = vunpack.c.l.b16 %v1429
    %v1590 = vunpack.c.l.b16 %v1430
    %v1591 = vunpack.c.l.b16 %v1431
    %v1592 = vunpack.c.l.b16 %v1432
    %v1593 = vunpack.c.l.b16 %v1433
    %v1594 = vunpack.c.l.b16 %v1434
    %v1595 = vpack.c.b16 %v1580, %v1579
    %v1596 = vpack.c.b16 %v1582, %v1581
    %v1597 = vpack.c.b16 %v1584, %v1583
    %v1598 = vpack.c.b16 %v1586, %v1585
    %v1599 = vpack.c.b16 %v1588, %v1587
    %v1600 = vpack.c.b16 %v1590, %v1589
    %v1601 = vpack.c.b16 %v1592, %v1591
    %v1602 = vpack.c.b16 %v1594, %v1593
    %1611 = vmatprep.subr.bf16.mxu0 0
    %1612 = vmatpush1.bf16.msra.mxu0 %v1602
    %1613 = vmatprep.subr.bf16.mxu0 0
    %1614 = vmatpush1.bf16.msra.mxu0 %v1601
    %1615 = vmatprep.subr.bf16.mxu0 0
    %1616 = vmatpush1.bf16.msra.mxu0 %v1600
    %1617 = vmatprep.subr.bf16.mxu0 0
    %1618 = vmatpush1.bf16.msra.mxu0 %v1599
    %1619 = vmatprep.subr.bf16.mxu0 0
    %1620 = vmatpush1.bf16.msra.mxu0 %v1598
    %1621 = vmatprep.subr.bf16.mxu0 0
    %1622 = vmatpush1.bf16.msra.mxu0 %v1597
    %1623 = vmatprep.subr.bf16.mxu0 0
    %1624 = vmatpush1.bf16.msra.mxu0 %v1596
    %1625 = vmatprep.subr.bf16.mxu0 0
    %1626 = vmatpush1.bf16.msra.mxu0 %v1595
    %1627 = vmatprep.subr.bf16.mxu0 0
    %1628 = vmatpush2.bf16.msra.mxu0 0
    %1629 = vmatprep.subr.bf16.mxu0 0
    %1630 = vmatpush2.bf16.msra.mxu0 0
    %1631 = vmatprep.subr.bf16.mxu0 0
    %1632 = vmatpush2.bf16.msra.mxu0 0
    %1633 = vmatprep.subr.bf16.mxu0 0
    %1634 = vmatpush2.bf16.msra.mxu0 0
    %1635 = vmatprep.subr.bf16.mxu0 0
    %1636 = vmatpush2.bf16.msra.mxu0 0
    %1637 = vmatprep.subr.bf16.mxu0 0
    %1638 = vmatpush2.bf16.msra.mxu0 0
    %1639 = vmatprep.subr.bf16.mxu0 0
    %1640 = vmatpush2.bf16.msra.mxu0 0
    %1641 = vmatprep.subr.bf16.mxu0 0
    %1642 = vmatpush2.bf16.msra.mxu0 0
    %1643 = vmatprep.mubr.bf16.mxu0 0
    %1644 = vmatmul.mubr.bf16.gmra.mxu0 %v77
    %v1645 = vpop.f32.mrf.mxu0
    %v1646 = vadd.f32 0.0, %v1645
    %v1647 = vpop.f32.mrf.mxu0
    %v1648 = vpop.f32.mrf.mxu0
    %v1649 = vadd.f32 0.0, %v1648
    %v1650 = vpop.f32.mrf.mxu0
    %1651 = vmatprep.mubr.bf16.mxu0 0
    %1652 = vmatmul.mubr.bf16.gmra.mxu0 %v78
    %v1653 = vpop.f32.mrf.mxu0
    %v1654 = vadd.f32 0.0, %v1653
    %v1655 = vpop.f32.mrf.mxu0
    %v1656 = vpop.f32.mrf.mxu0
    %v1657 = vpop.f32.mrf.mxu0
    %1658 = vdwg.mxu0
    %v1675 = vunpack.c.l.b16 %v1435
    %v1676 = vunpack.c.l.b16 %v1436
    %v1677 = vunpack.c.l.b16 %v1437
    %v1678 = vunpack.c.l.b16 %v1438
    %v1679 = vunpack.c.l.b16 %v1439
    %v1680 = vunpack.c.l.b16 %v1440
    %v1681 = vunpack.c.l.b16 %v1441
    %v1682 = vunpack.c.l.b16 %v1442
    %v1683 = vunpack.c.l.b16 %v1443
    %v1684 = vunpack.c.l.b16 %v1444
    %v1685 = vunpack.c.l.b16 %v1445
    %v1686 = vunpack.c.l.b16 %v1446
    %v1687 = vunpack.c.l.b16 %v1447
    %v1688 = vunpack.c.l.b16 %v1448
    %v1689 = vunpack.c.l.b16 %v1449
    %v1690 = vunpack.c.l.b16 %v1450
    %v1691 = vpack.c.b16 %v1676, %v1675
    %v1692 = vpack.c.b16 %v1678, %v1677
    %v1693 = vpack.c.b16 %v1680, %v1679
    %v1694 = vpack.c.b16 %v1682, %v1681
    %v1695 = vpack.c.b16 %v1684, %v1683
    %v1696 = vpack.c.b16 %v1686, %v1685
    %v1697 = vpack.c.b16 %v1688, %v1687
    %v1698 = vpack.c.b16 %v1690, %v1689
    %1707 = vmatprep.subr.bf16.mxu0 0
    %1708 = vmatpush1.bf16.msra.mxu0 %v1698
    %1709 = vmatprep.subr.bf16.mxu0 0
    %1710 = vmatpush1.bf16.msra.mxu0 %v1697
    %1711 = vmatprep.subr.bf16.mxu0 0
    %1712 = vmatpush1.bf16.msra.mxu0 %v1696
    %1713 = vmatprep.subr.bf16.mxu0 0
    %1714 = vmatpush1.bf16.msra.mxu0 %v1695
    %1715 = vmatprep.subr.bf16.mxu0 0
    %1716 = vmatpush1.bf16.msra.mxu0 %v1694
    %1717 = vmatprep.subr.bf16.mxu0 0
    %1718 = vmatpush1.bf16.msra.mxu0 %v1693
    %1719 = vmatprep.subr.bf16.mxu0 0
    %1720 = vmatpush1.bf16.msra.mxu0 %v1692
    %1721 = vmatprep.subr.bf16.mxu0 0
    %1722 = vmatpush1.bf16.msra.mxu0 %v1691
    %1723 = vmatprep.subr.bf16.mxu0 0
    %1724 = vmatpush2.bf16.msra.mxu0 0
    %1725 = vmatprep.subr.bf16.mxu0 0
    %1726 = vmatpush2.bf16.msra.mxu0 0
    %1727 = vmatprep.subr.bf16.mxu0 0
    %1728 = vmatpush2.bf16.msra.mxu0 0
    %1729 = vmatprep.subr.bf16.mxu0 0
    %1730 = vmatpush2.bf16.msra.mxu0 0
    %1731 = vmatprep.subr.bf16.mxu0 0
    %1732 = vmatpush2.bf16.msra.mxu0 0
    %1733 = vmatprep.subr.bf16.mxu0 0
    %1734 = vmatpush2.bf16.msra.mxu0 0
    %1735 = vmatprep.subr.bf16.mxu0 0
    %1736 = vmatpush2.bf16.msra.mxu0 0
    %1737 = vmatprep.subr.bf16.mxu0 0
    %1738 = vmatpush2.bf16.msra.mxu0 0
    %1739 = vmatprep.mubr.bf16.mxu0 0
    %1740 = vmatmul.mubr.bf16.gmra.mxu0 %v77
    %v1741 = vpop.f32.mrf.mxu0
    %v1742 = vadd.f32 0.0, %v1741
    %v1743 = vpop.f32.mrf.mxu0
    %v1744 = vpop.f32.mrf.mxu0
    %v1745 = vadd.f32 0.0, %v1744
    %v1746 = vpop.f32.mrf.mxu0
    %1747 = vmatprep.mubr.bf16.mxu0 0
    %1748 = vmatmul.mubr.bf16.gmra.mxu0 %v78
    %v1749 = vpop.f32.mrf.mxu0
    %v1750 = vadd.f32 0.0, %v1749
    %v1751 = vpop.f32.mrf.mxu0
    %v1752 = vpop.f32.mrf.mxu0
    %v1753 = vpop.f32.mrf.mxu0
    %1754 = vdwg.mxu0
    %v1771 = vunpack.c.l.b16 %v1451
    %v1772 = vunpack.c.l.b16 %v1452
    %v1773 = vunpack.c.l.b16 %v1453
    %v1774 = vunpack.c.l.b16 %v1454
    %v1775 = vunpack.c.l.b16 %v1455
    %v1776 = vunpack.c.l.b16 %v1456
    %v1777 = vunpack.c.l.b16 %v1457
    %v1778 = vunpack.c.l.b16 %v1458
    %v1779 = vunpack.c.l.b16 %v1459
    %v1780 = vunpack.c.l.b16 %v1460
    %v1781 = vunpack.c.l.b16 %v1461
    %v1782 = vunpack.c.l.b16 %v1462
    %v1783 = vunpack.c.l.b16 %v1463
    %v1784 = vunpack.c.l.b16 %v1464
    %v1785 = vunpack.c.l.b16 %v1465
    %v1786 = vunpack.c.l.b16 %v1466
    %v1787 = vpack.c.b16 %v1772, %v1771
    %v1788 = vpack.c.b16 %v1774, %v1773
    %v1789 = vpack.c.b16 %v1776, %v1775
    %v1790 = vpack.c.b16 %v1778, %v1777
    %v1791 = vpack.c.b16 %v1780, %v1779
    %v1792 = vpack.c.b16 %v1782, %v1781
    %v1793 = vpack.c.b16 %v1784, %v1783
    %v1794 = vpack.c.b16 %v1786, %v1785
    %1803 = vmatprep.subr.bf16.mxu0 0
    %1804 = vmatpush1.bf16.msra.mxu0 %v1794
    %1805 = vmatprep.subr.bf16.mxu0 0
    %1806 = vmatpush1.bf16.msra.mxu0 %v1793
    %1807 = vmatprep.subr.bf16.mxu0 0
    %1808 = vmatpush1.bf16.msra.mxu0 %v1792
    %1809 = vmatprep.subr.bf16.mxu0 0
    %1810 = vmatpush1.bf16.msra.mxu0 %v1791
    %1811 = vmatprep.subr.bf16.mxu0 0
    %1812 = vmatpush1.bf16.msra.mxu0 %v1790
    %1813 = vmatprep.subr.bf16.mxu0 0
    %1814 = vmatpush1.bf16.msra.mxu0 %v1789
    %1815 = vmatprep.subr.bf16.mxu0 0
    %1816 = vmatpush1.bf16.msra.mxu0 %v1788
    %1817 = vmatprep.subr.bf16.mxu0 0
    %1818 = vmatpush1.bf16.msra.mxu0 %v1787
    %1819 = vmatprep.subr.bf16.mxu0 0
    %1820 = vmatpush2.bf16.msra.mxu0 0
    %1821 = vmatprep.subr.bf16.mxu0 0
    %1822 = vmatpush2.bf16.msra.mxu0 0
    %1823 = vmatprep.subr.bf16.mxu0 0
    %1824 = vmatpush2.bf16.msra.mxu0 0
    %1825 = vmatprep.subr.bf16.mxu0 0
    %1826 = vmatpush2.bf16.msra.mxu0 0
    %1827 = vmatprep.subr.bf16.mxu0 0
    %1828 = vmatpush2.bf16.msra.mxu0 0
    %1829 = vmatprep.subr.bf16.mxu0 0
    %1830 = vmatpush2.bf16.msra.mxu0 0
    %1831 = vmatprep.subr.bf16.mxu0 0
    %1832 = vmatpush2.bf16.msra.mxu0 0
    %1833 = vmatprep.subr.bf16.mxu0 0
    %1834 = vmatpush2.bf16.msra.mxu0 0
    %1835 = vmatprep.mubr.bf16.mxu0 0
    %1836 = vmatmul.mubr.bf16.gmra.mxu0 %v77
    %v1837 = vpop.f32.mrf.mxu0
    %v1838 = vadd.f32 0.0, %v1837
    %v1839 = vpop.f32.mrf.mxu0
    %v1840 = vpop.f32.mrf.mxu0
    %v1841 = vadd.f32 0.0, %v1840
    %v1842 = vpop.f32.mrf.mxu0
    %1843 = vmatprep.mubr.bf16.mxu0 0
    %1844 = vmatmul.mubr.bf16.gmra.mxu0 %v78
    %v1845 = vpop.f32.mrf.mxu0
    %v1846 = vadd.f32 0.0, %v1845
    %v1847 = vpop.f32.mrf.mxu0
    %v1848 = vpop.f32.mrf.mxu0
    %v1849 = vpop.f32.mrf.mxu0
    %1850 = vdwg.mxu0
    %v1851 = vld [vmem:[%s3] sm:$0x1]
    %v1852 = vld [vmem:[%s3 + $0x1] sm:$0x1]
    %v1853 = vld [vmem:[%s3 + $0x2] sm:$0x1]
    %v1854 = vld [vmem:[%s3 + $0x3] sm:$0x1]
    %v1855 = vld [vmem:[%s4] sm:$0x1]
    %v1856 = vld [vmem:[%s4 + $0x1] sm:$0x1]
    %v1857 = vld [vmem:[%s4 + $0x2] sm:$0x1]
    %v1858 = vld [vmem:[%s4 + $0x3] sm:$0x1]
    %v1859 = vld [vmem:[%s6] sm:$0xff]
    %v1860 = vld [vmem:[%s6 + $0x8] sm:$0xff]
    %v1861 = vld [vmem:[%s6 + $0x10] sm:$0xff]
    %v1862 = vld [vmem:[%s6 + $0x18] sm:$0xff]
    %v1863 = vld [vmem:[%s6 + $0x20] sm:$0xff]
    %v1864 = vld [vmem:[%s6 + $0x28] sm:$0xff]
    %v1865 = vld [vmem:[%s6 + $0x30] sm:$0xff]
    %v1866 = vld [vmem:[%s6 + $0x38] sm:$0xff]
    %v1867 = vld [vmem:[%s6 + $0x40] sm:$0xff]
    %v1868 = vld [vmem:[%s6 + $0x48] sm:$0xff]
    %v1869 = vld [vmem:[%s6 + $0x50] sm:$0xff]
    %v1870 = vld [vmem:[%s6 + $0x58] sm:$0xff]
    %v1871 = vld [vmem:[%s6 + $0x60] sm:$0xff]
    %v1872 = vld [vmem:[%s6 + $0x68] sm:$0xff]
    %v1873 = vld [vmem:[%s6 + $0x70] sm:$0xff]
    %v1874 = vld [vmem:[%s6 + $0x78] sm:$0xff]
    %v1875 = vld [vmem:[%s6 + $0x80] sm:$0xff]
    %v1876 = vld [vmem:[%s6 + $0x88] sm:$0xff]
    %v1877 = vld [vmem:[%s6 + $0x90] sm:$0xff]
    %v1878 = vld [vmem:[%s6 + $0x98] sm:$0xff]
    %v1879 = vld [vmem:[%s6 + $0xa0] sm:$0xff]
    %v1880 = vld [vmem:[%s6 + $0xa8] sm:$0xff]
    %v1881 = vld [vmem:[%s6 + $0xb0] sm:$0xff]
    %v1882 = vld [vmem:[%s6 + $0xb8] sm:$0xff]
    %v1883 = vld [vmem:[%s11] sm:$0xf]
    %v1884 = vld [vmem:[%s11 + $0x4] sm:$0xf]
    %v1885 = vld [vmem:[%s11 + $0x8] sm:$0xf]
    %v1886 = vld [vmem:[%s11 + $0xc] sm:$0xf]
    %v1887 = vld [vmem:[%s11 + $0x10] sm:$0xf]
    %v1888 = vld [vmem:[%s11 + $0x14] sm:$0xf]
    %v1889 = vld [vmem:[%s11 + $0x18] sm:$0xf]
    %v1890 = vld [vmem:[%s11 + $0x1c] sm:$0xf]
    %v1891 = vld [vmem:[%s11 + $0x20] sm:$0xf]
    %v1892 = vld [vmem:[%s11 + $0x24] sm:$0xf]
    %v1893 = vld [vmem:[%s11 + $0x28] sm:$0xf]
    %v1894 = vld [vmem:[%s11 + $0x2c] sm:$0xf]
    %v1895 = vld [vmem:[%s11 + $0x30] sm:$0xf]
    %v1896 = vld [vmem:[%s11 + $0x34] sm:$0xf]
    %v1897 = vld [vmem:[%s11 + $0x38] sm:$0xf]
    %v1898 = vld [vmem:[%s11 + $0x3c] sm:$0xf]
    %v1903 = vlaneseq
    %v1904 = vshrl.u32 %v1903, 7
    %v1905 = vsub.s32 0, %v1904
    %v1906 = vrot.slane %v1851, %v1905
    %v1907 = vlaneseq
    %v1908 = vshrl.u32 %v1907, 7
    %v1909 = vsub.s32 0, %v1908
    %v1910 = vrot.slane %v1852, %v1909
    %v1911 = vlaneseq
    %v1912 = vshrl.u32 %v1911, 7
    %v1913 = vsub.s32 0, %v1912
    %v1914 = vrot.slane %v1853, %v1913
    %v1915 = vlaneseq
    %v1916 = vshrl.u32 %v1915, 7
    %v1917 = vsub.s32 0, %v1916
    %v1918 = vrot.slane %v1854, %v1917
    %v1923 = vadd.f32 %v226, %v1906
    %v1924 = vadd.f32 %v315, %v1910
    %v1925 = vadd.f32 %v404, %v1914
    %v1926 = vadd.f32 %v493, %v1918
    %v1931 = vlaneseq
    %v1932 = vshrl.u32 %v1931, 7
    %v1933 = vsub.s32 0, %v1932
    %v1934 = vrot.slane %v1855, %v1933
    %v1935 = vlaneseq
    %v1936 = vshrl.u32 %v1935, 7
    %v1937 = vsub.s32 0, %v1936
    %v1938 = vrot.slane %v1856, %v1937
    %v1939 = vlaneseq
    %v1940 = vshrl.u32 %v1939, 7
    %v1941 = vsub.s32 0, %v1940
    %v1942 = vrot.slane %v1857, %v1941
    %v1943 = vlaneseq
    %v1944 = vshrl.u32 %v1943, 7
    %v1945 = vsub.s32 0, %v1944
    %v1946 = vrot.slane %v1858, %v1945
    %v1951 = vadd.f32 %v226, %v1934
    %v1952 = vadd.f32 %v315, %v1938
    %v1953 = vadd.f32 %v404, %v1942
    %v1954 = vadd.f32 %v493, %v1946
    %vm1955 = vcmask 261120
    %v1957 = vsel %vm1955, %v1951, 0
    %v1960 = vsel %vm1955, %v1550, 0
    %v1963 = vsel %vm1955, %v1553, 0
    %v1966 = vsel %vm1955, %v1558, 0
    %1968 = vmatprep.subr.mxu0 0.0
    %1969 = vmatpush1.xpose.msra.mxu0 0.0
    %1970 = vmatprep.subr.mxu0 0.0
    %1971 = vmatpush1.xpose.msra.mxu0 0.0
    %1972 = vmatprep.subr.mxu0 0.0
    %1973 = vmatpush1.xpose.msra.mxu0 0.0
    %1974 = vmatprep.subr.mxu0 0.0
    %1975 = vmatpush1.xpose.msra.mxu0 0.0
    %1976 = vmatprep.subr.mxu0 0.0
    %1977 = vmatpush1.xpose.msra.mxu0 0.0
    %1978 = vmatprep.subr.mxu0 0.0
    %1979 = vmatpush1.xpose.msra.mxu0 0.0
    %1980 = vmatprep.subr.mxu0 0.0
    %1981 = vmatpush1.xpose.msra.mxu0 0.0
    %1982 = vmatprep.subr.mxu0 0.0
    %1983 = vmatpush1.xpose.msra.mxu0 0.0
    %1984 = vmatprep.subr.mxu0 0.0
    %1985 = vmatpush1.xpose.msra.mxu0 0.0
    %1986 = vmatprep.subr.mxu0 0.0
    %1987 = vmatpush1.xpose.msra.mxu0 0.0
    %1988 = vmatprep.subr.mxu0 0.0
    %1989 = vmatpush1.xpose.msra.mxu0 0.0
    %1990 = vmatprep.subr.mxu0 0.0
    %1991 = vmatpush1.xpose.msra.mxu0 0.0
    %1992 = vmatprep.subr.mxu0 0.0
    %1993 = vmatpush1.xpose.msra.mxu0 0.0
    %1994 = vmatprep.subr.mxu0 0.0
    %1995 = vmatpush1.xpose.msra.mxu0 %v1966
    %1996 = vmatprep.subr.mxu0 0.0
    %1997 = vmatpush1.xpose.msra.mxu0 %v1963
    %1998 = vmatprep.subr.mxu0 0.0
    %1999 = vmatpush1.xpose.msra.mxu0 %v1960
    %2000 = vmatprep.subr.mxu0 0.0
    %2001 = vmatpush2.xpose.msra.mxu0 0.0
    %2002 = vmatprep.subr.mxu0 0.0
    %2003 = vmatpush2.xpose.msra.mxu0 0.0
    %2004 = vmatprep.subr.mxu0 0.0
    %2005 = vmatpush2.xpose.msra.mxu0 0.0
    %2006 = vmatprep.subr.mxu0 0.0
    %2007 = vmatpush2.xpose.msra.mxu0 0.0
    %2008 = vmatprep.subr.mxu0 0.0
    %2009 = vmatpush2.xpose.msra.mxu0 0.0
    %2010 = vmatprep.subr.mxu0 0.0
    %2011 = vmatpush2.xpose.msra.mxu0 0.0
    %2012 = vmatprep.subr.mxu0 0.0
    %2013 = vmatpush2.xpose.msra.mxu0 0.0
    %2014 = vmatprep.subr.mxu0 0.0
    %2015 = vmatpush2.xpose.msra.mxu0 0.0
    %2016 = vmatprep.subr.mxu0 0.0
    %2017 = vmatpush2.xpose.msra.mxu0 0.0
    %2018 = vmatprep.subr.mxu0 0.0
    %2019 = vmatpush2.xpose.msra.mxu0 0.0
    %2020 = vmatprep.subr.mxu0 0.0
    %2021 = vmatpush2.xpose.msra.mxu0 0.0
    %2022 = vmatprep.subr.mxu0 0.0
    %2023 = vmatpush2.xpose.msra.mxu0 0.0
    %2024 = vmatprep.subr.mxu0 0.0
    %2025 = vmatpush2.xpose.msra.mxu0 0.0
    %2026 = vmatprep.subr.mxu0 0.0
    %2027 = vmatpush2.xpose.msra.mxu0 0.0
    %2028 = vmatprep.subr.mxu0 0.0
    %2029 = vmatpush2.xpose.msra.mxu0 0.0
    %2030 = vmatprep.subr.mxu0 0.0
    %2031 = vmatpush2.xpose.msra.mxu0 0.0
    %2032 = vmatprep.mubr.f32.mxu0 0.0
    %2033 = vmatmul.mubr.f32.gmra.mxu0 %v1957
    %v2034 = vpop.f32.mrf.mxu0
    %v2035 = vadd.f32 0.0, %v2034
    %v2036 = vpop.f32.mrf.mxu0
    %2037 = vdwg.mxu0
    %v2039 = vsel %vm1955, %v1952, 0
    %v2042 = vsel %vm1955, %v1646, 0
    %v2045 = vsel %vm1955, %v1649, 0
    %v2048 = vsel %vm1955, %v1654, 0
    %2050 = vmatprep.subr.mxu0 0.0
    %2051 = vmatpush1.xpose.msra.mxu0 0.0
    %2052 = vmatprep.subr.mxu0 0.0
    %2053 = vmatpush1.xpose.msra.mxu0 0.0
    %2054 = vmatprep.subr.mxu0 0.0
    %2055 = vmatpush1.xpose.msra.mxu0 0.0
    %2056 = vmatprep.subr.mxu0 0.0
    %2057 = vmatpush1.xpose.msra.mxu0 0.0
    %2058 = vmatprep.subr.mxu0 0.0
    %2059 = vmatpush1.xpose.msra.mxu0 0.0
    %2060 = vmatprep.subr.mxu0 0.0
    %2061 = vmatpush1.xpose.msra.mxu0 0.0
    %2062 = vmatprep.subr.mxu0 0.0
    %2063 = vmatpush1.xpose.msra.mxu0 0.0
    %2064 = vmatprep.subr.mxu0 0.0
    %2065 = vmatpush1.xpose.msra.mxu0 0.0
    %2066 = vmatprep.subr.mxu0 0.0
    %2067 = vmatpush1.xpose.msra.mxu0 0.0
    %2068 = vmatprep.subr.mxu0 0.0
    %2069 = vmatpush1.xpose.msra.mxu0 0.0
    %2070 = vmatprep.subr.mxu0 0.0
    %2071 = vmatpush1.xpose.msra.mxu0 0.0
    %2072 = vmatprep.subr.mxu0 0.0
    %2073 = vmatpush1.xpose.msra.mxu0 0.0
    %2074 = vmatprep.subr.mxu0 0.0
    %2075 = vmatpush1.xpose.msra.mxu0 0.0
    %2076 = vmatprep.subr.mxu0 0.0
    %2077 = vmatpush1.xpose.msra.mxu0 %v2048
    %2078 = vmatprep.subr.mxu0 0.0
    %2079 = vmatpush1.xpose.msra.mxu0 %v2045
    %2080 = vmatprep.subr.mxu0 0.0
    %2081 = vmatpush1.xpose.msra.mxu0 %v2042
    %2082 = vmatprep.subr.mxu0 0.0
    %2083 = vmatpush2.xpose.msra.mxu0 0.0
    %2084 = vmatprep.subr.mxu0 0.0
    %2085 = vmatpush2.xpose.msra.mxu0 0.0
    %2086 = vmatprep.subr.mxu0 0.0
    %2087 = vmatpush2.xpose.msra.mxu0 0.0
    %2088 = vmatprep.subr.mxu0 0.0
    %2089 = vmatpush2.xpose.msra.mxu0 0.0
    %2090 = vmatprep.subr.mxu0 0.0
    %2091 = vmatpush2.xpose.msra.mxu0 0.0
    %2092 = vmatprep.subr.mxu0 0.0
    %2093 = vmatpush2.xpose.msra.mxu0 0.0
    %2094 = vmatprep.subr.mxu0 0.0
    %2095 = vmatpush2.xpose.msra.mxu0 0.0
    %2096 = vmatprep.subr.mxu0 0.0
    %2097 = vmatpush2.xpose.msra.mxu0 0.0
    %2098 = vmatprep.subr.mxu0 0.0
    %2099 = vmatpush2.xpose.msra.mxu0 0.0
    %2100 = vmatprep.subr.mxu0 0.0
    %2101 = vmatpush2.xpose.msra.mxu0 0.0
    %2102 = vmatprep.subr.mxu0 0.0
    %2103 = vmatpush2.xpose.msra.mxu0 0.0
    %2104 = vmatprep.subr.mxu0 0.0
    %2105 = vmatpush2.xpose.msra.mxu0 0.0
    %2106 = vmatprep.subr.mxu0 0.0
    %2107 = vmatpush2.xpose.msra.mxu0 0.0
    %2108 = vmatprep.subr.mxu0 0.0
    %2109 = vmatpush2.xpose.msra.mxu0 0.0
    %2110 = vmatprep.subr.mxu0 0.0
    %2111 = vmatpush2.xpose.msra.mxu0 0.0
    %2112 = vmatprep.subr.mxu0 0.0
    %2113 = vmatpush2.xpose.msra.mxu0 0.0
    %2114 = vmatprep.mubr.f32.mxu0 0.0
    %2115 = vmatmul.mubr.f32.gmra.mxu0 %v2039
    %v2116 = vpop.f32.mrf.mxu0
    %v2117 = vadd.f32 0.0, %v2116
    %v2118 = vpop.f32.mrf.mxu0
    %2119 = vdwg.mxu0
    %v2121 = vsel %vm1955, %v1953, 0
    %v2124 = vsel %vm1955, %v1742, 0
    %v2127 = vsel %vm1955, %v1745, 0
    %v2130 = vsel %vm1955, %v1750, 0
    %2132 = vmatprep.subr.mxu0 0.0
    %2133 = vmatpush1.xpose.msra.mxu0 0.0
    %2134 = vmatprep.subr.mxu0 0.0
    %2135 = vmatpush1.xpose.msra.mxu0 0.0
    %2136 = vmatprep.subr.mxu0 0.0
    %2137 = vmatpush1.xpose.msra.mxu0 0.0
    %2138 = vmatprep.subr.mxu0 0.0
    %2139 = vmatpush1.xpose.msra.mxu0 0.0
    %2140 = vmatprep.subr.mxu0 0.0
    %2141 = vmatpush1.xpose.msra.mxu0 0.0
    %2142 = vmatprep.subr.mxu0 0.0
    %2143 = vmatpush1.xpose.msra.mxu0 0.0
    %2144 = vmatprep.subr.mxu0 0.0
    %2145 = vmatpush1.xpose.msra.mxu0 0.0
    %2146 = vmatprep.subr.mxu0 0.0
    %2147 = vmatpush1.xpose.msra.mxu0 0.0
    %2148 = vmatprep.subr.mxu0 0.0
    %2149 = vmatpush1.xpose.msra.mxu0 0.0
    %2150 = vmatprep.subr.mxu0 0.0
    %2151 = vmatpush1.xpose.msra.mxu0 0.0
    %2152 = vmatprep.subr.mxu0 0.0
    %2153 = vmatpush1.xpose.msra.mxu0 0.0
    %2154 = vmatprep.subr.mxu0 0.0
    %2155 = vmatpush1.xpose.msra.mxu0 0.0
    %2156 = vmatprep.subr.mxu0 0.0
    %2157 = vmatpush1.xpose.msra.mxu0 0.0
    %2158 = vmatprep.subr.mxu0 0.0
    %2159 = vmatpush1.xpose.msra.mxu0 %v2130
    %2160 = vmatprep.subr.mxu0 0.0
    %2161 = vmatpush1.xpose.msra.mxu0 %v2127
    %2162 = vmatprep.subr.mxu0 0.0
    %2163 = vmatpush1.xpose.msra.mxu0 %v2124
    %2164 = vmatprep.subr.mxu0 0.0
    %2165 = vmatpush2.xpose.msra.mxu0 0.0
    %2166 = vmatprep.subr.mxu0 0.0
    %2167 = vmatpush2.xpose.msra.mxu0 0.0
    %2168 = vmatprep.subr.mxu0 0.0
    %2169 = vmatpush2.xpose.msra.mxu0 0.0
    %2170 = vmatprep.subr.mxu0 0.0
    %2171 = vmatpush2.xpose.msra.mxu0 0.0
    %2172 = vmatprep.subr.mxu0 0.0
    %2173 = vmatpush2.xpose.msra.mxu0 0.0
    %2174 = vmatprep.subr.mxu0 0.0
    %2175 = vmatpush2.xpose.msra.mxu0 0.0
    %2176 = vmatprep.subr.mxu0 0.0
    %2177 = vmatpush2.xpose.msra.mxu0 0.0
    %2178 = vmatprep.subr.mxu0 0.0
    %2179 = vmatpush2.xpose.msra.mxu0 0.0
    %2180 = vmatprep.subr.mxu0 0.0
    %2181 = vmatpush2.xpose.msra.mxu0 0.0
    %2182 = vmatprep.subr.mxu0 0.0
    %2183 = vmatpush2.xpose.msra.mxu0 0.0
    %2184 = vmatprep.subr.mxu0 0.0
    %2185 = vmatpush2.xpose.msra.mxu0 0.0
    %2186 = vmatprep.subr.mxu0 0.0
    %2187 = vmatpush2.xpose.msra.mxu0 0.0
    %2188 = vmatprep.subr.mxu0 0.0
    %2189 = vmatpush2.xpose.msra.mxu0 0.0
    %2190 = vmatprep.subr.mxu0 0.0
    %2191 = vmatpush2.xpose.msra.mxu0 0.0
    %2192 = vmatprep.subr.mxu0 0.0
    %2193 = vmatpush2.xpose.msra.mxu0 0.0
    %2194 = vmatprep.subr.mxu0 0.0
    %2195 = vmatpush2.xpose.msra.mxu0 0.0
    %2196 = vmatprep.mubr.f32.mxu0 0.0
    %2197 = vmatmul.mubr.f32.gmra.mxu0 %v2121
    %v2198 = vpop.f32.mrf.mxu0
    %v2199 = vadd.f32 0.0, %v2198
    %v2200 = vpop.f32.mrf.mxu0
    %2201 = vdwg.mxu0
    %v2203 = vsel %vm1955, %v1954, 0
    %v2206 = vsel %vm1955, %v1838, 0
    %v2209 = vsel %vm1955, %v1841, 0
    %v2212 = vsel %vm1955, %v1846, 0
    %2214 = vmatprep.subr.mxu0 0.0
    %2215 = vmatpush1.xpose.msra.mxu0 0.0
    %2216 = vmatprep.subr.mxu0 0.0
    %2217 = vmatpush1.xpose.msra.mxu0 0.0
    %2218 = vmatprep.subr.mxu0 0.0
    %2219 = vmatpush1.xpose.msra.mxu0 0.0
    %2220 = vmatprep.subr.mxu0 0.0
    %2221 = vmatpush1.xpose.msra.mxu0 0.0
    %2222 = vmatprep.subr.mxu0 0.0
    %2223 = vmatpush1.xpose.msra.mxu0 0.0
    %2224 = vmatprep.subr.mxu0 0.0
    %2225 = vmatpush1.xpose.msra.mxu0 0.0
    %2226 = vmatprep.subr.mxu0 0.0
    %2227 = vmatpush1.xpose.msra.mxu0 0.0
    %2228 = vmatprep.subr.mxu0 0.0
    %2229 = vmatpush1.xpose.msra.mxu0 0.0
    %2230 = vmatprep.subr.mxu0 0.0
    %2231 = vmatpush1.xpose.msra.mxu0 0.0
    %2232 = vmatprep.subr.mxu0 0.0
    %2233 = vmatpush1.xpose.msra.mxu0 0.0
    %2234 = vmatprep.subr.mxu0 0.0
    %2235 = vmatpush1.xpose.msra.mxu0 0.0
    %2236 = vmatprep.subr.mxu0 0.0
    %2237 = vmatpush1.xpose.msra.mxu0 0.0
    %2238 = vmatprep.subr.mxu0 0.0
    %2239 = vmatpush1.xpose.msra.mxu0 0.0
    %2240 = vmatprep.subr.mxu0 0.0
    %2241 = vmatpush1.xpose.msra.mxu0 %v2212
    %2242 = vmatprep.subr.mxu0 0.0
    %2243 = vmatpush1.xpose.msra.mxu0 %v2209
    %2244 = vmatprep.subr.mxu0 0.0
    %2245 = vmatpush1.xpose.msra.mxu0 %v2206
    %2246 = vmatprep.subr.mxu0 0.0
    %2247 = vmatpush2.xpose.msra.mxu0 0.0
    %2248 = vmatprep.subr.mxu0 0.0
    %2249 = vmatpush2.xpose.msra.mxu0 0.0
    %2250 = vmatprep.subr.mxu0 0.0
    %2251 = vmatpush2.xpose.msra.mxu0 0.0
    %2252 = vmatprep.subr.mxu0 0.0
    %2253 = vmatpush2.xpose.msra.mxu0 0.0
    %2254 = vmatprep.subr.mxu0 0.0
    %2255 = vmatpush2.xpose.msra.mxu0 0.0
    %2256 = vmatprep.subr.mxu0 0.0
    %2257 = vmatpush2.xpose.msra.mxu0 0.0
    %2258 = vmatprep.subr.mxu0 0.0
    %2259 = vmatpush2.xpose.msra.mxu0 0.0
    %2260 = vmatprep.subr.mxu0 0.0
    %2261 = vmatpush2.xpose.msra.mxu0 0.0
    %2262 = vmatprep.subr.mxu0 0.0
    %2263 = vmatpush2.xpose.msra.mxu0 0.0
    %2264 = vmatprep.subr.mxu0 0.0
    %2265 = vmatpush2.xpose.msra.mxu0 0.0
    %2266 = vmatprep.subr.mxu0 0.0
    %2267 = vmatpush2.xpose.msra.mxu0 0.0
    %2268 = vmatprep.subr.mxu0 0.0
    %2269 = vmatpush2.xpose.msra.mxu0 0.0
    %2270 = vmatprep.subr.mxu0 0.0
    %2271 = vmatpush2.xpose.msra.mxu0 0.0
    %2272 = vmatprep.subr.mxu0 0.0
    %2273 = vmatpush2.xpose.msra.mxu0 0.0
    %2274 = vmatprep.subr.mxu0 0.0
    %2275 = vmatpush2.xpose.msra.mxu0 0.0
    %2276 = vmatprep.subr.mxu0 0.0
    %2277 = vmatpush2.xpose.msra.mxu0 0.0
    %2278 = vmatprep.mubr.f32.mxu0 0.0
    %2279 = vmatmul.mubr.f32.gmra.mxu0 %v2203
    %v2280 = vpop.f32.mrf.mxu0
    %v2281 = vadd.f32 0.0, %v2280
    %v2282 = vpop.f32.mrf.mxu0
    %2283 = vdwg.mxu0
    %2284 = vxpose.xlu0.b32.start [1/16] %v2035, 128
    %2285 = vxpose.xlu0.b32.cont [2/16] 0.0, 128
    %2286 = vxpose.xlu0.b32.cont [3/16] 0.0, 128
    %2287 = vxpose.xlu0.b32.cont [4/16] 0.0, 128
    %2288 = vxpose.xlu0.b32.cont [5/16] 0.0, 128
    %2289 = vxpose.xlu0.b32.cont [6/16] 0.0, 128
    %2290 = vxpose.xlu0.b32.cont [7/16] 0.0, 128
    %2291 = vxpose.xlu0.b32.cont [8/16] 0.0, 128
    %2292 = vxpose.xlu0.b32.cont [9/16] 0.0, 128
    %2293 = vxpose.xlu0.b32.cont [10/16] 0.0, 128
    %2294 = vxpose.xlu0.b32.cont [11/16] 0.0, 128
    %2295 = vxpose.xlu0.b32.cont [12/16] 0.0, 128
    %2296 = vxpose.xlu0.b32.cont [13/16] 0.0, 128
    %2297 = vxpose.xlu0.b32.cont [14/16] 0.0, 128
    %2298 = vxpose.xlu0.b32.cont [15/16] 0.0, 128
    %2299 = vxpose.xlu0.b32.end [16/16] 0.0, 128
    %v2300 = vpop.trf.xlu0
    %v2301 = vpop.trf.xlu0
    %v2302 = vpop.trf.xlu0
    %v2303 = vpop.trf.xlu0
    %v2304 = vpop.trf.xlu0
    %v2305 = vpop.trf.xlu0
    %v2306 = vpop.trf.xlu0
    %v2307 = vpop.trf.xlu0
    %v2308 = vpop.trf.xlu0
    %v2309 = vpop.trf.xlu0
    %v2310 = vpop.trf.xlu0
    %v2311 = vpop.trf.xlu0
    %v2312 = vpop.trf.xlu0
    %v2313 = vpop.trf.xlu0
    %v2314 = vpop.trf.xlu0
    %v2315 = vpop.trf.xlu0
    %2316 = vxpose.xlu0.b32.start [1/16] %v2117, 128
    %2317 = vxpose.xlu0.b32.cont [2/16] 0.0, 128
    %2318 = vxpose.xlu0.b32.cont [3/16] 0.0, 128
    %2319 = vxpose.xlu0.b32.cont [4/16] 0.0, 128
    %2320 = vxpose.xlu0.b32.cont [5/16] 0.0, 128
    %2321 = vxpose.xlu0.b32.cont [6/16] 0.0, 128
    %2322 = vxpose.xlu0.b32.cont [7/16] 0.0, 128
    %2323 = vxpose.xlu0.b32.cont [8/16] 0.0, 128
    %2324 = vxpose.xlu0.b32.cont [9/16] 0.0, 128
    %2325 = vxpose.xlu0.b32.cont [10/16] 0.0, 128
    %2326 = vxpose.xlu0.b32.cont [11/16] 0.0, 128
    %2327 = vxpose.xlu0.b32.cont [12/16] 0.0, 128
    %2328 = vxpose.xlu0.b32.cont [13/16] 0.0, 128
    %2329 = vxpose.xlu0.b32.cont [14/16] 0.0, 128
    %2330 = vxpose.xlu0.b32.cont [15/16] 0.0, 128
    %2331 = vxpose.xlu0.b32.end [16/16] 0.0, 128
    %v2332 = vpop.trf.xlu0
    %v2333 = vpop.trf.xlu0
    %v2334 = vpop.trf.xlu0
    %v2335 = vpop.trf.xlu0
    %v2336 = vpop.trf.xlu0
    %v2337 = vpop.trf.xlu0
    %v2338 = vpop.trf.xlu0
    %v2339 = vpop.trf.xlu0
    %v2340 = vpop.trf.xlu0
    %v2341 = vpop.trf.xlu0
    %v2342 = vpop.trf.xlu0
    %v2343 = vpop.trf.xlu0
    %v2344 = vpop.trf.xlu0
    %v2345 = vpop.trf.xlu0
    %v2346 = vpop.trf.xlu0
    %v2347 = vpop.trf.xlu0
    %2348 = vxpose.xlu0.b32.start [1/16] %v2199, 128
    %2349 = vxpose.xlu0.b32.cont [2/16] 0.0, 128
    %2350 = vxpose.xlu0.b32.cont [3/16] 0.0, 128
    %2351 = vxpose.xlu0.b32.cont [4/16] 0.0, 128
    %2352 = vxpose.xlu0.b32.cont [5/16] 0.0, 128
    %2353 = vxpose.xlu0.b32.cont [6/16] 0.0, 128
    %2354 = vxpose.xlu0.b32.cont [7/16] 0.0, 128
    %2355 = vxpose.xlu0.b32.cont [8/16] 0.0, 128
    %2356 = vxpose.xlu0.b32.cont [9/16] 0.0, 128
    %2357 = vxpose.xlu0.b32.cont [10/16] 0.0, 128
    %2358 = vxpose.xlu0.b32.cont [11/16] 0.0, 128
    %2359 = vxpose.xlu0.b32.cont [12/16] 0.0, 128
    %2360 = vxpose.xlu0.b32.cont [13/16] 0.0, 128
    %2361 = vxpose.xlu0.b32.cont [14/16] 0.0, 128
    %2362 = vxpose.xlu0.b32.cont [15/16] 0.0, 128
    %2363 = vxpose.xlu0.b32.end [16/16] 0.0, 128
    %v2364 = vpop.trf.xlu0
    %v2365 = vpop.trf.xlu0
    %v2366 = vpop.trf.xlu0
    %v2367 = vpop.trf.xlu0
    %v2368 = vpop.trf.xlu0
    %v2369 = vpop.trf.xlu0
    %v2370 = vpop.trf.xlu0
    %v2371 = vpop.trf.xlu0
    %v2372 = vpop.trf.xlu0
    %v2373 = vpop.trf.xlu0
    %v2374 = vpop.trf.xlu0
    %v2375 = vpop.trf.xlu0
    %v2376 = vpop.trf.xlu0
    %v2377 = vpop.trf.xlu0
    %v2378 = vpop.trf.xlu0
    %v2379 = vpop.trf.xlu0
    %2380 = vxpose.xlu0.b32.start [1/16] %v2281, 128
    %2381 = vxpose.xlu0.b32.cont [2/16] 0.0, 128
    %2382 = vxpose.xlu0.b32.cont [3/16] 0.0, 128
    %2383 = vxpose.xlu0.b32.cont [4/16] 0.0, 128
    %2384 = vxpose.xlu0.b32.cont [5/16] 0.0, 128
    %2385 = vxpose.xlu0.b32.cont [6/16] 0.0, 128
    %2386 = vxpose.xlu0.b32.cont [7/16] 0.0, 128
    %2387 = vxpose.xlu0.b32.cont [8/16] 0.0, 128
    %2388 = vxpose.xlu0.b32.cont [9/16] 0.0, 128
    %2389 = vxpose.xlu0.b32.cont [10/16] 0.0, 128
    %2390 = vxpose.xlu0.b32.cont [11/16] 0.0, 128
    %2391 = vxpose.xlu0.b32.cont [12/16] 0.0, 128
    %2392 = vxpose.xlu0.b32.cont [13/16] 0.0, 128
    %2393 = vxpose.xlu0.b32.cont [14/16] 0.0, 128
    %2394 = vxpose.xlu0.b32.cont [15/16] 0.0, 128
    %2395 = vxpose.xlu0.b32.end [16/16] 0.0, 128
    %v2396 = vpop.trf.xlu0
    %v2397 = vpop.trf.xlu0
    %v2398 = vpop.trf.xlu0
    %v2399 = vpop.trf.xlu0
    %v2400 = vpop.trf.xlu0
    %v2401 = vpop.trf.xlu0
    %v2402 = vpop.trf.xlu0
    %v2403 = vpop.trf.xlu0
    %v2404 = vpop.trf.xlu0
    %v2405 = vpop.trf.xlu0
    %v2406 = vpop.trf.xlu0
    %v2407 = vpop.trf.xlu0
    %v2408 = vpop.trf.xlu0
    %v2409 = vpop.trf.xlu0
    %v2410 = vpop.trf.xlu0
    %v2411 = vpop.trf.xlu0
    %v2412 = vcombine.low %v2300, %v2364
    %v2413 = vcombine.high %v2300, %v2364
    %v2415 = vunpack.c.l.s4 1983009808
    %v2416 = vunpack.c.0.s8 %v2415
    %v2417 = vlaneseq
    %v2418 = vshrl.u32 %v2417, 7
    %v2419 = vsub.s32 %v2416, %v2418
    %v2420 = vrot.slane %v2412, %v2419
    %v2422 = vunpack.c.l.s4 1983009808
    %v2423 = vunpack.c.0.s8 %v2422
    %v2424 = vlaneseq
    %v2425 = vshrl.u32 %v2424, 7
    %v2426 = vsub.s32 %v2423, %v2425
    %v2427 = vrot.slane %v2413, %v2426
    %v2428 = vcombine.low %v2332, %v2396
    %v2429 = vcombine.high %v2332, %v2396
    %v2431 = vunpack.c.l.s4 1983009808
    %v2432 = vunpack.c.0.s8 %v2431
    %v2433 = vlaneseq
    %v2434 = vshrl.u32 %v2433, 7
    %v2435 = vsub.s32 %v2432, %v2434
    %v2436 = vrot.slane %v2428, %v2435
    %v2438 = vunpack.c.l.s4 1983009808
    %v2439 = vunpack.c.0.s8 %v2438
    %v2440 = vlaneseq
    %v2441 = vshrl.u32 %v2440, 7
    %v2442 = vsub.s32 %v2439, %v2441
    %v2443 = vrot.slane %v2429, %v2442
    %v2444 = vcombine.low %v2420, %v2436
    %v2445 = vcombine.high %v2420, %v2436
    %v2447 = vunpack.c.l.s4 1934713408
    %v2448 = vunpack.c.0.s8 %v2447
    %v2449 = vlaneseq
    %v2450 = vshrl.u32 %v2449, 7
    %v2451 = vsub.s32 %v2448, %v2450
    %v2452 = vrot.slane %v2444, %v2451
    %v2454 = vunpack.c.l.s4 1934713408
    %v2455 = vunpack.c.0.s8 %v2454
    %v2456 = vlaneseq
    %v2457 = vshrl.u32 %v2456, 7
    %v2458 = vsub.s32 %v2455, %v2457
    %v2459 = vrot.slane %v2445, %v2458
    %v2460 = vcombine.low %v2427, %v2443
    %v2461 = vcombine.high %v2427, %v2443
    %v2463 = vunpack.c.l.s4 1934713408
    %v2464 = vunpack.c.0.s8 %v2463
    %v2465 = vlaneseq
    %v2466 = vshrl.u32 %v2465, 7
    %v2467 = vsub.s32 %v2464, %v2466
    %v2468 = vrot.slane %v2460, %v2467
    %v2470 = vunpack.c.l.s4 1934713408
    %v2471 = vunpack.c.0.s8 %v2470
    %v2472 = vlaneseq
    %v2473 = vshrl.u32 %v2472, 7
    %v2474 = vsub.s32 %v2471, %v2473
    %v2475 = vrot.slane %v2461, %v2474
    %v2476 = vcombine.high %v2452, 0.0
    %v2477 = vcombine.high %v2459, 0.0
    %v2478 = vcombine.high %v2468, 0.0
    %v2479 = vcombine.high %v2475, 0.0
    %v2480 = vcombine.low %v2301, %v2365
    %v2481 = vcombine.high %v2301, %v2365
    %v2483 = vunpack.c.l.s4 1983009808
    %v2484 = vunpack.c.0.s8 %v2483
    %v2485 = vlaneseq
    %v2486 = vshrl.u32 %v2485, 7
    %v2487 = vsub.s32 %v2484, %v2486
    %v2488 = vrot.slane %v2480, %v2487
    %v2490 = vunpack.c.l.s4 1983009808
    %v2491 = vunpack.c.0.s8 %v2490
    %v2492 = vlaneseq
    %v2493 = vshrl.u32 %v2492, 7
    %v2494 = vsub.s32 %v2491, %v2493
    %v2495 = vrot.slane %v2481, %v2494
    %v2496 = vcombine.low %v2333, %v2397
    %v2497 = vcombine.high %v2333, %v2397
    %v2499 = vunpack.c.l.s4 1983009808
    %v2500 = vunpack.c.0.s8 %v2499
    %v2501 = vlaneseq
    %v2502 = vshrl.u32 %v2501, 7
    %v2503 = vsub.s32 %v2500, %v2502
    %v2504 = vrot.slane %v2496, %v2503
    %v2506 = vunpack.c.l.s4 1983009808
    %v2507 = vunpack.c.0.s8 %v2506
    %v2508 = vlaneseq
    %v2509 = vshrl.u32 %v2508, 7
    %v2510 = vsub.s32 %v2507, %v2509
    %v2511 = vrot.slane %v2497, %v2510
    %v2512 = vcombine.low %v2488, %v2504
    %v2513 = vcombine.high %v2488, %v2504
    %v2515 = vunpack.c.l.s4 1934713408
    %v2516 = vunpack.c.0.s8 %v2515
    %v2517 = vlaneseq
    %v2518 = vshrl.u32 %v2517, 7
    %v2519 = vsub.s32 %v2516, %v2518
    %v2520 = vrot.slane %v2512, %v2519
    %v2522 = vunpack.c.l.s4 1934713408
    %v2523 = vunpack.c.0.s8 %v2522
    %v2524 = vlaneseq
    %v2525 = vshrl.u32 %v2524, 7
    %v2526 = vsub.s32 %v2523, %v2525
    %v2527 = vrot.slane %v2513, %v2526
    %v2528 = vcombine.low %v2495, %v2511
    %v2529 = vcombine.high %v2495, %v2511
    %v2531 = vunpack.c.l.s4 1934713408
    %v2532 = vunpack.c.0.s8 %v2531
    %v2533 = vlaneseq
    %v2534 = vshrl.u32 %v2533, 7
    %v2535 = vsub.s32 %v2532, %v2534
    %v2536 = vrot.slane %v2528, %v2535
    %v2538 = vunpack.c.l.s4 1934713408
    %v2539 = vunpack.c.0.s8 %v2538
    %v2540 = vlaneseq
    %v2541 = vshrl.u32 %v2540, 7
    %v2542 = vsub.s32 %v2539, %v2541
    %v2543 = vrot.slane %v2529, %v2542
    %v2544 = vcombine.high %v2520, 0.0
    %v2545 = vcombine.high %v2527, 0.0
    %v2546 = vcombine.high %v2536, 0.0
    %v2547 = vcombine.high %v2543, 0.0
    %v2548 = vcombine.low %v2302, %v2366
    %v2549 = vcombine.high %v2302, %v2366
    %v2551 = vunpack.c.l.s4 1983009808
    %v2552 = vunpack.c.0.s8 %v2551
    %v2553 = vlaneseq
    %v2554 = vshrl.u32 %v2553, 7
    %v2555 = vsub.s32 %v2552, %v2554
    %v2556 = vrot.slane %v2548, %v2555
    %v2558 = vunpack.c.l.s4 1983009808
    %v2559 = vunpack.c.0.s8 %v2558
    %v2560 = vlaneseq
    %v2561 = vshrl.u32 %v2560, 7
    %v2562 = vsub.s32 %v2559, %v2561
    %v2563 = vrot.slane %v2549, %v2562
    %v2564 = vcombine.low %v2334, %v2398
    %v2565 = vcombine.high %v2334, %v2398
    %v2567 = vunpack.c.l.s4 1983009808
    %v2568 = vunpack.c.0.s8 %v2567
    %v2569 = vlaneseq
    %v2570 = vshrl.u32 %v2569, 7
    %v2571 = vsub.s32 %v2568, %v2570
    %v2572 = vrot.slane %v2564, %v2571
    %v2574 = vunpack.c.l.s4 1983009808
    %v2575 = vunpack.c.0.s8 %v2574
    %v2576 = vlaneseq
    %v2577 = vshrl.u32 %v2576, 7
    %v2578 = vsub.s32 %v2575, %v2577
    %v2579 = vrot.slane %v2565, %v2578
    %v2580 = vcombine.low %v2556, %v2572
    %v2581 = vcombine.high %v2556, %v2572
    %v2583 = vunpack.c.l.s4 1934713408
    %v2584 = vunpack.c.0.s8 %v2583
    %v2585 = vlaneseq
    %v2586 = vshrl.u32 %v2585, 7
    %v2587 = vsub.s32 %v2584, %v2586
    %v2588 = vrot.slane %v2580, %v2587
    %v2590 = vunpack.c.l.s4 1934713408
    %v2591 = vunpack.c.0.s8 %v2590
    %v2592 = vlaneseq
    %v2593 = vshrl.u32 %v2592, 7
    %v2594 = vsub.s32 %v2591, %v2593
    %v2595 = vrot.slane %v2581, %v2594
    %v2596 = vcombine.low %v2563, %v2579
    %v2597 = vcombine.high %v2563, %v2579
    %v2599 = vunpack.c.l.s4 1934713408
    %v2600 = vunpack.c.0.s8 %v2599
    %v2601 = vlaneseq
    %v2602 = vshrl.u32 %v2601, 7
    %v2603 = vsub.s32 %v2600, %v2602
    %v2604 = vrot.slane %v2596, %v2603
    %v2606 = vunpack.c.l.s4 1934713408
    %v2607 = vunpack.c.0.s8 %v2606
    %v2608 = vlaneseq
    %v2609 = vshrl.u32 %v2608, 7
    %v2610 = vsub.s32 %v2607, %v2609
    %v2611 = vrot.slane %v2597, %v2610
    %v2612 = vcombine.high %v2588, 0.0
    %v2613 = vcombine.high %v2595, 0.0
    %v2614 = vcombine.high %v2604, 0.0
    %v2615 = vcombine.high %v2611, 0.0
    %2616 = vxpose.xlu0.b32.start [1/16] %v2452, 128
    %2617 = vxpose.xlu0.b32.cont [2/16] 0.0, 128
    %2618 = vxpose.xlu0.b32.cont [3/16] 0.0, 128
    %2619 = vxpose.xlu0.b32.cont [4/16] 0.0, 128
    %2620 = vxpose.xlu0.b32.cont [5/16] 0.0, 128
    %2621 = vxpose.xlu0.b32.cont [6/16] 0.0, 128
    %2622 = vxpose.xlu0.b32.cont [7/16] 0.0, 128
    %2623 = vxpose.xlu0.b32.cont [8/16] 0.0, 128
    %2624 = vxpose.xlu0.b32.cont [9/16] 0.0, 128
    %2625 = vxpose.xlu0.b32.cont [10/16] 0.0, 128
    %2626 = vxpose.xlu0.b32.cont [11/16] 0.0, 128
    %2627 = vxpose.xlu0.b32.cont [12/16] 0.0, 128
    %2628 = vxpose.xlu0.b32.cont [13/16] 0.0, 128
    %2629 = vxpose.xlu0.b32.cont [14/16] 0.0, 128
    %2630 = vxpose.xlu0.b32.cont [15/16] 0.0, 128
    %2631 = vxpose.xlu0.b32.end [16/16] 0.0, 128
    %v2632 = vpop.trf.xlu0
    %v2633 = vpop.trf.xlu0
    %v2634 = vpop.trf.xlu0
    %v2635 = vpop.trf.xlu0
    %v2636 = vpop.trf.xlu0
    %v2637 = vpop.trf.xlu0
    %v2638 = vpop.trf.xlu0
    %v2639 = vpop.trf.xlu0
    %v2640 = vpop.trf.xlu0
    %v2641 = vpop.trf.xlu0
    %v2642 = vpop.trf.xlu0
    %v2643 = vpop.trf.xlu0
    %v2644 = vpop.trf.xlu0
    %v2645 = vpop.trf.xlu0
    %v2646 = vpop.trf.xlu0
    %v2647 = vpop.trf.xlu0
    %2648 = vxpose.xlu0.b32.start [1/16] %v2476, 128
    %2649 = vxpose.xlu0.b32.cont [2/16] 0.0, 128
    %2650 = vxpose.xlu0.b32.cont [3/16] 0.0, 128
    %2651 = vxpose.xlu0.b32.cont [4/16] 0.0, 128
    %2652 = vxpose.xlu0.b32.cont [5/16] 0.0, 128
    %2653 = vxpose.xlu0.b32.cont [6/16] 0.0, 128
    %2654 = vxpose.xlu0.b32.cont [7/16] 0.0, 128
    %2655 = vxpose.xlu0.b32.cont [8/16] 0.0, 128
    %2656 = vxpose.xlu0.b32.cont [9/16] 0.0, 128
    %2657 = vxpose.xlu0.b32.cont [10/16] 0.0, 128
    %2658 = vxpose.xlu0.b32.cont [11/16] 0.0, 128
    %2659 = vxpose.xlu0.b32.cont [12/16] 0.0, 128
    %2660 = vxpose.xlu0.b32.cont [13/16] 0.0, 128
    %2661 = vxpose.xlu0.b32.cont [14/16] 0.0, 128
    %2662 = vxpose.xlu0.b32.cont [15/16] 0.0, 128
    %2663 = vxpose.xlu0.b32.end [16/16] 0.0, 128
    %v2664 = vpop.trf.xlu0
    %v2665 = vpop.trf.xlu0
    %v2666 = vpop.trf.xlu0
    %v2667 = vpop.trf.xlu0
    %v2668 = vpop.trf.xlu0
    %v2669 = vpop.trf.xlu0
    %v2670 = vpop.trf.xlu0
    %v2671 = vpop.trf.xlu0
    %v2672 = vpop.trf.xlu0
    %v2673 = vpop.trf.xlu0
    %v2674 = vpop.trf.xlu0
    %v2675 = vpop.trf.xlu0
    %v2676 = vpop.trf.xlu0
    %v2677 = vpop.trf.xlu0
    %v2678 = vpop.trf.xlu0
    %v2679 = vpop.trf.xlu0
    %2680 = vxpose.xlu0.b32.start [1/16] %v2459, 128
    %2681 = vxpose.xlu0.b32.cont [2/16] 0.0, 128
    %2682 = vxpose.xlu0.b32.cont [3/16] 0.0, 128
    %2683 = vxpose.xlu0.b32.cont [4/16] 0.0, 128
    %2684 = vxpose.xlu0.b32.cont [5/16] 0.0, 128
    %2685 = vxpose.xlu0.b32.cont [6/16] 0.0, 128
    %2686 = vxpose.xlu0.b32.cont [7/16] 0.0, 128
    %2687 = vxpose.xlu0.b32.cont [8/16] 0.0, 128
    %2688 = vxpose.xlu0.b32.cont [9/16] 0.0, 128
    %2689 = vxpose.xlu0.b32.cont [10/16] 0.0, 128
    %2690 = vxpose.xlu0.b32.cont [11/16] 0.0, 128
    %2691 = vxpose.xlu0.b32.cont [12/16] 0.0, 128
    %2692 = vxpose.xlu0.b32.cont [13/16] 0.0, 128
    %2693 = vxpose.xlu0.b32.cont [14/16] 0.0, 128
    %2694 = vxpose.xlu0.b32.cont [15/16] 0.0, 128
    %2695 = vxpose.xlu0.b32.end [16/16] 0.0, 128
    %v2696 = vpop.trf.xlu0
    %v2697 = vpop.trf.xlu0
    %v2698 = vpop.trf.xlu0
    %v2699 = vpop.trf.xlu0
    %v2700 = vpop.trf.xlu0
    %v2701 = vpop.trf.xlu0
    %v2702 = vpop.trf.xlu0
    %v2703 = vpop.trf.xlu0
    %v2704 = vpop.trf.xlu0
    %v2705 = vpop.trf.xlu0
    %v2706 = vpop.trf.xlu0
    %v2707 = vpop.trf.xlu0
    %v2708 = vpop.trf.xlu0
    %v2709 = vpop.trf.xlu0
    %v2710 = vpop.trf.xlu0
    %v2711 = vpop.trf.xlu0
    %2712 = vxpose.xlu0.b32.start [1/16] %v2477, 128
    %2713 = vxpose.xlu0.b32.cont [2/16] 0.0, 128
    %2714 = vxpose.xlu0.b32.cont [3/16] 0.0, 128
    %2715 = vxpose.xlu0.b32.cont [4/16] 0.0, 128
    %2716 = vxpose.xlu0.b32.cont [5/16] 0.0, 128
    %2717 = vxpose.xlu0.b32.cont [6/16] 0.0, 128
    %2718 = vxpose.xlu0.b32.cont [7/16] 0.0, 128
    %2719 = vxpose.xlu0.b32.cont [8/16] 0.0, 128
    %2720 = vxpose.xlu0.b32.cont [9/16] 0.0, 128
    %2721 = vxpose.xlu0.b32.cont [10/16] 0.0, 128
    %2722 = vxpose.xlu0.b32.cont [11/16] 0.0, 128
    %2723 = vxpose.xlu0.b32.cont [12/16] 0.0, 128
    %2724 = vxpose.xlu0.b32.cont [13/16] 0.0, 128
    %2725 = vxpose.xlu0.b32.cont [14/16] 0.0, 128
    %2726 = vxpose.xlu0.b32.cont [15/16] 0.0, 128
    %2727 = vxpose.xlu0.b32.end [16/16] 0.0, 128
    %v2728 = vpop.trf.xlu0
    %v2729 = vpop.trf.xlu0
    %v2730 = vpop.trf.xlu0
    %v2731 = vpop.trf.xlu0
    %v2732 = vpop.trf.xlu0
    %v2733 = vpop.trf.xlu0
    %v2734 = vpop.trf.xlu0
    %v2735 = vpop.trf.xlu0
    %v2736 = vpop.trf.xlu0
    %v2737 = vpop.trf.xlu0
    %v2738 = vpop.trf.xlu0
    %v2739 = vpop.trf.xlu0
    %v2740 = vpop.trf.xlu0
    %v2741 = vpop.trf.xlu0
    %v2742 = vpop.trf.xlu0
    %v2743 = vpop.trf.xlu0
    %2744 = vxpose.xlu0.b32.start [1/16] %v2468, 128
    %2745 = vxpose.xlu0.b32.cont [2/16] 0.0, 128
    %2746 = vxpose.xlu0.b32.cont [3/16] 0.0, 128
    %2747 = vxpose.xlu0.b32.cont [4/16] 0.0, 128
    %2748 = vxpose.xlu0.b32.cont [5/16] 0.0, 128
    %2749 = vxpose.xlu0.b32.cont [6/16] 0.0, 128
    %2750 = vxpose.xlu0.b32.cont [7/16] 0.0, 128
    %2751 = vxpose.xlu0.b32.cont [8/16] 0.0, 128
    %2752 = vxpose.xlu0.b32.cont [9/16] 0.0, 128
    %2753 = vxpose.xlu0.b32.cont [10/16] 0.0, 128
    %2754 = vxpose.xlu0.b32.cont [11/16] 0.0, 128
    %2755 = vxpose.xlu0.b32.cont [12/16] 0.0, 128
    %2756 = vxpose.xlu0.b32.cont [13/16] 0.0, 128
    %2757 = vxpose.xlu0.b32.cont [14/16] 0.0, 128
    %2758 = vxpose.xlu0.b32.cont [15/16] 0.0, 128
    %2759 = vxpose.xlu0.b32.end [16/16] 0.0, 128
    %v2760 = vpop.trf.xlu0
    %v2761 = vpop.trf.xlu0
    %v2762 = vpop.trf.xlu0
    %v2763 = vpop.trf.xlu0
    %v2764 = vpop.trf.xlu0
    %v2765 = vpop.trf.xlu0
    %v2766 = vpop.trf.xlu0
    %v2767 = vpop.trf.xlu0
    %v2768 = vpop.trf.xlu0
    %v2769 = vpop.trf.xlu0
    %v2770 = vpop.trf.xlu0
    %v2771 = vpop.trf.xlu0
    %v2772 = vpop.trf.xlu0
    %v2773 = vpop.trf.xlu0
    %v2774 = vpop.trf.xlu0
    %v2775 = vpop.trf.xlu0
    %2776 = vxpose.xlu0.b32.start [1/16] %v2478, 128
    %2777 = vxpose.xlu0.b32.cont [2/16] 0.0, 128
    %2778 = vxpose.xlu0.b32.cont [3/16] 0.0, 128
    %2779 = vxpose.xlu0.b32.cont [4/16] 0.0, 128
    %2780 = vxpose.xlu0.b32.cont [5/16] 0.0, 128
    %2781 = vxpose.xlu0.b32.cont [6/16] 0.0, 128
    %2782 = vxpose.xlu0.b32.cont [7/16] 0.0, 128
    %2783 = vxpose.xlu0.b32.cont [8/16] 0.0, 128
    %2784 = vxpose.xlu0.b32.cont [9/16] 0.0, 128
    %2785 = vxpose.xlu0.b32.cont [10/16] 0.0, 128
    %2786 = vxpose.xlu0.b32.cont [11/16] 0.0, 128
    %2787 = vxpose.xlu0.b32.cont [12/16] 0.0, 128
    %2788 = vxpose.xlu0.b32.cont [13/16] 0.0, 128
    %2789 = vxpose.xlu0.b32.cont [14/16] 0.0, 128
    %2790 = vxpose.xlu0.b32.cont [15/16] 0.0, 128
    %2791 = vxpose.xlu0.b32.end [16/16] 0.0, 128
    %v2792 = vpop.trf.xlu0
    %v2793 = vpop.trf.xlu0
    %v2794 = vpop.trf.xlu0
    %v2795 = vpop.trf.xlu0
    %v2796 = vpop.trf.xlu0
    %v2797 = vpop.trf.xlu0
    %v2798 = vpop.trf.xlu0
    %v2799 = vpop.trf.xlu0
    %v2800 = vpop.trf.xlu0
    %v2801 = vpop.trf.xlu0
    %v2802 = vpop.trf.xlu0
    %v2803 = vpop.trf.xlu0
    %v2804 = vpop.trf.xlu0
    %v2805 = vpop.trf.xlu0
    %v2806 = vpop.trf.xlu0
    %v2807 = vpop.trf.xlu0
    %2808 = vxpose.xlu0.b32.start [1/16] %v2475, 128
    %2809 = vxpose.xlu0.b32.cont [2/16] 0.0, 128
    %2810 = vxpose.xlu0.b32.cont [3/16] 0.0, 128
    %2811 = vxpose.xlu0.b32.cont [4/16] 0.0, 128
    %2812 = vxpose.xlu0.b32.cont [5/16] 0.0, 128
    %2813 = vxpose.xlu0.b32.cont [6/16] 0.0, 128
    %2814 = vxpose.xlu0.b32.cont [7/16] 0.0, 128
    %2815 = vxpose.xlu0.b32.cont [8/16] 0.0, 128
    %2816 = vxpose.xlu0.b32.cont [9/16] 0.0, 128
    %2817 = vxpose.xlu0.b32.cont [10/16] 0.0, 128
    %2818 = vxpose.xlu0.b32.cont [11/16] 0.0, 128
    %2819 = vxpose.xlu0.b32.cont [12/16] 0.0, 128
    %2820 = vxpose.xlu0.b32.cont [13/16] 0.0, 128
    %2821 = vxpose.xlu0.b32.cont [14/16] 0.0, 128
    %2822 = vxpose.xlu0.b32.cont [15/16] 0.0, 128
    %2823 = vxpose.xlu0.b32.end [16/16] 0.0, 128
    %v2824 = vpop.trf.xlu0
    %v2825 = vpop.trf.xlu0
    %v2826 = vpop.trf.xlu0
    %v2827 = vpop.trf.xlu0
    %v2828 = vpop.trf.xlu0
    %v2829 = vpop.trf.xlu0
    %v2830 = vpop.trf.xlu0
    %v2831 = vpop.trf.xlu0
    %v2832 = vpop.trf.xlu0
    %v2833 = vpop.trf.xlu0
    %v2834 = vpop.trf.xlu0
    %v2835 = vpop.trf.xlu0
    %v2836 = vpop.trf.xlu0
    %v2837 = vpop.trf.xlu0
    %v2838 = vpop.trf.xlu0
    %v2839 = vpop.trf.xlu0
    %2840 = vxpose.xlu0.b32.start [1/16] %v2479, 128
    %2841 = vxpose.xlu0.b32.cont [2/16] 0.0, 128
    %2842 = vxpose.xlu0.b32.cont [3/16] 0.0, 128
    %2843 = vxpose.xlu0.b32.cont [4/16] 0.0, 128
    %2844 = vxpose.xlu0.b32.cont [5/16] 0.0, 128
    %2845 = vxpose.xlu0.b32.cont [6/16] 0.0, 128
    %2846 = vxpose.xlu0.b32.cont [7/16] 0.0, 128
    %2847 = vxpose.xlu0.b32.cont [8/16] 0.0, 128
    %2848 = vxpose.xlu0.b32.cont [9/16] 0.0, 128
    %2849 = vxpose.xlu0.b32.cont [10/16] 0.0, 128
    %2850 = vxpose.xlu0.b32.cont [11/16] 0.0, 128
    %2851 = vxpose.xlu0.b32.cont [12/16] 0.0, 128
    %2852 = vxpose.xlu0.b32.cont [13/16] 0.0, 128
    %2853 = vxpose.xlu0.b32.cont [14/16] 0.0, 128
    %2854 = vxpose.xlu0.b32.cont [15/16] 0.0, 128
    %2855 = vxpose.xlu0.b32.end [16/16] 0.0, 128
    %v2856 = vpop.trf.xlu0
    %v2857 = vpop.trf.xlu0
    %v2858 = vpop.trf.xlu0
    %v2859 = vpop.trf.xlu0
    %v2860 = vpop.trf.xlu0
    %v2861 = vpop.trf.xlu0
    %v2862 = vpop.trf.xlu0
    %v2863 = vpop.trf.xlu0
    %v2864 = vpop.trf.xlu0
    %v2865 = vpop.trf.xlu0
    %v2866 = vpop.trf.xlu0
    %v2867 = vpop.trf.xlu0
    %v2868 = vpop.trf.xlu0
    %v2869 = vpop.trf.xlu0
    %v2870 = vpop.trf.xlu0
    %v2871 = vpop.trf.xlu0
    %2872 = vxpose.xlu0.b32.start [1/16] %v2520, 128
    %2873 = vxpose.xlu0.b32.cont [2/16] 0.0, 128
    %2874 = vxpose.xlu0.b32.cont [3/16] 0.0, 128
    %2875 = vxpose.xlu0.b32.cont [4/16] 0.0, 128
    %2876 = vxpose.xlu0.b32.cont [5/16] 0.0, 128
    %2877 = vxpose.xlu0.b32.cont [6/16] 0.0, 128
    %2878 = vxpose.xlu0.b32.cont [7/16] 0.0, 128
    %2879 = vxpose.xlu0.b32.cont [8/16] 0.0, 128
    %2880 = vxpose.xlu0.b32.cont [9/16] 0.0, 128
    %2881 = vxpose.xlu0.b32.cont [10/16] 0.0, 128
    %2882 = vxpose.xlu0.b32.cont [11/16] 0.0, 128
    %2883 = vxpose.xlu0.b32.cont [12/16] 0.0, 128
    %2884 = vxpose.xlu0.b32.cont [13/16] 0.0, 128
    %2885 = vxpose.xlu0.b32.cont [14/16] 0.0, 128
    %2886 = vxpose.xlu0.b32.cont [15/16] 0.0, 128
    %2887 = vxpose.xlu0.b32.end [16/16] 0.0, 128
    %v2888 = vpop.trf.xlu0
    %v2889 = vpop.trf.xlu0
    %v2890 = vpop.trf.xlu0
    %v2891 = vpop.trf.xlu0
    %v2892 = vpop.trf.xlu0
    %v2893 = vpop.trf.xlu0
    %v2894 = vpop.trf.xlu0
    %v2895 = vpop.trf.xlu0
    %v2896 = vpop.trf.xlu0
    %v2897 = vpop.trf.xlu0
    %v2898 = vpop.trf.xlu0
    %v2899 = vpop.trf.xlu0
    %v2900 = vpop.trf.xlu0
    %v2901 = vpop.trf.xlu0
    %v2902 = vpop.trf.xlu0
    %v2903 = vpop.trf.xlu0
    %2904 = vxpose.xlu0.b32.start [1/16] %v2544, 128
    %2905 = vxpose.xlu0.b32.cont [2/16] 0.0, 128
    %2906 = vxpose.xlu0.b32.cont [3/16] 0.0, 128
    %2907 = vxpose.xlu0.b32.cont [4/16] 0.0, 128
    %2908 = vxpose.xlu0.b32.cont [5/16] 0.0, 128
    %2909 = vxpose.xlu0.b32.cont [6/16] 0.0, 128
    %2910 = vxpose.xlu0.b32.cont [7/16] 0.0, 128
    %2911 = vxpose.xlu0.b32.cont [8/16] 0.0, 128
    %2912 = vxpose.xlu0.b32.cont [9/16] 0.0, 128
    %2913 = vxpose.xlu0.b32.cont [10/16] 0.0, 128
    %2914 = vxpose.xlu0.b32.cont [11/16] 0.0, 128
    %2915 = vxpose.xlu0.b32.cont [12/16] 0.0, 128
    %2916 = vxpose.xlu0.b32.cont [13/16] 0.0, 128
    %2917 = vxpose.xlu0.b32.cont [14/16] 0.0, 128
    %2918 = vxpose.xlu0.b32.cont [15/16] 0.0, 128
    %2919 = vxpose.xlu0.b32.end [16/16] 0.0, 128
    %v2920 = vpop.trf.xlu0
    %v2921 = vpop.trf.xlu0
    %v2922 = vpop.trf.xlu0
    %v2923 = vpop.trf.xlu0
    %v2924 = vpop.trf.xlu0
    %v2925 = vpop.trf.xlu0
    %v2926 = vpop.trf.xlu0
    %v2927 = vpop.trf.xlu0
    %v2928 = vpop.trf.xlu0
    %v2929 = vpop.trf.xlu0
    %v2930 = vpop.trf.xlu0
    %v2931 = vpop.trf.xlu0
    %v2932 = vpop.trf.xlu0
    %v2933 = vpop.trf.xlu0
    %v2934 = vpop.trf.xlu0
    %v2935 = vpop.trf.xlu0
    %2936 = vxpose.xlu0.b32.start [1/16] %v2527, 128
    %2937 = vxpose.xlu0.b32.cont [2/16] 0.0, 128
    %2938 = vxpose.xlu0.b32.cont [3/16] 0.0, 128
    %2939 = vxpose.xlu0.b32.cont [4/16] 0.0, 128
    %2940 = vxpose.xlu0.b32.cont [5/16] 0.0, 128
    %2941 = vxpose.xlu0.b32.cont [6/16] 0.0, 128
    %2942 = vxpose.xlu0.b32.cont [7/16] 0.0, 128
    %2943 = vxpose.xlu0.b32.cont [8/16] 0.0, 128
    %2944 = vxpose.xlu0.b32.cont [9/16] 0.0, 128
    %2945 = vxpose.xlu0.b32.cont [10/16] 0.0, 128
    %2946 = vxpose.xlu0.b32.cont [11/16] 0.0, 128
    %2947 = vxpose.xlu0.b32.cont [12/16] 0.0, 128
    %2948 = vxpose.xlu0.b32.cont [13/16] 0.0, 128
    %2949 = vxpose.xlu0.b32.cont [14/16] 0.0, 128
    %2950 = vxpose.xlu0.b32.cont [15/16] 0.0, 128
    %2951 = vxpose.xlu0.b32.end [16/16] 0.0, 128
    %v2952 = vpop.trf.xlu0
    %v2953 = vpop.trf.xlu0
    %v2954 = vpop.trf.xlu0
    %v2955 = vpop.trf.xlu0
    %v2956 = vpop.trf.xlu0
    %v2957 = vpop.trf.xlu0
    %v2958 = vpop.trf.xlu0
    %v2959 = vpop.trf.xlu0
    %v2960 = vpop.trf.xlu0
    %v2961 = vpop.trf.xlu0
    %v2962 = vpop.trf.xlu0
    %v2963 = vpop.trf.xlu0
    %v2964 = vpop.trf.xlu0
    %v2965 = vpop.trf.xlu0
    %v2966 = vpop.trf.xlu0
    %v2967 = vpop.trf.xlu0
    %2968 = vxpose.xlu0.b32.start [1/16] %v2545, 128
    %2969 = vxpose.xlu0.b32.cont [2/16] 0.0, 128
    %2970 = vxpose.xlu0.b32.cont [3/16] 0.0, 128
    %2971 = vxpose.xlu0.b32.cont [4/16] 0.0, 128
    %2972 = vxpose.xlu0.b32.cont [5/16] 0.0, 128
    %2973 = vxpose.xlu0.b32.cont [6/16] 0.0, 128
    %2974 = vxpose.xlu0.b32.cont [7/16] 0.0, 128
    %2975 = vxpose.xlu0.b32.cont [8/16] 0.0, 128
    %2976 = vxpose.xlu0.b32.cont [9/16] 0.0, 128
    %2977 = vxpose.xlu0.b32.cont [10/16] 0.0, 128
    %2978 = vxpose.xlu0.b32.cont [11/16] 0.0, 128
    %2979 = vxpose.xlu0.b32.cont [12/16] 0.0, 128
    %2980 = vxpose.xlu0.b32.cont [13/16] 0.0, 128
    %2981 = vxpose.xlu0.b32.cont [14/16] 0.0, 128
    %2982 = vxpose.xlu0.b32.cont [15/16] 0.0, 128
    %2983 = vxpose.xlu0.b32.end [16/16] 0.0, 128
    %v2984 = vpop.trf.xlu0
    %v2985 = vpop.trf.xlu0
    %v2986 = vpop.trf.xlu0
    %v2987 = vpop.trf.xlu0
    %v2988 = vpop.trf.xlu0
    %v2989 = vpop.trf.xlu0
    %v2990 = vpop.trf.xlu0
    %v2991 = vpop.trf.xlu0
    %v2992 = vpop.trf.xlu0
    %v2993 = vpop.trf.xlu0
    %v2994 = vpop.trf.xlu0
    %v2995 = vpop.trf.xlu0
    %v2996 = vpop.trf.xlu0
    %v2997 = vpop.trf.xlu0
    %v2998 = vpop.trf.xlu0
    %v2999 = vpop.trf.xlu0
    %3000 = vxpose.xlu0.b32.start [1/16] %v2536, 128
    %3001 = vxpose.xlu0.b32.cont [2/16] 0.0, 128
    %3002 = vxpose.xlu0.b32.cont [3/16] 0.0, 128
    %3003 = vxpose.xlu0.b32.cont [4/16] 0.0, 128
    %3004 = vxpose.xlu0.b32.cont [5/16] 0.0, 128
    %3005 = vxpose.xlu0.b32.cont [6/16] 0.0, 128
    %3006 = vxpose.xlu0.b32.cont [7/16] 0.0, 128
    %3007 = vxpose.xlu0.b32.cont [8/16] 0.0, 128
    %3008 = vxpose.xlu0.b32.cont [9/16] 0.0, 128
    %3009 = vxpose.xlu0.b32.cont [10/16] 0.0, 128
    %3010 = vxpose.xlu0.b32.cont [11/16] 0.0, 128
    %3011 = vxpose.xlu0.b32.cont [12/16] 0.0, 128
    %3012 = vxpose.xlu0.b32.cont [13/16] 0.0, 128
    %3013 = vxpose.xlu0.b32.cont [14/16] 0.0, 128
    %3014 = vxpose.xlu0.b32.cont [15/16] 0.0, 128
    %3015 = vxpose.xlu0.b32.end [16/16] 0.0, 128
    %v3016 = vpop.trf.xlu0
    %v3017 = vpop.trf.xlu0
    %v3018 = vpop.trf.xlu0
    %v3019 = vpop.trf.xlu0
    %v3020 = vpop.trf.xlu0
    %v3021 = vpop.trf.xlu0
    %v3022 = vpop.trf.xlu0
    %v3023 = vpop.trf.xlu0
    %v3024 = vpop.trf.xlu0
    %v3025 = vpop.trf.xlu0
    %v3026 = vpop.trf.xlu0
    %v3027 = vpop.trf.xlu0
    %v3028 = vpop.trf.xlu0
    %v3029 = vpop.trf.xlu0
    %v3030 = vpop.trf.xlu0
    %v3031 = vpop.trf.xlu0
    %3032 = vxpose.xlu0.b32.start [1/16] %v2546, 128
    %3033 = vxpose.xlu0.b32.cont [2/16] 0.0, 128
    %3034 = vxpose.xlu0.b32.cont [3/16] 0.0, 128
    %3035 = vxpose.xlu0.b32.cont [4/16] 0.0, 128
    %3036 = vxpose.xlu0.b32.cont [5/16] 0.0, 128
    %3037 = vxpose.xlu0.b32.cont [6/16] 0.0, 128
    %3038 = vxpose.xlu0.b32.cont [7/16] 0.0, 128
    %3039 = vxpose.xlu0.b32.cont [8/16] 0.0, 128
    %3040 = vxpose.xlu0.b32.cont [9/16] 0.0, 128
    %3041 = vxpose.xlu0.b32.cont [10/16] 0.0, 128
    %3042 = vxpose.xlu0.b32.cont [11/16] 0.0, 128
    %3043 = vxpose.xlu0.b32.cont [12/16] 0.0, 128
    %3044 = vxpose.xlu0.b32.cont [13/16] 0.0, 128
    %3045 = vxpose.xlu0.b32.cont [14/16] 0.0, 128
    %3046 = vxpose.xlu0.b32.cont [15/16] 0.0, 128
    %3047 = vxpose.xlu0.b32.end [16/16] 0.0, 128
    %v3048 = vpop.trf.xlu0
    %v3049 = vpop.trf.xlu0
    %v3050 = vpop.trf.xlu0
    %v3051 = vpop.trf.xlu0
    %v3052 = vpop.trf.xlu0
    %v3053 = vpop.trf.xlu0
    %v3054 = vpop.trf.xlu0
    %v3055 = vpop.trf.xlu0
    %v3056 = vpop.trf.xlu0
    %v3057 = vpop.trf.xlu0
    %v3058 = vpop.trf.xlu0
    %v3059 = vpop.trf.xlu0
    %v3060 = vpop.trf.xlu0
    %v3061 = vpop.trf.xlu0
    %v3062 = vpop.trf.xlu0
    %v3063 = vpop.trf.xlu0
    %3064 = vxpose.xlu0.b32.start [1/16] %v2543, 128
    %3065 = vxpose.xlu0.b32.cont [2/16] 0.0, 128
    %3066 = vxpose.xlu0.b32.cont [3/16] 0.0, 128
    %3067 = vxpose.xlu0.b32.cont [4/16] 0.0, 128
    %3068 = vxpose.xlu0.b32.cont [5/16] 0.0, 128
    %3069 = vxpose.xlu0.b32.cont [6/16] 0.0, 128
    %3070 = vxpose.xlu0.b32.cont [7/16] 0.0, 128
    %3071 = vxpose.xlu0.b32.cont [8/16] 0.0, 128
    %3072 = vxpose.xlu0.b32.cont [9/16] 0.0, 128
    %3073 = vxpose.xlu0.b32.cont [10/16] 0.0, 128
    %3074 = vxpose.xlu0.b32.cont [11/16] 0.0, 128
    %3075 = vxpose.xlu0.b32.cont [12/16] 0.0, 128
    %3076 = vxpose.xlu0.b32.cont [13/16] 0.0, 128
    %3077 = vxpose.xlu0.b32.cont [14/16] 0.0, 128
    %3078 = vxpose.xlu0.b32.cont [15/16] 0.0, 128
    %3079 = vxpose.xlu0.b32.end [16/16] 0.0, 128
    %v3080 = vpop.trf.xlu0
    %v3081 = vpop.trf.xlu0
    %v3082 = vpop.trf.xlu0
    %v3083 = vpop.trf.xlu0
    %v3084 = vpop.trf.xlu0
    %v3085 = vpop.trf.xlu0
    %v3086 = vpop.trf.xlu0
    %v3087 = vpop.trf.xlu0
    %v3088 = vpop.trf.xlu0
    %v3089 = vpop.trf.xlu0
    %v3090 = vpop.trf.xlu0
    %v3091 = vpop.trf.xlu0
    %v3092 = vpop.trf.xlu0
    %v3093 = vpop.trf.xlu0
    %v3094 = vpop.trf.xlu0
    %v3095 = vpop.trf.xlu0
    %3096 = vxpose.xlu0.b32.start [1/16] %v2547, 128
    %3097 = vxpose.xlu0.b32.cont [2/16] 0.0, 128
    %3098 = vxpose.xlu0.b32.cont [3/16] 0.0, 128
    %3099 = vxpose.xlu0.b32.cont [4/16] 0.0, 128
    %3100 = vxpose.xlu0.b32.cont [5/16] 0.0, 128
    %3101 = vxpose.xlu0.b32.cont [6/16] 0.0, 128
    %3102 = vxpose.xlu0.b32.cont [7/16] 0.0, 128
    %3103 = vxpose.xlu0.b32.cont [8/16] 0.0, 128
    %3104 = vxpose.xlu0.b32.cont [9/16] 0.0, 128
    %3105 = vxpose.xlu0.b32.cont [10/16] 0.0, 128
    %3106 = vxpose.xlu0.b32.cont [11/16] 0.0, 128
    %3107 = vxpose.xlu0.b32.cont [12/16] 0.0, 128
    %3108 = vxpose.xlu0.b32.cont [13/16] 0.0, 128
    %3109 = vxpose.xlu0.b32.cont [14/16] 0.0, 128
    %3110 = vxpose.xlu0.b32.cont [15/16] 0.0, 128
    %3111 = vxpose.xlu0.b32.end [16/16] 0.0, 128
    %v3112 = vpop.trf.xlu0
    %v3113 = vpop.trf.xlu0
    %v3114 = vpop.trf.xlu0
    %v3115 = vpop.trf.xlu0
    %v3116 = vpop.trf.xlu0
    %v3117 = vpop.trf.xlu0
    %v3118 = vpop.trf.xlu0
    %v3119 = vpop.trf.xlu0
    %v3120 = vpop.trf.xlu0
    %v3121 = vpop.trf.xlu0
    %v3122 = vpop.trf.xlu0
    %v3123 = vpop.trf.xlu0
    %v3124 = vpop.trf.xlu0
    %v3125 = vpop.trf.xlu0
    %v3126 = vpop.trf.xlu0
    %v3127 = vpop.trf.xlu0
    %3128 = vxpose.xlu0.b32.start [1/16] %v2588, 128
    %3129 = vxpose.xlu0.b32.cont [2/16] 0.0, 128
    %3130 = vxpose.xlu0.b32.cont [3/16] 0.0, 128
    %3131 = vxpose.xlu0.b32.cont [4/16] 0.0, 128
    %3132 = vxpose.xlu0.b32.cont [5/16] 0.0, 128
    %3133 = vxpose.xlu0.b32.cont [6/16] 0.0, 128
    %3134 = vxpose.xlu0.b32.cont [7/16] 0.0, 128
    %3135 = vxpose.xlu0.b32.cont [8/16] 0.0, 128
    %3136 = vxpose.xlu0.b32.cont [9/16] 0.0, 128
    %3137 = vxpose.xlu0.b32.cont [10/16] 0.0, 128
    %3138 = vxpose.xlu0.b32.cont [11/16] 0.0, 128
    %3139 = vxpose.xlu0.b32.cont [12/16] 0.0, 128
    %3140 = vxpose.xlu0.b32.cont [13/16] 0.0, 128
    %3141 = vxpose.xlu0.b32.cont [14/16] 0.0, 128
    %3142 = vxpose.xlu0.b32.cont [15/16] 0.0, 128
    %3143 = vxpose.xlu0.b32.end [16/16] 0.0, 128
    %v3144 = vpop.trf.xlu0
    %v3145 = vpop.trf.xlu0
    %v3146 = vpop.trf.xlu0
    %v3147 = vpop.trf.xlu0
    %v3148 = vpop.trf.xlu0
    %v3149 = vpop.trf.xlu0
    %v3150 = vpop.trf.xlu0
    %v3151 = vpop.trf.xlu0
    %v3152 = vpop.trf.xlu0
    %v3153 = vpop.trf.xlu0
    %v3154 = vpop.trf.xlu0
    %v3155 = vpop.trf.xlu0
    %v3156 = vpop.trf.xlu0
    %v3157 = vpop.trf.xlu0
    %v3158 = vpop.trf.xlu0
    %v3159 = vpop.trf.xlu0
    %3160 = vxpose.xlu0.b32.start [1/16] %v2612, 128
    %3161 = vxpose.xlu0.b32.cont [2/16] 0.0, 128
    %3162 = vxpose.xlu0.b32.cont [3/16] 0.0, 128
    %3163 = vxpose.xlu0.b32.cont [4/16] 0.0, 128
    %3164 = vxpose.xlu0.b32.cont [5/16] 0.0, 128
    %3165 = vxpose.xlu0.b32.cont [6/16] 0.0, 128
    %3166 = vxpose.xlu0.b32.cont [7/16] 0.0, 128
    %3167 = vxpose.xlu0.b32.cont [8/16] 0.0, 128
    %3168 = vxpose.xlu0.b32.cont [9/16] 0.0, 128
    %3169 = vxpose.xlu0.b32.cont [10/16] 0.0, 128
    %3170 = vxpose.xlu0.b32.cont [11/16] 0.0, 128
    %3171 = vxpose.xlu0.b32.cont [12/16] 0.0, 128
    %3172 = vxpose.xlu0.b32.cont [13/16] 0.0, 128
    %3173 = vxpose.xlu0.b32.cont [14/16] 0.0, 128
    %3174 = vxpose.xlu0.b32.cont [15/16] 0.0, 128
    %3175 = vxpose.xlu0.b32.end [16/16] 0.0, 128
    %v3176 = vpop.trf.xlu0
    %v3177 = vpop.trf.xlu0
    %v3178 = vpop.trf.xlu0
    %v3179 = vpop.trf.xlu0
    %v3180 = vpop.trf.xlu0
    %v3181 = vpop.trf.xlu0
    %v3182 = vpop.trf.xlu0
    %v3183 = vpop.trf.xlu0
    %v3184 = vpop.trf.xlu0
    %v3185 = vpop.trf.xlu0
    %v3186 = vpop.trf.xlu0
    %v3187 = vpop.trf.xlu0
    %v3188 = vpop.trf.xlu0
    %v3189 = vpop.trf.xlu0
    %v3190 = vpop.trf.xlu0
    %v3191 = vpop.trf.xlu0
    %3192 = vxpose.xlu0.b32.start [1/16] %v2595, 128
    %3193 = vxpose.xlu0.b32.cont [2/16] 0.0, 128
    %3194 = vxpose.xlu0.b32.cont [3/16] 0.0, 128
    %3195 = vxpose.xlu0.b32.cont [4/16] 0.0, 128
    %3196 = vxpose.xlu0.b32.cont [5/16] 0.0, 128
    %3197 = vxpose.xlu0.b32.cont [6/16] 0.0, 128
    %3198 = vxpose.xlu0.b32.cont [7/16] 0.0, 128
    %3199 = vxpose.xlu0.b32.cont [8/16] 0.0, 128
    %3200 = vxpose.xlu0.b32.cont [9/16] 0.0, 128
    %3201 = vxpose.xlu0.b32.cont [10/16] 0.0, 128
    %3202 = vxpose.xlu0.b32.cont [11/16] 0.0, 128
    %3203 = vxpose.xlu0.b32.cont [12/16] 0.0, 128
    %3204 = vxpose.xlu0.b32.cont [13/16] 0.0, 128
    %3205 = vxpose.xlu0.b32.cont [14/16] 0.0, 128
    %3206 = vxpose.xlu0.b32.cont [15/16] 0.0, 128
    %3207 = vxpose.xlu0.b32.end [16/16] 0.0, 128
    %v3208 = vpop.trf.xlu0
    %v3209 = vpop.trf.xlu0
    %v3210 = vpop.trf.xlu0
    %v3211 = vpop.trf.xlu0
    %v3212 = vpop.trf.xlu0
    %v3213 = vpop.trf.xlu0
    %v3214 = vpop.trf.xlu0
    %v3215 = vpop.trf.xlu0
    %v3216 = vpop.trf.xlu0
    %v3217 = vpop.trf.xlu0
    %v3218 = vpop.trf.xlu0
    %v3219 = vpop.trf.xlu0
    %v3220 = vpop.trf.xlu0
    %v3221 = vpop.trf.xlu0
    %v3222 = vpop.trf.xlu0
    %v3223 = vpop.trf.xlu0
    %3224 = vxpose.xlu0.b32.start [1/16] %v2613, 128
    %3225 = vxpose.xlu0.b32.cont [2/16] 0.0, 128
    %3226 = vxpose.xlu0.b32.cont [3/16] 0.0, 128
    %3227 = vxpose.xlu0.b32.cont [4/16] 0.0, 128
    %3228 = vxpose.xlu0.b32.cont [5/16] 0.0, 128
    %3229 = vxpose.xlu0.b32.cont [6/16] 0.0, 128
    %3230 = vxpose.xlu0.b32.cont [7/16] 0.0, 128
    %3231 = vxpose.xlu0.b32.cont [8/16] 0.0, 128
    %3232 = vxpose.xlu0.b32.cont [9/16] 0.0, 128
    %3233 = vxpose.xlu0.b32.cont [10/16] 0.0, 128
    %3234 = vxpose.xlu0.b32.cont [11/16] 0.0, 128
    %3235 = vxpose.xlu0.b32.cont [12/16] 0.0, 128
    %3236 = vxpose.xlu0.b32.cont [13/16] 0.0, 128
    %3237 = vxpose.xlu0.b32.cont [14/16] 0.0, 128
    %3238 = vxpose.xlu0.b32.cont [15/16] 0.0, 128
    %3239 = vxpose.xlu0.b32.end [16/16] 0.0, 128
    %v3240 = vpop.trf.xlu0
    %v3241 = vpop.trf.xlu0
    %v3242 = vpop.trf.xlu0
    %v3243 = vpop.trf.xlu0
    %v3244 = vpop.trf.xlu0
    %v3245 = vpop.trf.xlu0
    %v3246 = vpop.trf.xlu0
    %v3247 = vpop.trf.xlu0
    %v3248 = vpop.trf.xlu0
    %v3249 = vpop.trf.xlu0
    %v3250 = vpop.trf.xlu0
    %v3251 = vpop.trf.xlu0
    %v3252 = vpop.trf.xlu0
    %v3253 = vpop.trf.xlu0
    %v3254 = vpop.trf.xlu0
    %v3255 = vpop.trf.xlu0
    %3256 = vxpose.xlu0.b32.start [1/16] %v2604, 128
    %3257 = vxpose.xlu0.b32.cont [2/16] 0.0, 128
    %3258 = vxpose.xlu0.b32.cont [3/16] 0.0, 128
    %3259 = vxpose.xlu0.b32.cont [4/16] 0.0, 128
    %3260 = vxpose.xlu0.b32.cont [5/16] 0.0, 128
    %3261 = vxpose.xlu0.b32.cont [6/16] 0.0, 128
    %3262 = vxpose.xlu0.b32.cont [7/16] 0.0, 128
    %3263 = vxpose.xlu0.b32.cont [8/16] 0.0, 128
    %3264 = vxpose.xlu0.b32.cont [9/16] 0.0, 128
    %3265 = vxpose.xlu0.b32.cont [10/16] 0.0, 128
    %3266 = vxpose.xlu0.b32.cont [11/16] 0.0, 128
    %3267 = vxpose.xlu0.b32.cont [12/16] 0.0, 128
    %3268 = vxpose.xlu0.b32.cont [13/16] 0.0, 128
    %3269 = vxpose.xlu0.b32.cont [14/16] 0.0, 128
    %3270 = vxpose.xlu0.b32.cont [15/16] 0.0, 128
    %3271 = vxpose.xlu0.b32.end [16/16] 0.0, 128
    %v3272 = vpop.trf.xlu0
    %v3273 = vpop.trf.xlu0
    %v3274 = vpop.trf.xlu0
    %v3275 = vpop.trf.xlu0
    %v3276 = vpop.trf.xlu0
    %v3277 = vpop.trf.xlu0
    %v3278 = vpop.trf.xlu0
    %v3279 = vpop.trf.xlu0
    %v3280 = vpop.trf.xlu0
    %v3281 = vpop.trf.xlu0
    %v3282 = vpop.trf.xlu0
    %v3283 = vpop.trf.xlu0
    %v3284 = vpop.trf.xlu0
    %v3285 = vpop.trf.xlu0
    %v3286 = vpop.trf.xlu0
    %v3287 = vpop.trf.xlu0
    %3288 = vxpose.xlu0.b32.start [1/16] %v2614, 128
    %3289 = vxpose.xlu0.b32.cont [2/16] 0.0, 128
    %3290 = vxpose.xlu0.b32.cont [3/16] 0.0, 128
    %3291 = vxpose.xlu0.b32.cont [4/16] 0.0, 128
    %3292 = vxpose.xlu0.b32.cont [5/16] 0.0, 128
    %3293 = vxpose.xlu0.b32.cont [6/16] 0.0, 128
    %3294 = vxpose.xlu0.b32.cont [7/16] 0.0, 128
    %3295 = vxpose.xlu0.b32.cont [8/16] 0.0, 128
    %3296 = vxpose.xlu0.b32.cont [9/16] 0.0, 128
    %3297 = vxpose.xlu0.b32.cont [10/16] 0.0, 128
    %3298 = vxpose.xlu0.b32.cont [11/16] 0.0, 128
    %3299 = vxpose.xlu0.b32.cont [12/16] 0.0, 128
    %3300 = vxpose.xlu0.b32.cont [13/16] 0.0, 128
    %3301 = vxpose.xlu0.b32.cont [14/16] 0.0, 128
    %3302 = vxpose.xlu0.b32.cont [15/16] 0.0, 128
    %3303 = vxpose.xlu0.b32.end [16/16] 0.0, 128
    %v3304 = vpop.trf.xlu0
    %v3305 = vpop.trf.xlu0
    %v3306 = vpop.trf.xlu0
    %v3307 = vpop.trf.xlu0
    %v3308 = vpop.trf.xlu0
    %v3309 = vpop.trf.xlu0
    %v3310 = vpop.trf.xlu0
    %v3311 = vpop.trf.xlu0
    %v3312 = vpop.trf.xlu0
    %v3313 = vpop.trf.xlu0
    %v3314 = vpop.trf.xlu0
    %v3315 = vpop.trf.xlu0
    %v3316 = vpop.trf.xlu0
    %v3317 = vpop.trf.xlu0
    %v3318 = vpop.trf.xlu0
    %v3319 = vpop.trf.xlu0
    %3320 = vxpose.xlu0.b32.start [1/16] %v2611, 128
    %3321 = vxpose.xlu0.b32.cont [2/16] 0.0, 128
    %3322 = vxpose.xlu0.b32.cont [3/16] 0.0, 128
    %3323 = vxpose.xlu0.b32.cont [4/16] 0.0, 128
    %3324 = vxpose.xlu0.b32.cont [5/16] 0.0, 128
    %3325 = vxpose.xlu0.b32.cont [6/16] 0.0, 128
    %3326 = vxpose.xlu0.b32.cont [7/16] 0.0, 128
    %3327 = vxpose.xlu0.b32.cont [8/16] 0.0, 128
    %3328 = vxpose.xlu0.b32.cont [9/16] 0.0, 128
    %3329 = vxpose.xlu0.b32.cont [10/16] 0.0, 128
    %3330 = vxpose.xlu0.b32.cont [11/16] 0.0, 128
    %3331 = vxpose.xlu0.b32.cont [12/16] 0.0, 128
    %3332 = vxpose.xlu0.b32.cont [13/16] 0.0, 128
    %3333 = vxpose.xlu0.b32.cont [14/16] 0.0, 128
    %3334 = vxpose.xlu0.b32.cont [15/16] 0.0, 128
    %3335 = vxpose.xlu0.b32.end [16/16] 0.0, 128
    %v3336 = vpop.trf.xlu0
    %v3337 = vpop.trf.xlu0
    %v3338 = vpop.trf.xlu0
    %v3339 = vpop.trf.xlu0
    %v3340 = vpop.trf.xlu0
    %v3341 = vpop.trf.xlu0
    %v3342 = vpop.trf.xlu0
    %v3343 = vpop.trf.xlu0
    %v3344 = vpop.trf.xlu0
    %v3345 = vpop.trf.xlu0
    %v3346 = vpop.trf.xlu0
    %v3347 = vpop.trf.xlu0
    %v3348 = vpop.trf.xlu0
    %v3349 = vpop.trf.xlu0
    %v3350 = vpop.trf.xlu0
    %v3351 = vpop.trf.xlu0
    %3352 = vxpose.xlu0.b32.start [1/16] %v2615, 128
    %3353 = vxpose.xlu0.b32.cont [2/16] 0.0, 128
    %3354 = vxpose.xlu0.b32.cont [3/16] 0.0, 128
    %3355 = vxpose.xlu0.b32.cont [4/16] 0.0, 128
    %3356 = vxpose.xlu0.b32.cont [5/16] 0.0, 128
    %3357 = vxpose.xlu0.b32.cont [6/16] 0.0, 128
    %3358 = vxpose.xlu0.b32.cont [7/16] 0.0, 128
    %3359 = vxpose.xlu0.b32.cont [8/16] 0.0, 128
    %3360 = vxpose.xlu0.b32.cont [9/16] 0.0, 128
    %3361 = vxpose.xlu0.b32.cont [10/16] 0.0, 128
    %3362 = vxpose.xlu0.b32.cont [11/16] 0.0, 128
    %3363 = vxpose.xlu0.b32.cont [12/16] 0.0, 128
    %3364 = vxpose.xlu0.b32.cont [13/16] 0.0, 128
    %3365 = vxpose.xlu0.b32.cont [14/16] 0.0, 128
    %3366 = vxpose.xlu0.b32.cont [15/16] 0.0, 128
    %3367 = vxpose.xlu0.b32.end [16/16] 0.0, 128
    %v3368 = vpop.trf.xlu0
    %v3369 = vpop.trf.xlu0
    %v3370 = vpop.trf.xlu0
    %v3371 = vpop.trf.xlu0
    %v3372 = vpop.trf.xlu0
    %v3373 = vpop.trf.xlu0
    %v3374 = vpop.trf.xlu0
    %v3375 = vpop.trf.xlu0
    %v3376 = vpop.trf.xlu0
    %v3377 = vpop.trf.xlu0
    %v3378 = vpop.trf.xlu0
    %v3379 = vpop.trf.xlu0
    %v3380 = vpop.trf.xlu0
    %v3381 = vpop.trf.xlu0
    %v3382 = vpop.trf.xlu0
    %v3383 = vpop.trf.xlu0
    %v3384 = vcombine.low %v2632, %v2696
    %v3385 = vcombine.high %v2632, %v2696
    %v3387 = vunpack.c.l.s4 1983009808
    %v3388 = vunpack.c.0.s8 %v3387
    %v3389 = vlaneseq
    %v3390 = vshrl.u32 %v3389, 7
    %v3391 = vsub.s32 %v3388, %v3390
    %v3392 = vrot.slane %v3384, %v3391
    %v3394 = vunpack.c.l.s4 1983009808
    %v3395 = vunpack.c.0.s8 %v3394
    %v3396 = vlaneseq
    %v3397 = vshrl.u32 %v3396, 7
    %v3398 = vsub.s32 %v3395, %v3397
    %v3399 = vrot.slane %v3385, %v3398
    %v3400 = vcombine.low %v2664, %v2728
    %v3401 = vcombine.high %v2664, %v2728
    %v3403 = vunpack.c.l.s4 1983009808
    %v3404 = vunpack.c.0.s8 %v3403
    %v3405 = vlaneseq
    %v3406 = vshrl.u32 %v3405, 7
    %v3407 = vsub.s32 %v3404, %v3406
    %v3408 = vrot.slane %v3400, %v3407
    %v3410 = vunpack.c.l.s4 1983009808
    %v3411 = vunpack.c.0.s8 %v3410
    %v3412 = vlaneseq
    %v3413 = vshrl.u32 %v3412, 7
    %v3414 = vsub.s32 %v3411, %v3413
    %v3415 = vrot.slane %v3401, %v3414
    %v3416 = vcombine.low %v2760, %v2824
    %v3417 = vcombine.high %v2760, %v2824
    %v3419 = vunpack.c.l.s4 1983009808
    %v3420 = vunpack.c.0.s8 %v3419
    %v3421 = vlaneseq
    %v3422 = vshrl.u32 %v3421, 7
    %v3423 = vsub.s32 %v3420, %v3422
    %v3424 = vrot.slane %v3416, %v3423
    %v3426 = vunpack.c.l.s4 1983009808
    %v3427 = vunpack.c.0.s8 %v3426
    %v3428 = vlaneseq
    %v3429 = vshrl.u32 %v3428, 7
    %v3430 = vsub.s32 %v3427, %v3429
    %v3431 = vrot.slane %v3417, %v3430
    %v3432 = vcombine.low %v2792, %v2856
    %v3433 = vcombine.high %v2792, %v2856
    %v3435 = vunpack.c.l.s4 1983009808
    %v3436 = vunpack.c.0.s8 %v3435
    %v3437 = vlaneseq
    %v3438 = vshrl.u32 %v3437, 7
    %v3439 = vsub.s32 %v3436, %v3438
    %v3440 = vrot.slane %v3432, %v3439
    %v3442 = vunpack.c.l.s4 1983009808
    %v3443 = vunpack.c.0.s8 %v3442
    %v3444 = vlaneseq
    %v3445 = vshrl.u32 %v3444, 7
    %v3446 = vsub.s32 %v3443, %v3445
    %v3447 = vrot.slane %v3433, %v3446
    %v3448 = vcombine.low %v3392, %v3408
    %v3449 = vcombine.high %v3392, %v3408
    %v3451 = vunpack.c.l.s4 1934713408
    %v3452 = vunpack.c.0.s8 %v3451
    %v3453 = vlaneseq
    %v3454 = vshrl.u32 %v3453, 7
    %v3455 = vsub.s32 %v3452, %v3454
    %v3456 = vrot.slane %v3448, %v3455
    %v3458 = vunpack.c.l.s4 1934713408
    %v3459 = vunpack.c.0.s8 %v3458
    %v3460 = vlaneseq
    %v3461 = vshrl.u32 %v3460, 7
    %v3462 = vsub.s32 %v3459, %v3461
    %v3463 = vrot.slane %v3449, %v3462
    %v3464 = vcombine.low %v3399, %v3415
    %v3465 = vcombine.high %v3399, %v3415
    %v3467 = vunpack.c.l.s4 1934713408
    %v3468 = vunpack.c.0.s8 %v3467
    %v3469 = vlaneseq
    %v3470 = vshrl.u32 %v3469, 7
    %v3471 = vsub.s32 %v3468, %v3470
    %v3472 = vrot.slane %v3464, %v3471
    %v3474 = vunpack.c.l.s4 1934713408
    %v3475 = vunpack.c.0.s8 %v3474
    %v3476 = vlaneseq
    %v3477 = vshrl.u32 %v3476, 7
    %v3478 = vsub.s32 %v3475, %v3477
    %v3479 = vrot.slane %v3465, %v3478
    %v3480 = vcombine.low %v3424, %v3440
    %v3481 = vcombine.high %v3424, %v3440
    %v3483 = vunpack.c.l.s4 1934713408
    %v3484 = vunpack.c.0.s8 %v3483
    %v3485 = vlaneseq
    %v3486 = vshrl.u32 %v3485, 7
    %v3487 = vsub.s32 %v3484, %v3486
    %v3488 = vrot.slane %v3480, %v3487
    %v3490 = vunpack.c.l.s4 1934713408
    %v3491 = vunpack.c.0.s8 %v3490
    %v3492 = vlaneseq
    %v3493 = vshrl.u32 %v3492, 7
    %v3494 = vsub.s32 %v3491, %v3493
    %v3495 = vrot.slane %v3481, %v3494
    %v3496 = vcombine.low %v3431, %v3447
    %v3497 = vcombine.high %v3431, %v3447
    %v3499 = vunpack.c.l.s4 1934713408
    %v3500 = vunpack.c.0.s8 %v3499
    %v3501 = vlaneseq
    %v3502 = vshrl.u32 %v3501, 7
    %v3503 = vsub.s32 %v3500, %v3502
    %v3504 = vrot.slane %v3496, %v3503
    %v3506 = vunpack.c.l.s4 1934713408
    %v3507 = vunpack.c.0.s8 %v3506
    %v3508 = vlaneseq
    %v3509 = vshrl.u32 %v3508, 7
    %v3510 = vsub.s32 %v3507, %v3509
    %v3511 = vrot.slane %v3497, %v3510
    %v3512 = vcombine.low %v3456, %v3488
    %v3513 = vcombine.high %v3456, %v3488
    %v3514 = vcombine.low %v3463, %v3495
    %v3515 = vcombine.high %v3463, %v3495
    %v3516 = vcombine.low %v3472, %v3504
    %v3517 = vcombine.high %v3472, %v3504
    %v3518 = vcombine.low %v3479, %v3511
    %v3519 = vcombine.high %v3479, %v3511
    %v3520 = vcombine.low %v2888, %v2952
    %v3521 = vcombine.high %v2888, %v2952
    %v3523 = vunpack.c.l.s4 1983009808
    %v3524 = vunpack.c.0.s8 %v3523
    %v3525 = vlaneseq
    %v3526 = vshrl.u32 %v3525, 7
    %v3527 = vsub.s32 %v3524, %v3526
    %v3528 = vrot.slane %v3520, %v3527
    %v3530 = vunpack.c.l.s4 1983009808
    %v3531 = vunpack.c.0.s8 %v3530
    %v3532 = vlaneseq
    %v3533 = vshrl.u32 %v3532, 7
    %v3534 = vsub.s32 %v3531, %v3533
    %v3535 = vrot.slane %v3521, %v3534
    %v3536 = vcombine.low %v2920, %v2984
    %v3537 = vcombine.high %v2920, %v2984
    %v3539 = vunpack.c.l.s4 1983009808
    %v3540 = vunpack.c.0.s8 %v3539
    %v3541 = vlaneseq
    %v3542 = vshrl.u32 %v3541, 7
    %v3543 = vsub.s32 %v3540, %v3542
    %v3544 = vrot.slane %v3536, %v3543
    %v3546 = vunpack.c.l.s4 1983009808
    %v3547 = vunpack.c.0.s8 %v3546
    %v3548 = vlaneseq
    %v3549 = vshrl.u32 %v3548, 7
    %v3550 = vsub.s32 %v3547, %v3549
    %v3551 = vrot.slane %v3537, %v3550
    %v3552 = vcombine.low %v3016, %v3080
    %v3553 = vcombine.high %v3016, %v3080
    %v3555 = vunpack.c.l.s4 1983009808
    %v3556 = vunpack.c.0.s8 %v3555
    %v3557 = vlaneseq
    %v3558 = vshrl.u32 %v3557, 7
    %v3559 = vsub.s32 %v3556, %v3558
    %v3560 = vrot.slane %v3552, %v3559
    %v3562 = vunpack.c.l.s4 1983009808
    %v3563 = vunpack.c.0.s8 %v3562
    %v3564 = vlaneseq
    %v3565 = vshrl.u32 %v3564, 7
    %v3566 = vsub.s32 %v3563, %v3565
    %v3567 = vrot.slane %v3553, %v3566
    %v3568 = vcombine.low %v3048, %v3112
    %v3569 = vcombine.high %v3048, %v3112
    %v3571 = vunpack.c.l.s4 1983009808
    %v3572 = vunpack.c.0.s8 %v3571
    %v3573 = vlaneseq
    %v3574 = vshrl.u32 %v3573, 7
    %v3575 = vsub.s32 %v3572, %v3574
    %v3576 = vrot.slane %v3568, %v3575
    %v3578 = vunpack.c.l.s4 1983009808
    %v3579 = vunpack.c.0.s8 %v3578
    %v3580 = vlaneseq
    %v3581 = vshrl.u32 %v3580, 7
    %v3582 = vsub.s32 %v3579, %v3581
    %v3583 = vrot.slane %v3569, %v3582
    %v3584 = vcombine.low %v3528, %v3544
    %v3585 = vcombine.high %v3528, %v3544
    %v3587 = vunpack.c.l.s4 1934713408
    %v3588 = vunpack.c.0.s8 %v3587
    %v3589 = vlaneseq
    %v3590 = vshrl.u32 %v3589, 7
    %v3591 = vsub.s32 %v3588, %v3590
    %v3592 = vrot.slane %v3584, %v3591
    %v3594 = vunpack.c.l.s4 1934713408
    %v3595 = vunpack.c.0.s8 %v3594
    %v3596 = vlaneseq
    %v3597 = vshrl.u32 %v3596, 7
    %v3598 = vsub.s32 %v3595, %v3597
    %v3599 = vrot.slane %v3585, %v3598
    %v3600 = vcombine.low %v3535, %v3551
    %v3601 = vcombine.high %v3535, %v3551
    %v3603 = vunpack.c.l.s4 1934713408
    %v3604 = vunpack.c.0.s8 %v3603
    %v3605 = vlaneseq
    %v3606 = vshrl.u32 %v3605, 7
    %v3607 = vsub.s32 %v3604, %v3606
    %v3608 = vrot.slane %v3600, %v3607
    %v3610 = vunpack.c.l.s4 1934713408
    %v3611 = vunpack.c.0.s8 %v3610
    %v3612 = vlaneseq
    %v3613 = vshrl.u32 %v3612, 7
    %v3614 = vsub.s32 %v3611, %v3613
    %v3615 = vrot.slane %v3601, %v3614
    %v3616 = vcombine.low %v3560, %v3576
    %v3617 = vcombine.high %v3560, %v3576
    %v3619 = vunpack.c.l.s4 1934713408
    %v3620 = vunpack.c.0.s8 %v3619
    %v3621 = vlaneseq
    %v3622 = vshrl.u32 %v3621, 7
    %v3623 = vsub.s32 %v3620, %v3622
    %v3624 = vrot.slane %v3616, %v3623
    %v3626 = vunpack.c.l.s4 1934713408
    %v3627 = vunpack.c.0.s8 %v3626
    %v3628 = vlaneseq
    %v3629 = vshrl.u32 %v3628, 7
    %v3630 = vsub.s32 %v3627, %v3629
    %v3631 = vrot.slane %v3617, %v3630
    %v3632 = vcombine.low %v3567, %v3583
    %v3633 = vcombine.high %v3567, %v3583
    %v3635 = vunpack.c.l.s4 1934713408
    %v3636 = vunpack.c.0.s8 %v3635
    %v3637 = vlaneseq
    %v3638 = vshrl.u32 %v3637, 7
    %v3639 = vsub.s32 %v3636, %v3638
    %v3640 = vrot.slane %v3632, %v3639
    %v3642 = vunpack.c.l.s4 1934713408
    %v3643 = vunpack.c.0.s8 %v3642
    %v3644 = vlaneseq
    %v3645 = vshrl.u32 %v3644, 7
    %v3646 = vsub.s32 %v3643, %v3645
    %v3647 = vrot.slane %v3633, %v3646
    %v3648 = vcombine.low %v3592, %v3624
    %v3649 = vcombine.high %v3592, %v3624
    %v3650 = vcombine.low %v3599, %v3631
    %v3651 = vcombine.high %v3599, %v3631
    %v3652 = vcombine.low %v3608, %v3640
    %v3653 = vcombine.high %v3608, %v3640
    %v3654 = vcombine.low %v3615, %v3647
    %v3655 = vcombine.high %v3615, %v3647
    %v3656 = vcombine.low %v3144, %v3208
    %v3657 = vcombine.high %v3144, %v3208
    %v3659 = vunpack.c.l.s4 1983009808
    %v3660 = vunpack.c.0.s8 %v3659
    %v3661 = vlaneseq
    %v3662 = vshrl.u32 %v3661, 7
    %v3663 = vsub.s32 %v3660, %v3662
    %v3664 = vrot.slane %v3656, %v3663
    %v3666 = vunpack.c.l.s4 1983009808
    %v3667 = vunpack.c.0.s8 %v3666
    %v3668 = vlaneseq
    %v3669 = vshrl.u32 %v3668, 7
    %v3670 = vsub.s32 %v3667, %v3669
    %v3671 = vrot.slane %v3657, %v3670
    %v3672 = vcombine.low %v3176, %v3240
    %v3673 = vcombine.high %v3176, %v3240
    %v3675 = vunpack.c.l.s4 1983009808
    %v3676 = vunpack.c.0.s8 %v3675
    %v3677 = vlaneseq
    %v3678 = vshrl.u32 %v3677, 7
    %v3679 = vsub.s32 %v3676, %v3678
    %v3680 = vrot.slane %v3672, %v3679
    %v3682 = vunpack.c.l.s4 1983009808
    %v3683 = vunpack.c.0.s8 %v3682
    %v3684 = vlaneseq
    %v3685 = vshrl.u32 %v3684, 7
    %v3686 = vsub.s32 %v3683, %v3685
    %v3687 = vrot.slane %v3673, %v3686
    %v3688 = vcombine.low %v3272, %v3336
    %v3689 = vcombine.high %v3272, %v3336
    %v3691 = vunpack.c.l.s4 1983009808
    %v3692 = vunpack.c.0.s8 %v3691
    %v3693 = vlaneseq
    %v3694 = vshrl.u32 %v3693, 7
    %v3695 = vsub.s32 %v3692, %v3694
    %v3696 = vrot.slane %v3688, %v3695
    %v3698 = vunpack.c.l.s4 1983009808
    %v3699 = vunpack.c.0.s8 %v3698
    %v3700 = vlaneseq
    %v3701 = vshrl.u32 %v3700, 7
    %v3702 = vsub.s32 %v3699, %v3701
    %v3703 = vrot.slane %v3689, %v3702
    %v3704 = vcombine.low %v3304, %v3368
    %v3705 = vcombine.high %v3304, %v3368
    %v3707 = vunpack.c.l.s4 1983009808
    %v3708 = vunpack.c.0.s8 %v3707
    %v3709 = vlaneseq
    %v3710 = vshrl.u32 %v3709, 7
    %v3711 = vsub.s32 %v3708, %v3710
    %v3712 = vrot.slane %v3704, %v3711
    %v3714 = vunpack.c.l.s4 1983009808
    %v3715 = vunpack.c.0.s8 %v3714
    %v3716 = vlaneseq
    %v3717 = vshrl.u32 %v3716, 7
    %v3718 = vsub.s32 %v3715, %v3717
    %v3719 = vrot.slane %v3705, %v3718
    %v3720 = vcombine.low %v3664, %v3680
    %v3721 = vcombine.high %v3664, %v3680
    %v3723 = vunpack.c.l.s4 1934713408
    %v3724 = vunpack.c.0.s8 %v3723
    %v3725 = vlaneseq
    %v3726 = vshrl.u32 %v3725, 7
    %v3727 = vsub.s32 %v3724, %v3726
    %v3728 = vrot.slane %v3720, %v3727
    %v3730 = vunpack.c.l.s4 1934713408
    %v3731 = vunpack.c.0.s8 %v3730
    %v3732 = vlaneseq
    %v3733 = vshrl.u32 %v3732, 7
    %v3734 = vsub.s32 %v3731, %v3733
    %v3735 = vrot.slane %v3721, %v3734
    %v3736 = vcombine.low %v3671, %v3687
    %v3737 = vcombine.high %v3671, %v3687
    %v3739 = vunpack.c.l.s4 1934713408
    %v3740 = vunpack.c.0.s8 %v3739
    %v3741 = vlaneseq
    %v3742 = vshrl.u32 %v3741, 7
    %v3743 = vsub.s32 %v3740, %v3742
    %v3744 = vrot.slane %v3736, %v3743
    %v3746 = vunpack.c.l.s4 1934713408
    %v3747 = vunpack.c.0.s8 %v3746
    %v3748 = vlaneseq
    %v3749 = vshrl.u32 %v3748, 7
    %v3750 = vsub.s32 %v3747, %v3749
    %v3751 = vrot.slane %v3737, %v3750
    %v3752 = vcombine.low %v3696, %v3712
    %v3753 = vcombine.high %v3696, %v3712
    %v3755 = vunpack.c.l.s4 1934713408
    %v3756 = vunpack.c.0.s8 %v3755
    %v3757 = vlaneseq
    %v3758 = vshrl.u32 %v3757, 7
    %v3759 = vsub.s32 %v3756, %v3758
    %v3760 = vrot.slane %v3752, %v3759
    %v3762 = vunpack.c.l.s4 1934713408
    %v3763 = vunpack.c.0.s8 %v3762
    %v3764 = vlaneseq
    %v3765 = vshrl.u32 %v3764, 7
    %v3766 = vsub.s32 %v3763, %v3765
    %v3767 = vrot.slane %v3753, %v3766
    %v3768 = vcombine.low %v3703, %v3719
    %v3769 = vcombine.high %v3703, %v3719
    %v3771 = vunpack.c.l.s4 1934713408
    %v3772 = vunpack.c.0.s8 %v3771
    %v3773 = vlaneseq
    %v3774 = vshrl.u32 %v3773, 7
    %v3775 = vsub.s32 %v3772, %v3774
    %v3776 = vrot.slane %v3768, %v3775
    %v3778 = vunpack.c.l.s4 1934713408
    %v3779 = vunpack.c.0.s8 %v3778
    %v3780 = vlaneseq
    %v3781 = vshrl.u32 %v3780, 7
    %v3782 = vsub.s32 %v3779, %v3781
    %v3783 = vrot.slane %v3769, %v3782
    %v3784 = vcombine.low %v3728, %v3760
    %v3785 = vcombine.high %v3728, %v3760
    %v3786 = vcombine.low %v3735, %v3767
    %v3787 = vcombine.high %v3735, %v3767
    %v3788 = vcombine.low %v3744, %v3776
    %v3789 = vcombine.high %v3744, %v3776
    %v3790 = vcombine.low %v3751, %v3783
    %v3791 = vcombine.high %v3751, %v3783
    %3792 = vxpose.xlu0.b32.start [1/16] %v1859, 128
    %3793 = vxpose.xlu0.b32.cont [2/16] %v1860, 128
    %3794 = vxpose.xlu0.b32.cont [3/16] %v1861, 128
    %3795 = vxpose.xlu0.b32.cont [4/16] 0.0, 128
    %3796 = vxpose.xlu0.b32.cont [5/16] 0.0, 128
    %3797 = vxpose.xlu0.b32.cont [6/16] 0.0, 128
    %3798 = vxpose.xlu0.b32.cont [7/16] 0.0, 128
    %3799 = vxpose.xlu0.b32.cont [8/16] 0.0, 128
    %3800 = vxpose.xlu0.b32.cont [9/16] 0.0, 128
    %3801 = vxpose.xlu0.b32.cont [10/16] 0.0, 128
    %3802 = vxpose.xlu0.b32.cont [11/16] 0.0, 128
    %3803 = vxpose.xlu0.b32.cont [12/16] 0.0, 128
    %3804 = vxpose.xlu0.b32.cont [13/16] 0.0, 128
    %3805 = vxpose.xlu0.b32.cont [14/16] 0.0, 128
    %3806 = vxpose.xlu0.b32.cont [15/16] 0.0, 128
    %3807 = vxpose.xlu0.b32.end [16/16] 0.0, 128
    %v3808 = vpop.trf.xlu0
    %v3809 = vpop.trf.xlu0
    %v3810 = vpop.trf.xlu0
    %v3811 = vpop.trf.xlu0
    %v3812 = vpop.trf.xlu0
    %v3813 = vpop.trf.xlu0
    %v3814 = vpop.trf.xlu0
    %v3815 = vpop.trf.xlu0
    %v3816 = vpop.trf.xlu0
    %v3817 = vpop.trf.xlu0
    %v3818 = vpop.trf.xlu0
    %v3819 = vpop.trf.xlu0
    %v3820 = vpop.trf.xlu0
    %v3821 = vpop.trf.xlu0
    %v3822 = vpop.trf.xlu0
    %v3823 = vpop.trf.xlu0
    %vm3824 = vcmask 195584
    %v3826 = vsel %vm3824, %v3808, 0
    %v3829 = vsel %vm3824, %v3809, 0
    %3831 = vmatprep.subr.mxu0 0.0
    %3832 = vmatpush1.msra.mxu0 0.0
    %3833 = vmatprep.subr.mxu0 0.0
    %3834 = vmatpush1.msra.mxu0 0.0
    %3835 = vmatprep.subr.mxu0 0.0
    %3836 = vmatpush1.msra.mxu0 0.0
    %3837 = vmatprep.subr.mxu0 0.0
    %3838 = vmatpush1.msra.mxu0 0.0
    %3839 = vmatprep.subr.mxu0 0.0
    %3840 = vmatpush1.msra.mxu0 0.0
    %3841 = vmatprep.subr.mxu0 0.0
    %3842 = vmatpush1.msra.mxu0 0.0
    %3843 = vmatprep.subr.mxu0 0.0
    %3844 = vmatpush1.msra.mxu0 0.0
    %3845 = vmatprep.subr.mxu0 0.0
    %3846 = vmatpush1.msra.mxu0 0.0
    %3847 = vmatprep.subr.mxu0 0.0
    %3848 = vmatpush1.msra.mxu0 0.0
    %3849 = vmatprep.subr.mxu0 0.0
    %3850 = vmatpush1.msra.mxu0 0.0
    %3851 = vmatprep.subr.mxu0 0.0
    %3852 = vmatpush1.msra.mxu0 0.0
    %3853 = vmatprep.subr.mxu0 0.0
    %3854 = vmatpush1.msra.mxu0 0.0
    %3855 = vmatprep.subr.mxu0 0.0
    %3856 = vmatpush1.msra.mxu0 0.0
    %3857 = vmatprep.subr.mxu0 0.0
    %3858 = vmatpush1.msra.mxu0 %v3784
    %3859 = vmatprep.subr.mxu0 0.0
    %3860 = vmatpush1.msra.mxu0 %v3648
    %3861 = vmatprep.subr.mxu0 0.0
    %3862 = vmatpush1.msra.mxu0 %v3512
    %3863 = vmatprep.subr.mxu0 0.0
    %3864 = vmatpush2.msra.mxu0 0.0
    %3865 = vmatprep.subr.mxu0 0.0
    %3866 = vmatpush2.msra.mxu0 0.0
    %3867 = vmatprep.subr.mxu0 0.0
    %3868 = vmatpush2.msra.mxu0 0.0
    %3869 = vmatprep.subr.mxu0 0.0
    %3870 = vmatpush2.msra.mxu0 0.0
    %3871 = vmatprep.subr.mxu0 0.0
    %3872 = vmatpush2.msra.mxu0 0.0
    %3873 = vmatprep.subr.mxu0 0.0
    %3874 = vmatpush2.msra.mxu0 0.0
    %3875 = vmatprep.subr.mxu0 0.0
    %3876 = vmatpush2.msra.mxu0 0.0
    %3877 = vmatprep.subr.mxu0 0.0
    %3878 = vmatpush2.msra.mxu0 0.0
    %3879 = vmatprep.subr.mxu0 0.0
    %3880 = vmatpush2.msra.mxu0 0.0
    %3881 = vmatprep.subr.mxu0 0.0
    %3882 = vmatpush2.msra.mxu0 0.0
    %3883 = vmatprep.subr.mxu0 0.0
    %3884 = vmatpush2.msra.mxu0 0.0
    %3885 = vmatprep.subr.mxu0 0.0
    %3886 = vmatpush2.msra.mxu0 0.0
    %3887 = vmatprep.subr.mxu0 0.0
    %3888 = vmatpush2.msra.mxu0 0.0
    %3889 = vmatprep.subr.mxu0 0.0
    %3890 = vmatpush2.msra.mxu0 0.0
    %3891 = vmatprep.subr.mxu0 0.0
    %3892 = vmatpush2.msra.mxu0 0.0
    %3893 = vmatprep.subr.mxu0 0.0
    %3894 = vmatpush2.msra.mxu0 0.0
    %3895 = vmatprep.mubr.f32.mxu0 0.0
    %3896 = vmatmul.mubr.f32.gmra.mxu0 %v3826
    %v3897 = vpop.f32.mrf.mxu0
    %v3898 = vadd.f32 0.0, %v3897
    %v3899 = vpop.f32.mrf.mxu0
    %3900 = vmatprep.mubr.f32.mxu0 0.0
    %3901 = vmatmul.mubr.f32.gmra.mxu0 %v3829
    %v3902 = vpop.f32.mrf.mxu0
    %v3903 = vadd.f32 0.0, %v3902
    %v3904 = vpop.f32.mrf.mxu0
    %3905 = vdwg.mxu0
    %3906 = vxpose.xlu0.b32.start [1/16] %v1862, 128
    %3907 = vxpose.xlu0.b32.cont [2/16] %v1863, 128
    %3908 = vxpose.xlu0.b32.cont [3/16] %v1864, 128
    %3909 = vxpose.xlu0.b32.cont [4/16] 0.0, 128
    %3910 = vxpose.xlu0.b32.cont [5/16] 0.0, 128
    %3911 = vxpose.xlu0.b32.cont [6/16] 0.0, 128
    %3912 = vxpose.xlu0.b32.cont [7/16] 0.0, 128
    %3913 = vxpose.xlu0.b32.cont [8/16] 0.0, 128
    %3914 = vxpose.xlu0.b32.cont [9/16] 0.0, 128
    %3915 = vxpose.xlu0.b32.cont [10/16] 0.0, 128
    %3916 = vxpose.xlu0.b32.cont [11/16] 0.0, 128
    %3917 = vxpose.xlu0.b32.cont [12/16] 0.0, 128
    %3918 = vxpose.xlu0.b32.cont [13/16] 0.0, 128
    %3919 = vxpose.xlu0.b32.cont [14/16] 0.0, 128
    %3920 = vxpose.xlu0.b32.cont [15/16] 0.0, 128
    %3921 = vxpose.xlu0.b32.end [16/16] 0.0, 128
    %v3922 = vpop.trf.xlu0
    %v3923 = vpop.trf.xlu0
    %v3924 = vpop.trf.xlu0
    %v3925 = vpop.trf.xlu0
    %v3926 = vpop.trf.xlu0
    %v3927 = vpop.trf.xlu0
    %v3928 = vpop.trf.xlu0
    %v3929 = vpop.trf.xlu0
    %v3930 = vpop.trf.xlu0
    %v3931 = vpop.trf.xlu0
    %v3932 = vpop.trf.xlu0
    %v3933 = vpop.trf.xlu0
    %v3934 = vpop.trf.xlu0
    %v3935 = vpop.trf.xlu0
    %v3936 = vpop.trf.xlu0
    %v3937 = vpop.trf.xlu0
    %v3939 = vsel %vm3824, %v3922, 0
    %v3942 = vsel %vm3824, %v3923, 0
    %3944 = vmatprep.subr.mxu0 0.0
    %3945 = vmatpush1.msra.mxu0 0.0
    %3946 = vmatprep.subr.mxu0 0.0
    %3947 = vmatpush1.msra.mxu0 0.0
    %3948 = vmatprep.subr.mxu0 0.0
    %3949 = vmatpush1.msra.mxu0 0.0
    %3950 = vmatprep.subr.mxu0 0.0
    %3951 = vmatpush1.msra.mxu0 0.0
    %3952 = vmatprep.subr.mxu0 0.0
    %3953 = vmatpush1.msra.mxu0 0.0
    %3954 = vmatprep.subr.mxu0 0.0
    %3955 = vmatpush1.msra.mxu0 0.0
    %3956 = vmatprep.subr.mxu0 0.0
    %3957 = vmatpush1.msra.mxu0 0.0
    %3958 = vmatprep.subr.mxu0 0.0
    %3959 = vmatpush1.msra.mxu0 0.0
    %3960 = vmatprep.subr.mxu0 0.0
    %3961 = vmatpush1.msra.mxu0 0.0
    %3962 = vmatprep.subr.mxu0 0.0
    %3963 = vmatpush1.msra.mxu0 0.0
    %3964 = vmatprep.subr.mxu0 0.0
    %3965 = vmatpush1.msra.mxu0 0.0
    %3966 = vmatprep.subr.mxu0 0.0
    %3967 = vmatpush1.msra.mxu0 0.0
    %3968 = vmatprep.subr.mxu0 0.0
    %3969 = vmatpush1.msra.mxu0 0.0
    %3970 = vmatprep.subr.mxu0 0.0
    %3971 = vmatpush1.msra.mxu0 %v3785
    %3972 = vmatprep.subr.mxu0 0.0
    %3973 = vmatpush1.msra.mxu0 %v3649
    %3974 = vmatprep.subr.mxu0 0.0
    %3975 = vmatpush1.msra.mxu0 %v3513
    %3976 = vmatprep.subr.mxu0 0.0
    %3977 = vmatpush2.msra.mxu0 0.0
    %3978 = vmatprep.subr.mxu0 0.0
    %3979 = vmatpush2.msra.mxu0 0.0
    %3980 = vmatprep.subr.mxu0 0.0
    %3981 = vmatpush2.msra.mxu0 0.0
    %3982 = vmatprep.subr.mxu0 0.0
    %3983 = vmatpush2.msra.mxu0 0.0
    %3984 = vmatprep.subr.mxu0 0.0
    %3985 = vmatpush2.msra.mxu0 0.0
    %3986 = vmatprep.subr.mxu0 0.0
    %3987 = vmatpush2.msra.mxu0 0.0
    %3988 = vmatprep.subr.mxu0 0.0
    %3989 = vmatpush2.msra.mxu0 0.0
    %3990 = vmatprep.subr.mxu0 0.0
    %3991 = vmatpush2.msra.mxu0 0.0
    %3992 = vmatprep.subr.mxu0 0.0
    %3993 = vmatpush2.msra.mxu0 0.0
    %3994 = vmatprep.subr.mxu0 0.0
    %3995 = vmatpush2.msra.mxu0 0.0
    %3996 = vmatprep.subr.mxu0 0.0
    %3997 = vmatpush2.msra.mxu0 0.0
    %3998 = vmatprep.subr.mxu0 0.0
    %3999 = vmatpush2.msra.mxu0 0.0
    %4000 = vmatprep.subr.mxu0 0.0
    %4001 = vmatpush2.msra.mxu0 0.0
    %4002 = vmatprep.subr.mxu0 0.0
    %4003 = vmatpush2.msra.mxu0 0.0
    %4004 = vmatprep.subr.mxu0 0.0
    %4005 = vmatpush2.msra.mxu0 0.0
    %4006 = vmatprep.subr.mxu0 0.0
    %4007 = vmatpush2.msra.mxu0 0.0
    %4008 = vmatprep.mubr.f32.mxu0 0.0
    %4009 = vmatmul.mubr.f32.gmra.mxu0 %v3939
    %v4010 = vpop.f32.mrf.mxu0
    %v4011 = vadd.f32 0.0, %v4010
    %v4012 = vpop.f32.mrf.mxu0
    %4013 = vmatprep.mubr.f32.mxu0 0.0
    %4014 = vmatmul.mubr.f32.gmra.mxu0 %v3942
    %v4015 = vpop.f32.mrf.mxu0
    %v4016 = vadd.f32 0.0, %v4015
    %v4017 = vpop.f32.mrf.mxu0
    %4018 = vdwg.mxu0
    %4019 = vxpose.xlu0.b32.start [1/16] %v1865, 128
    %4020 = vxpose.xlu0.b32.cont [2/16] %v1866, 128
    %4021 = vxpose.xlu0.b32.cont [3/16] %v1867, 128
    %4022 = vxpose.xlu0.b32.cont [4/16] 0.0, 128
    %4023 = vxpose.xlu0.b32.cont [5/16] 0.0, 128
    %4024 = vxpose.xlu0.b32.cont [6/16] 0.0, 128
    %4025 = vxpose.xlu0.b32.cont [7/16] 0.0, 128
    %4026 = vxpose.xlu0.b32.cont [8/16] 0.0, 128
    %4027 = vxpose.xlu0.b32.cont [9/16] 0.0, 128
    %4028 = vxpose.xlu0.b32.cont [10/16] 0.0, 128
    %4029 = vxpose.xlu0.b32.cont [11/16] 0.0, 128
    %4030 = vxpose.xlu0.b32.cont [12/16] 0.0, 128
    %4031 = vxpose.xlu0.b32.cont [13/16] 0.0, 128
    %4032 = vxpose.xlu0.b32.cont [14/16] 0.0, 128
    %4033 = vxpose.xlu0.b32.cont [15/16] 0.0, 128
    %4034 = vxpose.xlu0.b32.end [16/16] 0.0, 128
    %v4035 = vpop.trf.xlu0
    %v4036 = vpop.trf.xlu0
    %v4037 = vpop.trf.xlu0
    %v4038 = vpop.trf.xlu0
    %v4039 = vpop.trf.xlu0
    %v4040 = vpop.trf.xlu0
    %v4041 = vpop.trf.xlu0
    %v4042 = vpop.trf.xlu0
    %v4043 = vpop.trf.xlu0
    %v4044 = vpop.trf.xlu0
    %v4045 = vpop.trf.xlu0
    %v4046 = vpop.trf.xlu0
    %v4047 = vpop.trf.xlu0
    %v4048 = vpop.trf.xlu0
    %v4049 = vpop.trf.xlu0
    %v4050 = vpop.trf.xlu0
    %v4052 = vsel %vm3824, %v4035, 0
    %v4055 = vsel %vm3824, %v4036, 0
    %4057 = vmatprep.subr.mxu0 0.0
    %4058 = vmatpush1.msra.mxu0 0.0
    %4059 = vmatprep.subr.mxu0 0.0
    %4060 = vmatpush1.msra.mxu0 0.0
    %4061 = vmatprep.subr.mxu0 0.0
    %4062 = vmatpush1.msra.mxu0 0.0
    %4063 = vmatprep.subr.mxu0 0.0
    %4064 = vmatpush1.msra.mxu0 0.0
    %4065 = vmatprep.subr.mxu0 0.0
    %4066 = vmatpush1.msra.mxu0 0.0
    %4067 = vmatprep.subr.mxu0 0.0
    %4068 = vmatpush1.msra.mxu0 0.0
    %4069 = vmatprep.subr.mxu0 0.0
    %4070 = vmatpush1.msra.mxu0 0.0
    %4071 = vmatprep.subr.mxu0 0.0
    %4072 = vmatpush1.msra.mxu0 0.0
    %4073 = vmatprep.subr.mxu0 0.0
    %4074 = vmatpush1.msra.mxu0 0.0
    %4075 = vmatprep.subr.mxu0 0.0
    %4076 = vmatpush1.msra.mxu0 0.0
    %4077 = vmatprep.subr.mxu0 0.0
    %4078 = vmatpush1.msra.mxu0 0.0
    %4079 = vmatprep.subr.mxu0 0.0
    %4080 = vmatpush1.msra.mxu0 0.0
    %4081 = vmatprep.subr.mxu0 0.0
    %4082 = vmatpush1.msra.mxu0 0.0
    %4083 = vmatprep.subr.mxu0 0.0
    %4084 = vmatpush1.msra.mxu0 %v3786
    %4085 = vmatprep.subr.mxu0 0.0
    %4086 = vmatpush1.msra.mxu0 %v3650
    %4087 = vmatprep.subr.mxu0 0.0
    %4088 = vmatpush1.msra.mxu0 %v3514
    %4089 = vmatprep.subr.mxu0 0.0
    %4090 = vmatpush2.msra.mxu0 0.0
    %4091 = vmatprep.subr.mxu0 0.0
    %4092 = vmatpush2.msra.mxu0 0.0
    %4093 = vmatprep.subr.mxu0 0.0
    %4094 = vmatpush2.msra.mxu0 0.0
    %4095 = vmatprep.subr.mxu0 0.0
    %4096 = vmatpush2.msra.mxu0 0.0
    %4097 = vmatprep.subr.mxu0 0.0
    %4098 = vmatpush2.msra.mxu0 0.0
    %4099 = vmatprep.subr.mxu0 0.0
    %4100 = vmatpush2.msra.mxu0 0.0
    %4101 = vmatprep.subr.mxu0 0.0
    %4102 = vmatpush2.msra.mxu0 0.0
    %4103 = vmatprep.subr.mxu0 0.0
    %4104 = vmatpush2.msra.mxu0 0.0
    %4105 = vmatprep.subr.mxu0 0.0
    %4106 = vmatpush2.msra.mxu0 0.0
    %4107 = vmatprep.subr.mxu0 0.0
    %4108 = vmatpush2.msra.mxu0 0.0
    %4109 = vmatprep.subr.mxu0 0.0
    %4110 = vmatpush2.msra.mxu0 0.0
    %4111 = vmatprep.subr.mxu0 0.0
    %4112 = vmatpush2.msra.mxu0 0.0
    %4113 = vmatprep.subr.mxu0 0.0
    %4114 = vmatpush2.msra.mxu0 0.0
    %4115 = vmatprep.subr.mxu0 0.0
    %4116 = vmatpush2.msra.mxu0 0.0
    %4117 = vmatprep.subr.mxu0 0.0
    %4118 = vmatpush2.msra.mxu0 0.0
    %4119 = vmatprep.subr.mxu0 0.0
    %4120 = vmatpush2.msra.mxu0 0.0
    %4121 = vmatprep.mubr.f32.mxu0 0.0
    %4122 = vmatmul.mubr.f32.gmra.mxu0 %v4052
    %v4123 = vpop.f32.mrf.mxu0
    %v4124 = vadd.f32 0.0, %v4123
    %v4125 = vpop.f32.mrf.mxu0
    %4126 = vmatprep.mubr.f32.mxu0 0.0
    %4127 = vmatmul.mubr.f32.gmra.mxu0 %v4055
    %v4128 = vpop.f32.mrf.mxu0
    %v4129 = vadd.f32 0.0, %v4128
    %v4130 = vpop.f32.mrf.mxu0
    %4131 = vdwg.mxu0
    %4132 = vxpose.xlu0.b32.start [1/16] %v1868, 128
    %4133 = vxpose.xlu0.b32.cont [2/16] %v1869, 128
    %4134 = vxpose.xlu0.b32.cont [3/16] %v1870, 128
    %4135 = vxpose.xlu0.b32.cont [4/16] 0.0, 128
    %4136 = vxpose.xlu0.b32.cont [5/16] 0.0, 128
    %4137 = vxpose.xlu0.b32.cont [6/16] 0.0, 128
    %4138 = vxpose.xlu0.b32.cont [7/16] 0.0, 128
    %4139 = vxpose.xlu0.b32.cont [8/16] 0.0, 128
    %4140 = vxpose.xlu0.b32.cont [9/16] 0.0, 128
    %4141 = vxpose.xlu0.b32.cont [10/16] 0.0, 128
    %4142 = vxpose.xlu0.b32.cont [11/16] 0.0, 128
    %4143 = vxpose.xlu0.b32.cont [12/16] 0.0, 128
    %4144 = vxpose.xlu0.b32.cont [13/16] 0.0, 128
    %4145 = vxpose.xlu0.b32.cont [14/16] 0.0, 128
    %4146 = vxpose.xlu0.b32.cont [15/16] 0.0, 128
    %4147 = vxpose.xlu0.b32.end [16/16] 0.0, 128
    %v4148 = vpop.trf.xlu0
    %v4149 = vpop.trf.xlu0
    %v4150 = vpop.trf.xlu0
    %v4151 = vpop.trf.xlu0
    %v4152 = vpop.trf.xlu0
    %v4153 = vpop.trf.xlu0
    %v4154 = vpop.trf.xlu0
    %v4155 = vpop.trf.xlu0
    %v4156 = vpop.trf.xlu0
    %v4157 = vpop.trf.xlu0
    %v4158 = vpop.trf.xlu0
    %v4159 = vpop.trf.xlu0
    %v4160 = vpop.trf.xlu0
    %v4161 = vpop.trf.xlu0
    %v4162 = vpop.trf.xlu0
    %v4163 = vpop.trf.xlu0
    %v4165 = vsel %vm3824, %v4148, 0
    %v4168 = vsel %vm3824, %v4149, 0
    %4170 = vmatprep.subr.mxu0 0.0
    %4171 = vmatpush1.msra.mxu0 0.0
    %4172 = vmatprep.subr.mxu0 0.0
    %4173 = vmatpush1.msra.mxu0 0.0
    %4174 = vmatprep.subr.mxu0 0.0
    %4175 = vmatpush1.msra.mxu0 0.0
    %4176 = vmatprep.subr.mxu0 0.0
    %4177 = vmatpush1.msra.mxu0 0.0
    %4178 = vmatprep.subr.mxu0 0.0
    %4179 = vmatpush1.msra.mxu0 0.0
    %4180 = vmatprep.subr.mxu0 0.0
    %4181 = vmatpush1.msra.mxu0 0.0
    %4182 = vmatprep.subr.mxu0 0.0
    %4183 = vmatpush1.msra.mxu0 0.0
    %4184 = vmatprep.subr.mxu0 0.0
    %4185 = vmatpush1.msra.mxu0 0.0
    %4186 = vmatprep.subr.mxu0 0.0
    %4187 = vmatpush1.msra.mxu0 0.0
    %4188 = vmatprep.subr.mxu0 0.0
    %4189 = vmatpush1.msra.mxu0 0.0
    %4190 = vmatprep.subr.mxu0 0.0
    %4191 = vmatpush1.msra.mxu0 0.0
    %4192 = vmatprep.subr.mxu0 0.0
    %4193 = vmatpush1.msra.mxu0 0.0
    %4194 = vmatprep.subr.mxu0 0.0
    %4195 = vmatpush1.msra.mxu0 0.0
    %4196 = vmatprep.subr.mxu0 0.0
    %4197 = vmatpush1.msra.mxu0 %v3787
    %4198 = vmatprep.subr.mxu0 0.0
    %4199 = vmatpush1.msra.mxu0 %v3651
    %4200 = vmatprep.subr.mxu0 0.0
    %4201 = vmatpush1.msra.mxu0 %v3515
    %4202 = vmatprep.subr.mxu0 0.0
    %4203 = vmatpush2.msra.mxu0 0.0
    %4204 = vmatprep.subr.mxu0 0.0
    %4205 = vmatpush2.msra.mxu0 0.0
    %4206 = vmatprep.subr.mxu0 0.0
    %4207 = vmatpush2.msra.mxu0 0.0
    %4208 = vmatprep.subr.mxu0 0.0
    %4209 = vmatpush2.msra.mxu0 0.0
    %4210 = vmatprep.subr.mxu0 0.0
    %4211 = vmatpush2.msra.mxu0 0.0
    %4212 = vmatprep.subr.mxu0 0.0
    %4213 = vmatpush2.msra.mxu0 0.0
    %4214 = vmatprep.subr.mxu0 0.0
    %4215 = vmatpush2.msra.mxu0 0.0
    %4216 = vmatprep.subr.mxu0 0.0
    %4217 = vmatpush2.msra.mxu0 0.0
    %4218 = vmatprep.subr.mxu0 0.0
    %4219 = vmatpush2.msra.mxu0 0.0
    %4220 = vmatprep.subr.mxu0 0.0
    %4221 = vmatpush2.msra.mxu0 0.0
    %4222 = vmatprep.subr.mxu0 0.0
    %4223 = vmatpush2.msra.mxu0 0.0
    %4224 = vmatprep.subr.mxu0 0.0
    %4225 = vmatpush2.msra.mxu0 0.0
    %4226 = vmatprep.subr.mxu0 0.0
    %4227 = vmatpush2.msra.mxu0 0.0
    %4228 = vmatprep.subr.mxu0 0.0
    %4229 = vmatpush2.msra.mxu0 0.0
    %4230 = vmatprep.subr.mxu0 0.0
    %4231 = vmatpush2.msra.mxu0 0.0
    %4232 = vmatprep.subr.mxu0 0.0
    %4233 = vmatpush2.msra.mxu0 0.0
    %4234 = vmatprep.mubr.f32.mxu0 0.0
    %4235 = vmatmul.mubr.f32.gmra.mxu0 %v4165
    %v4236 = vpop.f32.mrf.mxu0
    %v4237 = vadd.f32 0.0, %v4236
    %v4238 = vpop.f32.mrf.mxu0
    %4239 = vmatprep.mubr.f32.mxu0 0.0
    %4240 = vmatmul.mubr.f32.gmra.mxu0 %v4168
    %v4241 = vpop.f32.mrf.mxu0
    %v4242 = vadd.f32 0.0, %v4241
    %v4243 = vpop.f32.mrf.mxu0
    %4244 = vdwg.mxu0
    %4245 = vxpose.xlu0.b32.start [1/16] %v1871, 128
    %4246 = vxpose.xlu0.b32.cont [2/16] %v1872, 128
    %4247 = vxpose.xlu0.b32.cont [3/16] %v1873, 128
    %4248 = vxpose.xlu0.b32.cont [4/16] 0.0, 128
    %4249 = vxpose.xlu0.b32.cont [5/16] 0.0, 128
    %4250 = vxpose.xlu0.b32.cont [6/16] 0.0, 128
    %4251 = vxpose.xlu0.b32.cont [7/16] 0.0, 128
    %4252 = vxpose.xlu0.b32.cont [8/16] 0.0, 128
    %4253 = vxpose.xlu0.b32.cont [9/16] 0.0, 128
    %4254 = vxpose.xlu0.b32.cont [10/16] 0.0, 128
    %4255 = vxpose.xlu0.b32.cont [11/16] 0.0, 128
    %4256 = vxpose.xlu0.b32.cont [12/16] 0.0, 128
    %4257 = vxpose.xlu0.b32.cont [13/16] 0.0, 128
    %4258 = vxpose.xlu0.b32.cont [14/16] 0.0, 128
    %4259 = vxpose.xlu0.b32.cont [15/16] 0.0, 128
    %4260 = vxpose.xlu0.b32.end [16/16] 0.0, 128
    %v4261 = vpop.trf.xlu0
    %v4262 = vpop.trf.xlu0
    %v4263 = vpop.trf.xlu0
    %v4264 = vpop.trf.xlu0
    %v4265 = vpop.trf.xlu0
    %v4266 = vpop.trf.xlu0
    %v4267 = vpop.trf.xlu0
    %v4268 = vpop.trf.xlu0
    %v4269 = vpop.trf.xlu0
    %v4270 = vpop.trf.xlu0
    %v4271 = vpop.trf.xlu0
    %v4272 = vpop.trf.xlu0
    %v4273 = vpop.trf.xlu0
    %v4274 = vpop.trf.xlu0
    %v4275 = vpop.trf.xlu0
    %v4276 = vpop.trf.xlu0
    %v4278 = vsel %vm3824, %v4261, 0
    %v4281 = vsel %vm3824, %v4262, 0
    %4283 = vmatprep.subr.mxu0 0.0
    %4284 = vmatpush1.msra.mxu0 0.0
    %4285 = vmatprep.subr.mxu0 0.0
    %4286 = vmatpush1.msra.mxu0 0.0
    %4287 = vmatprep.subr.mxu0 0.0
    %4288 = vmatpush1.msra.mxu0 0.0
    %4289 = vmatprep.subr.mxu0 0.0
    %4290 = vmatpush1.msra.mxu0 0.0
    %4291 = vmatprep.subr.mxu0 0.0
    %4292 = vmatpush1.msra.mxu0 0.0
    %4293 = vmatprep.subr.mxu0 0.0
    %4294 = vmatpush1.msra.mxu0 0.0
    %4295 = vmatprep.subr.mxu0 0.0
    %4296 = vmatpush1.msra.mxu0 0.0
    %4297 = vmatprep.subr.mxu0 0.0
    %4298 = vmatpush1.msra.mxu0 0.0
    %4299 = vmatprep.subr.mxu0 0.0
    %4300 = vmatpush1.msra.mxu0 0.0
    %4301 = vmatprep.subr.mxu0 0.0
    %4302 = vmatpush1.msra.mxu0 0.0
    %4303 = vmatprep.subr.mxu0 0.0
    %4304 = vmatpush1.msra.mxu0 0.0
    %4305 = vmatprep.subr.mxu0 0.0
    %4306 = vmatpush1.msra.mxu0 0.0
    %4307 = vmatprep.subr.mxu0 0.0
    %4308 = vmatpush1.msra.mxu0 0.0
    %4309 = vmatprep.subr.mxu0 0.0
    %4310 = vmatpush1.msra.mxu0 %v3788
    %4311 = vmatprep.subr.mxu0 0.0
    %4312 = vmatpush1.msra.mxu0 %v3652
    %4313 = vmatprep.subr.mxu0 0.0
    %4314 = vmatpush1.msra.mxu0 %v3516
    %4315 = vmatprep.subr.mxu0 0.0
    %4316 = vmatpush2.msra.mxu0 0.0
    %4317 = vmatprep.subr.mxu0 0.0
    %4318 = vmatpush2.msra.mxu0 0.0
    %4319 = vmatprep.subr.mxu0 0.0
    %4320 = vmatpush2.msra.mxu0 0.0
    %4321 = vmatprep.subr.mxu0 0.0
    %4322 = vmatpush2.msra.mxu0 0.0
    %4323 = vmatprep.subr.mxu0 0.0
    %4324 = vmatpush2.msra.mxu0 0.0
    %4325 = vmatprep.subr.mxu0 0.0
    %4326 = vmatpush2.msra.mxu0 0.0
    %4327 = vmatprep.subr.mxu0 0.0
    %4328 = vmatpush2.msra.mxu0 0.0
    %4329 = vmatprep.subr.mxu0 0.0
    %4330 = vmatpush2.msra.mxu0 0.0
    %4331 = vmatprep.subr.mxu0 0.0
    %4332 = vmatpush2.msra.mxu0 0.0
    %4333 = vmatprep.subr.mxu0 0.0
    %4334 = vmatpush2.msra.mxu0 0.0
    %4335 = vmatprep.subr.mxu0 0.0
    %4336 = vmatpush2.msra.mxu0 0.0
    %4337 = vmatprep.subr.mxu0 0.0
    %4338 = vmatpush2.msra.mxu0 0.0
    %4339 = vmatprep.subr.mxu0 0.0
    %4340 = vmatpush2.msra.mxu0 0.0
    %4341 = vmatprep.subr.mxu0 0.0
    %4342 = vmatpush2.msra.mxu0 0.0
    %4343 = vmatprep.subr.mxu0 0.0
    %4344 = vmatpush2.msra.mxu0 0.0
    %4345 = vmatprep.subr.mxu0 0.0
    %4346 = vmatpush2.msra.mxu0 0.0
    %4347 = vmatprep.mubr.f32.mxu0 0.0
    %4348 = vmatmul.mubr.f32.gmra.mxu0 %v4278
    %v4349 = vpop.f32.mrf.mxu0
    %v4350 = vadd.f32 0.0, %v4349
    %v4351 = vpop.f32.mrf.mxu0
    %4352 = vmatprep.mubr.f32.mxu0 0.0
    %4353 = vmatmul.mubr.f32.gmra.mxu0 %v4281
    %v4354 = vpop.f32.mrf.mxu0
    %v4355 = vadd.f32 0.0, %v4354
    %v4356 = vpop.f32.mrf.mxu0
    %4357 = vdwg.mxu0
    %4358 = vxpose.xlu0.b32.start [1/16] %v1874, 128
    %4359 = vxpose.xlu0.b32.cont [2/16] %v1875, 128
    %4360 = vxpose.xlu0.b32.cont [3/16] %v1876, 128
    %4361 = vxpose.xlu0.b32.cont [4/16] 0.0, 128
    %4362 = vxpose.xlu0.b32.cont [5/16] 0.0, 128
    %4363 = vxpose.xlu0.b32.cont [6/16] 0.0, 128
    %4364 = vxpose.xlu0.b32.cont [7/16] 0.0, 128
    %4365 = vxpose.xlu0.b32.cont [8/16] 0.0, 128
    %4366 = vxpose.xlu0.b32.cont [9/16] 0.0, 128
    %4367 = vxpose.xlu0.b32.cont [10/16] 0.0, 128
    %4368 = vxpose.xlu0.b32.cont [11/16] 0.0, 128
    %4369 = vxpose.xlu0.b32.cont [12/16] 0.0, 128
    %4370 = vxpose.xlu0.b32.cont [13/16] 0.0, 128
    %4371 = vxpose.xlu0.b32.cont [14/16] 0.0, 128
    %4372 = vxpose.xlu0.b32.cont [15/16] 0.0, 128
    %4373 = vxpose.xlu0.b32.end [16/16] 0.0, 128
    %v4374 = vpop.trf.xlu0
    %v4375 = vpop.trf.xlu0
    %v4376 = vpop.trf.xlu0
    %v4377 = vpop.trf.xlu0
    %v4378 = vpop.trf.xlu0
    %v4379 = vpop.trf.xlu0
    %v4380 = vpop.trf.xlu0
    %v4381 = vpop.trf.xlu0
    %v4382 = vpop.trf.xlu0
    %v4383 = vpop.trf.xlu0
    %v4384 = vpop.trf.xlu0
    %v4385 = vpop.trf.xlu0
    %v4386 = vpop.trf.xlu0
    %v4387 = vpop.trf.xlu0
    %v4388 = vpop.trf.xlu0
    %v4389 = vpop.trf.xlu0
    %v4391 = vsel %vm3824, %v4374, 0
    %v4394 = vsel %vm3824, %v4375, 0
    %4396 = vmatprep.subr.mxu0 0.0
    %4397 = vmatpush1.msra.mxu0 0.0
    %4398 = vmatprep.subr.mxu0 0.0
    %4399 = vmatpush1.msra.mxu0 0.0
    %4400 = vmatprep.subr.mxu0 0.0
    %4401 = vmatpush1.msra.mxu0 0.0
    %4402 = vmatprep.subr.mxu0 0.0
    %4403 = vmatpush1.msra.mxu0 0.0
    %4404 = vmatprep.subr.mxu0 0.0
    %4405 = vmatpush1.msra.mxu0 0.0
    %4406 = vmatprep.subr.mxu0 0.0
    %4407 = vmatpush1.msra.mxu0 0.0
    %4408 = vmatprep.subr.mxu0 0.0
    %4409 = vmatpush1.msra.mxu0 0.0
    %4410 = vmatprep.subr.mxu0 0.0
    %4411 = vmatpush1.msra.mxu0 0.0
    %4412 = vmatprep.subr.mxu0 0.0
    %4413 = vmatpush1.msra.mxu0 0.0
    %4414 = vmatprep.subr.mxu0 0.0
    %4415 = vmatpush1.msra.mxu0 0.0
    %4416 = vmatprep.subr.mxu0 0.0
    %4417 = vmatpush1.msra.mxu0 0.0
    %4418 = vmatprep.subr.mxu0 0.0
    %4419 = vmatpush1.msra.mxu0 0.0
    %4420 = vmatprep.subr.mxu0 0.0
    %4421 = vmatpush1.msra.mxu0 0.0
    %4422 = vmatprep.subr.mxu0 0.0
    %4423 = vmatpush1.msra.mxu0 %v3789
    %4424 = vmatprep.subr.mxu0 0.0
    %4425 = vmatpush1.msra.mxu0 %v3653
    %4426 = vmatprep.subr.mxu0 0.0
    %4427 = vmatpush1.msra.mxu0 %v3517
    %4428 = vmatprep.subr.mxu0 0.0
    %4429 = vmatpush2.msra.mxu0 0.0
    %4430 = vmatprep.subr.mxu0 0.0
    %4431 = vmatpush2.msra.mxu0 0.0
    %4432 = vmatprep.subr.mxu0 0.0
    %4433 = vmatpush2.msra.mxu0 0.0
    %4434 = vmatprep.subr.mxu0 0.0
    %4435 = vmatpush2.msra.mxu0 0.0
    %4436 = vmatprep.subr.mxu0 0.0
    %4437 = vmatpush2.msra.mxu0 0.0
    %4438 = vmatprep.subr.mxu0 0.0
    %4439 = vmatpush2.msra.mxu0 0.0
    %4440 = vmatprep.subr.mxu0 0.0
    %4441 = vmatpush2.msra.mxu0 0.0
    %4442 = vmatprep.subr.mxu0 0.0
    %4443 = vmatpush2.msra.mxu0 0.0
    %4444 = vmatprep.subr.mxu0 0.0
    %4445 = vmatpush2.msra.mxu0 0.0
    %4446 = vmatprep.subr.mxu0 0.0
    %4447 = vmatpush2.msra.mxu0 0.0
    %4448 = vmatprep.subr.mxu0 0.0
    %4449 = vmatpush2.msra.mxu0 0.0
    %4450 = vmatprep.subr.mxu0 0.0
    %4451 = vmatpush2.msra.mxu0 0.0
    %4452 = vmatprep.subr.mxu0 0.0
    %4453 = vmatpush2.msra.mxu0 0.0
    %4454 = vmatprep.subr.mxu0 0.0
    %4455 = vmatpush2.msra.mxu0 0.0
    %4456 = vmatprep.subr.mxu0 0.0
    %4457 = vmatpush2.msra.mxu0 0.0
    %4458 = vmatprep.subr.mxu0 0.0
    %4459 = vmatpush2.msra.mxu0 0.0
    %4460 = vmatprep.mubr.f32.mxu0 0.0
    %4461 = vmatmul.mubr.f32.gmra.mxu0 %v4391
    %v4462 = vpop.f32.mrf.mxu0
    %v4463 = vadd.f32 0.0, %v4462
    %v4464 = vpop.f32.mrf.mxu0
    %4465 = vmatprep.mubr.f32.mxu0 0.0
    %4466 = vmatmul.mubr.f32.gmra.mxu0 %v4394
    %v4467 = vpop.f32.mrf.mxu0
    %v4468 = vadd.f32 0.0, %v4467
    %v4469 = vpop.f32.mrf.mxu0
    %4470 = vdwg.mxu0
    %4471 = vxpose.xlu0.b32.start [1/16] %v1877, 128
    %4472 = vxpose.xlu0.b32.cont [2/16] %v1878, 128
    %4473 = vxpose.xlu0.b32.cont [3/16] %v1879, 128
    %4474 = vxpose.xlu0.b32.cont [4/16] 0.0, 128
    %4475 = vxpose.xlu0.b32.cont [5/16] 0.0, 128
    %4476 = vxpose.xlu0.b32.cont [6/16] 0.0, 128
    %4477 = vxpose.xlu0.b32.cont [7/16] 0.0, 128
    %4478 = vxpose.xlu0.b32.cont [8/16] 0.0, 128
    %4479 = vxpose.xlu0.b32.cont [9/16] 0.0, 128
    %4480 = vxpose.xlu0.b32.cont [10/16] 0.0, 128
    %4481 = vxpose.xlu0.b32.cont [11/16] 0.0, 128
    %4482 = vxpose.xlu0.b32.cont [12/16] 0.0, 128
    %4483 = vxpose.xlu0.b32.cont [13/16] 0.0, 128
    %4484 = vxpose.xlu0.b32.cont [14/16] 0.0, 128
    %4485 = vxpose.xlu0.b32.cont [15/16] 0.0, 128
    %4486 = vxpose.xlu0.b32.end [16/16] 0.0, 128
    %v4487 = vpop.trf.xlu0
    %v4488 = vpop.trf.xlu0
    %v4489 = vpop.trf.xlu0
    %v4490 = vpop.trf.xlu0
    %v4491 = vpop.trf.xlu0
    %v4492 = vpop.trf.xlu0
    %v4493 = vpop.trf.xlu0
    %v4494 = vpop.trf.xlu0
    %v4495 = vpop.trf.xlu0
    %v4496 = vpop.trf.xlu0
    %v4497 = vpop.trf.xlu0
    %v4498 = vpop.trf.xlu0
    %v4499 = vpop.trf.xlu0
    %v4500 = vpop.trf.xlu0
    %v4501 = vpop.trf.xlu0
    %v4502 = vpop.trf.xlu0
    %v4504 = vsel %vm3824, %v4487, 0
    %v4507 = vsel %vm3824, %v4488, 0
    %4509 = vmatprep.subr.mxu0 0.0
    %4510 = vmatpush1.msra.mxu0 0.0
    %4511 = vmatprep.subr.mxu0 0.0
    %4512 = vmatpush1.msra.mxu0 0.0
    %4513 = vmatprep.subr.mxu0 0.0
    %4514 = vmatpush1.msra.mxu0 0.0
    %4515 = vmatprep.subr.mxu0 0.0
    %4516 = vmatpush1.msra.mxu0 0.0
    %4517 = vmatprep.subr.mxu0 0.0
    %4518 = vmatpush1.msra.mxu0 0.0
    %4519 = vmatprep.subr.mxu0 0.0
    %4520 = vmatpush1.msra.mxu0 0.0
    %4521 = vmatprep.subr.mxu0 0.0
    %4522 = vmatpush1.msra.mxu0 0.0
    %4523 = vmatprep.subr.mxu0 0.0
    %4524 = vmatpush1.msra.mxu0 0.0
    %4525 = vmatprep.subr.mxu0 0.0
    %4526 = vmatpush1.msra.mxu0 0.0
    %4527 = vmatprep.subr.mxu0 0.0
    %4528 = vmatpush1.msra.mxu0 0.0
    %4529 = vmatprep.subr.mxu0 0.0
    %4530 = vmatpush1.msra.mxu0 0.0
    %4531 = vmatprep.subr.mxu0 0.0
    %4532 = vmatpush1.msra.mxu0 0.0
    %4533 = vmatprep.subr.mxu0 0.0
    %4534 = vmatpush1.msra.mxu0 0.0
    %4535 = vmatprep.subr.mxu0 0.0
    %4536 = vmatpush1.msra.mxu0 %v3790
    %4537 = vmatprep.subr.mxu0 0.0
    %4538 = vmatpush1.msra.mxu0 %v3654
    %4539 = vmatprep.subr.mxu0 0.0
    %4540 = vmatpush1.msra.mxu0 %v3518
    %4541 = vmatprep.subr.mxu0 0.0
    %4542 = vmatpush2.msra.mxu0 0.0
    %4543 = vmatprep.subr.mxu0 0.0
    %4544 = vmatpush2.msra.mxu0 0.0
    %4545 = vmatprep.subr.mxu0 0.0
    %4546 = vmatpush2.msra.mxu0 0.0
    %4547 = vmatprep.subr.mxu0 0.0
    %4548 = vmatpush2.msra.mxu0 0.0
    %4549 = vmatprep.subr.mxu0 0.0
    %4550 = vmatpush2.msra.mxu0 0.0
    %4551 = vmatprep.subr.mxu0 0.0
    %4552 = vmatpush2.msra.mxu0 0.0
    %4553 = vmatprep.subr.mxu0 0.0
    %4554 = vmatpush2.msra.mxu0 0.0
    %4555 = vmatprep.subr.mxu0 0.0
    %4556 = vmatpush2.msra.mxu0 0.0
    %4557 = vmatprep.subr.mxu0 0.0
    %4558 = vmatpush2.msra.mxu0 0.0
    %4559 = vmatprep.subr.mxu0 0.0
    %4560 = vmatpush2.msra.mxu0 0.0
    %4561 = vmatprep.subr.mxu0 0.0
    %4562 = vmatpush2.msra.mxu0 0.0
    %4563 = vmatprep.subr.mxu0 0.0
    %4564 = vmatpush2.msra.mxu0 0.0
    %4565 = vmatprep.subr.mxu0 0.0
    %4566 = vmatpush2.msra.mxu0 0.0
    %4567 = vmatprep.subr.mxu0 0.0
    %4568 = vmatpush2.msra.mxu0 0.0
    %4569 = vmatprep.subr.mxu0 0.0
    %4570 = vmatpush2.msra.mxu0 0.0
    %4571 = vmatprep.subr.mxu0 0.0
    %4572 = vmatpush2.msra.mxu0 0.0
    %4573 = vmatprep.mubr.f32.mxu0 0.0
    %4574 = vmatmul.mubr.f32.gmra.mxu0 %v4504
    %v4575 = vpop.f32.mrf.mxu0
    %v4576 = vadd.f32 0.0, %v4575
    %v4577 = vpop.f32.mrf.mxu0
    %4578 = vmatprep.mubr.f32.mxu0 0.0
    %4579 = vmatmul.mubr.f32.gmra.mxu0 %v4507
    %v4580 = vpop.f32.mrf.mxu0
    %v4581 = vadd.f32 0.0, %v4580
    %v4582 = vpop.f32.mrf.mxu0
    %4583 = vdwg.mxu0
    %4584 = vxpose.xlu0.b32.start [1/16] %v1880, 128
    %4585 = vxpose.xlu0.b32.cont [2/16] %v1881, 128
    %4586 = vxpose.xlu0.b32.cont [3/16] %v1882, 128
    %4587 = vxpose.xlu0.b32.cont [4/16] 0.0, 128
    %4588 = vxpose.xlu0.b32.cont [5/16] 0.0, 128
    %4589 = vxpose.xlu0.b32.cont [6/16] 0.0, 128
    %4590 = vxpose.xlu0.b32.cont [7/16] 0.0, 128
    %4591 = vxpose.xlu0.b32.cont [8/16] 0.0, 128
    %4592 = vxpose.xlu0.b32.cont [9/16] 0.0, 128
    %4593 = vxpose.xlu0.b32.cont [10/16] 0.0, 128
    %4594 = vxpose.xlu0.b32.cont [11/16] 0.0, 128
    %4595 = vxpose.xlu0.b32.cont [12/16] 0.0, 128
    %4596 = vxpose.xlu0.b32.cont [13/16] 0.0, 128
    %4597 = vxpose.xlu0.b32.cont [14/16] 0.0, 128
    %4598 = vxpose.xlu0.b32.cont [15/16] 0.0, 128
    %4599 = vxpose.xlu0.b32.end [16/16] 0.0, 128
    %v4600 = vpop.trf.xlu0
    %v4601 = vpop.trf.xlu0
    %v4602 = vpop.trf.xlu0
    %v4603 = vpop.trf.xlu0
    %v4604 = vpop.trf.xlu0
    %v4605 = vpop.trf.xlu0
    %v4606 = vpop.trf.xlu0
    %v4607 = vpop.trf.xlu0
    %v4608 = vpop.trf.xlu0
    %v4609 = vpop.trf.xlu0
    %v4610 = vpop.trf.xlu0
    %v4611 = vpop.trf.xlu0
    %v4612 = vpop.trf.xlu0
    %v4613 = vpop.trf.xlu0
    %v4614 = vpop.trf.xlu0
    %v4615 = vpop.trf.xlu0
    %v4617 = vsel %vm3824, %v4600, 0
    %v4620 = vsel %vm3824, %v4601, 0
    %4622 = vmatprep.subr.mxu0 0.0
    %4623 = vmatpush1.msra.mxu0 0.0
    %4624 = vmatprep.subr.mxu0 0.0
    %4625 = vmatpush1.msra.mxu0 0.0
    %4626 = vmatprep.subr.mxu0 0.0
    %4627 = vmatpush1.msra.mxu0 0.0
    %4628 = vmatprep.subr.mxu0 0.0
    %4629 = vmatpush1.msra.mxu0 0.0
    %4630 = vmatprep.subr.mxu0 0.0
    %4631 = vmatpush1.msra.mxu0 0.0
    %4632 = vmatprep.subr.mxu0 0.0
    %4633 = vmatpush1.msra.mxu0 0.0
    %4634 = vmatprep.subr.mxu0 0.0
    %4635 = vmatpush1.msra.mxu0 0.0
    %4636 = vmatprep.subr.mxu0 0.0
    %4637 = vmatpush1.msra.mxu0 0.0
    %4638 = vmatprep.subr.mxu0 0.0
    %4639 = vmatpush1.msra.mxu0 0.0
    %4640 = vmatprep.subr.mxu0 0.0
    %4641 = vmatpush1.msra.mxu0 0.0
    %4642 = vmatprep.subr.mxu0 0.0
    %4643 = vmatpush1.msra.mxu0 0.0
    %4644 = vmatprep.subr.mxu0 0.0
    %4645 = vmatpush1.msra.mxu0 0.0
    %4646 = vmatprep.subr.mxu0 0.0
    %4647 = vmatpush1.msra.mxu0 0.0
    %4648 = vmatprep.subr.mxu0 0.0
    %4649 = vmatpush1.msra.mxu0 %v3791
    %4650 = vmatprep.subr.mxu0 0.0
    %4651 = vmatpush1.msra.mxu0 %v3655
    %4652 = vmatprep.subr.mxu0 0.0
    %4653 = vmatpush1.msra.mxu0 %v3519
    %4654 = vmatprep.subr.mxu0 0.0
    %4655 = vmatpush2.msra.mxu0 0.0
    %4656 = vmatprep.subr.mxu0 0.0
    %4657 = vmatpush2.msra.mxu0 0.0
    %4658 = vmatprep.subr.mxu0 0.0
    %4659 = vmatpush2.msra.mxu0 0.0
    %4660 = vmatprep.subr.mxu0 0.0
    %4661 = vmatpush2.msra.mxu0 0.0
    %4662 = vmatprep.subr.mxu0 0.0
    %4663 = vmatpush2.msra.mxu0 0.0
    %4664 = vmatprep.subr.mxu0 0.0
    %4665 = vmatpush2.msra.mxu0 0.0
    %4666 = vmatprep.subr.mxu0 0.0
    %4667 = vmatpush2.msra.mxu0 0.0
    %4668 = vmatprep.subr.mxu0 0.0
    %4669 = vmatpush2.msra.mxu0 0.0
    %4670 = vmatprep.subr.mxu0 0.0
    %4671 = vmatpush2.msra.mxu0 0.0
    %4672 = vmatprep.subr.mxu0 0.0
    %4673 = vmatpush2.msra.mxu0 0.0
    %4674 = vmatprep.subr.mxu0 0.0
    %4675 = vmatpush2.msra.mxu0 0.0
    %4676 = vmatprep.subr.mxu0 0.0
    %4677 = vmatpush2.msra.mxu0 0.0
    %4678 = vmatprep.subr.mxu0 0.0
    %4679 = vmatpush2.msra.mxu0 0.0
    %4680 = vmatprep.subr.mxu0 0.0
    %4681 = vmatpush2.msra.mxu0 0.0
    %4682 = vmatprep.subr.mxu0 0.0
    %4683 = vmatpush2.msra.mxu0 0.0
    %4684 = vmatprep.subr.mxu0 0.0
    %4685 = vmatpush2.msra.mxu0 0.0
    %4686 = vmatprep.mubr.f32.mxu0 0.0
    %4687 = vmatmul.mubr.f32.gmra.mxu0 %v4617
    %v4688 = vpop.f32.mrf.mxu0
    %v4689 = vadd.f32 0.0, %v4688
    %v4690 = vpop.f32.mrf.mxu0
    %4691 = vmatprep.mubr.f32.mxu0 0.0
    %4692 = vmatmul.mubr.f32.gmra.mxu0 %v4620
    %v4693 = vpop.f32.mrf.mxu0
    %v4694 = vadd.f32 0.0, %v4693
    %v4695 = vpop.f32.mrf.mxu0
    %4696 = vdwg.mxu0
    %4697 = vxpose.xlu0.b32.start [1/16] %v3898, 128
    %4698 = vxpose.xlu0.b32.cont [2/16] %v3903, 128
    %4699 = vxpose.xlu0.b32.cont [3/16] 0.0, 128
    %4700 = vxpose.xlu0.b32.cont [4/16] 0.0, 128
    %4701 = vxpose.xlu0.b32.cont [5/16] 0.0, 128
    %4702 = vxpose.xlu0.b32.cont [6/16] 0.0, 128
    %4703 = vxpose.xlu0.b32.cont [7/16] 0.0, 128
    %4704 = vxpose.xlu0.b32.cont [8/16] 0.0, 128
    %4705 = vxpose.xlu0.b32.cont [9/16] 0.0, 128
    %4706 = vxpose.xlu0.b32.cont [10/16] 0.0, 128
    %4707 = vxpose.xlu0.b32.cont [11/16] 0.0, 128
    %4708 = vxpose.xlu0.b32.cont [12/16] 0.0, 128
    %4709 = vxpose.xlu0.b32.cont [13/16] 0.0, 128
    %4710 = vxpose.xlu0.b32.cont [14/16] 0.0, 128
    %4711 = vxpose.xlu0.b32.cont [15/16] 0.0, 128
    %4712 = vxpose.xlu0.b32.end [16/16] 0.0, 128
    %v4713 = vpop.trf.xlu0
    %v4714 = vpop.trf.xlu0
    %v4715 = vpop.trf.xlu0
    %v4716 = vpop.trf.xlu0
    %v4717 = vpop.trf.xlu0
    %v4718 = vpop.trf.xlu0
    %v4719 = vpop.trf.xlu0
    %v4720 = vpop.trf.xlu0
    %v4721 = vpop.trf.xlu0
    %v4722 = vpop.trf.xlu0
    %v4723 = vpop.trf.xlu0
    %v4724 = vpop.trf.xlu0
    %v4725 = vpop.trf.xlu0
    %v4726 = vpop.trf.xlu0
    %v4727 = vpop.trf.xlu0
    %v4728 = vpop.trf.xlu0
    %4729 = vxpose.xlu0.b32.start [1/16] %v4011, 128
    %4730 = vxpose.xlu0.b32.cont [2/16] %v4016, 128
    %4731 = vxpose.xlu0.b32.cont [3/16] 0.0, 128
    %4732 = vxpose.xlu0.b32.cont [4/16] 0.0, 128
    %4733 = vxpose.xlu0.b32.cont [5/16] 0.0, 128
    %4734 = vxpose.xlu0.b32.cont [6/16] 0.0, 128
    %4735 = vxpose.xlu0.b32.cont [7/16] 0.0, 128
    %4736 = vxpose.xlu0.b32.cont [8/16] 0.0, 128
    %4737 = vxpose.xlu0.b32.cont [9/16] 0.0, 128
    %4738 = vxpose.xlu0.b32.cont [10/16] 0.0, 128
    %4739 = vxpose.xlu0.b32.cont [11/16] 0.0, 128
    %4740 = vxpose.xlu0.b32.cont [12/16] 0.0, 128
    %4741 = vxpose.xlu0.b32.cont [13/16] 0.0, 128
    %4742 = vxpose.xlu0.b32.cont [14/16] 0.0, 128
    %4743 = vxpose.xlu0.b32.cont [15/16] 0.0, 128
    %4744 = vxpose.xlu0.b32.end [16/16] 0.0, 128
    %v4745 = vpop.trf.xlu0
    %v4746 = vpop.trf.xlu0
    %v4747 = vpop.trf.xlu0
    %v4748 = vpop.trf.xlu0
    %v4749 = vpop.trf.xlu0
    %v4750 = vpop.trf.xlu0
    %v4751 = vpop.trf.xlu0
    %v4752 = vpop.trf.xlu0
    %v4753 = vpop.trf.xlu0
    %v4754 = vpop.trf.xlu0
    %v4755 = vpop.trf.xlu0
    %v4756 = vpop.trf.xlu0
    %v4757 = vpop.trf.xlu0
    %v4758 = vpop.trf.xlu0
    %v4759 = vpop.trf.xlu0
    %v4760 = vpop.trf.xlu0
    %4761 = vxpose.xlu0.b32.start [1/16] %v4124, 128
    %4762 = vxpose.xlu0.b32.cont [2/16] %v4129, 128
    %4763 = vxpose.xlu0.b32.cont [3/16] 0.0, 128
    %4764 = vxpose.xlu0.b32.cont [4/16] 0.0, 128
    %4765 = vxpose.xlu0.b32.cont [5/16] 0.0, 128
    %4766 = vxpose.xlu0.b32.cont [6/16] 0.0, 128
    %4767 = vxpose.xlu0.b32.cont [7/16] 0.0, 128
    %4768 = vxpose.xlu0.b32.cont [8/16] 0.0, 128
    %4769 = vxpose.xlu0.b32.cont [9/16] 0.0, 128
    %4770 = vxpose.xlu0.b32.cont [10/16] 0.0, 128
    %4771 = vxpose.xlu0.b32.cont [11/16] 0.0, 128
    %4772 = vxpose.xlu0.b32.cont [12/16] 0.0, 128
    %4773 = vxpose.xlu0.b32.cont [13/16] 0.0, 128
    %4774 = vxpose.xlu0.b32.cont [14/16] 0.0, 128
    %4775 = vxpose.xlu0.b32.cont [15/16] 0.0, 128
    %4776 = vxpose.xlu0.b32.end [16/16] 0.0, 128
    %v4777 = vpop.trf.xlu0
    %v4778 = vpop.trf.xlu0
    %v4779 = vpop.trf.xlu0
    %v4780 = vpop.trf.xlu0
    %v4781 = vpop.trf.xlu0
    %v4782 = vpop.trf.xlu0
    %v4783 = vpop.trf.xlu0
    %v4784 = vpop.trf.xlu0
    %v4785 = vpop.trf.xlu0
    %v4786 = vpop.trf.xlu0
    %v4787 = vpop.trf.xlu0
    %v4788 = vpop.trf.xlu0
    %v4789 = vpop.trf.xlu0
    %v4790 = vpop.trf.xlu0
    %v4791 = vpop.trf.xlu0
    %v4792 = vpop.trf.xlu0
    %4793 = vxpose.xlu0.b32.start [1/16] %v4237, 128
    %4794 = vxpose.xlu0.b32.cont [2/16] %v4242, 128
    %4795 = vxpose.xlu0.b32.cont [3/16] 0.0, 128
    %4796 = vxpose.xlu0.b32.cont [4/16] 0.0, 128
    %4797 = vxpose.xlu0.b32.cont [5/16] 0.0, 128
    %4798 = vxpose.xlu0.b32.cont [6/16] 0.0, 128
    %4799 = vxpose.xlu0.b32.cont [7/16] 0.0, 128
    %4800 = vxpose.xlu0.b32.cont [8/16] 0.0, 128
    %4801 = vxpose.xlu0.b32.cont [9/16] 0.0, 128
    %4802 = vxpose.xlu0.b32.cont [10/16] 0.0, 128
    %4803 = vxpose.xlu0.b32.cont [11/16] 0.0, 128
    %4804 = vxpose.xlu0.b32.cont [12/16] 0.0, 128
    %4805 = vxpose.xlu0.b32.cont [13/16] 0.0, 128
    %4806 = vxpose.xlu0.b32.cont [14/16] 0.0, 128
    %4807 = vxpose.xlu0.b32.cont [15/16] 0.0, 128
    %4808 = vxpose.xlu0.b32.end [16/16] 0.0, 128
    %v4809 = vpop.trf.xlu0
    %v4810 = vpop.trf.xlu0
    %v4811 = vpop.trf.xlu0
    %v4812 = vpop.trf.xlu0
    %v4813 = vpop.trf.xlu0
    %v4814 = vpop.trf.xlu0
    %v4815 = vpop.trf.xlu0
    %v4816 = vpop.trf.xlu0
    %v4817 = vpop.trf.xlu0
    %v4818 = vpop.trf.xlu0
    %v4819 = vpop.trf.xlu0
    %v4820 = vpop.trf.xlu0
    %v4821 = vpop.trf.xlu0
    %v4822 = vpop.trf.xlu0
    %v4823 = vpop.trf.xlu0
    %v4824 = vpop.trf.xlu0
    %4825 = vxpose.xlu0.b32.start [1/16] %v4350, 128
    %4826 = vxpose.xlu0.b32.cont [2/16] %v4355, 128
    %4827 = vxpose.xlu0.b32.cont [3/16] 0.0, 128
    %4828 = vxpose.xlu0.b32.cont [4/16] 0.0, 128
    %4829 = vxpose.xlu0.b32.cont [5/16] 0.0, 128
    %4830 = vxpose.xlu0.b32.cont [6/16] 0.0, 128
    %4831 = vxpose.xlu0.b32.cont [7/16] 0.0, 128
    %4832 = vxpose.xlu0.b32.cont [8/16] 0.0, 128
    %4833 = vxpose.xlu0.b32.cont [9/16] 0.0, 128
    %4834 = vxpose.xlu0.b32.cont [10/16] 0.0, 128
    %4835 = vxpose.xlu0.b32.cont [11/16] 0.0, 128
    %4836 = vxpose.xlu0.b32.cont [12/16] 0.0, 128
    %4837 = vxpose.xlu0.b32.cont [13/16] 0.0, 128
    %4838 = vxpose.xlu0.b32.cont [14/16] 0.0, 128
    %4839 = vxpose.xlu0.b32.cont [15/16] 0.0, 128
    %4840 = vxpose.xlu0.b32.end [16/16] 0.0, 128
    %v4841 = vpop.trf.xlu0
    %v4842 = vpop.trf.xlu0
    %v4843 = vpop.trf.xlu0
    %v4844 = vpop.trf.xlu0
    %v4845 = vpop.trf.xlu0
    %v4846 = vpop.trf.xlu0
    %v4847 = vpop.trf.xlu0
    %v4848 = vpop.trf.xlu0
    %v4849 = vpop.trf.xlu0
    %v4850 = vpop.trf.xlu0
    %v4851 = vpop.trf.xlu0
    %v4852 = vpop.trf.xlu0
    %v4853 = vpop.trf.xlu0
    %v4854 = vpop.trf.xlu0
    %v4855 = vpop.trf.xlu0
    %v4856 = vpop.trf.xlu0
    %4857 = vxpose.xlu0.b32.start [1/16] %v4463, 128
    %4858 = vxpose.xlu0.b32.cont [2/16] %v4468, 128
    %4859 = vxpose.xlu0.b32.cont [3/16] 0.0, 128
    %4860 = vxpose.xlu0.b32.cont [4/16] 0.0, 128
    %4861 = vxpose.xlu0.b32.cont [5/16] 0.0, 128
    %4862 = vxpose.xlu0.b32.cont [6/16] 0.0, 128
    %4863 = vxpose.xlu0.b32.cont [7/16] 0.0, 128
    %4864 = vxpose.xlu0.b32.cont [8/16] 0.0, 128
    %4865 = vxpose.xlu0.b32.cont [9/16] 0.0, 128
    %4866 = vxpose.xlu0.b32.cont [10/16] 0.0, 128
    %4867 = vxpose.xlu0.b32.cont [11/16] 0.0, 128
    %4868 = vxpose.xlu0.b32.cont [12/16] 0.0, 128
    %4869 = vxpose.xlu0.b32.cont [13/16] 0.0, 128
    %4870 = vxpose.xlu0.b32.cont [14/16] 0.0, 128
    %4871 = vxpose.xlu0.b32.cont [15/16] 0.0, 128
    %4872 = vxpose.xlu0.b32.end [16/16] 0.0, 128
    %v4873 = vpop.trf.xlu0
    %v4874 = vpop.trf.xlu0
    %v4875 = vpop.trf.xlu0
    %v4876 = vpop.trf.xlu0
    %v4877 = vpop.trf.xlu0
    %v4878 = vpop.trf.xlu0
    %v4879 = vpop.trf.xlu0
    %v4880 = vpop.trf.xlu0
    %v4881 = vpop.trf.xlu0
    %v4882 = vpop.trf.xlu0
    %v4883 = vpop.trf.xlu0
    %v4884 = vpop.trf.xlu0
    %v4885 = vpop.trf.xlu0
    %v4886 = vpop.trf.xlu0
    %v4887 = vpop.trf.xlu0
    %v4888 = vpop.trf.xlu0
    %4889 = vxpose.xlu0.b32.start [1/16] %v4576, 128
    %4890 = vxpose.xlu0.b32.cont [2/16] %v4581, 128
    %4891 = vxpose.xlu0.b32.cont [3/16] 0.0, 128
    %4892 = vxpose.xlu0.b32.cont [4/16] 0.0, 128
    %4893 = vxpose.xlu0.b32.cont [5/16] 0.0, 128
    %4894 = vxpose.xlu0.b32.cont [6/16] 0.0, 128
    %4895 = vxpose.xlu0.b32.cont [7/16] 0.0, 128
    %4896 = vxpose.xlu0.b32.cont [8/16] 0.0, 128
    %4897 = vxpose.xlu0.b32.cont [9/16] 0.0, 128
    %4898 = vxpose.xlu0.b32.cont [10/16] 0.0, 128
    %4899 = vxpose.xlu0.b32.cont [11/16] 0.0, 128
    %4900 = vxpose.xlu0.b32.cont [12/16] 0.0, 128
    %4901 = vxpose.xlu0.b32.cont [13/16] 0.0, 128
    %4902 = vxpose.xlu0.b32.cont [14/16] 0.0, 128
    %4903 = vxpose.xlu0.b32.cont [15/16] 0.0, 128
    %4904 = vxpose.xlu0.b32.end [16/16] 0.0, 128
    %v4905 = vpop.trf.xlu0
    %v4906 = vpop.trf.xlu0
    %v4907 = vpop.trf.xlu0
    %v4908 = vpop.trf.xlu0
    %v4909 = vpop.trf.xlu0
    %v4910 = vpop.trf.xlu0
    %v4911 = vpop.trf.xlu0
    %v4912 = vpop.trf.xlu0
    %v4913 = vpop.trf.xlu0
    %v4914 = vpop.trf.xlu0
    %v4915 = vpop.trf.xlu0
    %v4916 = vpop.trf.xlu0
    %v4917 = vpop.trf.xlu0
    %v4918 = vpop.trf.xlu0
    %v4919 = vpop.trf.xlu0
    %v4920 = vpop.trf.xlu0
    %4921 = vxpose.xlu0.b32.start [1/16] %v4689, 128
    %4922 = vxpose.xlu0.b32.cont [2/16] %v4694, 128
    %4923 = vxpose.xlu0.b32.cont [3/16] 0.0, 128
    %4924 = vxpose.xlu0.b32.cont [4/16] 0.0, 128
    %4925 = vxpose.xlu0.b32.cont [5/16] 0.0, 128
    %4926 = vxpose.xlu0.b32.cont [6/16] 0.0, 128
    %4927 = vxpose.xlu0.b32.cont [7/16] 0.0, 128
    %4928 = vxpose.xlu0.b32.cont [8/16] 0.0, 128
    %4929 = vxpose.xlu0.b32.cont [9/16] 0.0, 128
    %4930 = vxpose.xlu0.b32.cont [10/16] 0.0, 128
    %4931 = vxpose.xlu0.b32.cont [11/16] 0.0, 128
    %4932 = vxpose.xlu0.b32.cont [12/16] 0.0, 128
    %4933 = vxpose.xlu0.b32.cont [13/16] 0.0, 128
    %4934 = vxpose.xlu0.b32.cont [14/16] 0.0, 128
    %4935 = vxpose.xlu0.b32.cont [15/16] 0.0, 128
    %4936 = vxpose.xlu0.b32.end [16/16] 0.0, 128
    %v4937 = vpop.trf.xlu0
    %v4938 = vpop.trf.xlu0
    %v4939 = vpop.trf.xlu0
    %v4940 = vpop.trf.xlu0
    %v4941 = vpop.trf.xlu0
    %v4942 = vpop.trf.xlu0
    %v4943 = vpop.trf.xlu0
    %v4944 = vpop.trf.xlu0
    %v4945 = vpop.trf.xlu0
    %v4946 = vpop.trf.xlu0
    %v4947 = vpop.trf.xlu0
    %v4948 = vpop.trf.xlu0
    %v4949 = vpop.trf.xlu0
    %v4950 = vpop.trf.xlu0
    %v4951 = vpop.trf.xlu0
    %v4952 = vpop.trf.xlu0
    %v4953 = vcombine.low %v4713, %v4777
    %v4955 = vunpack.c.l.s4 1983009808
    %v4956 = vunpack.c.0.s8 %v4955
    %v4957 = vlaneseq
    %v4958 = vshrl.u32 %v4957, 7
    %v4959 = vsub.s32 %v4956, %v4958
    %v4960 = vrot.slane %v4953, %v4959
    %v4961 = vcombine.low %v4745, %v4809
    %v4963 = vunpack.c.l.s4 1983009808
    %v4964 = vunpack.c.0.s8 %v4963
    %v4965 = vlaneseq
    %v4966 = vshrl.u32 %v4965, 7
    %v4967 = vsub.s32 %v4964, %v4966
    %v4968 = vrot.slane %v4961, %v4967
    %v4969 = vcombine.low %v4841, %v4905
    %v4971 = vunpack.c.l.s4 1983009808
    %v4972 = vunpack.c.0.s8 %v4971
    %v4973 = vlaneseq
    %v4974 = vshrl.u32 %v4973, 7
    %v4975 = vsub.s32 %v4972, %v4974
    %v4976 = vrot.slane %v4969, %v4975
    %v4977 = vcombine.low %v4873, %v4937
    %v4979 = vunpack.c.l.s4 1983009808
    %v4980 = vunpack.c.0.s8 %v4979
    %v4981 = vlaneseq
    %v4982 = vshrl.u32 %v4981, 7
    %v4983 = vsub.s32 %v4980, %v4982
    %v4984 = vrot.slane %v4977, %v4983
    %v4985 = vcombine.low %v4960, %v4968
    %v4986 = vcombine.high %v4960, %v4968
    %v4988 = vunpack.c.l.s4 1934713408
    %v4989 = vunpack.c.0.s8 %v4988
    %v4990 = vlaneseq
    %v4991 = vshrl.u32 %v4990, 7
    %v4992 = vsub.s32 %v4989, %v4991
    %v4993 = vrot.slane %v4985, %v4992
    %v4995 = vunpack.c.l.s4 1934713408
    %v4996 = vunpack.c.0.s8 %v4995
    %v4997 = vlaneseq
    %v4998 = vshrl.u32 %v4997, 7
    %v4999 = vsub.s32 %v4996, %v4998
    %v5000 = vrot.slane %v4986, %v4999
    %v5001 = vcombine.low %v4976, %v4984
    %v5002 = vcombine.high %v4976, %v4984
    %v5004 = vunpack.c.l.s4 1934713408
    %v5005 = vunpack.c.0.s8 %v5004
    %v5006 = vlaneseq
    %v5007 = vshrl.u32 %v5006, 7
    %v5008 = vsub.s32 %v5005, %v5007
    %v5009 = vrot.slane %v5001, %v5008
    %v5011 = vunpack.c.l.s4 1934713408
    %v5012 = vunpack.c.0.s8 %v5011
    %v5013 = vlaneseq
    %v5014 = vshrl.u32 %v5013, 7
    %v5015 = vsub.s32 %v5012, %v5014
    %v5016 = vrot.slane %v5002, %v5015
    %v5017 = vcombine.low %v4993, %v5009
    %v5018 = vcombine.high %v4993, %v5009
    %v5019 = vcombine.low %v5000, %v5016
    %v5020 = vcombine.high %v5000, %v5016
    %v5022 = vsel %vm1955, %v1923, 0
    %v5025 = vsel %vm1955, %v646, 0
    %v5028 = vsel %vm1955, %v649, 0
    %5030 = vmatprep.subr.mxu0 0.0
    %5031 = vmatpush1.xpose.msra.mxu0 0.0
    %5032 = vmatprep.subr.mxu0 0.0
    %5033 = vmatpush1.xpose.msra.mxu0 0.0
    %5034 = vmatprep.subr.mxu0 0.0
    %5035 = vmatpush1.xpose.msra.mxu0 0.0
    %5036 = vmatprep.subr.mxu0 0.0
    %5037 = vmatpush1.xpose.msra.mxu0 0.0
    %5038 = vmatprep.subr.mxu0 0.0
    %5039 = vmatpush1.xpose.msra.mxu0 0.0
    %5040 = vmatprep.subr.mxu0 0.0
    %5041 = vmatpush1.xpose.msra.mxu0 0.0
    %5042 = vmatprep.subr.mxu0 0.0
    %5043 = vmatpush1.xpose.msra.mxu0 0.0
    %5044 = vmatprep.subr.mxu0 0.0
    %5045 = vmatpush1.xpose.msra.mxu0 0.0
    %5046 = vmatprep.subr.mxu0 0.0
    %5047 = vmatpush1.xpose.msra.mxu0 0.0
    %5048 = vmatprep.subr.mxu0 0.0
    %5049 = vmatpush1.xpose.msra.mxu0 0.0
    %5050 = vmatprep.subr.mxu0 0.0
    %5051 = vmatpush1.xpose.msra.mxu0 0.0
    %5052 = vmatprep.subr.mxu0 0.0
    %5053 = vmatpush1.xpose.msra.mxu0 0.0
    %5054 = vmatprep.subr.mxu0 0.0
    %5055 = vmatpush1.xpose.msra.mxu0 0.0
    %5056 = vmatprep.subr.mxu0 0.0
    %5057 = vmatpush1.xpose.msra.mxu0 0.0
    %5058 = vmatprep.subr.mxu0 0.0
    %5059 = vmatpush1.xpose.msra.mxu0 %v5028
    %5060 = vmatprep.subr.mxu0 0.0
    %5061 = vmatpush1.xpose.msra.mxu0 %v5025
    %5062 = vmatprep.subr.mxu0 0.0
    %5063 = vmatpush2.xpose.msra.mxu0 0.0
    %5064 = vmatprep.subr.mxu0 0.0
    %5065 = vmatpush2.xpose.msra.mxu0 0.0
    %5066 = vmatprep.subr.mxu0 0.0
    %5067 = vmatpush2.xpose.msra.mxu0 0.0
    %5068 = vmatprep.subr.mxu0 0.0
    %5069 = vmatpush2.xpose.msra.mxu0 0.0
    %5070 = vmatprep.subr.mxu0 0.0
    %5071 = vmatpush2.xpose.msra.mxu0 0.0
    %5072 = vmatprep.subr.mxu0 0.0
    %5073 = vmatpush2.xpose.msra.mxu0 0.0
    %5074 = vmatprep.subr.mxu0 0.0
    %5075 = vmatpush2.xpose.msra.mxu0 0.0
    %5076 = vmatprep.subr.mxu0 0.0
    %5077 = vmatpush2.xpose.msra.mxu0 0.0
    %5078 = vmatprep.subr.mxu0 0.0
    %5079 = vmatpush2.xpose.msra.mxu0 0.0
    %5080 = vmatprep.subr.mxu0 0.0
    %5081 = vmatpush2.xpose.msra.mxu0 0.0
    %5082 = vmatprep.subr.mxu0 0.0
    %5083 = vmatpush2.xpose.msra.mxu0 0.0
    %5084 = vmatprep.subr.mxu0 0.0
    %5085 = vmatpush2.xpose.msra.mxu0 0.0
    %5086 = vmatprep.subr.mxu0 0.0
    %5087 = vmatpush2.xpose.msra.mxu0 0.0
    %5088 = vmatprep.subr.mxu0 0.0
    %5089 = vmatpush2.xpose.msra.mxu0 0.0
    %5090 = vmatprep.subr.mxu0 0.0
    %5091 = vmatpush2.xpose.msra.mxu0 0.0
    %5092 = vmatprep.subr.mxu0 0.0
    %5093 = vmatpush2.xpose.msra.mxu0 0.0
    %5094 = vmatprep.mubr.f32.mxu0 0.0
    %5095 = vmatmul.mubr.f32.gmra.mxu0 %v5022
    %v5096 = vpop.f32.mrf.mxu0
    %v5097 = vadd.f32 %v5017, %v5096
    %v5098 = vpop.f32.mrf.mxu0
    %5099 = vdwg.mxu0
    %v5101 = vsel %vm1955, %v1924, 0
    %v5104 = vsel %vm1955, %v743, 0
    %v5107 = vsel %vm1955, %v746, 0
    %5109 = vmatprep.subr.mxu0 0.0
    %5110 = vmatpush1.xpose.msra.mxu0 0.0
    %5111 = vmatprep.subr.mxu0 0.0
    %5112 = vmatpush1.xpose.msra.mxu0 0.0
    %5113 = vmatprep.subr.mxu0 0.0
    %5114 = vmatpush1.xpose.msra.mxu0 0.0
    %5115 = vmatprep.subr.mxu0 0.0
    %5116 = vmatpush1.xpose.msra.mxu0 0.0
    %5117 = vmatprep.subr.mxu0 0.0
    %5118 = vmatpush1.xpose.msra.mxu0 0.0
    %5119 = vmatprep.subr.mxu0 0.0
    %5120 = vmatpush1.xpose.msra.mxu0 0.0
    %5121 = vmatprep.subr.mxu0 0.0
    %5122 = vmatpush1.xpose.msra.mxu0 0.0
    %5123 = vmatprep.subr.mxu0 0.0
    %5124 = vmatpush1.xpose.msra.mxu0 0.0
    %5125 = vmatprep.subr.mxu0 0.0
    %5126 = vmatpush1.xpose.msra.mxu0 0.0
    %5127 = vmatprep.subr.mxu0 0.0
    %5128 = vmatpush1.xpose.msra.mxu0 0.0
    %5129 = vmatprep.subr.mxu0 0.0
    %5130 = vmatpush1.xpose.msra.mxu0 0.0
    %5131 = vmatprep.subr.mxu0 0.0
    %5132 = vmatpush1.xpose.msra.mxu0 0.0
    %5133 = vmatprep.subr.mxu0 0.0
    %5134 = vmatpush1.xpose.msra.mxu0 0.0
    %5135 = vmatprep.subr.mxu0 0.0
    %5136 = vmatpush1.xpose.msra.mxu0 0.0
    %5137 = vmatprep.subr.mxu0 0.0
    %5138 = vmatpush1.xpose.msra.mxu0 %v5107
    %5139 = vmatprep.subr.mxu0 0.0
    %5140 = vmatpush1.xpose.msra.mxu0 %v5104
    %5141 = vmatprep.subr.mxu0 0.0
    %5142 = vmatpush2.xpose.msra.mxu0 0.0
    %5143 = vmatprep.subr.mxu0 0.0
    %5144 = vmatpush2.xpose.msra.mxu0 0.0
    %5145 = vmatprep.subr.mxu0 0.0
    %5146 = vmatpush2.xpose.msra.mxu0 0.0
    %5147 = vmatprep.subr.mxu0 0.0
    %5148 = vmatpush2.xpose.msra.mxu0 0.0
    %5149 = vmatprep.subr.mxu0 0.0
    %5150 = vmatpush2.xpose.msra.mxu0 0.0
    %5151 = vmatprep.subr.mxu0 0.0
    %5152 = vmatpush2.xpose.msra.mxu0 0.0
    %5153 = vmatprep.subr.mxu0 0.0
    %5154 = vmatpush2.xpose.msra.mxu0 0.0
    %5155 = vmatprep.subr.mxu0 0.0
    %5156 = vmatpush2.xpose.msra.mxu0 0.0
    %5157 = vmatprep.subr.mxu0 0.0
    %5158 = vmatpush2.xpose.msra.mxu0 0.0
    %5159 = vmatprep.subr.mxu0 0.0
    %5160 = vmatpush2.xpose.msra.mxu0 0.0
    %5161 = vmatprep.subr.mxu0 0.0
    %5162 = vmatpush2.xpose.msra.mxu0 0.0
    %5163 = vmatprep.subr.mxu0 0.0
    %5164 = vmatpush2.xpose.msra.mxu0 0.0
    %5165 = vmatprep.subr.mxu0 0.0
    %5166 = vmatpush2.xpose.msra.mxu0 0.0
    %5167 = vmatprep.subr.mxu0 0.0
    %5168 = vmatpush2.xpose.msra.mxu0 0.0
    %5169 = vmatprep.subr.mxu0 0.0
    %5170 = vmatpush2.xpose.msra.mxu0 0.0
    %5171 = vmatprep.subr.mxu0 0.0
    %5172 = vmatpush2.xpose.msra.mxu0 0.0
    %5173 = vmatprep.mubr.f32.mxu0 0.0
    %5174 = vmatmul.mubr.f32.gmra.mxu0 %v5101
    %v5175 = vpop.f32.mrf.mxu0
    %v5176 = vadd.f32 %v5018, %v5175
    %v5177 = vpop.f32.mrf.mxu0
    %5178 = vdwg.mxu0
    %v5180 = vsel %vm1955, %v1925, 0
    %v5183 = vsel %vm1955, %v840, 0
    %v5186 = vsel %vm1955, %v843, 0
    %5188 = vmatprep.subr.mxu0 0.0
    %5189 = vmatpush1.xpose.msra.mxu0 0.0
    %5190 = vmatprep.subr.mxu0 0.0
    %5191 = vmatpush1.xpose.msra.mxu0 0.0
    %5192 = vmatprep.subr.mxu0 0.0
    %5193 = vmatpush1.xpose.msra.mxu0 0.0
    %5194 = vmatprep.subr.mxu0 0.0
    %5195 = vmatpush1.xpose.msra.mxu0 0.0
    %5196 = vmatprep.subr.mxu0 0.0
    %5197 = vmatpush1.xpose.msra.mxu0 0.0
    %5198 = vmatprep.subr.mxu0 0.0
    %5199 = vmatpush1.xpose.msra.mxu0 0.0
    %5200 = vmatprep.subr.mxu0 0.0
    %5201 = vmatpush1.xpose.msra.mxu0 0.0
    %5202 = vmatprep.subr.mxu0 0.0
    %5203 = vmatpush1.xpose.msra.mxu0 0.0
    %5204 = vmatprep.subr.mxu0 0.0
    %5205 = vmatpush1.xpose.msra.mxu0 0.0
    %5206 = vmatprep.subr.mxu0 0.0
    %5207 = vmatpush1.xpose.msra.mxu0 0.0
    %5208 = vmatprep.subr.mxu0 0.0
    %5209 = vmatpush1.xpose.msra.mxu0 0.0
    %5210 = vmatprep.subr.mxu0 0.0
    %5211 = vmatpush1.xpose.msra.mxu0 0.0
    %5212 = vmatprep.subr.mxu0 0.0
    %5213 = vmatpush1.xpose.msra.mxu0 0.0
    %5214 = vmatprep.subr.mxu0 0.0
    %5215 = vmatpush1.xpose.msra.mxu0 0.0
    %5216 = vmatprep.subr.mxu0 0.0
    %5217 = vmatpush1.xpose.msra.mxu0 %v5186
    %5218 = vmatprep.subr.mxu0 0.0
    %5219 = vmatpush1.xpose.msra.mxu0 %v5183
    %5220 = vmatprep.subr.mxu0 0.0
    %5221 = vmatpush2.xpose.msra.mxu0 0.0
    %5222 = vmatprep.subr.mxu0 0.0
    %5223 = vmatpush2.xpose.msra.mxu0 0.0
    %5224 = vmatprep.subr.mxu0 0.0
    %5225 = vmatpush2.xpose.msra.mxu0 0.0
    %5226 = vmatprep.subr.mxu0 0.0
    %5227 = vmatpush2.xpose.msra.mxu0 0.0
    %5228 = vmatprep.subr.mxu0 0.0
    %5229 = vmatpush2.xpose.msra.mxu0 0.0
    %5230 = vmatprep.subr.mxu0 0.0
    %5231 = vmatpush2.xpose.msra.mxu0 0.0
    %5232 = vmatprep.subr.mxu0 0.0
    %5233 = vmatpush2.xpose.msra.mxu0 0.0
    %5234 = vmatprep.subr.mxu0 0.0
    %5235 = vmatpush2.xpose.msra.mxu0 0.0
    %5236 = vmatprep.subr.mxu0 0.0
    %5237 = vmatpush2.xpose.msra.mxu0 0.0
    %5238 = vmatprep.subr.mxu0 0.0
    %5239 = vmatpush2.xpose.msra.mxu0 0.0
    %5240 = vmatprep.subr.mxu0 0.0
    %5241 = vmatpush2.xpose.msra.mxu0 0.0
    %5242 = vmatprep.subr.mxu0 0.0
    %5243 = vmatpush2.xpose.msra.mxu0 0.0
    %5244 = vmatprep.subr.mxu0 0.0
    %5245 = vmatpush2.xpose.msra.mxu0 0.0
    %5246 = vmatprep.subr.mxu0 0.0
    %5247 = vmatpush2.xpose.msra.mxu0 0.0
    %5248 = vmatprep.subr.mxu0 0.0
    %5249 = vmatpush2.xpose.msra.mxu0 0.0
    %5250 = vmatprep.subr.mxu0 0.0
    %5251 = vmatpush2.xpose.msra.mxu0 0.0
    %5252 = vmatprep.mubr.f32.mxu0 0.0
    %5253 = vmatmul.mubr.f32.gmra.mxu0 %v5180
    %v5254 = vpop.f32.mrf.mxu0
    %v5255 = vadd.f32 %v5019, %v5254
    %v5256 = vpop.f32.mrf.mxu0
    %5257 = vdwg.mxu0
    %v5259 = vsel %vm1955, %v1926, 0
    %v5262 = vsel %vm1955, %v937, 0
    %v5265 = vsel %vm1955, %v940, 0
    %5267 = vmatprep.subr.mxu0 0.0
    %5268 = vmatpush1.xpose.msra.mxu0 0.0
    %5269 = vmatprep.subr.mxu0 0.0
    %5270 = vmatpush1.xpose.msra.mxu0 0.0
    %5271 = vmatprep.subr.mxu0 0.0
    %5272 = vmatpush1.xpose.msra.mxu0 0.0
    %5273 = vmatprep.subr.mxu0 0.0
    %5274 = vmatpush1.xpose.msra.mxu0 0.0
    %5275 = vmatprep.subr.mxu0 0.0
    %5276 = vmatpush1.xpose.msra.mxu0 0.0
    %5277 = vmatprep.subr.mxu0 0.0
    %5278 = vmatpush1.xpose.msra.mxu0 0.0
    %5279 = vmatprep.subr.mxu0 0.0
    %5280 = vmatpush1.xpose.msra.mxu0 0.0
    %5281 = vmatprep.subr.mxu0 0.0
    %5282 = vmatpush1.xpose.msra.mxu0 0.0
    %5283 = vmatprep.subr.mxu0 0.0
    %5284 = vmatpush1.xpose.msra.mxu0 0.0
    %5285 = vmatprep.subr.mxu0 0.0
    %5286 = vmatpush1.xpose.msra.mxu0 0.0
    %5287 = vmatprep.subr.mxu0 0.0
    %5288 = vmatpush1.xpose.msra.mxu0 0.0
    %5289 = vmatprep.subr.mxu0 0.0
    %5290 = vmatpush1.xpose.msra.mxu0 0.0
    %5291 = vmatprep.subr.mxu0 0.0
    %5292 = vmatpush1.xpose.msra.mxu0 0.0
    %5293 = vmatprep.subr.mxu0 0.0
    %5294 = vmatpush1.xpose.msra.mxu0 0.0
    %5295 = vmatprep.subr.mxu0 0.0
    %5296 = vmatpush1.xpose.msra.mxu0 %v5265
    %5297 = vmatprep.subr.mxu0 0.0
    %5298 = vmatpush1.xpose.msra.mxu0 %v5262
    %5299 = vmatprep.subr.mxu0 0.0
    %5300 = vmatpush2.xpose.msra.mxu0 0.0
    %5301 = vmatprep.subr.mxu0 0.0
    %5302 = vmatpush2.xpose.msra.mxu0 0.0
    %5303 = vmatprep.subr.mxu0 0.0
    %5304 = vmatpush2.xpose.msra.mxu0 0.0
    %5305 = vmatprep.subr.mxu0 0.0
    %5306 = vmatpush2.xpose.msra.mxu0 0.0
    %5307 = vmatprep.subr.mxu0 0.0
    %5308 = vmatpush2.xpose.msra.mxu0 0.0
    %5309 = vmatprep.subr.mxu0 0.0
    %5310 = vmatpush2.xpose.msra.mxu0 0.0
    %5311 = vmatprep.subr.mxu0 0.0
    %5312 = vmatpush2.xpose.msra.mxu0 0.0
    %5313 = vmatprep.subr.mxu0 0.0
    %5314 = vmatpush2.xpose.msra.mxu0 0.0
    %5315 = vmatprep.subr.mxu0 0.0
    %5316 = vmatpush2.xpose.msra.mxu0 0.0
    %5317 = vmatprep.subr.mxu0 0.0
    %5318 = vmatpush2.xpose.msra.mxu0 0.0
    %5319 = vmatprep.subr.mxu0 0.0
    %5320 = vmatpush2.xpose.msra.mxu0 0.0
    %5321 = vmatprep.subr.mxu0 0.0
    %5322 = vmatpush2.xpose.msra.mxu0 0.0
    %5323 = vmatprep.subr.mxu0 0.0
    %5324 = vmatpush2.xpose.msra.mxu0 0.0
    %5325 = vmatprep.subr.mxu0 0.0
    %5326 = vmatpush2.xpose.msra.mxu0 0.0
    %5327 = vmatprep.subr.mxu0 0.0
    %5328 = vmatpush2.xpose.msra.mxu0 0.0
    %5329 = vmatprep.subr.mxu0 0.0
    %5330 = vmatpush2.xpose.msra.mxu0 0.0
    %5331 = vmatprep.mubr.f32.mxu0 0.0
    %5332 = vmatmul.mubr.f32.gmra.mxu0 %v5259
    %v5333 = vpop.f32.mrf.mxu0
    %v5334 = vadd.f32 %v5020, %v5333
    %v5335 = vpop.f32.mrf.mxu0
    %5336 = vdwg.mxu0
    %v5337 = vmul.f32 %v5097, 0.17677669
    %v5338 = vmul.f32 %v5176, 0.17677669
    %v5339 = vmul.f32 %v5255, 0.17677669
    %v5340 = vmul.f32 %v5334, 0.17677669
    %v5341 = vld [vmem:[%s5] sm:$0xff]
    %v5342 = vadd.f32 %v5337, %v5341
    %v5343 = vadd.f32 %v5338, %v5341
    %v5344 = vadd.f32 %v5339, %v5341
    %v5345 = vadd.f32 %v5340, %v5341
    %vm5346 = vcmask 130048
    %v5347 = vsel %vm5346, %v5342, -inf
    %5348 = vmax.xlane.f32.xlu0 %v5347
    %v5349 = vpop.xlane.xlu0 %5348
    %v5350 = vsel %vm5346, %v5343, -inf
    %5351 = vmax.xlane.f32.xlu0 %v5350
    %v5352 = vpop.xlane.xlu0 %5351
    %v5353 = vsel %vm5346, %v5344, -inf
    %5354 = vmax.xlane.f32.xlu0 %v5353
    %v5355 = vpop.xlane.xlu0 %5354
    %v5356 = vsel %vm5346, %v5345, -inf
    %5357 = vmax.xlane.f32.xlu0 %v5356
    %v5358 = vpop.xlane.xlu0 %5357
    %v5359 = vsub.f32 %v5342, %v5349
    %v5360 = vsub.f32 %v5343, %v5352
    %v5361 = vsub.f32 %v5344, %v5355
    %v5362 = vsub.f32 %v5345, %v5358
    %v5363 = vmul.f32 %v5359, 1.442695
    %v5364 = vpow.pop %v5363
    %v5365 = vmul.f32 %v5360, 1.442695
    %v5366 = vpow.pop %v5365
    %v5367 = vmul.f32 %v5361, 1.442695
    %v5368 = vpow.pop %v5367
    %v5369 = vmul.f32 %v5362, 1.442695
    %v5370 = vpow.pop %v5369
    %v5371 = vsel %vm5346, %v5364, 0.0
    %5372 = vadd.xlane.f32.xlu0 %v5371
    %v5373 = vpop.xlane.xlu0 %5372
    %v5374 = vsel %vm5346, %v5366, 0.0
    %5375 = vadd.xlane.f32.xlu0 %v5374
    %v5376 = vpop.xlane.xlu0 %5375
    %v5377 = vsel %vm5346, %v5368, 0.0
    %5378 = vadd.xlane.f32.xlu0 %v5377
    %v5379 = vpop.xlane.xlu0 %5378
    %v5380 = vsel %vm5346, %v5370, 0.0
    %5381 = vadd.xlane.f32.xlu0 %v5380
    %v5382 = vpop.xlane.xlu0 %5381
    %v5383 = vrcp.pop %v5373
    %v5384 = vrcp.pop %v5376
    %v5385 = vrcp.pop %v5379
    %v5386 = vrcp.pop %v5382
    %v5387 = vmul.f32 %v5364, %v5383
    %v5388 = vmul.f32 %v5366, %v5384
    %v5389 = vmul.f32 %v5368, %v5385
    %v5390 = vmul.f32 %v5370, %v5386
    %v5392 = vsel %vm5346, %v5387, 0
    %5394 = vmatprep.subr.mxu0 0.0
    %5395 = vmatpush1.msra.mxu0 0.0
    %5396 = vmatprep.subr.mxu0 0.0
    %5397 = vmatpush1.msra.mxu0 0.0
    %5398 = vmatprep.subr.mxu0 0.0
    %5399 = vmatpush1.msra.mxu0 0.0
    %5400 = vmatprep.subr.mxu0 0.0
    %5401 = vmatpush1.msra.mxu0 0.0
    %5402 = vmatprep.subr.mxu0 0.0
    %5403 = vmatpush1.msra.mxu0 0.0
    %5404 = vmatprep.subr.mxu0 0.0
    %5405 = vmatpush1.msra.mxu0 0.0
    %5406 = vmatprep.subr.mxu0 0.0
    %5407 = vmatpush1.msra.mxu0 0.0
    %5408 = vmatprep.subr.mxu0 0.0
    %5409 = vmatpush1.msra.mxu0 0.0
    %5410 = vmatprep.subr.mxu0 0.0
    %5411 = vmatpush1.msra.mxu0 0.0
    %5412 = vmatprep.subr.mxu0 0.0
    %5413 = vmatpush1.msra.mxu0 0.0
    %5414 = vmatprep.subr.mxu0 0.0
    %5415 = vmatpush1.msra.mxu0 0.0
    %5416 = vmatprep.subr.mxu0 0.0
    %5417 = vmatpush1.msra.mxu0 0.0
    %5418 = vmatprep.subr.mxu0 0.0
    %5419 = vmatpush1.msra.mxu0 0.0
    %5420 = vmatprep.subr.mxu0 0.0
    %5421 = vmatpush1.msra.mxu0 0.0
    %5422 = vmatprep.subr.mxu0 0.0
    %5423 = vmatpush1.msra.mxu0 %v1101
    %5424 = vmatprep.subr.mxu0 0.0
    %5425 = vmatpush1.msra.mxu0 %v1098
    %5426 = vmatprep.subr.mxu0 0.0
    %5427 = vmatpush2.msra.mxu0 0.0
    %5428 = vmatprep.subr.mxu0 0.0
    %5429 = vmatpush2.msra.mxu0 0.0
    %5430 = vmatprep.subr.mxu0 0.0
    %5431 = vmatpush2.msra.mxu0 0.0
    %5432 = vmatprep.subr.mxu0 0.0
    %5433 = vmatpush2.msra.mxu0 0.0
    %5434 = vmatprep.subr.mxu0 0.0
    %5435 = vmatpush2.msra.mxu0 0.0
    %5436 = vmatprep.subr.mxu0 0.0
    %5437 = vmatpush2.msra.mxu0 0.0
    %5438 = vmatprep.subr.mxu0 0.0
    %5439 = vmatpush2.msra.mxu0 0.0
    %5440 = vmatprep.subr.mxu0 0.0
    %5441 = vmatpush2.msra.mxu0 0.0
    %5442 = vmatprep.subr.mxu0 0.0
    %5443 = vmatpush2.msra.mxu0 0.0
    %5444 = vmatprep.subr.mxu0 0.0
    %5445 = vmatpush2.msra.mxu0 0.0
    %5446 = vmatprep.subr.mxu0 0.0
    %5447 = vmatpush2.msra.mxu0 0.0
    %5448 = vmatprep.subr.mxu0 0.0
    %5449 = vmatpush2.msra.mxu0 0.0
    %5450 = vmatprep.subr.mxu0 0.0
    %5451 = vmatpush2.msra.mxu0 0.0
    %5452 = vmatprep.subr.mxu0 0.0
    %5453 = vmatpush2.msra.mxu0 0.0
    %5454 = vmatprep.subr.mxu0 0.0
    %5455 = vmatpush2.msra.mxu0 0.0
    %5456 = vmatprep.subr.mxu0 0.0
    %5457 = vmatpush2.msra.mxu0 0.0
    %5458 = vmatprep.mubr.f32.mxu0 0.0
    %5459 = vmatmul.mubr.f32.gmra.mxu0 %v5392
    %v5460 = vpop.f32.mrf.mxu0
    %v5461 = vadd.f32 0.0, %v5460
    %v5462 = vpop.f32.mrf.mxu0
    %5463 = vdwg.mxu0
    %v5465 = vsel %vm5346, %v5388, 0
    %5467 = vmatprep.subr.mxu0 0.0
    %5468 = vmatpush1.msra.mxu0 0.0
    %5469 = vmatprep.subr.mxu0 0.0
    %5470 = vmatpush1.msra.mxu0 0.0
    %5471 = vmatprep.subr.mxu0 0.0
    %5472 = vmatpush1.msra.mxu0 0.0
    %5473 = vmatprep.subr.mxu0 0.0
    %5474 = vmatpush1.msra.mxu0 0.0
    %5475 = vmatprep.subr.mxu0 0.0
    %5476 = vmatpush1.msra.mxu0 0.0
    %5477 = vmatprep.subr.mxu0 0.0
    %5478 = vmatpush1.msra.mxu0 0.0
    %5479 = vmatprep.subr.mxu0 0.0
    %5480 = vmatpush1.msra.mxu0 0.0
    %5481 = vmatprep.subr.mxu0 0.0
    %5482 = vmatpush1.msra.mxu0 0.0
    %5483 = vmatprep.subr.mxu0 0.0
    %5484 = vmatpush1.msra.mxu0 0.0
    %5485 = vmatprep.subr.mxu0 0.0
    %5486 = vmatpush1.msra.mxu0 0.0
    %5487 = vmatprep.subr.mxu0 0.0
    %5488 = vmatpush1.msra.mxu0 0.0
    %5489 = vmatprep.subr.mxu0 0.0
    %5490 = vmatpush1.msra.mxu0 0.0
    %5491 = vmatprep.subr.mxu0 0.0
    %5492 = vmatpush1.msra.mxu0 0.0
    %5493 = vmatprep.subr.mxu0 0.0
    %5494 = vmatpush1.msra.mxu0 0.0
    %5495 = vmatprep.subr.mxu0 0.0
    %5496 = vmatpush1.msra.mxu0 %v1198
    %5497 = vmatprep.subr.mxu0 0.0
    %5498 = vmatpush1.msra.mxu0 %v1195
    %5499 = vmatprep.subr.mxu0 0.0
    %5500 = vmatpush2.msra.mxu0 0.0
    %5501 = vmatprep.subr.mxu0 0.0
    %5502 = vmatpush2.msra.mxu0 0.0
    %5503 = vmatprep.subr.mxu0 0.0
    %5504 = vmatpush2.msra.mxu0 0.0
    %5505 = vmatprep.subr.mxu0 0.0
    %5506 = vmatpush2.msra.mxu0 0.0
    %5507 = vmatprep.subr.mxu0 0.0
    %5508 = vmatpush2.msra.mxu0 0.0
    %5509 = vmatprep.subr.mxu0 0.0
    %5510 = vmatpush2.msra.mxu0 0.0
    %5511 = vmatprep.subr.mxu0 0.0
    %5512 = vmatpush2.msra.mxu0 0.0
    %5513 = vmatprep.subr.mxu0 0.0
    %5514 = vmatpush2.msra.mxu0 0.0
    %5515 = vmatprep.subr.mxu0 0.0
    %5516 = vmatpush2.msra.mxu0 0.0
    %5517 = vmatprep.subr.mxu0 0.0
    %5518 = vmatpush2.msra.mxu0 0.0
    %5519 = vmatprep.subr.mxu0 0.0
    %5520 = vmatpush2.msra.mxu0 0.0
    %5521 = vmatprep.subr.mxu0 0.0
    %5522 = vmatpush2.msra.mxu0 0.0
    %5523 = vmatprep.subr.mxu0 0.0
    %5524 = vmatpush2.msra.mxu0 0.0
    %5525 = vmatprep.subr.mxu0 0.0
    %5526 = vmatpush2.msra.mxu0 0.0
    %5527 = vmatprep.subr.mxu0 0.0
    %5528 = vmatpush2.msra.mxu0 0.0
    %5529 = vmatprep.subr.mxu0 0.0
    %5530 = vmatpush2.msra.mxu0 0.0
    %5531 = vmatprep.mubr.f32.mxu0 0.0
    %5532 = vmatmul.mubr.f32.gmra.mxu0 %v5465
    %v5533 = vpop.f32.mrf.mxu0
    %v5534 = vadd.f32 0.0, %v5533
    %v5535 = vpop.f32.mrf.mxu0
    %5536 = vdwg.mxu0
    %v5538 = vsel %vm5346, %v5389, 0
    %5540 = vmatprep.subr.mxu0 0.0
    %5541 = vmatpush1.msra.mxu0 0.0
    %5542 = vmatprep.subr.mxu0 0.0
    %5543 = vmatpush1.msra.mxu0 0.0
    %5544 = vmatprep.subr.mxu0 0.0
    %5545 = vmatpush1.msra.mxu0 0.0
    %5546 = vmatprep.subr.mxu0 0.0
    %5547 = vmatpush1.msra.mxu0 0.0
    %5548 = vmatprep.subr.mxu0 0.0
    %5549 = vmatpush1.msra.mxu0 0.0
    %5550 = vmatprep.subr.mxu0 0.0
    %5551 = vmatpush1.msra.mxu0 0.0
    %5552 = vmatprep.subr.mxu0 0.0
    %5553 = vmatpush1.msra.mxu0 0.0
    %5554 = vmatprep.subr.mxu0 0.0
    %5555 = vmatpush1.msra.mxu0 0.0
    %5556 = vmatprep.subr.mxu0 0.0
    %5557 = vmatpush1.msra.mxu0 0.0
    %5558 = vmatprep.subr.mxu0 0.0
    %5559 = vmatpush1.msra.mxu0 0.0
    %5560 = vmatprep.subr.mxu0 0.0
    %5561 = vmatpush1.msra.mxu0 0.0
    %5562 = vmatprep.subr.mxu0 0.0
    %5563 = vmatpush1.msra.mxu0 0.0
    %5564 = vmatprep.subr.mxu0 0.0
    %5565 = vmatpush1.msra.mxu0 0.0
    %5566 = vmatprep.subr.mxu0 0.0
    %5567 = vmatpush1.msra.mxu0 0.0
    %5568 = vmatprep.subr.mxu0 0.0
    %5569 = vmatpush1.msra.mxu0 %v1295
    %5570 = vmatprep.subr.mxu0 0.0
    %5571 = vmatpush1.msra.mxu0 %v1292
    %5572 = vmatprep.subr.mxu0 0.0
    %5573 = vmatpush2.msra.mxu0 0.0
    %5574 = vmatprep.subr.mxu0 0.0
    %5575 = vmatpush2.msra.mxu0 0.0
    %5576 = vmatprep.subr.mxu0 0.0
    %5577 = vmatpush2.msra.mxu0 0.0
    %5578 = vmatprep.subr.mxu0 0.0
    %5579 = vmatpush2.msra.mxu0 0.0
    %5580 = vmatprep.subr.mxu0 0.0
    %5581 = vmatpush2.msra.mxu0 0.0
    %5582 = vmatprep.subr.mxu0 0.0
    %5583 = vmatpush2.msra.mxu0 0.0
    %5584 = vmatprep.subr.mxu0 0.0
    %5585 = vmatpush2.msra.mxu0 0.0
    %5586 = vmatprep.subr.mxu0 0.0
    %5587 = vmatpush2.msra.mxu0 0.0
    %5588 = vmatprep.subr.mxu0 0.0
    %5589 = vmatpush2.msra.mxu0 0.0
    %5590 = vmatprep.subr.mxu0 0.0
    %5591 = vmatpush2.msra.mxu0 0.0
    %5592 = vmatprep.subr.mxu0 0.0
    %5593 = vmatpush2.msra.mxu0 0.0
    %5594 = vmatprep.subr.mxu0 0.0
    %5595 = vmatpush2.msra.mxu0 0.0
    %5596 = vmatprep.subr.mxu0 0.0
    %5597 = vmatpush2.msra.mxu0 0.0
    %5598 = vmatprep.subr.mxu0 0.0
    %5599 = vmatpush2.msra.mxu0 0.0
    %5600 = vmatprep.subr.mxu0 0.0
    %5601 = vmatpush2.msra.mxu0 0.0
    %5602 = vmatprep.subr.mxu0 0.0
    %5603 = vmatpush2.msra.mxu0 0.0
    %5604 = vmatprep.mubr.f32.mxu0 0.0
    %5605 = vmatmul.mubr.f32.gmra.mxu0 %v5538
    %v5606 = vpop.f32.mrf.mxu0
    %v5607 = vadd.f32 0.0, %v5606
    %v5608 = vpop.f32.mrf.mxu0
    %5609 = vdwg.mxu0
    %v5611 = vsel %vm5346, %v5390, 0
    %5613 = vmatprep.subr.mxu0 0.0
    %5614 = vmatpush1.msra.mxu0 0.0
    %5615 = vmatprep.subr.mxu0 0.0
    %5616 = vmatpush1.msra.mxu0 0.0
    %5617 = vmatprep.subr.mxu0 0.0
    %5618 = vmatpush1.msra.mxu0 0.0
    %5619 = vmatprep.subr.mxu0 0.0
    %5620 = vmatpush1.msra.mxu0 0.0
    %5621 = vmatprep.subr.mxu0 0.0
    %5622 = vmatpush1.msra.mxu0 0.0
    %5623 = vmatprep.subr.mxu0 0.0
    %5624 = vmatpush1.msra.mxu0 0.0
    %5625 = vmatprep.subr.mxu0 0.0
    %5626 = vmatpush1.msra.mxu0 0.0
    %5627 = vmatprep.subr.mxu0 0.0
    %5628 = vmatpush1.msra.mxu0 0.0
    %5629 = vmatprep.subr.mxu0 0.0
    %5630 = vmatpush1.msra.mxu0 0.0
    %5631 = vmatprep.subr.mxu0 0.0
    %5632 = vmatpush1.msra.mxu0 0.0
    %5633 = vmatprep.subr.mxu0 0.0
    %5634 = vmatpush1.msra.mxu0 0.0
    %5635 = vmatprep.subr.mxu0 0.0
    %5636 = vmatpush1.msra.mxu0 0.0
    %5637 = vmatprep.subr.mxu0 0.0
    %5638 = vmatpush1.msra.mxu0 0.0
    %5639 = vmatprep.subr.mxu0 0.0
    %5640 = vmatpush1.msra.mxu0 0.0
    %5641 = vmatprep.subr.mxu0 0.0
    %5642 = vmatpush1.msra.mxu0 %v1392
    %5643 = vmatprep.subr.mxu0 0.0
    %5644 = vmatpush1.msra.mxu0 %v1389
    %5645 = vmatprep.subr.mxu0 0.0
    %5646 = vmatpush2.msra.mxu0 0.0
    %5647 = vmatprep.subr.mxu0 0.0
    %5648 = vmatpush2.msra.mxu0 0.0
    %5649 = vmatprep.subr.mxu0 0.0
    %5650 = vmatpush2.msra.mxu0 0.0
    %5651 = vmatprep.subr.mxu0 0.0
    %5652 = vmatpush2.msra.mxu0 0.0
    %5653 = vmatprep.subr.mxu0 0.0
    %5654 = vmatpush2.msra.mxu0 0.0
    %5655 = vmatprep.subr.mxu0 0.0
    %5656 = vmatpush2.msra.mxu0 0.0
    %5657 = vmatprep.subr.mxu0 0.0
    %5658 = vmatpush2.msra.mxu0 0.0
    %5659 = vmatprep.subr.mxu0 0.0
    %5660 = vmatpush2.msra.mxu0 0.0
    %5661 = vmatprep.subr.mxu0 0.0
    %5662 = vmatpush2.msra.mxu0 0.0
    %5663 = vmatprep.subr.mxu0 0.0
    %5664 = vmatpush2.msra.mxu0 0.0
    %5665 = vmatprep.subr.mxu0 0.0
    %5666 = vmatpush2.msra.mxu0 0.0
    %5667 = vmatprep.subr.mxu0 0.0
    %5668 = vmatpush2.msra.mxu0 0.0
    %5669 = vmatprep.subr.mxu0 0.0
    %5670 = vmatpush2.msra.mxu0 0.0
    %5671 = vmatprep.subr.mxu0 0.0
    %5672 = vmatpush2.msra.mxu0 0.0
    %5673 = vmatprep.subr.mxu0 0.0
    %5674 = vmatpush2.msra.mxu0 0.0
    %5675 = vmatprep.subr.mxu0 0.0
    %5676 = vmatpush2.msra.mxu0 0.0
    %5677 = vmatprep.mubr.f32.mxu0 0.0
    %5678 = vmatmul.mubr.f32.gmra.mxu0 %v5611
    %v5679 = vpop.f32.mrf.mxu0
    %v5680 = vadd.f32 0.0, %v5679
    %v5681 = vpop.f32.mrf.mxu0
    %5682 = vdwg.mxu0
    %v5683 = vpack.c.bf16 %v5461, %v5461
    %v5684 = vpack.c.bf16 %v5534, %v5534
    %v5685 = vpack.c.bf16 %v5607, %v5607
    %v5686 = vpack.c.bf16 %v5680, %v5680
    %v5691 = vunpack.c.l.b16 %v1883
    %v5692 = vunpack.c.l.b16 %v1884
    %v5693 = vunpack.c.l.b16 %v1885
    %v5694 = vunpack.c.l.b16 %v1886
    %v5695 = vpack.c.b16 %v5692, %v5691
    %v5696 = vpack.c.b16 %v5694, %v5693
    %v5700 = vsel %vm1955, %v5683, 0
    %5702 = vmatprep.subr.bf16.mxu0 0
    %5703 = vmatpush1.bf16.msra.mxu0 0
    %5704 = vmatprep.subr.bf16.mxu0 0
    %5705 = vmatpush1.bf16.msra.mxu0 0
    %5706 = vmatprep.subr.bf16.mxu0 0
    %5707 = vmatpush1.bf16.msra.mxu0 0
    %5708 = vmatprep.subr.bf16.mxu0 0
    %5709 = vmatpush1.bf16.msra.mxu0 0
    %5710 = vmatprep.subr.bf16.mxu0 0
    %5711 = vmatpush1.bf16.msra.mxu0 0
    %5712 = vmatprep.subr.bf16.mxu0 0
    %5713 = vmatpush1.bf16.msra.mxu0 0
    %5714 = vmatprep.subr.bf16.mxu0 0
    %5715 = vmatpush1.bf16.msra.mxu0 %v5696
    %5716 = vmatprep.subr.bf16.mxu0 0
    %5717 = vmatpush1.bf16.msra.mxu0 %v5695
    %5718 = vmatprep.subr.bf16.mxu0 0
    %5719 = vmatpush2.bf16.msra.mxu0 0
    %5720 = vmatprep.subr.bf16.mxu0 0
    %5721 = vmatpush2.bf16.msra.mxu0 0
    %5722 = vmatprep.subr.bf16.mxu0 0
    %5723 = vmatpush2.bf16.msra.mxu0 0
    %5724 = vmatprep.subr.bf16.mxu0 0
    %5725 = vmatpush2.bf16.msra.mxu0 0
    %5726 = vmatprep.subr.bf16.mxu0 0
    %5727 = vmatpush2.bf16.msra.mxu0 0
    %5728 = vmatprep.subr.bf16.mxu0 0
    %5729 = vmatpush2.bf16.msra.mxu0 0
    %5730 = vmatprep.subr.bf16.mxu0 0
    %5731 = vmatpush2.bf16.msra.mxu0 0
    %5732 = vmatprep.subr.bf16.mxu0 0
    %5733 = vmatpush2.bf16.msra.mxu0 0
    %5734 = vmatprep.mubr.bf16.mxu0 0
    %5735 = vmatmul.mubr.bf16.gmra.mxu0 %v5700
    %v5736 = vpop.f32.mrf.mxu0
    %v5737 = vadd.f32 0.0, %v5736
    %v5738 = vpop.f32.mrf.mxu0
    %v5739 = vpop.f32.mrf.mxu0
    %v5740 = vpop.f32.mrf.mxu0
    %5741 = vdwg.mxu0
    %v5746 = vunpack.c.l.b16 %v1887
    %v5747 = vunpack.c.l.b16 %v1888
    %v5748 = vunpack.c.l.b16 %v1889
    %v5749 = vunpack.c.l.b16 %v1890
    %v5750 = vpack.c.b16 %v5747, %v5746
    %v5751 = vpack.c.b16 %v5749, %v5748
    %v5755 = vsel %vm1955, %v5684, 0
    %5757 = vmatprep.subr.bf16.mxu0 0
    %5758 = vmatpush1.bf16.msra.mxu0 0
    %5759 = vmatprep.subr.bf16.mxu0 0
    %5760 = vmatpush1.bf16.msra.mxu0 0
    %5761 = vmatprep.subr.bf16.mxu0 0
    %5762 = vmatpush1.bf16.msra.mxu0 0
    %5763 = vmatprep.subr.bf16.mxu0 0
    %5764 = vmatpush1.bf16.msra.mxu0 0
    %5765 = vmatprep.subr.bf16.mxu0 0
    %5766 = vmatpush1.bf16.msra.mxu0 0
    %5767 = vmatprep.subr.bf16.mxu0 0
    %5768 = vmatpush1.bf16.msra.mxu0 0
    %5769 = vmatprep.subr.bf16.mxu0 0
    %5770 = vmatpush1.bf16.msra.mxu0 %v5751
    %5771 = vmatprep.subr.bf16.mxu0 0
    %5772 = vmatpush1.bf16.msra.mxu0 %v5750
    %5773 = vmatprep.subr.bf16.mxu0 0
    %5774 = vmatpush2.bf16.msra.mxu0 0
    %5775 = vmatprep.subr.bf16.mxu0 0
    %5776 = vmatpush2.bf16.msra.mxu0 0
    %5777 = vmatprep.subr.bf16.mxu0 0
    %5778 = vmatpush2.bf16.msra.mxu0 0
    %5779 = vmatprep.subr.bf16.mxu0 0
    %5780 = vmatpush2.bf16.msra.mxu0 0
    %5781 = vmatprep.subr.bf16.mxu0 0
    %5782 = vmatpush2.bf16.msra.mxu0 0
    %5783 = vmatprep.subr.bf16.mxu0 0
    %5784 = vmatpush2.bf16.msra.mxu0 0
    %5785 = vmatprep.subr.bf16.mxu0 0
    %5786 = vmatpush2.bf16.msra.mxu0 0
    %5787 = vmatprep.subr.bf16.mxu0 0
    %5788 = vmatpush2.bf16.msra.mxu0 0
    %5789 = vmatprep.mubr.bf16.mxu0 0
    %5790 = vmatmul.mubr.bf16.gmra.mxu0 %v5755
    %v5791 = vpop.f32.mrf.mxu0
    %v5792 = vadd.f32 0.0, %v5791
    %v5793 = vpop.f32.mrf.mxu0
    %v5794 = vpop.f32.mrf.mxu0
    %v5795 = vpop.f32.mrf.mxu0
    %5796 = vdwg.mxu0
    %v5801 = vunpack.c.l.b16 %v1891
    %v5802 = vunpack.c.l.b16 %v1892
    %v5803 = vunpack.c.l.b16 %v1893
    %v5804 = vunpack.c.l.b16 %v1894
    %v5805 = vpack.c.b16 %v5802, %v5801
    %v5806 = vpack.c.b16 %v5804, %v5803
    %v5810 = vsel %vm1955, %v5685, 0
    %5812 = vmatprep.subr.bf16.mxu0 0
    %5813 = vmatpush1.bf16.msra.mxu0 0
    %5814 = vmatprep.subr.bf16.mxu0 0
    %5815 = vmatpush1.bf16.msra.mxu0 0
    %5816 = vmatprep.subr.bf16.mxu0 0
    %5817 = vmatpush1.bf16.msra.mxu0 0
    %5818 = vmatprep.subr.bf16.mxu0 0
    %5819 = vmatpush1.bf16.msra.mxu0 0
    %5820 = vmatprep.subr.bf16.mxu0 0
    %5821 = vmatpush1.bf16.msra.mxu0 0
    %5822 = vmatprep.subr.bf16.mxu0 0
    %5823 = vmatpush1.bf16.msra.mxu0 0
    %5824 = vmatprep.subr.bf16.mxu0 0
    %5825 = vmatpush1.bf16.msra.mxu0 %v5806
    %5826 = vmatprep.subr.bf16.mxu0 0
    %5827 = vmatpush1.bf16.msra.mxu0 %v5805
    %5828 = vmatprep.subr.bf16.mxu0 0
    %5829 = vmatpush2.bf16.msra.mxu0 0
    %5830 = vmatprep.subr.bf16.mxu0 0
    %5831 = vmatpush2.bf16.msra.mxu0 0
    %5832 = vmatprep.subr.bf16.mxu0 0
    %5833 = vmatpush2.bf16.msra.mxu0 0
    %5834 = vmatprep.subr.bf16.mxu0 0
    %5835 = vmatpush2.bf16.msra.mxu0 0
    %5836 = vmatprep.subr.bf16.mxu0 0
    %5837 = vmatpush2.bf16.msra.mxu0 0
    %5838 = vmatprep.subr.bf16.mxu0 0
    %5839 = vmatpush2.bf16.msra.mxu0 0
    %5840 = vmatprep.subr.bf16.mxu0 0
    %5841 = vmatpush2.bf16.msra.mxu0 0
    %5842 = vmatprep.subr.bf16.mxu0 0
    %5843 = vmatpush2.bf16.msra.mxu0 0
    %5844 = vmatprep.mubr.bf16.mxu0 0
    %5845 = vmatmul.mubr.bf16.gmra.mxu0 %v5810
    %v5846 = vpop.f32.mrf.mxu0
    %v5847 = vadd.f32 0.0, %v5846
    %v5848 = vpop.f32.mrf.mxu0
    %v5849 = vpop.f32.mrf.mxu0
    %v5850 = vpop.f32.mrf.mxu0
    %5851 = vdwg.mxu0
    %v5856 = vunpack.c.l.b16 %v1895
    %v5857 = vunpack.c.l.b16 %v1896
    %v5858 = vunpack.c.l.b16 %v1897
    %v5859 = vunpack.c.l.b16 %v1898
    %v5860 = vpack.c.b16 %v5857, %v5856
    %v5861 = vpack.c.b16 %v5859, %v5858
    %v5865 = vsel %vm1955, %v5686, 0
    %5867 = vmatprep.subr.bf16.mxu0 0
    %5868 = vmatpush1.bf16.msra.mxu0 0
    %5869 = vmatprep.subr.bf16.mxu0 0
    %5870 = vmatpush1.bf16.msra.mxu0 0
    %5871 = vmatprep.subr.bf16.mxu0 0
    %5872 = vmatpush1.bf16.msra.mxu0 0
    %5873 = vmatprep.subr.bf16.mxu0 0
    %5874 = vmatpush1.bf16.msra.mxu0 0
    %5875 = vmatprep.subr.bf16.mxu0 0
    %5876 = vmatpush1.bf16.msra.mxu0 0
    %5877 = vmatprep.subr.bf16.mxu0 0
    %5878 = vmatpush1.bf16.msra.mxu0 0
    %5879 = vmatprep.subr.bf16.mxu0 0
    %5880 = vmatpush1.bf16.msra.mxu0 %v5861
    %5881 = vmatprep.subr.bf16.mxu0 0
    %5882 = vmatpush1.bf16.msra.mxu0 %v5860
    %5883 = vmatprep.subr.bf16.mxu0 0
    %5884 = vmatpush2.bf16.msra.mxu0 0
    %5885 = vmatprep.subr.bf16.mxu0 0
    %5886 = vmatpush2.bf16.msra.mxu0 0
    %5887 = vmatprep.subr.bf16.mxu0 0
    %5888 = vmatpush2.bf16.msra.mxu0 0
    %5889 = vmatprep.subr.bf16.mxu0 0
    %5890 = vmatpush2.bf16.msra.mxu0 0
    %5891 = vmatprep.subr.bf16.mxu0 0
    %5892 = vmatpush2.bf16.msra.mxu0 0
    %5893 = vmatprep.subr.bf16.mxu0 0
    %5894 = vmatpush2.bf16.msra.mxu0 0
    %5895 = vmatprep.subr.bf16.mxu0 0
    %5896 = vmatpush2.bf16.msra.mxu0 0
    %5897 = vmatprep.subr.bf16.mxu0 0
    %5898 = vmatpush2.bf16.msra.mxu0 0
    %5899 = vmatprep.mubr.bf16.mxu0 0
    %5900 = vmatmul.mubr.bf16.gmra.mxu0 %v5865
    %v5901 = vpop.f32.mrf.mxu0
    %v5902 = vadd.f32 0.0, %v5901
    %v5903 = vpop.f32.mrf.mxu0
    %v5904 = vpop.f32.mrf.mxu0
    %v5905 = vpop.f32.mrf.mxu0
    %5906 = vdwg.mxu0
    %v5907 = vadd.f32 %v5737, %v5792
    %v5908 = vadd.f32 %v5907, %v5847
    %v5909 = vadd.f32 %v5908, %v5902
    %v5910 = vadd.f32 %v229, %v1906
    %v5911 = vadd.f32 %v318, %v1910
    %v5912 = vadd.f32 %v407, %v1914
    %v5913 = vadd.f32 %v496, %v1918
    %v5914 = vadd.f32 %v229, %v1934
    %v5915 = vadd.f32 %v318, %v1938
    %v5916 = vadd.f32 %v407, %v1942
    %v5917 = vadd.f32 %v496, %v1946
    %v5919 = vsel %vm1955, %v5914, 0
    %5921 = vmatprep.subr.mxu0 0.0
    %5922 = vmatpush1.xpose.msra.mxu0 0.0
    %5923 = vmatprep.subr.mxu0 0.0
    %5924 = vmatpush1.xpose.msra.mxu0 0.0
    %5925 = vmatprep.subr.mxu0 0.0
    %5926 = vmatpush1.xpose.msra.mxu0 0.0
    %5927 = vmatprep.subr.mxu0 0.0
    %5928 = vmatpush1.xpose.msra.mxu0 0.0
    %5929 = vmatprep.subr.mxu0 0.0
    %5930 = vmatpush1.xpose.msra.mxu0 0.0
    %5931 = vmatprep.subr.mxu0 0.0
    %5932 = vmatpush1.xpose.msra.mxu0 0.0
    %5933 = vmatprep.subr.mxu0 0.0
    %5934 = vmatpush1.xpose.msra.mxu0 0.0
    %5935 = vmatprep.subr.mxu0 0.0
    %5936 = vmatpush1.xpose.msra.mxu0 0.0
    %5937 = vmatprep.subr.mxu0 0.0
    %5938 = vmatpush1.xpose.msra.mxu0 0.0
    %5939 = vmatprep.subr.mxu0 0.0
    %5940 = vmatpush1.xpose.msra.mxu0 0.0
    %5941 = vmatprep.subr.mxu0 0.0
    %5942 = vmatpush1.xpose.msra.mxu0 0.0
    %5943 = vmatprep.subr.mxu0 0.0
    %5944 = vmatpush1.xpose.msra.mxu0 0.0
    %5945 = vmatprep.subr.mxu0 0.0
    %5946 = vmatpush1.xpose.msra.mxu0 0.0
    %5947 = vmatprep.subr.mxu0 0.0
    %5948 = vmatpush1.xpose.msra.mxu0 %v1966
    %5949 = vmatprep.subr.mxu0 0.0
    %5950 = vmatpush1.xpose.msra.mxu0 %v1963
    %5951 = vmatprep.subr.mxu0 0.0
    %5952 = vmatpush1.xpose.msra.mxu0 %v1960
    %5953 = vmatprep.subr.mxu0 0.0
    %5954 = vmatpush2.xpose.msra.mxu0 0.0
    %5955 = vmatprep.subr.mxu0 0.0
    %5956 = vmatpush2.xpose.msra.mxu0 0.0
    %5957 = vmatprep.subr.mxu0 0.0
    %5958 = vmatpush2.xpose.msra.mxu0 0.0
    %5959 = vmatprep.subr.mxu0 0.0
    %5960 = vmatpush2.xpose.msra.mxu0 0.0
    %5961 = vmatprep.subr.mxu0 0.0
    %5962 = vmatpush2.xpose.msra.mxu0 0.0
    %5963 = vmatprep.subr.mxu0 0.0
    %5964 = vmatpush2.xpose.msra.mxu0 0.0
    %5965 = vmatprep.subr.mxu0 0.0
    %5966 = vmatpush2.xpose.msra.mxu0 0.0
    %5967 = vmatprep.subr.mxu0 0.0
    %5968 = vmatpush2.xpose.msra.mxu0 0.0
    %5969 = vmatprep.subr.mxu0 0.0
    %5970 = vmatpush2.xpose.msra.mxu0 0.0
    %5971 = vmatprep.subr.mxu0 0.0
    %5972 = vmatpush2.xpose.msra.mxu0 0.0
    %5973 = vmatprep.subr.mxu0 0.0
    %5974 = vmatpush2.xpose.msra.mxu0 0.0
    %5975 = vmatprep.subr.mxu0 0.0
    %5976 = vmatpush2.xpose.msra.mxu0 0.0
    %5977 = vmatprep.subr.mxu0 0.0
    %5978 = vmatpush2.xpose.msra.mxu0 0.0
    %5979 = vmatprep.subr.mxu0 0.0
    %5980 = vmatpush2.xpose.msra.mxu0 0.0
    %5981 = vmatprep.subr.mxu0 0.0
    %5982 = vmatpush2.xpose.msra.mxu0 0.0
    %5983 = vmatprep.subr.mxu0 0.0
    %5984 = vmatpush2.xpose.msra.mxu0 0.0
    %5985 = vmatprep.mubr.f32.mxu0 0.0
    %5986 = vmatmul.mubr.f32.gmra.mxu0 %v5919
    %v5987 = vpop.f32.mrf.mxu0
    %v5988 = vadd.f32 0.0, %v5987
    %v5989 = vpop.f32.mrf.mxu0
    %5990 = vdwg.mxu0
    %v5992 = vsel %vm1955, %v5915, 0
    %5994 = vmatprep.subr.mxu0 0.0
    %5995 = vmatpush1.xpose.msra.mxu0 0.0
    %5996 = vmatprep.subr.mxu0 0.0
    %5997 = vmatpush1.xpose.msra.mxu0 0.0
    %5998 = vmatprep.subr.mxu0 0.0
    %5999 = vmatpush1.xpose.msra.mxu0 0.0
    %6000 = vmatprep.subr.mxu0 0.0
    %6001 = vmatpush1.xpose.msra.mxu0 0.0
    %6002 = vmatprep.subr.mxu0 0.0
    %6003 = vmatpush1.xpose.msra.mxu0 0.0
    %6004 = vmatprep.subr.mxu0 0.0
    %6005 = vmatpush1.xpose.msra.mxu0 0.0
    %6006 = vmatprep.subr.mxu0 0.0
    %6007 = vmatpush1.xpose.msra.mxu0 0.0
    %6008 = vmatprep.subr.mxu0 0.0
    %6009 = vmatpush1.xpose.msra.mxu0 0.0
    %6010 = vmatprep.subr.mxu0 0.0
    %6011 = vmatpush1.xpose.msra.mxu0 0.0
    %6012 = vmatprep.subr.mxu0 0.0
    %6013 = vmatpush1.xpose.msra.mxu0 0.0
    %6014 = vmatprep.subr.mxu0 0.0
    %6015 = vmatpush1.xpose.msra.mxu0 0.0
    %6016 = vmatprep.subr.mxu0 0.0
    %6017 = vmatpush1.xpose.msra.mxu0 0.0
    %6018 = vmatprep.subr.mxu0 0.0
    %6019 = vmatpush1.xpose.msra.mxu0 0.0
    %6020 = vmatprep.subr.mxu0 0.0
    %6021 = vmatpush1.xpose.msra.mxu0 %v2048
    %6022 = vmatprep.subr.mxu0 0.0
    %6023 = vmatpush1.xpose.msra.mxu0 %v2045
    %6024 = vmatprep.subr.mxu0 0.0
    %6025 = vmatpush1.xpose.msra.mxu0 %v2042
    %6026 = vmatprep.subr.mxu0 0.0
    %6027 = vmatpush2.xpose.msra.mxu0 0.0
    %6028 = vmatprep.subr.mxu0 0.0
    %6029 = vmatpush2.xpose.msra.mxu0 0.0
    %6030 = vmatprep.subr.mxu0 0.0
    %6031 = vmatpush2.xpose.msra.mxu0 0.0
    %6032 = vmatprep.subr.mxu0 0.0
    %6033 = vmatpush2.xpose.msra.mxu0 0.0
    %6034 = vmatprep.subr.mxu0 0.0
    %6035 = vmatpush2.xpose.msra.mxu0 0.0
    %6036 = vmatprep.subr.mxu0 0.0
    %6037 = vmatpush2.xpose.msra.mxu0 0.0
    %6038 = vmatprep.subr.mxu0 0.0
    %6039 = vmatpush2.xpose.msra.mxu0 0.0
    %6040 = vmatprep.subr.mxu0 0.0
    %6041 = vmatpush2.xpose.msra.mxu0 0.0
    %6042 = vmatprep.subr.mxu0 0.0
    %6043 = vmatpush2.xpose.msra.mxu0 0.0
    %6044 = vmatprep.subr.mxu0 0.0
    %6045 = vmatpush2.xpose.msra.mxu0 0.0
    %6046 = vmatprep.subr.mxu0 0.0
    %6047 = vmatpush2.xpose.msra.mxu0 0.0
    %6048 = vmatprep.subr.mxu0 0.0
    %6049 = vmatpush2.xpose.msra.mxu0 0.0
    %6050 = vmatprep.subr.mxu0 0.0
    %6051 = vmatpush2.xpose.msra.mxu0 0.0
    %6052 = vmatprep.subr.mxu0 0.0
    %6053 = vmatpush2.xpose.msra.mxu0 0.0
    %6054 = vmatprep.subr.mxu0 0.0
    %6055 = vmatpush2.xpose.msra.mxu0 0.0
    %6056 = vmatprep.subr.mxu0 0.0
    %6057 = vmatpush2.xpose.msra.mxu0 0.0
    %6058 = vmatprep.mubr.f32.mxu0 0.0
    %6059 = vmatmul.mubr.f32.gmra.mxu0 %v5992
    %v6060 = vpop.f32.mrf.mxu0
    %v6061 = vadd.f32 0.0, %v6060
    %v6062 = vpop.f32.mrf.mxu0
    %6063 = vdwg.mxu0
    %v6065 = vsel %vm1955, %v5916, 0
    %6067 = vmatprep.subr.mxu0 0.0
    %6068 = vmatpush1.xpose.msra.mxu0 0.0
    %6069 = vmatprep.subr.mxu0 0.0
    %6070 = vmatpush1.xpose.msra.mxu0 0.0
    %6071 = vmatprep.subr.mxu0 0.0
    %6072 = vmatpush1.xpose.msra.mxu0 0.0
    %6073 = vmatprep.subr.mxu0 0.0
    %6074 = vmatpush1.xpose.msra.mxu0 0.0
    %6075 = vmatprep.subr.mxu0 0.0
    %6076 = vmatpush1.xpose.msra.mxu0 0.0
    %6077 = vmatprep.subr.mxu0 0.0
    %6078 = vmatpush1.xpose.msra.mxu0 0.0
    %6079 = vmatprep.subr.mxu0 0.0
    %6080 = vmatpush1.xpose.msra.mxu0 0.0
    %6081 = vmatprep.subr.mxu0 0.0
    %6082 = vmatpush1.xpose.msra.mxu0 0.0
    %6083 = vmatprep.subr.mxu0 0.0
    %6084 = vmatpush1.xpose.msra.mxu0 0.0
    %6085 = vmatprep.subr.mxu0 0.0
    %6086 = vmatpush1.xpose.msra.mxu0 0.0
    %6087 = vmatprep.subr.mxu0 0.0
    %6088 = vmatpush1.xpose.msra.mxu0 0.0
    %6089 = vmatprep.subr.mxu0 0.0
    %6090 = vmatpush1.xpose.msra.mxu0 0.0
    %6091 = vmatprep.subr.mxu0 0.0
    %6092 = vmatpush1.xpose.msra.mxu0 0.0
    %6093 = vmatprep.subr.mxu0 0.0
    %6094 = vmatpush1.xpose.msra.mxu0 %v2130
    %6095 = vmatprep.subr.mxu0 0.0
    %6096 = vmatpush1.xpose.msra.mxu0 %v2127
    %6097 = vmatprep.subr.mxu0 0.0
    %6098 = vmatpush1.xpose.msra.mxu0 %v2124
    %6099 = vmatprep.subr.mxu0 0.0
    %6100 = vmatpush2.xpose.msra.mxu0 0.0
    %6101 = vmatprep.subr.mxu0 0.0
    %6102 = vmatpush2.xpose.msra.mxu0 0.0
    %6103 = vmatprep.subr.mxu0 0.0
    %6104 = vmatpush2.xpose.msra.mxu0 0.0
    %6105 = vmatprep.subr.mxu0 0.0
    %6106 = vmatpush2.xpose.msra.mxu0 0.0
    %6107 = vmatprep.subr.mxu0 0.0
    %6108 = vmatpush2.xpose.msra.mxu0 0.0
    %6109 = vmatprep.subr.mxu0 0.0
    %6110 = vmatpush2.xpose.msra.mxu0 0.0
    %6111 = vmatprep.subr.mxu0 0.0
    %6112 = vmatpush2.xpose.msra.mxu0 0.0
    %6113 = vmatprep.subr.mxu0 0.0
    %6114 = vmatpush2.xpose.msra.mxu0 0.0
    %6115 = vmatprep.subr.mxu0 0.0
    %6116 = vmatpush2.xpose.msra.mxu0 0.0
    %6117 = vmatprep.subr.mxu0 0.0
    %6118 = vmatpush2.xpose.msra.mxu0 0.0
    %6119 = vmatprep.subr.mxu0 0.0
    %6120 = vmatpush2.xpose.msra.mxu0 0.0
    %6121 = vmatprep.subr.mxu0 0.0
    %6122 = vmatpush2.xpose.msra.mxu0 0.0
    %6123 = vmatprep.subr.mxu0 0.0
    %6124 = vmatpush2.xpose.msra.mxu0 0.0
    %6125 = vmatprep.subr.mxu0 0.0
    %6126 = vmatpush2.xpose.msra.mxu0 0.0
    %6127 = vmatprep.subr.mxu0 0.0
    %6128 = vmatpush2.xpose.msra.mxu0 0.0
    %6129 = vmatprep.subr.mxu0 0.0
    %6130 = vmatpush2.xpose.msra.mxu0 0.0
    %6131 = vmatprep.mubr.f32.mxu0 0.0
    %6132 = vmatmul.mubr.f32.gmra.mxu0 %v6065
    %v6133 = vpop.f32.mrf.mxu0
    %v6134 = vadd.f32 0.0, %v6133
    %v6135 = vpop.f32.mrf.mxu0
    %6136 = vdwg.mxu0
    %v6138 = vsel %vm1955, %v5917, 0
    %6140 = vmatprep.subr.mxu0 0.0
    %6141 = vmatpush1.xpose.msra.mxu0 0.0
    %6142 = vmatprep.subr.mxu0 0.0
    %6143 = vmatpush1.xpose.msra.mxu0 0.0
    %6144 = vmatprep.subr.mxu0 0.0
    %6145 = vmatpush1.xpose.msra.mxu0 0.0
    %6146 = vmatprep.subr.mxu0 0.0
    %6147 = vmatpush1.xpose.msra.mxu0 0.0
    %6148 = vmatprep.subr.mxu0 0.0
    %6149 = vmatpush1.xpose.msra.mxu0 0.0
    %6150 = vmatprep.subr.mxu0 0.0
    %6151 = vmatpush1.xpose.msra.mxu0 0.0
    %6152 = vmatprep.subr.mxu0 0.0
    %6153 = vmatpush1.xpose.msra.mxu0 0.0
    %6154 = vmatprep.subr.mxu0 0.0
    %6155 = vmatpush1.xpose.msra.mxu0 0.0
    %6156 = vmatprep.subr.mxu0 0.0
    %6157 = vmatpush1.xpose.msra.mxu0 0.0
    %6158 = vmatprep.subr.mxu0 0.0
    %6159 = vmatpush1.xpose.msra.mxu0 0.0
    %6160 = vmatprep.subr.mxu0 0.0
    %6161 = vmatpush1.xpose.msra.mxu0 0.0
    %6162 = vmatprep.subr.mxu0 0.0
    %6163 = vmatpush1.xpose.msra.mxu0 0.0
    %6164 = vmatprep.subr.mxu0 0.0
    %6165 = vmatpush1.xpose.msra.mxu0 0.0
    %6166 = vmatprep.subr.mxu0 0.0
    %6167 = vmatpush1.xpose.msra.mxu0 %v2212
    %6168 = vmatprep.subr.mxu0 0.0
    %6169 = vmatpush1.xpose.msra.mxu0 %v2209
    %6170 = vmatprep.subr.mxu0 0.0
    %6171 = vmatpush1.xpose.msra.mxu0 %v2206
    %6172 = vmatprep.subr.mxu0 0.0
    %6173 = vmatpush2.xpose.msra.mxu0 0.0
    %6174 = vmatprep.subr.mxu0 0.0
    %6175 = vmatpush2.xpose.msra.mxu0 0.0
    %6176 = vmatprep.subr.mxu0 0.0
    %6177 = vmatpush2.xpose.msra.mxu0 0.0
    %6178 = vmatprep.subr.mxu0 0.0
    %6179 = vmatpush2.xpose.msra.mxu0 0.0
    %6180 = vmatprep.subr.mxu0 0.0
    %6181 = vmatpush2.xpose.msra.mxu0 0.0
    %6182 = vmatprep.subr.mxu0 0.0
    %6183 = vmatpush2.xpose.msra.mxu0 0.0
    %6184 = vmatprep.subr.mxu0 0.0
    %6185 = vmatpush2.xpose.msra.mxu0 0.0
    %6186 = vmatprep.subr.mxu0 0.0
    %6187 = vmatpush2.xpose.msra.mxu0 0.0
    %6188 = vmatprep.subr.mxu0 0.0
    %6189 = vmatpush2.xpose.msra.mxu0 0.0
    %6190 = vmatprep.subr.mxu0 0.0
    %6191 = vmatpush2.xpose.msra.mxu0 0.0
    %6192 = vmatprep.subr.mxu0 0.0
    %6193 = vmatpush2.xpose.msra.mxu0 0.0
    %6194 = vmatprep.subr.mxu0 0.0
    %6195 = vmatpush2.xpose.msra.mxu0 0.0
    %6196 = vmatprep.subr.mxu0 0.0
    %6197 = vmatpush2.xpose.msra.mxu0 0.0
    %6198 = vmatprep.subr.mxu0 0.0
    %6199 = vmatpush2.xpose.msra.mxu0 0.0
    %6200 = vmatprep.subr.mxu0 0.0
    %6201 = vmatpush2.xpose.msra.mxu0 0.0
    %6202 = vmatprep.subr.mxu0 0.0
    %6203 = vmatpush2.xpose.msra.mxu0 0.0
    %6204 = vmatprep.mubr.f32.mxu0 0.0
    %6205 = vmatmul.mubr.f32.gmra.mxu0 %v6138
    %v6206 = vpop.f32.mrf.mxu0
    %v6207 = vadd.f32 0.0, %v6206
    %v6208 = vpop.f32.mrf.mxu0
    %6209 = vdwg.mxu0
    %6210 = vxpose.xlu0.b32.start [1/16] %v5988, 128
    %6211 = vxpose.xlu0.b32.cont [2/16] 0.0, 128
    %6212 = vxpose.xlu0.b32.cont [3/16] 0.0, 128
    %6213 = vxpose.xlu0.b32.cont [4/16] 0.0, 128
    %6214 = vxpose.xlu0.b32.cont [5/16] 0.0, 128
    %6215 = vxpose.xlu0.b32.cont [6/16] 0.0, 128
    %6216 = vxpose.xlu0.b32.cont [7/16] 0.0, 128
    %6217 = vxpose.xlu0.b32.cont [8/16] 0.0, 128
    %6218 = vxpose.xlu0.b32.cont [9/16] 0.0, 128
    %6219 = vxpose.xlu0.b32.cont [10/16] 0.0, 128
    %6220 = vxpose.xlu0.b32.cont [11/16] 0.0, 128
    %6221 = vxpose.xlu0.b32.cont [12/16] 0.0, 128
    %6222 = vxpose.xlu0.b32.cont [13/16] 0.0, 128
    %6223 = vxpose.xlu0.b32.cont [14/16] 0.0, 128
    %6224 = vxpose.xlu0.b32.cont [15/16] 0.0, 128
    %6225 = vxpose.xlu0.b32.end [16/16] 0.0, 128
    %v6226 = vpop.trf.xlu0
    %v6227 = vpop.trf.xlu0
    %v6228 = vpop.trf.xlu0
    %v6229 = vpop.trf.xlu0
    %v6230 = vpop.trf.xlu0
    %v6231 = vpop.trf.xlu0
    %v6232 = vpop.trf.xlu0
    %v6233 = vpop.trf.xlu0
    %v6234 = vpop.trf.xlu0
    %v6235 = vpop.trf.xlu0
    %v6236 = vpop.trf.xlu0
    %v6237 = vpop.trf.xlu0
    %v6238 = vpop.trf.xlu0
    %v6239 = vpop.trf.xlu0
    %v6240 = vpop.trf.xlu0
    %v6241 = vpop.trf.xlu0
    %6242 = vxpose.xlu0.b32.start [1/16] %v6061, 128
    %6243 = vxpose.xlu0.b32.cont [2/16] 0.0, 128
    %6244 = vxpose.xlu0.b32.cont [3/16] 0.0, 128
    %6245 = vxpose.xlu0.b32.cont [4/16] 0.0, 128
    %6246 = vxpose.xlu0.b32.cont [5/16] 0.0, 128
    %6247 = vxpose.xlu0.b32.cont [6/16] 0.0, 128
    %6248 = vxpose.xlu0.b32.cont [7/16] 0.0, 128
    %6249 = vxpose.xlu0.b32.cont [8/16] 0.0, 128
    %6250 = vxpose.xlu0.b32.cont [9/16] 0.0, 128
    %6251 = vxpose.xlu0.b32.cont [10/16] 0.0, 128
    %6252 = vxpose.xlu0.b32.cont [11/16] 0.0, 128
    %6253 = vxpose.xlu0.b32.cont [12/16] 0.0, 128
    %6254 = vxpose.xlu0.b32.cont [13/16] 0.0, 128
    %6255 = vxpose.xlu0.b32.cont [14/16] 0.0, 128
    %6256 = vxpose.xlu0.b32.cont [15/16] 0.0, 128
    %6257 = vxpose.xlu0.b32.end [16/16] 0.0, 128
    %v6258 = vpop.trf.xlu0
    %v6259 = vpop.trf.xlu0
    %v6260 = vpop.trf.xlu0
    %v6261 = vpop.trf.xlu0
    %v6262 = vpop.trf.xlu0
    %v6263 = vpop.trf.xlu0
    %v6264 = vpop.trf.xlu0
    %v6265 = vpop.trf.xlu0
    %v6266 = vpop.trf.xlu0
    %v6267 = vpop.trf.xlu0
    %v6268 = vpop.trf.xlu0
    %v6269 = vpop.trf.xlu0
    %v6270 = vpop.trf.xlu0
    %v6271 = vpop.trf.xlu0
    %v6272 = vpop.trf.xlu0
    %v6273 = vpop.trf.xlu0
    %6274 = vxpose.xlu0.b32.start [1/16] %v6134, 128
    %6275 = vxpose.xlu0.b32.cont [2/16] 0.0, 128
    %6276 = vxpose.xlu0.b32.cont [3/16] 0.0, 128
    %6277 = vxpose.xlu0.b32.cont [4/16] 0.0, 128
    %6278 = vxpose.xlu0.b32.cont [5/16] 0.0, 128
    %6279 = vxpose.xlu0.b32.cont [6/16] 0.0, 128
    %6280 = vxpose.xlu0.b32.cont [7/16] 0.0, 128
    %6281 = vxpose.xlu0.b32.cont [8/16] 0.0, 128
    %6282 = vxpose.xlu0.b32.cont [9/16] 0.0, 128
    %6283 = vxpose.xlu0.b32.cont [10/16] 0.0, 128
    %6284 = vxpose.xlu0.b32.cont [11/16] 0.0, 128
    %6285 = vxpose.xlu0.b32.cont [12/16] 0.0, 128
    %6286 = vxpose.xlu0.b32.cont [13/16] 0.0, 128
    %6287 = vxpose.xlu0.b32.cont [14/16] 0.0, 128
    %6288 = vxpose.xlu0.b32.cont [15/16] 0.0, 128
    %6289 = vxpose.xlu0.b32.end [16/16] 0.0, 128
    %v6290 = vpop.trf.xlu0
    %v6291 = vpop.trf.xlu0
    %v6292 = vpop.trf.xlu0
    %v6293 = vpop.trf.xlu0
    %v6294 = vpop.trf.xlu0
    %v6295 = vpop.trf.xlu0
    %v6296 = vpop.trf.xlu0
    %v6297 = vpop.trf.xlu0
    %v6298 = vpop.trf.xlu0
    %v6299 = vpop.trf.xlu0
    %v6300 = vpop.trf.xlu0
    %v6301 = vpop.trf.xlu0
    %v6302 = vpop.trf.xlu0
    %v6303 = vpop.trf.xlu0
    %v6304 = vpop.trf.xlu0
    %v6305 = vpop.trf.xlu0
    %6306 = vxpose.xlu0.b32.start [1/16] %v6207, 128
    %6307 = vxpose.xlu0.b32.cont [2/16] 0.0, 128
    %6308 = vxpose.xlu0.b32.cont [3/16] 0.0, 128
    %6309 = vxpose.xlu0.b32.cont [4/16] 0.0, 128
    %6310 = vxpose.xlu0.b32.cont [5/16] 0.0, 128
    %6311 = vxpose.xlu0.b32.cont [6/16] 0.0, 128
    %6312 = vxpose.xlu0.b32.cont [7/16] 0.0, 128
    %6313 = vxpose.xlu0.b32.cont [8/16] 0.0, 128
    %6314 = vxpose.xlu0.b32.cont [9/16] 0.0, 128
    %6315 = vxpose.xlu0.b32.cont [10/16] 0.0, 128
    %6316 = vxpose.xlu0.b32.cont [11/16] 0.0, 128
    %6317 = vxpose.xlu0.b32.cont [12/16] 0.0, 128
    %6318 = vxpose.xlu0.b32.cont [13/16] 0.0, 128
    %6319 = vxpose.xlu0.b32.cont [14/16] 0.0, 128
    %6320 = vxpose.xlu0.b32.cont [15/16] 0.0, 128
    %6321 = vxpose.xlu0.b32.end [16/16] 0.0, 128
    %v6322 = vpop.trf.xlu0
    %v6323 = vpop.trf.xlu0
    %v6324 = vpop.trf.xlu0
    %v6325 = vpop.trf.xlu0
    %v6326 = vpop.trf.xlu0
    %v6327 = vpop.trf.xlu0
    %v6328 = vpop.trf.xlu0
    %v6329 = vpop.trf.xlu0
    %v6330 = vpop.trf.xlu0
    %v6331 = vpop.trf.xlu0
    %v6332 = vpop.trf.xlu0
    %v6333 = vpop.trf.xlu0
    %v6334 = vpop.trf.xlu0
    %v6335 = vpop.trf.xlu0
    %v6336 = vpop.trf.xlu0
    %v6337 = vpop.trf.xlu0
    %v6338 = vcombine.low %v6226, %v6290
    %v6339 = vcombine.high %v6226, %v6290
    %v6341 = vunpack.c.l.s4 1983009808
    %v6342 = vunpack.c.0.s8 %v6341
    %v6343 = vlaneseq
    %v6344 = vshrl.u32 %v6343, 7
    %v6345 = vsub.s32 %v6342, %v6344
    %v6346 = vrot.slane %v6338, %v6345
    %v6348 = vunpack.c.l.s4 1983009808
    %v6349 = vunpack.c.0.s8 %v6348
    %v6350 = vlaneseq
    %v6351 = vshrl.u32 %v6350, 7
    %v6352 = vsub.s32 %v6349, %v6351
    %v6353 = vrot.slane %v6339, %v6352
    %v6354 = vcombine.low %v6258, %v6322
    %v6355 = vcombine.high %v6258, %v6322
    %v6357 = vunpack.c.l.s4 1983009808
    %v6358 = vunpack.c.0.s8 %v6357
    %v6359 = vlaneseq
    %v6360 = vshrl.u32 %v6359, 7
    %v6361 = vsub.s32 %v6358, %v6360
    %v6362 = vrot.slane %v6354, %v6361
    %v6364 = vunpack.c.l.s4 1983009808
    %v6365 = vunpack.c.0.s8 %v6364
    %v6366 = vlaneseq
    %v6367 = vshrl.u32 %v6366, 7
    %v6368 = vsub.s32 %v6365, %v6367
    %v6369 = vrot.slane %v6355, %v6368
    %v6370 = vcombine.low %v6346, %v6362
    %v6371 = vcombine.high %v6346, %v6362
    %v6373 = vunpack.c.l.s4 1934713408
    %v6374 = vunpack.c.0.s8 %v6373
    %v6375 = vlaneseq
    %v6376 = vshrl.u32 %v6375, 7
    %v6377 = vsub.s32 %v6374, %v6376
    %v6378 = vrot.slane %v6370, %v6377
    %v6380 = vunpack.c.l.s4 1934713408
    %v6381 = vunpack.c.0.s8 %v6380
    %v6382 = vlaneseq
    %v6383 = vshrl.u32 %v6382, 7
    %v6384 = vsub.s32 %v6381, %v6383
    %v6385 = vrot.slane %v6371, %v6384
    %v6386 = vcombine.low %v6353, %v6369
    %v6387 = vcombine.high %v6353, %v6369
    %v6389 = vunpack.c.l.s4 1934713408
    %v6390 = vunpack.c.0.s8 %v6389
    %v6391 = vlaneseq
    %v6392 = vshrl.u32 %v6391, 7
    %v6393 = vsub.s32 %v6390, %v6392
    %v6394 = vrot.slane %v6386, %v6393
    %v6396 = vunpack.c.l.s4 1934713408
    %v6397 = vunpack.c.0.s8 %v6396
    %v6398 = vlaneseq
    %v6399 = vshrl.u32 %v6398, 7
    %v6400 = vsub.s32 %v6397, %v6399
    %v6401 = vrot.slane %v6387, %v6400
    %v6402 = vcombine.high %v6378, 0.0
    %v6403 = vcombine.high %v6385, 0.0
    %v6404 = vcombine.high %v6394, 0.0
    %v6405 = vcombine.high %v6401, 0.0
    %v6406 = vcombine.low %v6227, %v6291
    %v6407 = vcombine.high %v6227, %v6291
    %v6409 = vunpack.c.l.s4 1983009808
    %v6410 = vunpack.c.0.s8 %v6409
    %v6411 = vlaneseq
    %v6412 = vshrl.u32 %v6411, 7
    %v6413 = vsub.s32 %v6410, %v6412
    %v6414 = vrot.slane %v6406, %v6413
    %v6416 = vunpack.c.l.s4 1983009808
    %v6417 = vunpack.c.0.s8 %v6416
    %v6418 = vlaneseq
    %v6419 = vshrl.u32 %v6418, 7
    %v6420 = vsub.s32 %v6417, %v6419
    %v6421 = vrot.slane %v6407, %v6420
    %v6422 = vcombine.low %v6259, %v6323
    %v6423 = vcombine.high %v6259, %v6323
    %v6425 = vunpack.c.l.s4 1983009808
    %v6426 = vunpack.c.0.s8 %v6425
    %v6427 = vlaneseq
    %v6428 = vshrl.u32 %v6427, 7
    %v6429 = vsub.s32 %v6426, %v6428
    %v6430 = vrot.slane %v6422, %v6429
    %v6432 = vunpack.c.l.s4 1983009808
    %v6433 = vunpack.c.0.s8 %v6432
    %v6434 = vlaneseq
    %v6435 = vshrl.u32 %v6434, 7
    %v6436 = vsub.s32 %v6433, %v6435
    %v6437 = vrot.slane %v6423, %v6436
    %v6438 = vcombine.low %v6414, %v6430
    %v6439 = vcombine.high %v6414, %v6430
    %v6441 = vunpack.c.l.s4 1934713408
    %v6442 = vunpack.c.0.s8 %v6441
    %v6443 = vlaneseq
    %v6444 = vshrl.u32 %v6443, 7
    %v6445 = vsub.s32 %v6442, %v6444
    %v6446 = vrot.slane %v6438, %v6445
    %v6448 = vunpack.c.l.s4 1934713408
    %v6449 = vunpack.c.0.s8 %v6448
    %v6450 = vlaneseq
    %v6451 = vshrl.u32 %v6450, 7
    %v6452 = vsub.s32 %v6449, %v6451
    %v6453 = vrot.slane %v6439, %v6452
    %v6454 = vcombine.low %v6421, %v6437
    %v6455 = vcombine.high %v6421, %v6437
    %v6457 = vunpack.c.l.s4 1934713408
    %v6458 = vunpack.c.0.s8 %v6457
    %v6459 = vlaneseq
    %v6460 = vshrl.u32 %v6459, 7
    %v6461 = vsub.s32 %v6458, %v6460
    %v6462 = vrot.slane %v6454, %v6461
    %v6464 = vunpack.c.l.s4 1934713408
    %v6465 = vunpack.c.0.s8 %v6464
    %v6466 = vlaneseq
    %v6467 = vshrl.u32 %v6466, 7
    %v6468 = vsub.s32 %v6465, %v6467
    %v6469 = vrot.slane %v6455, %v6468
    %v6470 = vcombine.high %v6446, 0.0
    %v6471 = vcombine.high %v6453, 0.0
    %v6472 = vcombine.high %v6462, 0.0
    %v6473 = vcombine.high %v6469, 0.0
    %v6474 = vcombine.low %v6228, %v6292
    %v6475 = vcombine.high %v6228, %v6292
    %v6477 = vunpack.c.l.s4 1983009808
    %v6478 = vunpack.c.0.s8 %v6477
    %v6479 = vlaneseq
    %v6480 = vshrl.u32 %v6479, 7
    %v6481 = vsub.s32 %v6478, %v6480
    %v6482 = vrot.slane %v6474, %v6481
    %v6484 = vunpack.c.l.s4 1983009808
    %v6485 = vunpack.c.0.s8 %v6484
    %v6486 = vlaneseq
    %v6487 = vshrl.u32 %v6486, 7
    %v6488 = vsub.s32 %v6485, %v6487
    %v6489 = vrot.slane %v6475, %v6488
    %v6490 = vcombine.low %v6260, %v6324
    %v6491 = vcombine.high %v6260, %v6324
    %v6493 = vunpack.c.l.s4 1983009808
    %v6494 = vunpack.c.0.s8 %v6493
    %v6495 = vlaneseq
    %v6496 = vshrl.u32 %v6495, 7
    %v6497 = vsub.s32 %v6494, %v6496
    %v6498 = vrot.slane %v6490, %v6497
    %v6500 = vunpack.c.l.s4 1983009808
    %v6501 = vunpack.c.0.s8 %v6500
    %v6502 = vlaneseq
    %v6503 = vshrl.u32 %v6502, 7
    %v6504 = vsub.s32 %v6501, %v6503
    %v6505 = vrot.slane %v6491, %v6504
    %v6506 = vcombine.low %v6482, %v6498
    %v6507 = vcombine.high %v6482, %v6498
    %v6509 = vunpack.c.l.s4 1934713408
    %v6510 = vunpack.c.0.s8 %v6509
    %v6511 = vlaneseq
    %v6512 = vshrl.u32 %v6511, 7
    %v6513 = vsub.s32 %v6510, %v6512
    %v6514 = vrot.slane %v6506, %v6513
    %v6516 = vunpack.c.l.s4 1934713408
    %v6517 = vunpack.c.0.s8 %v6516
    %v6518 = vlaneseq
    %v6519 = vshrl.u32 %v6518, 7
    %v6520 = vsub.s32 %v6517, %v6519
    %v6521 = vrot.slane %v6507, %v6520
    %v6522 = vcombine.low %v6489, %v6505
    %v6523 = vcombine.high %v6489, %v6505
    %v6525 = vunpack.c.l.s4 1934713408
    %v6526 = vunpack.c.0.s8 %v6525
    %v6527 = vlaneseq
    %v6528 = vshrl.u32 %v6527, 7
    %v6529 = vsub.s32 %v6526, %v6528
    %v6530 = vrot.slane %v6522, %v6529
    %v6532 = vunpack.c.l.s4 1934713408
    %v6533 = vunpack.c.0.s8 %v6532
    %v6534 = vlaneseq
    %v6535 = vshrl.u32 %v6534, 7
    %v6536 = vsub.s32 %v6533, %v6535
    %v6537 = vrot.slane %v6523, %v6536
    %v6538 = vcombine.high %v6514, 0.0
    %v6539 = vcombine.high %v6521, 0.0
    %v6540 = vcombine.high %v6530, 0.0
    %v6541 = vcombine.high %v6537, 0.0
    %6542 = vxpose.xlu0.b32.start [1/16] %v6378, 128
    %6543 = vxpose.xlu0.b32.cont [2/16] 0.0, 128
    %6544 = vxpose.xlu0.b32.cont [3/16] 0.0, 128
    %6545 = vxpose.xlu0.b32.cont [4/16] 0.0, 128
    %6546 = vxpose.xlu0.b32.cont [5/16] 0.0, 128
    %6547 = vxpose.xlu0.b32.cont [6/16] 0.0, 128
    %6548 = vxpose.xlu0.b32.cont [7/16] 0.0, 128
    %6549 = vxpose.xlu0.b32.cont [8/16] 0.0, 128
    %6550 = vxpose.xlu0.b32.cont [9/16] 0.0, 128
    %6551 = vxpose.xlu0.b32.cont [10/16] 0.0, 128
    %6552 = vxpose.xlu0.b32.cont [11/16] 0.0, 128
    %6553 = vxpose.xlu0.b32.cont [12/16] 0.0, 128
    %6554 = vxpose.xlu0.b32.cont [13/16] 0.0, 128
    %6555 = vxpose.xlu0.b32.cont [14/16] 0.0, 128
    %6556 = vxpose.xlu0.b32.cont [15/16] 0.0, 128
    %6557 = vxpose.xlu0.b32.end [16/16] 0.0, 128
    %v6558 = vpop.trf.xlu0
    %v6559 = vpop.trf.xlu0
    %v6560 = vpop.trf.xlu0
    %v6561 = vpop.trf.xlu0
    %v6562 = vpop.trf.xlu0
    %v6563 = vpop.trf.xlu0
    %v6564 = vpop.trf.xlu0
    %v6565 = vpop.trf.xlu0
    %v6566 = vpop.trf.xlu0
    %v6567 = vpop.trf.xlu0
    %v6568 = vpop.trf.xlu0
    %v6569 = vpop.trf.xlu0
    %v6570 = vpop.trf.xlu0
    %v6571 = vpop.trf.xlu0
    %v6572 = vpop.trf.xlu0
    %v6573 = vpop.trf.xlu0
    %6574 = vxpose.xlu0.b32.start [1/16] %v6402, 128
    %6575 = vxpose.xlu0.b32.cont [2/16] 0.0, 128
    %6576 = vxpose.xlu0.b32.cont [3/16] 0.0, 128
    %6577 = vxpose.xlu0.b32.cont [4/16] 0.0, 128
    %6578 = vxpose.xlu0.b32.cont [5/16] 0.0, 128
    %6579 = vxpose.xlu0.b32.cont [6/16] 0.0, 128
    %6580 = vxpose.xlu0.b32.cont [7/16] 0.0, 128
    %6581 = vxpose.xlu0.b32.cont [8/16] 0.0, 128
    %6582 = vxpose.xlu0.b32.cont [9/16] 0.0, 128
    %6583 = vxpose.xlu0.b32.cont [10/16] 0.0, 128
    %6584 = vxpose.xlu0.b32.cont [11/16] 0.0, 128
    %6585 = vxpose.xlu0.b32.cont [12/16] 0.0, 128
    %6586 = vxpose.xlu0.b32.cont [13/16] 0.0, 128
    %6587 = vxpose.xlu0.b32.cont [14/16] 0.0, 128
    %6588 = vxpose.xlu0.b32.cont [15/16] 0.0, 128
    %6589 = vxpose.xlu0.b32.end [16/16] 0.0, 128
    %v6590 = vpop.trf.xlu0
    %v6591 = vpop.trf.xlu0
    %v6592 = vpop.trf.xlu0
    %v6593 = vpop.trf.xlu0
    %v6594 = vpop.trf.xlu0
    %v6595 = vpop.trf.xlu0
    %v6596 = vpop.trf.xlu0
    %v6597 = vpop.trf.xlu0
    %v6598 = vpop.trf.xlu0
    %v6599 = vpop.trf.xlu0
    %v6600 = vpop.trf.xlu0
    %v6601 = vpop.trf.xlu0
    %v6602 = vpop.trf.xlu0
    %v6603 = vpop.trf.xlu0
    %v6604 = vpop.trf.xlu0
    %v6605 = vpop.trf.xlu0
    %6606 = vxpose.xlu0.b32.start [1/16] %v6385, 128
    %6607 = vxpose.xlu0.b32.cont [2/16] 0.0, 128
    %6608 = vxpose.xlu0.b32.cont [3/16] 0.0, 128
    %6609 = vxpose.xlu0.b32.cont [4/16] 0.0, 128
    %6610 = vxpose.xlu0.b32.cont [5/16] 0.0, 128
    %6611 = vxpose.xlu0.b32.cont [6/16] 0.0, 128
    %6612 = vxpose.xlu0.b32.cont [7/16] 0.0, 128
    %6613 = vxpose.xlu0.b32.cont [8/16] 0.0, 128
    %6614 = vxpose.xlu0.b32.cont [9/16] 0.0, 128
    %6615 = vxpose.xlu0.b32.cont [10/16] 0.0, 128
    %6616 = vxpose.xlu0.b32.cont [11/16] 0.0, 128
    %6617 = vxpose.xlu0.b32.cont [12/16] 0.0, 128
    %6618 = vxpose.xlu0.b32.cont [13/16] 0.0, 128
    %6619 = vxpose.xlu0.b32.cont [14/16] 0.0, 128
    %6620 = vxpose.xlu0.b32.cont [15/16] 0.0, 128
    %6621 = vxpose.xlu0.b32.end [16/16] 0.0, 128
    %v6622 = vpop.trf.xlu0
    %v6623 = vpop.trf.xlu0
    %v6624 = vpop.trf.xlu0
    %v6625 = vpop.trf.xlu0
    %v6626 = vpop.trf.xlu0
    %v6627 = vpop.trf.xlu0
    %v6628 = vpop.trf.xlu0
    %v6629 = vpop.trf.xlu0
    %v6630 = vpop.trf.xlu0
    %v6631 = vpop.trf.xlu0
    %v6632 = vpop.trf.xlu0
    %v6633 = vpop.trf.xlu0
    %v6634 = vpop.trf.xlu0
    %v6635 = vpop.trf.xlu0
    %v6636 = vpop.trf.xlu0
    %v6637 = vpop.trf.xlu0
    %6638 = vxpose.xlu0.b32.start [1/16] %v6403, 128
    %6639 = vxpose.xlu0.b32.cont [2/16] 0.0, 128
    %6640 = vxpose.xlu0.b32.cont [3/16] 0.0, 128
    %6641 = vxpose.xlu0.b32.cont [4/16] 0.0, 128
    %6642 = vxpose.xlu0.b32.cont [5/16] 0.0, 128
    %6643 = vxpose.xlu0.b32.cont [6/16] 0.0, 128
    %6644 = vxpose.xlu0.b32.cont [7/16] 0.0, 128
    %6645 = vxpose.xlu0.b32.cont [8/16] 0.0, 128
    %6646 = vxpose.xlu0.b32.cont [9/16] 0.0, 128
    %6647 = vxpose.xlu0.b32.cont [10/16] 0.0, 128
    %6648 = vxpose.xlu0.b32.cont [11/16] 0.0, 128
    %6649 = vxpose.xlu0.b32.cont [12/16] 0.0, 128
    %6650 = vxpose.xlu0.b32.cont [13/16] 0.0, 128
    %6651 = vxpose.xlu0.b32.cont [14/16] 0.0, 128
    %6652 = vxpose.xlu0.b32.cont [15/16] 0.0, 128
    %6653 = vxpose.xlu0.b32.end [16/16] 0.0, 128
    %v6654 = vpop.trf.xlu0
    %v6655 = vpop.trf.xlu0
    %v6656 = vpop.trf.xlu0
    %v6657 = vpop.trf.xlu0
    %v6658 = vpop.trf.xlu0
    %v6659 = vpop.trf.xlu0
    %v6660 = vpop.trf.xlu0
    %v6661 = vpop.trf.xlu0
    %v6662 = vpop.trf.xlu0
    %v6663 = vpop.trf.xlu0
    %v6664 = vpop.trf.xlu0
    %v6665 = vpop.trf.xlu0
    %v6666 = vpop.trf.xlu0
    %v6667 = vpop.trf.xlu0
    %v6668 = vpop.trf.xlu0
    %v6669 = vpop.trf.xlu0
    %6670 = vxpose.xlu0.b32.start [1/16] %v6394, 128
    %6671 = vxpose.xlu0.b32.cont [2/16] 0.0, 128
    %6672 = vxpose.xlu0.b32.cont [3/16] 0.0, 128
    %6673 = vxpose.xlu0.b32.cont [4/16] 0.0, 128
    %6674 = vxpose.xlu0.b32.cont [5/16] 0.0, 128
    %6675 = vxpose.xlu0.b32.cont [6/16] 0.0, 128
    %6676 = vxpose.xlu0.b32.cont [7/16] 0.0, 128
    %6677 = vxpose.xlu0.b32.cont [8/16] 0.0, 128
    %6678 = vxpose.xlu0.b32.cont [9/16] 0.0, 128
    %6679 = vxpose.xlu0.b32.cont [10/16] 0.0, 128
    %6680 = vxpose.xlu0.b32.cont [11/16] 0.0, 128
    %6681 = vxpose.xlu0.b32.cont [12/16] 0.0, 128
    %6682 = vxpose.xlu0.b32.cont [13/16] 0.0, 128
    %6683 = vxpose.xlu0.b32.cont [14/16] 0.0, 128
    %6684 = vxpose.xlu0.b32.cont [15/16] 0.0, 128
    %6685 = vxpose.xlu0.b32.end [16/16] 0.0, 128
    %v6686 = vpop.trf.xlu0
    %v6687 = vpop.trf.xlu0
    %v6688 = vpop.trf.xlu0
    %v6689 = vpop.trf.xlu0
    %v6690 = vpop.trf.xlu0
    %v6691 = vpop.trf.xlu0
    %v6692 = vpop.trf.xlu0
    %v6693 = vpop.trf.xlu0
    %v6694 = vpop.trf.xlu0
    %v6695 = vpop.trf.xlu0
    %v6696 = vpop.trf.xlu0
    %v6697 = vpop.trf.xlu0
    %v6698 = vpop.trf.xlu0
    %v6699 = vpop.trf.xlu0
    %v6700 = vpop.trf.xlu0
    %v6701 = vpop.trf.xlu0
    %6702 = vxpose.xlu0.b32.start [1/16] %v6404, 128
    %6703 = vxpose.xlu0.b32.cont [2/16] 0.0, 128
    %6704 = vxpose.xlu0.b32.cont [3/16] 0.0, 128
    %6705 = vxpose.xlu0.b32.cont [4/16] 0.0, 128
    %6706 = vxpose.xlu0.b32.cont [5/16] 0.0, 128
    %6707 = vxpose.xlu0.b32.cont [6/16] 0.0, 128
    %6708 = vxpose.xlu0.b32.cont [7/16] 0.0, 128
    %6709 = vxpose.xlu0.b32.cont [8/16] 0.0, 128
    %6710 = vxpose.xlu0.b32.cont [9/16] 0.0, 128
    %6711 = vxpose.xlu0.b32.cont [10/16] 0.0, 128
    %6712 = vxpose.xlu0.b32.cont [11/16] 0.0, 128
    %6713 = vxpose.xlu0.b32.cont [12/16] 0.0, 128
    %6714 = vxpose.xlu0.b32.cont [13/16] 0.0, 128
    %6715 = vxpose.xlu0.b32.cont [14/16] 0.0, 128
    %6716 = vxpose.xlu0.b32.cont [15/16] 0.0, 128
    %6717 = vxpose.xlu0.b32.end [16/16] 0.0, 128
    %v6718 = vpop.trf.xlu0
    %v6719 = vpop.trf.xlu0
    %v6720 = vpop.trf.xlu0
    %v6721 = vpop.trf.xlu0
    %v6722 = vpop.trf.xlu0
    %v6723 = vpop.trf.xlu0
    %v6724 = vpop.trf.xlu0
    %v6725 = vpop.trf.xlu0
    %v6726 = vpop.trf.xlu0
    %v6727 = vpop.trf.xlu0
    %v6728 = vpop.trf.xlu0
    %v6729 = vpop.trf.xlu0
    %v6730 = vpop.trf.xlu0
    %v6731 = vpop.trf.xlu0
    %v6732 = vpop.trf.xlu0
    %v6733 = vpop.trf.xlu0
    %6734 = vxpose.xlu0.b32.start [1/16] %v6401, 128
    %6735 = vxpose.xlu0.b32.cont [2/16] 0.0, 128
    %6736 = vxpose.xlu0.b32.cont [3/16] 0.0, 128
    %6737 = vxpose.xlu0.b32.cont [4/16] 0.0, 128
    %6738 = vxpose.xlu0.b32.cont [5/16] 0.0, 128
    %6739 = vxpose.xlu0.b32.cont [6/16] 0.0, 128
    %6740 = vxpose.xlu0.b32.cont [7/16] 0.0, 128
    %6741 = vxpose.xlu0.b32.cont [8/16] 0.0, 128
    %6742 = vxpose.xlu0.b32.cont [9/16] 0.0, 128
    %6743 = vxpose.xlu0.b32.cont [10/16] 0.0, 128
    %6744 = vxpose.xlu0.b32.cont [11/16] 0.0, 128
    %6745 = vxpose.xlu0.b32.cont [12/16] 0.0, 128
    %6746 = vxpose.xlu0.b32.cont [13/16] 0.0, 128
    %6747 = vxpose.xlu0.b32.cont [14/16] 0.0, 128
    %6748 = vxpose.xlu0.b32.cont [15/16] 0.0, 128
    %6749 = vxpose.xlu0.b32.end [16/16] 0.0, 128
    %v6750 = vpop.trf.xlu0
    %v6751 = vpop.trf.xlu0
    %v6752 = vpop.trf.xlu0
    %v6753 = vpop.trf.xlu0
    %v6754 = vpop.trf.xlu0
    %v6755 = vpop.trf.xlu0
    %v6756 = vpop.trf.xlu0
    %v6757 = vpop.trf.xlu0
    %v6758 = vpop.trf.xlu0
    %v6759 = vpop.trf.xlu0
    %v6760 = vpop.trf.xlu0
    %v6761 = vpop.trf.xlu0
    %v6762 = vpop.trf.xlu0
    %v6763 = vpop.trf.xlu0
    %v6764 = vpop.trf.xlu0
    %v6765 = vpop.trf.xlu0
    %6766 = vxpose.xlu0.b32.start [1/16] %v6405, 128
    %6767 = vxpose.xlu0.b32.cont [2/16] 0.0, 128
    %6768 = vxpose.xlu0.b32.cont [3/16] 0.0, 128
    %6769 = vxpose.xlu0.b32.cont [4/16] 0.0, 128
    %6770 = vxpose.xlu0.b32.cont [5/16] 0.0, 128
    %6771 = vxpose.xlu0.b32.cont [6/16] 0.0, 128
    %6772 = vxpose.xlu0.b32.cont [7/16] 0.0, 128
    %6773 = vxpose.xlu0.b32.cont [8/16] 0.0, 128
    %6774 = vxpose.xlu0.b32.cont [9/16] 0.0, 128
    %6775 = vxpose.xlu0.b32.cont [10/16] 0.0, 128
    %6776 = vxpose.xlu0.b32.cont [11/16] 0.0, 128
    %6777 = vxpose.xlu0.b32.cont [12/16] 0.0, 128
    %6778 = vxpose.xlu0.b32.cont [13/16] 0.0, 128
    %6779 = vxpose.xlu0.b32.cont [14/16] 0.0, 128
    %6780 = vxpose.xlu0.b32.cont [15/16] 0.0, 128
    %6781 = vxpose.xlu0.b32.end [16/16] 0.0, 128
    %v6782 = vpop.trf.xlu0
    %v6783 = vpop.trf.xlu0
    %v6784 = vpop.trf.xlu0
    %v6785 = vpop.trf.xlu0
    %v6786 = vpop.trf.xlu0
    %v6787 = vpop.trf.xlu0
    %v6788 = vpop.trf.xlu0
    %v6789 = vpop.trf.xlu0
    %v6790 = vpop.trf.xlu0
    %v6791 = vpop.trf.xlu0
    %v6792 = vpop.trf.xlu0
    %v6793 = vpop.trf.xlu0
    %v6794 = vpop.trf.xlu0
    %v6795 = vpop.trf.xlu0
    %v6796 = vpop.trf.xlu0
    %v6797 = vpop.trf.xlu0
    %6798 = vxpose.xlu0.b32.start [1/16] %v6446, 128
    %6799 = vxpose.xlu0.b32.cont [2/16] 0.0, 128
    %6800 = vxpose.xlu0.b32.cont [3/16] 0.0, 128
    %6801 = vxpose.xlu0.b32.cont [4/16] 0.0, 128
    %6802 = vxpose.xlu0.b32.cont [5/16] 0.0, 128
    %6803 = vxpose.xlu0.b32.cont [6/16] 0.0, 128
    %6804 = vxpose.xlu0.b32.cont [7/16] 0.0, 128
    %6805 = vxpose.xlu0.b32.cont [8/16] 0.0, 128
    %6806 = vxpose.xlu0.b32.cont [9/16] 0.0, 128
    %6807 = vxpose.xlu0.b32.cont [10/16] 0.0, 128
    %6808 = vxpose.xlu0.b32.cont [11/16] 0.0, 128
    %6809 = vxpose.xlu0.b32.cont [12/16] 0.0, 128
    %6810 = vxpose.xlu0.b32.cont [13/16] 0.0, 128
    %6811 = vxpose.xlu0.b32.cont [14/16] 0.0, 128
    %6812 = vxpose.xlu0.b32.cont [15/16] 0.0, 128
    %6813 = vxpose.xlu0.b32.end [16/16] 0.0, 128
    %v6814 = vpop.trf.xlu0
    %v6815 = vpop.trf.xlu0
    %v6816 = vpop.trf.xlu0
    %v6817 = vpop.trf.xlu0
    %v6818 = vpop.trf.xlu0
    %v6819 = vpop.trf.xlu0
    %v6820 = vpop.trf.xlu0
    %v6821 = vpop.trf.xlu0
    %v6822 = vpop.trf.xlu0
    %v6823 = vpop.trf.xlu0
    %v6824 = vpop.trf.xlu0
    %v6825 = vpop.trf.xlu0
    %v6826 = vpop.trf.xlu0
    %v6827 = vpop.trf.xlu0
    %v6828 = vpop.trf.xlu0
    %v6829 = vpop.trf.xlu0
    %6830 = vxpose.xlu0.b32.start [1/16] %v6470, 128
    %6831 = vxpose.xlu0.b32.cont [2/16] 0.0, 128
    %6832 = vxpose.xlu0.b32.cont [3/16] 0.0, 128
    %6833 = vxpose.xlu0.b32.cont [4/16] 0.0, 128
    %6834 = vxpose.xlu0.b32.cont [5/16] 0.0, 128
    %6835 = vxpose.xlu0.b32.cont [6/16] 0.0, 128
    %6836 = vxpose.xlu0.b32.cont [7/16] 0.0, 128
    %6837 = vxpose.xlu0.b32.cont [8/16] 0.0, 128
    %6838 = vxpose.xlu0.b32.cont [9/16] 0.0, 128
    %6839 = vxpose.xlu0.b32.cont [10/16] 0.0, 128
    %6840 = vxpose.xlu0.b32.cont [11/16] 0.0, 128
    %6841 = vxpose.xlu0.b32.cont [12/16] 0.0, 128
    %6842 = vxpose.xlu0.b32.cont [13/16] 0.0, 128
    %6843 = vxpose.xlu0.b32.cont [14/16] 0.0, 128
    %6844 = vxpose.xlu0.b32.cont [15/16] 0.0, 128
    %6845 = vxpose.xlu0.b32.end [16/16] 0.0, 128
    %v6846 = vpop.trf.xlu0
    %v6847 = vpop.trf.xlu0
    %v6848 = vpop.trf.xlu0
    %v6849 = vpop.trf.xlu0
    %v6850 = vpop.trf.xlu0
    %v6851 = vpop.trf.xlu0
    %v6852 = vpop.trf.xlu0
    %v6853 = vpop.trf.xlu0
    %v6854 = vpop.trf.xlu0
    %v6855 = vpop.trf.xlu0
    %v6856 = vpop.trf.xlu0
    %v6857 = vpop.trf.xlu0
    %v6858 = vpop.trf.xlu0
    %v6859 = vpop.trf.xlu0
    %v6860 = vpop.trf.xlu0
    %v6861 = vpop.trf.xlu0
    %6862 = vxpose.xlu0.b32.start [1/16] %v6453, 128
    %6863 = vxpose.xlu0.b32.cont [2/16] 0.0, 128
    %6864 = vxpose.xlu0.b32.cont [3/16] 0.0, 128
    %6865 = vxpose.xlu0.b32.cont [4/16] 0.0, 128
    %6866 = vxpose.xlu0.b32.cont [5/16] 0.0, 128
    %6867 = vxpose.xlu0.b32.cont [6/16] 0.0, 128
    %6868 = vxpose.xlu0.b32.cont [7/16] 0.0, 128
    %6869 = vxpose.xlu0.b32.cont [8/16] 0.0, 128
    %6870 = vxpose.xlu0.b32.cont [9/16] 0.0, 128
    %6871 = vxpose.xlu0.b32.cont [10/16] 0.0, 128
    %6872 = vxpose.xlu0.b32.cont [11/16] 0.0, 128
    %6873 = vxpose.xlu0.b32.cont [12/16] 0.0, 128
    %6874 = vxpose.xlu0.b32.cont [13/16] 0.0, 128
    %6875 = vxpose.xlu0.b32.cont [14/16] 0.0, 128
    %6876 = vxpose.xlu0.b32.cont [15/16] 0.0, 128
    %6877 = vxpose.xlu0.b32.end [16/16] 0.0, 128
    %v6878 = vpop.trf.xlu0
    %v6879 = vpop.trf.xlu0
    %v6880 = vpop.trf.xlu0
    %v6881 = vpop.trf.xlu0
    %v6882 = vpop.trf.xlu0
    %v6883 = vpop.trf.xlu0
    %v6884 = vpop.trf.xlu0
    %v6885 = vpop.trf.xlu0
    %v6886 = vpop.trf.xlu0
    %v6887 = vpop.trf.xlu0
    %v6888 = vpop.trf.xlu0
    %v6889 = vpop.trf.xlu0
    %v6890 = vpop.trf.xlu0
    %v6891 = vpop.trf.xlu0
    %v6892 = vpop.trf.xlu0
    %v6893 = vpop.trf.xlu0
    %6894 = vxpose.xlu0.b32.start [1/16] %v6471, 128
    %6895 = vxpose.xlu0.b32.cont [2/16] 0.0, 128
    %6896 = vxpose.xlu0.b32.cont [3/16] 0.0, 128
    %6897 = vxpose.xlu0.b32.cont [4/16] 0.0, 128
    %6898 = vxpose.xlu0.b32.cont [5/16] 0.0, 128
    %6899 = vxpose.xlu0.b32.cont [6/16] 0.0, 128
    %6900 = vxpose.xlu0.b32.cont [7/16] 0.0, 128
    %6901 = vxpose.xlu0.b32.cont [8/16] 0.0, 128
    %6902 = vxpose.xlu0.b32.cont [9/16] 0.0, 128
    %6903 = vxpose.xlu0.b32.cont [10/16] 0.0, 128
    %6904 = vxpose.xlu0.b32.cont [11/16] 0.0, 128
    %6905 = vxpose.xlu0.b32.cont [12/16] 0.0, 128
    %6906 = vxpose.xlu0.b32.cont [13/16] 0.0, 128
    %6907 = vxpose.xlu0.b32.cont [14/16] 0.0, 128
    %6908 = vxpose.xlu0.b32.cont [15/16] 0.0, 128
    %6909 = vxpose.xlu0.b32.end [16/16] 0.0, 128
    %v6910 = vpop.trf.xlu0
    %v6911 = vpop.trf.xlu0
    %v6912 = vpop.trf.xlu0
    %v6913 = vpop.trf.xlu0
    %v6914 = vpop.trf.xlu0
    %v6915 = vpop.trf.xlu0
    %v6916 = vpop.trf.xlu0
    %v6917 = vpop.trf.xlu0
    %v6918 = vpop.trf.xlu0
    %v6919 = vpop.trf.xlu0
    %v6920 = vpop.trf.xlu0
    %v6921 = vpop.trf.xlu0
    %v6922 = vpop.trf.xlu0
    %v6923 = vpop.trf.xlu0
    %v6924 = vpop.trf.xlu0
    %v6925 = vpop.trf.xlu0
    %6926 = vxpose.xlu0.b32.start [1/16] %v6462, 128
    %6927 = vxpose.xlu0.b32.cont [2/16] 0.0, 128
    %6928 = vxpose.xlu0.b32.cont [3/16] 0.0, 128
    %6929 = vxpose.xlu0.b32.cont [4/16] 0.0, 128
    %6930 = vxpose.xlu0.b32.cont [5/16] 0.0, 128
    %6931 = vxpose.xlu0.b32.cont [6/16] 0.0, 128
    %6932 = vxpose.xlu0.b32.cont [7/16] 0.0, 128
    %6933 = vxpose.xlu0.b32.cont [8/16] 0.0, 128
    %6934 = vxpose.xlu0.b32.cont [9/16] 0.0, 128
    %6935 = vxpose.xlu0.b32.cont [10/16] 0.0, 128
    %6936 = vxpose.xlu0.b32.cont [11/16] 0.0, 128
    %6937 = vxpose.xlu0.b32.cont [12/16] 0.0, 128
    %6938 = vxpose.xlu0.b32.cont [13/16] 0.0, 128
    %6939 = vxpose.xlu0.b32.cont [14/16] 0.0, 128
    %6940 = vxpose.xlu0.b32.cont [15/16] 0.0, 128
    %6941 = vxpose.xlu0.b32.end [16/16] 0.0, 128
    %v6942 = vpop.trf.xlu0
    %v6943 = vpop.trf.xlu0
    %v6944 = vpop.trf.xlu0
    %v6945 = vpop.trf.xlu0
    %v6946 = vpop.trf.xlu0
    %v6947 = vpop.trf.xlu0
    %v6948 = vpop.trf.xlu0
    %v6949 = vpop.trf.xlu0
    %v6950 = vpop.trf.xlu0
    %v6951 = vpop.trf.xlu0
    %v6952 = vpop.trf.xlu0
    %v6953 = vpop.trf.xlu0
    %v6954 = vpop.trf.xlu0
    %v6955 = vpop.trf.xlu0
    %v6956 = vpop.trf.xlu0
    %v6957 = vpop.trf.xlu0
    %6958 = vxpose.xlu0.b32.start [1/16] %v6472, 128
    %6959 = vxpose.xlu0.b32.cont [2/16] 0.0, 128
    %6960 = vxpose.xlu0.b32.cont [3/16] 0.0, 128
    %6961 = vxpose.xlu0.b32.cont [4/16] 0.0, 128
    %6962 = vxpose.xlu0.b32.cont [5/16] 0.0, 128
    %6963 = vxpose.xlu0.b32.cont [6/16] 0.0, 128
    %6964 = vxpose.xlu0.b32.cont [7/16] 0.0, 128
    %6965 = vxpose.xlu0.b32.cont [8/16] 0.0, 128
    %6966 = vxpose.xlu0.b32.cont [9/16] 0.0, 128
    %6967 = vxpose.xlu0.b32.cont [10/16] 0.0, 128
    %6968 = vxpose.xlu0.b32.cont [11/16] 0.0, 128
    %6969 = vxpose.xlu0.b32.cont [12/16] 0.0, 128
    %6970 = vxpose.xlu0.b32.cont [13/16] 0.0, 128
    %6971 = vxpose.xlu0.b32.cont [14/16] 0.0, 128
    %6972 = vxpose.xlu0.b32.cont [15/16] 0.0, 128
    %6973 = vxpose.xlu0.b32.end [16/16] 0.0, 128
    %v6974 = vpop.trf.xlu0
    %v6975 = vpop.trf.xlu0
    %v6976 = vpop.trf.xlu0
    %v6977 = vpop.trf.xlu0
    %v6978 = vpop.trf.xlu0
    %v6979 = vpop.trf.xlu0
    %v6980 = vpop.trf.xlu0
    %v6981 = vpop.trf.xlu0
    %v6982 = vpop.trf.xlu0
    %v6983 = vpop.trf.xlu0
    %v6984 = vpop.trf.xlu0
    %v6985 = vpop.trf.xlu0
    %v6986 = vpop.trf.xlu0
    %v6987 = vpop.trf.xlu0
    %v6988 = vpop.trf.xlu0
    %v6989 = vpop.trf.xlu0
    %6990 = vxpose.xlu0.b32.start [1/16] %v6469, 128
    %6991 = vxpose.xlu0.b32.cont [2/16] 0.0, 128
    %6992 = vxpose.xlu0.b32.cont [3/16] 0.0, 128
    %6993 = vxpose.xlu0.b32.cont [4/16] 0.0, 128
    %6994 = vxpose.xlu0.b32.cont [5/16] 0.0, 128
    %6995 = vxpose.xlu0.b32.cont [6/16] 0.0, 128
    %6996 = vxpose.xlu0.b32.cont [7/16] 0.0, 128
    %6997 = vxpose.xlu0.b32.cont [8/16] 0.0, 128
    %6998 = vxpose.xlu0.b32.cont [9/16] 0.0, 128
    %6999 = vxpose.xlu0.b32.cont [10/16] 0.0, 128
    %7000 = vxpose.xlu0.b32.cont [11/16] 0.0, 128
    %7001 = vxpose.xlu0.b32.cont [12/16] 0.0, 128
    %7002 = vxpose.xlu0.b32.cont [13/16] 0.0, 128
    %7003 = vxpose.xlu0.b32.cont [14/16] 0.0, 128
    %7004 = vxpose.xlu0.b32.cont [15/16] 0.0, 128
    %7005 = vxpose.xlu0.b32.end [16/16] 0.0, 128
    %v7006 = vpop.trf.xlu0
    %v7007 = vpop.trf.xlu0
    %v7008 = vpop.trf.xlu0
    %v7009 = vpop.trf.xlu0
    %v7010 = vpop.trf.xlu0
    %v7011 = vpop.trf.xlu0
    %v7012 = vpop.trf.xlu0
    %v7013 = vpop.trf.xlu0
    %v7014 = vpop.trf.xlu0
    %v7015 = vpop.trf.xlu0
    %v7016 = vpop.trf.xlu0
    %v7017 = vpop.trf.xlu0
    %v7018 = vpop.trf.xlu0
    %v7019 = vpop.trf.xlu0
    %v7020 = vpop.trf.xlu0
    %v7021 = vpop.trf.xlu0
    %7022 = vxpose.xlu0.b32.start [1/16] %v6473, 128
    %7023 = vxpose.xlu0.b32.cont [2/16] 0.0, 128
    %7024 = vxpose.xlu0.b32.cont [3/16] 0.0, 128
    %7025 = vxpose.xlu0.b32.cont [4/16] 0.0, 128
    %7026 = vxpose.xlu0.b32.cont [5/16] 0.0, 128
    %7027 = vxpose.xlu0.b32.cont [6/16] 0.0, 128
    %7028 = vxpose.xlu0.b32.cont [7/16] 0.0, 128
    %7029 = vxpose.xlu0.b32.cont [8/16] 0.0, 128
    %7030 = vxpose.xlu0.b32.cont [9/16] 0.0, 128
    %7031 = vxpose.xlu0.b32.cont [10/16] 0.0, 128
    %7032 = vxpose.xlu0.b32.cont [11/16] 0.0, 128
    %7033 = vxpose.xlu0.b32.cont [12/16] 0.0, 128
    %7034 = vxpose.xlu0.b32.cont [13/16] 0.0, 128
    %7035 = vxpose.xlu0.b32.cont [14/16] 0.0, 128
    %7036 = vxpose.xlu0.b32.cont [15/16] 0.0, 128
    %7037 = vxpose.xlu0.b32.end [16/16] 0.0, 128
    %v7038 = vpop.trf.xlu0
    %v7039 = vpop.trf.xlu0
    %v7040 = vpop.trf.xlu0
    %v7041 = vpop.trf.xlu0
    %v7042 = vpop.trf.xlu0
    %v7043 = vpop.trf.xlu0
    %v7044 = vpop.trf.xlu0
    %v7045 = vpop.trf.xlu0
    %v7046 = vpop.trf.xlu0
    %v7047 = vpop.trf.xlu0
    %v7048 = vpop.trf.xlu0
    %v7049 = vpop.trf.xlu0
    %v7050 = vpop.trf.xlu0
    %v7051 = vpop.trf.xlu0
    %v7052 = vpop.trf.xlu0
    %v7053 = vpop.trf.xlu0
    %7054 = vxpose.xlu0.b32.start [1/16] %v6514, 128
    %7055 = vxpose.xlu0.b32.cont [2/16] 0.0, 128
    %7056 = vxpose.xlu0.b32.cont [3/16] 0.0, 128
    %7057 = vxpose.xlu0.b32.cont [4/16] 0.0, 128
    %7058 = vxpose.xlu0.b32.cont [5/16] 0.0, 128
    %7059 = vxpose.xlu0.b32.cont [6/16] 0.0, 128
    %7060 = vxpose.xlu0.b32.cont [7/16] 0.0, 128
    %7061 = vxpose.xlu0.b32.cont [8/16] 0.0, 128
    %7062 = vxpose.xlu0.b32.cont [9/16] 0.0, 128
    %7063 = vxpose.xlu0.b32.cont [10/16] 0.0, 128
    %7064 = vxpose.xlu0.b32.cont [11/16] 0.0, 128
    %7065 = vxpose.xlu0.b32.cont [12/16] 0.0, 128
    %7066 = vxpose.xlu0.b32.cont [13/16] 0.0, 128
    %7067 = vxpose.xlu0.b32.cont [14/16] 0.0, 128
    %7068 = vxpose.xlu0.b32.cont [15/16] 0.0, 128
    %7069 = vxpose.xlu0.b32.end [16/16] 0.0, 128
    %v7070 = vpop.trf.xlu0
    %v7071 = vpop.trf.xlu0
    %v7072 = vpop.trf.xlu0
    %v7073 = vpop.trf.xlu0
    %v7074 = vpop.trf.xlu0
    %v7075 = vpop.trf.xlu0
    %v7076 = vpop.trf.xlu0
    %v7077 = vpop.trf.xlu0
    %v7078 = vpop.trf.xlu0
    %v7079 = vpop.trf.xlu0
    %v7080 = vpop.trf.xlu0
    %v7081 = vpop.trf.xlu0
    %v7082 = vpop.trf.xlu0
    %v7083 = vpop.trf.xlu0
    %v7084 = vpop.trf.xlu0
    %v7085 = vpop.trf.xlu0
    %7086 = vxpose.xlu0.b32.start [1/16] %v6538, 128
    %7087 = vxpose.xlu0.b32.cont [2/16] 0.0, 128
    %7088 = vxpose.xlu0.b32.cont [3/16] 0.0, 128
    %7089 = vxpose.xlu0.b32.cont [4/16] 0.0, 128
    %7090 = vxpose.xlu0.b32.cont [5/16] 0.0, 128
    %7091 = vxpose.xlu0.b32.cont [6/16] 0.0, 128
    %7092 = vxpose.xlu0.b32.cont [7/16] 0.0, 128
    %7093 = vxpose.xlu0.b32.cont [8/16] 0.0, 128
    %7094 = vxpose.xlu0.b32.cont [9/16] 0.0, 128
    %7095 = vxpose.xlu0.b32.cont [10/16] 0.0, 128
    %7096 = vxpose.xlu0.b32.cont [11/16] 0.0, 128
    %7097 = vxpose.xlu0.b32.cont [12/16] 0.0, 128
    %7098 = vxpose.xlu0.b32.cont [13/16] 0.0, 128
    %7099 = vxpose.xlu0.b32.cont [14/16] 0.0, 128
    %7100 = vxpose.xlu0.b32.cont [15/16] 0.0, 128
    %7101 = vxpose.xlu0.b32.end [16/16] 0.0, 128
    %v7102 = vpop.trf.xlu0
    %v7103 = vpop.trf.xlu0
    %v7104 = vpop.trf.xlu0
    %v7105 = vpop.trf.xlu0
    %v7106 = vpop.trf.xlu0
    %v7107 = vpop.trf.xlu0
    %v7108 = vpop.trf.xlu0
    %v7109 = vpop.trf.xlu0
    %v7110 = vpop.trf.xlu0
    %v7111 = vpop.trf.xlu0
    %v7112 = vpop.trf.xlu0
    %v7113 = vpop.trf.xlu0
    %v7114 = vpop.trf.xlu0
    %v7115 = vpop.trf.xlu0
    %v7116 = vpop.trf.xlu0
    %v7117 = vpop.trf.xlu0
    %7118 = vxpose.xlu0.b32.start [1/16] %v6521, 128
    %7119 = vxpose.xlu0.b32.cont [2/16] 0.0, 128
    %7120 = vxpose.xlu0.b32.cont [3/16] 0.0, 128
    %7121 = vxpose.xlu0.b32.cont [4/16] 0.0, 128
    %7122 = vxpose.xlu0.b32.cont [5/16] 0.0, 128
    %7123 = vxpose.xlu0.b32.cont [6/16] 0.0, 128
    %7124 = vxpose.xlu0.b32.cont [7/16] 0.0, 128
    %7125 = vxpose.xlu0.b32.cont [8/16] 0.0, 128
    %7126 = vxpose.xlu0.b32.cont [9/16] 0.0, 128
    %7127 = vxpose.xlu0.b32.cont [10/16] 0.0, 128
    %7128 = vxpose.xlu0.b32.cont [11/16] 0.0, 128
    %7129 = vxpose.xlu0.b32.cont [12/16] 0.0, 128
    %7130 = vxpose.xlu0.b32.cont [13/16] 0.0, 128
    %7131 = vxpose.xlu0.b32.cont [14/16] 0.0, 128
    %7132 = vxpose.xlu0.b32.cont [15/16] 0.0, 128
    %7133 = vxpose.xlu0.b32.end [16/16] 0.0, 128
    %v7134 = vpop.trf.xlu0
    %v7135 = vpop.trf.xlu0
    %v7136 = vpop.trf.xlu0
    %v7137 = vpop.trf.xlu0
    %v7138 = vpop.trf.xlu0
    %v7139 = vpop.trf.xlu0
    %v7140 = vpop.trf.xlu0
    %v7141 = vpop.trf.xlu0
    %v7142 = vpop.trf.xlu0
    %v7143 = vpop.trf.xlu0
    %v7144 = vpop.trf.xlu0
    %v7145 = vpop.trf.xlu0
    %v7146 = vpop.trf.xlu0
    %v7147 = vpop.trf.xlu0
    %v7148 = vpop.trf.xlu0
    %v7149 = vpop.trf.xlu0
    %7150 = vxpose.xlu0.b32.start [1/16] %v6539, 128
    %7151 = vxpose.xlu0.b32.cont [2/16] 0.0, 128
    %7152 = vxpose.xlu0.b32.cont [3/16] 0.0, 128
    %7153 = vxpose.xlu0.b32.cont [4/16] 0.0, 128
    %7154 = vxpose.xlu0.b32.cont [5/16] 0.0, 128
    %7155 = vxpose.xlu0.b32.cont [6/16] 0.0, 128
    %7156 = vxpose.xlu0.b32.cont [7/16] 0.0, 128
    %7157 = vxpose.xlu0.b32.cont [8/16] 0.0, 128
    %7158 = vxpose.xlu0.b32.cont [9/16] 0.0, 128
    %7159 = vxpose.xlu0.b32.cont [10/16] 0.0, 128
    %7160 = vxpose.xlu0.b32.cont [11/16] 0.0, 128
    %7161 = vxpose.xlu0.b32.cont [12/16] 0.0, 128
    %7162 = vxpose.xlu0.b32.cont [13/16] 0.0, 128
    %7163 = vxpose.xlu0.b32.cont [14/16] 0.0, 128
    %7164 = vxpose.xlu0.b32.cont [15/16] 0.0, 128
    %7165 = vxpose.xlu0.b32.end [16/16] 0.0, 128
    %v7166 = vpop.trf.xlu0
    %v7167 = vpop.trf.xlu0
    %v7168 = vpop.trf.xlu0
    %v7169 = vpop.trf.xlu0
    %v7170 = vpop.trf.xlu0
    %v7171 = vpop.trf.xlu0
    %v7172 = vpop.trf.xlu0
    %v7173 = vpop.trf.xlu0
    %v7174 = vpop.trf.xlu0
    %v7175 = vpop.trf.xlu0
    %v7176 = vpop.trf.xlu0
    %v7177 = vpop.trf.xlu0
    %v7178 = vpop.trf.xlu0
    %v7179 = vpop.trf.xlu0
    %v7180 = vpop.trf.xlu0
    %v7181 = vpop.trf.xlu0
    %7182 = vxpose.xlu0.b32.start [1/16] %v6530, 128
    %7183 = vxpose.xlu0.b32.cont [2/16] 0.0, 128
    %7184 = vxpose.xlu0.b32.cont [3/16] 0.0, 128
    %7185 = vxpose.xlu0.b32.cont [4/16] 0.0, 128
    %7186 = vxpose.xlu0.b32.cont [5/16] 0.0, 128
    %7187 = vxpose.xlu0.b32.cont [6/16] 0.0, 128
    %7188 = vxpose.xlu0.b32.cont [7/16] 0.0, 128
    %7189 = vxpose.xlu0.b32.cont [8/16] 0.0, 128
    %7190 = vxpose.xlu0.b32.cont [9/16] 0.0, 128
    %7191 = vxpose.xlu0.b32.cont [10/16] 0.0, 128
    %7192 = vxpose.xlu0.b32.cont [11/16] 0.0, 128
    %7193 = vxpose.xlu0.b32.cont [12/16] 0.0, 128
    %7194 = vxpose.xlu0.b32.cont [13/16] 0.0, 128
    %7195 = vxpose.xlu0.b32.cont [14/16] 0.0, 128
    %7196 = vxpose.xlu0.b32.cont [15/16] 0.0, 128
    %7197 = vxpose.xlu0.b32.end [16/16] 0.0, 128
    %v7198 = vpop.trf.xlu0
    %v7199 = vpop.trf.xlu0
    %v7200 = vpop.trf.xlu0
    %v7201 = vpop.trf.xlu0
    %v7202 = vpop.trf.xlu0
    %v7203 = vpop.trf.xlu0
    %v7204 = vpop.trf.xlu0
    %v7205 = vpop.trf.xlu0
    %v7206 = vpop.trf.xlu0
    %v7207 = vpop.trf.xlu0
    %v7208 = vpop.trf.xlu0
    %v7209 = vpop.trf.xlu0
    %v7210 = vpop.trf.xlu0
    %v7211 = vpop.trf.xlu0
    %v7212 = vpop.trf.xlu0
    %v7213 = vpop.trf.xlu0
    %7214 = vxpose.xlu0.b32.start [1/16] %v6540, 128
    %7215 = vxpose.xlu0.b32.cont [2/16] 0.0, 128
    %7216 = vxpose.xlu0.b32.cont [3/16] 0.0, 128
    %7217 = vxpose.xlu0.b32.cont [4/16] 0.0, 128
    %7218 = vxpose.xlu0.b32.cont [5/16] 0.0, 128
    %7219 = vxpose.xlu0.b32.cont [6/16] 0.0, 128
    %7220 = vxpose.xlu0.b32.cont [7/16] 0.0, 128
    %7221 = vxpose.xlu0.b32.cont [8/16] 0.0, 128
    %7222 = vxpose.xlu0.b32.cont [9/16] 0.0, 128
    %7223 = vxpose.xlu0.b32.cont [10/16] 0.0, 128
    %7224 = vxpose.xlu0.b32.cont [11/16] 0.0, 128
    %7225 = vxpose.xlu0.b32.cont [12/16] 0.0, 128
    %7226 = vxpose.xlu0.b32.cont [13/16] 0.0, 128
    %7227 = vxpose.xlu0.b32.cont [14/16] 0.0, 128
    %7228 = vxpose.xlu0.b32.cont [15/16] 0.0, 128
    %7229 = vxpose.xlu0.b32.end [16/16] 0.0, 128
    %v7230 = vpop.trf.xlu0
    %v7231 = vpop.trf.xlu0
    %v7232 = vpop.trf.xlu0
    %v7233 = vpop.trf.xlu0
    %v7234 = vpop.trf.xlu0
    %v7235 = vpop.trf.xlu0
    %v7236 = vpop.trf.xlu0
    %v7237 = vpop.trf.xlu0
    %v7238 = vpop.trf.xlu0
    %v7239 = vpop.trf.xlu0
    %v7240 = vpop.trf.xlu0
    %v7241 = vpop.trf.xlu0
    %v7242 = vpop.trf.xlu0
    %v7243 = vpop.trf.xlu0
    %v7244 = vpop.trf.xlu0
    %v7245 = vpop.trf.xlu0
    %7246 = vxpose.xlu0.b32.start [1/16] %v6537, 128
    %7247 = vxpose.xlu0.b32.cont [2/16] 0.0, 128
    %7248 = vxpose.xlu0.b32.cont [3/16] 0.0, 128
    %7249 = vxpose.xlu0.b32.cont [4/16] 0.0, 128
    %7250 = vxpose.xlu0.b32.cont [5/16] 0.0, 128
    %7251 = vxpose.xlu0.b32.cont [6/16] 0.0, 128
    %7252 = vxpose.xlu0.b32.cont [7/16] 0.0, 128
    %7253 = vxpose.xlu0.b32.cont [8/16] 0.0, 128
    %7254 = vxpose.xlu0.b32.cont [9/16] 0.0, 128
    %7255 = vxpose.xlu0.b32.cont [10/16] 0.0, 128
    %7256 = vxpose.xlu0.b32.cont [11/16] 0.0, 128
    %7257 = vxpose.xlu0.b32.cont [12/16] 0.0, 128
    %7258 = vxpose.xlu0.b32.cont [13/16] 0.0, 128
    %7259 = vxpose.xlu0.b32.cont [14/16] 0.0, 128
    %7260 = vxpose.xlu0.b32.cont [15/16] 0.0, 128
    %7261 = vxpose.xlu0.b32.end [16/16] 0.0, 128
    %v7262 = vpop.trf.xlu0
    %v7263 = vpop.trf.xlu0
    %v7264 = vpop.trf.xlu0
    %v7265 = vpop.trf.xlu0
    %v7266 = vpop.trf.xlu0
    %v7267 = vpop.trf.xlu0
    %v7268 = vpop.trf.xlu0
    %v7269 = vpop.trf.xlu0
    %v7270 = vpop.trf.xlu0
    %v7271 = vpop.trf.xlu0
    %v7272 = vpop.trf.xlu0
    %v7273 = vpop.trf.xlu0
    %v7274 = vpop.trf.xlu0
    %v7275 = vpop.trf.xlu0
    %v7276 = vpop.trf.xlu0
    %v7277 = vpop.trf.xlu0
    %7278 = vxpose.xlu0.b32.start [1/16] %v6541, 128
    %7279 = vxpose.xlu0.b32.cont [2/16] 0.0, 128
    %7280 = vxpose.xlu0.b32.cont [3/16] 0.0, 128
    %7281 = vxpose.xlu0.b32.cont [4/16] 0.0, 128
    %7282 = vxpose.xlu0.b32.cont [5/16] 0.0, 128
    %7283 = vxpose.xlu0.b32.cont [6/16] 0.0, 128
    %7284 = vxpose.xlu0.b32.cont [7/16] 0.0, 128
    %7285 = vxpose.xlu0.b32.cont [8/16] 0.0, 128
    %7286 = vxpose.xlu0.b32.cont [9/16] 0.0, 128
    %7287 = vxpose.xlu0.b32.cont [10/16] 0.0, 128
    %7288 = vxpose.xlu0.b32.cont [11/16] 0.0, 128
    %7289 = vxpose.xlu0.b32.cont [12/16] 0.0, 128
    %7290 = vxpose.xlu0.b32.cont [13/16] 0.0, 128
    %7291 = vxpose.xlu0.b32.cont [14/16] 0.0, 128
    %7292 = vxpose.xlu0.b32.cont [15/16] 0.0, 128
    %7293 = vxpose.xlu0.b32.end [16/16] 0.0, 128
    %v7294 = vpop.trf.xlu0
    %v7295 = vpop.trf.xlu0
    %v7296 = vpop.trf.xlu0
    %v7297 = vpop.trf.xlu0
    %v7298 = vpop.trf.xlu0
    %v7299 = vpop.trf.xlu0
    %v7300 = vpop.trf.xlu0
    %v7301 = vpop.trf.xlu0
    %v7302 = vpop.trf.xlu0
    %v7303 = vpop.trf.xlu0
    %v7304 = vpop.trf.xlu0
    %v7305 = vpop.trf.xlu0
    %v7306 = vpop.trf.xlu0
    %v7307 = vpop.trf.xlu0
    %v7308 = vpop.trf.xlu0
    %v7309 = vpop.trf.xlu0
    %v7310 = vcombine.low %v6558, %v6622
    %v7311 = vcombine.high %v6558, %v6622
    %v7313 = vunpack.c.l.s4 1983009808
    %v7314 = vunpack.c.0.s8 %v7313
    %v7315 = vlaneseq
    %v7316 = vshrl.u32 %v7315, 7
    %v7317 = vsub.s32 %v7314, %v7316
    %v7318 = vrot.slane %v7310, %v7317
    %v7320 = vunpack.c.l.s4 1983009808
    %v7321 = vunpack.c.0.s8 %v7320
    %v7322 = vlaneseq
    %v7323 = vshrl.u32 %v7322, 7
    %v7324 = vsub.s32 %v7321, %v7323
    %v7325 = vrot.slane %v7311, %v7324
    %v7326 = vcombine.low %v6590, %v6654
    %v7327 = vcombine.high %v6590, %v6654
    %v7329 = vunpack.c.l.s4 1983009808
    %v7330 = vunpack.c.0.s8 %v7329
    %v7331 = vlaneseq
    %v7332 = vshrl.u32 %v7331, 7
    %v7333 = vsub.s32 %v7330, %v7332
    %v7334 = vrot.slane %v7326, %v7333
    %v7336 = vunpack.c.l.s4 1983009808
    %v7337 = vunpack.c.0.s8 %v7336
    %v7338 = vlaneseq
    %v7339 = vshrl.u32 %v7338, 7
    %v7340 = vsub.s32 %v7337, %v7339
    %v7341 = vrot.slane %v7327, %v7340
    %v7342 = vcombine.low %v6686, %v6750
    %v7343 = vcombine.high %v6686, %v6750
    %v7345 = vunpack.c.l.s4 1983009808
    %v7346 = vunpack.c.0.s8 %v7345
    %v7347 = vlaneseq
    %v7348 = vshrl.u32 %v7347, 7
    %v7349 = vsub.s32 %v7346, %v7348
    %v7350 = vrot.slane %v7342, %v7349
    %v7352 = vunpack.c.l.s4 1983009808
    %v7353 = vunpack.c.0.s8 %v7352
    %v7354 = vlaneseq
    %v7355 = vshrl.u32 %v7354, 7
    %v7356 = vsub.s32 %v7353, %v7355
    %v7357 = vrot.slane %v7343, %v7356
    %v7358 = vcombine.low %v6718, %v6782
    %v7359 = vcombine.high %v6718, %v6782
    %v7361 = vunpack.c.l.s4 1983009808
    %v7362 = vunpack.c.0.s8 %v7361
    %v7363 = vlaneseq
    %v7364 = vshrl.u32 %v7363, 7
    %v7365 = vsub.s32 %v7362, %v7364
    %v7366 = vrot.slane %v7358, %v7365
    %v7368 = vunpack.c.l.s4 1983009808
    %v7369 = vunpack.c.0.s8 %v7368
    %v7370 = vlaneseq
    %v7371 = vshrl.u32 %v7370, 7
    %v7372 = vsub.s32 %v7369, %v7371
    %v7373 = vrot.slane %v7359, %v7372
    %v7374 = vcombine.low %v7318, %v7334
    %v7375 = vcombine.high %v7318, %v7334
    %v7377 = vunpack.c.l.s4 1934713408
    %v7378 = vunpack.c.0.s8 %v7377
    %v7379 = vlaneseq
    %v7380 = vshrl.u32 %v7379, 7
    %v7381 = vsub.s32 %v7378, %v7380
    %v7382 = vrot.slane %v7374, %v7381
    %v7384 = vunpack.c.l.s4 1934713408
    %v7385 = vunpack.c.0.s8 %v7384
    %v7386 = vlaneseq
    %v7387 = vshrl.u32 %v7386, 7
    %v7388 = vsub.s32 %v7385, %v7387
    %v7389 = vrot.slane %v7375, %v7388
    %v7390 = vcombine.low %v7325, %v7341
    %v7391 = vcombine.high %v7325, %v7341
    %v7393 = vunpack.c.l.s4 1934713408
    %v7394 = vunpack.c.0.s8 %v7393
    %v7395 = vlaneseq
    %v7396 = vshrl.u32 %v7395, 7
    %v7397 = vsub.s32 %v7394, %v7396
    %v7398 = vrot.slane %v7390, %v7397
    %v7400 = vunpack.c.l.s4 1934713408
    %v7401 = vunpack.c.0.s8 %v7400
    %v7402 = vlaneseq
    %v7403 = vshrl.u32 %v7402, 7
    %v7404 = vsub.s32 %v7401, %v7403
    %v7405 = vrot.slane %v7391, %v7404
    %v7406 = vcombine.low %v7350, %v7366
    %v7407 = vcombine.high %v7350, %v7366
    %v7409 = vunpack.c.l.s4 1934713408
    %v7410 = vunpack.c.0.s8 %v7409
    %v7411 = vlaneseq
    %v7412 = vshrl.u32 %v7411, 7
    %v7413 = vsub.s32 %v7410, %v7412
    %v7414 = vrot.slane %v7406, %v7413
    %v7416 = vunpack.c.l.s4 1934713408
    %v7417 = vunpack.c.0.s8 %v7416
    %v7418 = vlaneseq
    %v7419 = vshrl.u32 %v7418, 7
    %v7420 = vsub.s32 %v7417, %v7419
    %v7421 = vrot.slane %v7407, %v7420
    %v7422 = vcombine.low %v7357, %v7373
    %v7423 = vcombine.high %v7357, %v7373
    %v7425 = vunpack.c.l.s4 1934713408
    %v7426 = vunpack.c.0.s8 %v7425
    %v7427 = vlaneseq
    %v7428 = vshrl.u32 %v7427, 7
    %v7429 = vsub.s32 %v7426, %v7428
    %v7430 = vrot.slane %v7422, %v7429
    %v7432 = vunpack.c.l.s4 1934713408
    %v7433 = vunpack.c.0.s8 %v7432
    %v7434 = vlaneseq
    %v7435 = vshrl.u32 %v7434, 7
    %v7436 = vsub.s32 %v7433, %v7435
    %v7437 = vrot.slane %v7423, %v7436
    %v7438 = vcombine.low %v7382, %v7414
    %v7439 = vcombine.high %v7382, %v7414
    %v7440 = vcombine.low %v7389, %v7421
    %v7441 = vcombine.high %v7389, %v7421
    %v7442 = vcombine.low %v7398, %v7430
    %v7443 = vcombine.high %v7398, %v7430
    %v7444 = vcombine.low %v7405, %v7437
    %v7445 = vcombine.high %v7405, %v7437
    %v7446 = vcombine.low %v6814, %v6878
    %v7447 = vcombine.high %v6814, %v6878
    %v7449 = vunpack.c.l.s4 1983009808
    %v7450 = vunpack.c.0.s8 %v7449
    %v7451 = vlaneseq
    %v7452 = vshrl.u32 %v7451, 7
    %v7453 = vsub.s32 %v7450, %v7452
    %v7454 = vrot.slane %v7446, %v7453
    %v7456 = vunpack.c.l.s4 1983009808
    %v7457 = vunpack.c.0.s8 %v7456
    %v7458 = vlaneseq
    %v7459 = vshrl.u32 %v7458, 7
    %v7460 = vsub.s32 %v7457, %v7459
    %v7461 = vrot.slane %v7447, %v7460
    %v7462 = vcombine.low %v6846, %v6910
    %v7463 = vcombine.high %v6846, %v6910
    %v7465 = vunpack.c.l.s4 1983009808
    %v7466 = vunpack.c.0.s8 %v7465
    %v7467 = vlaneseq
    %v7468 = vshrl.u32 %v7467, 7
    %v7469 = vsub.s32 %v7466, %v7468
    %v7470 = vrot.slane %v7462, %v7469
    %v7472 = vunpack.c.l.s4 1983009808
    %v7473 = vunpack.c.0.s8 %v7472
    %v7474 = vlaneseq
    %v7475 = vshrl.u32 %v7474, 7
    %v7476 = vsub.s32 %v7473, %v7475
    %v7477 = vrot.slane %v7463, %v7476
    %v7478 = vcombine.low %v6942, %v7006
    %v7479 = vcombine.high %v6942, %v7006
    %v7481 = vunpack.c.l.s4 1983009808
    %v7482 = vunpack.c.0.s8 %v7481
    %v7483 = vlaneseq
    %v7484 = vshrl.u32 %v7483, 7
    %v7485 = vsub.s32 %v7482, %v7484
    %v7486 = vrot.slane %v7478, %v7485
    %v7488 = vunpack.c.l.s4 1983009808
    %v7489 = vunpack.c.0.s8 %v7488
    %v7490 = vlaneseq
    %v7491 = vshrl.u32 %v7490, 7
    %v7492 = vsub.s32 %v7489, %v7491
    %v7493 = vrot.slane %v7479, %v7492
    %v7494 = vcombine.low %v6974, %v7038
    %v7495 = vcombine.high %v6974, %v7038
    %v7497 = vunpack.c.l.s4 1983009808
    %v7498 = vunpack.c.0.s8 %v7497
    %v7499 = vlaneseq
    %v7500 = vshrl.u32 %v7499, 7
    %v7501 = vsub.s32 %v7498, %v7500
    %v7502 = vrot.slane %v7494, %v7501
    %v7504 = vunpack.c.l.s4 1983009808
    %v7505 = vunpack.c.0.s8 %v7504
    %v7506 = vlaneseq
    %v7507 = vshrl.u32 %v7506, 7
    %v7508 = vsub.s32 %v7505, %v7507
    %v7509 = vrot.slane %v7495, %v7508
    %v7510 = vcombine.low %v7454, %v7470
    %v7511 = vcombine.high %v7454, %v7470
    %v7513 = vunpack.c.l.s4 1934713408
    %v7514 = vunpack.c.0.s8 %v7513
    %v7515 = vlaneseq
    %v7516 = vshrl.u32 %v7515, 7
    %v7517 = vsub.s32 %v7514, %v7516
    %v7518 = vrot.slane %v7510, %v7517
    %v7520 = vunpack.c.l.s4 1934713408
    %v7521 = vunpack.c.0.s8 %v7520
    %v7522 = vlaneseq
    %v7523 = vshrl.u32 %v7522, 7
    %v7524 = vsub.s32 %v7521, %v7523
    %v7525 = vrot.slane %v7511, %v7524
    %v7526 = vcombine.low %v7461, %v7477
    %v7527 = vcombine.high %v7461, %v7477
    %v7529 = vunpack.c.l.s4 1934713408
    %v7530 = vunpack.c.0.s8 %v7529
    %v7531 = vlaneseq
    %v7532 = vshrl.u32 %v7531, 7
    %v7533 = vsub.s32 %v7530, %v7532
    %v7534 = vrot.slane %v7526, %v7533
    %v7536 = vunpack.c.l.s4 1934713408
    %v7537 = vunpack.c.0.s8 %v7536
    %v7538 = vlaneseq
    %v7539 = vshrl.u32 %v7538, 7
    %v7540 = vsub.s32 %v7537, %v7539
    %v7541 = vrot.slane %v7527, %v7540
    %v7542 = vcombine.low %v7486, %v7502
    %v7543 = vcombine.high %v7486, %v7502
    %v7545 = vunpack.c.l.s4 1934713408
    %v7546 = vunpack.c.0.s8 %v7545
    %v7547 = vlaneseq
    %v7548 = vshrl.u32 %v7547, 7
    %v7549 = vsub.s32 %v7546, %v7548
    %v7550 = vrot.slane %v7542, %v7549
    %v7552 = vunpack.c.l.s4 1934713408
    %v7553 = vunpack.c.0.s8 %v7552
    %v7554 = vlaneseq
    %v7555 = vshrl.u32 %v7554, 7
    %v7556 = vsub.s32 %v7553, %v7555
    %v7557 = vrot.slane %v7543, %v7556
    %v7558 = vcombine.low %v7493, %v7509
    %v7559 = vcombine.high %v7493, %v7509
    %v7561 = vunpack.c.l.s4 1934713408
    %v7562 = vunpack.c.0.s8 %v7561
    %v7563 = vlaneseq
    %v7564 = vshrl.u32 %v7563, 7
    %v7565 = vsub.s32 %v7562, %v7564
    %v7566 = vrot.slane %v7558, %v7565
    %v7568 = vunpack.c.l.s4 1934713408
    %v7569 = vunpack.c.0.s8 %v7568
    %v7570 = vlaneseq
    %v7571 = vshrl.u32 %v7570, 7
    %v7572 = vsub.s32 %v7569, %v7571
    %v7573 = vrot.slane %v7559, %v7572
    %v7574 = vcombine.low %v7518, %v7550
    %v7575 = vcombine.high %v7518, %v7550
    %v7576 = vcombine.low %v7525, %v7557
    %v7577 = vcombine.high %v7525, %v7557
    %v7578 = vcombine.low %v7534, %v7566
    %v7579 = vcombine.high %v7534, %v7566
    %v7580 = vcombine.low %v7541, %v7573
    %v7581 = vcombine.high %v7541, %v7573
    %v7582 = vcombine.low %v7070, %v7134
    %v7583 = vcombine.high %v7070, %v7134
    %v7585 = vunpack.c.l.s4 1983009808
    %v7586 = vunpack.c.0.s8 %v7585
    %v7587 = vlaneseq
    %v7588 = vshrl.u32 %v7587, 7
    %v7589 = vsub.s32 %v7586, %v7588
    %v7590 = vrot.slane %v7582, %v7589
    %v7592 = vunpack.c.l.s4 1983009808
    %v7593 = vunpack.c.0.s8 %v7592
    %v7594 = vlaneseq
    %v7595 = vshrl.u32 %v7594, 7
    %v7596 = vsub.s32 %v7593, %v7595
    %v7597 = vrot.slane %v7583, %v7596
    %v7598 = vcombine.low %v7102, %v7166
    %v7599 = vcombine.high %v7102, %v7166
    %v7601 = vunpack.c.l.s4 1983009808
    %v7602 = vunpack.c.0.s8 %v7601
    %v7603 = vlaneseq
    %v7604 = vshrl.u32 %v7603, 7
    %v7605 = vsub.s32 %v7602, %v7604
    %v7606 = vrot.slane %v7598, %v7605
    %v7608 = vunpack.c.l.s4 1983009808
    %v7609 = vunpack.c.0.s8 %v7608
    %v7610 = vlaneseq
    %v7611 = vshrl.u32 %v7610, 7
    %v7612 = vsub.s32 %v7609, %v7611
    %v7613 = vrot.slane %v7599, %v7612
    %v7614 = vcombine.low %v7198, %v7262
    %v7615 = vcombine.high %v7198, %v7262
    %v7617 = vunpack.c.l.s4 1983009808
    %v7618 = vunpack.c.0.s8 %v7617
    %v7619 = vlaneseq
    %v7620 = vshrl.u32 %v7619, 7
    %v7621 = vsub.s32 %v7618, %v7620
    %v7622 = vrot.slane %v7614, %v7621
    %v7624 = vunpack.c.l.s4 1983009808
    %v7625 = vunpack.c.0.s8 %v7624
    %v7626 = vlaneseq
    %v7627 = vshrl.u32 %v7626, 7
    %v7628 = vsub.s32 %v7625, %v7627
    %v7629 = vrot.slane %v7615, %v7628
    %v7630 = vcombine.low %v7230, %v7294
    %v7631 = vcombine.high %v7230, %v7294
    %v7633 = vunpack.c.l.s4 1983009808
    %v7634 = vunpack.c.0.s8 %v7633
    %v7635 = vlaneseq
    %v7636 = vshrl.u32 %v7635, 7
    %v7637 = vsub.s32 %v7634, %v7636
    %v7638 = vrot.slane %v7630, %v7637
    %v7640 = vunpack.c.l.s4 1983009808
    %v7641 = vunpack.c.0.s8 %v7640
    %v7642 = vlaneseq
    %v7643 = vshrl.u32 %v7642, 7
    %v7644 = vsub.s32 %v7641, %v7643
    %v7645 = vrot.slane %v7631, %v7644
    %v7646 = vcombine.low %v7590, %v7606
    %v7647 = vcombine.high %v7590, %v7606
    %v7649 = vunpack.c.l.s4 1934713408
    %v7650 = vunpack.c.0.s8 %v7649
    %v7651 = vlaneseq
    %v7652 = vshrl.u32 %v7651, 7
    %v7653 = vsub.s32 %v7650, %v7652
    %v7654 = vrot.slane %v7646, %v7653
    %v7656 = vunpack.c.l.s4 1934713408
    %v7657 = vunpack.c.0.s8 %v7656
    %v7658 = vlaneseq
    %v7659 = vshrl.u32 %v7658, 7
    %v7660 = vsub.s32 %v7657, %v7659
    %v7661 = vrot.slane %v7647, %v7660
    %v7662 = vcombine.low %v7597, %v7613
    %v7663 = vcombine.high %v7597, %v7613
    %v7665 = vunpack.c.l.s4 1934713408
    %v7666 = vunpack.c.0.s8 %v7665
    %v7667 = vlaneseq
    %v7668 = vshrl.u32 %v7667, 7
    %v7669 = vsub.s32 %v7666, %v7668
    %v7670 = vrot.slane %v7662, %v7669
    %v7672 = vunpack.c.l.s4 1934713408
    %v7673 = vunpack.c.0.s8 %v7672
    %v7674 = vlaneseq
    %v7675 = vshrl.u32 %v7674, 7
    %v7676 = vsub.s32 %v7673, %v7675
    %v7677 = vrot.slane %v7663, %v7676
    %v7678 = vcombine.low %v7622, %v7638
    %v7679 = vcombine.high %v7622, %v7638
    %v7681 = vunpack.c.l.s4 1934713408
    %v7682 = vunpack.c.0.s8 %v7681
    %v7683 = vlaneseq
    %v7684 = vshrl.u32 %v7683, 7
    %v7685 = vsub.s32 %v7682, %v7684
    %v7686 = vrot.slane %v7678, %v7685
    %v7688 = vunpack.c.l.s4 1934713408
    %v7689 = vunpack.c.0.s8 %v7688
    %v7690 = vlaneseq
    %v7691 = vshrl.u32 %v7690, 7
    %v7692 = vsub.s32 %v7689, %v7691
    %v7693 = vrot.slane %v7679, %v7692
    %v7694 = vcombine.low %v7629, %v7645
    %v7695 = vcombine.high %v7629, %v7645
    %v7697 = vunpack.c.l.s4 1934713408
    %v7698 = vunpack.c.0.s8 %v7697
    %v7699 = vlaneseq
    %v7700 = vshrl.u32 %v7699, 7
    %v7701 = vsub.s32 %v7698, %v7700
    %v7702 = vrot.slane %v7694, %v7701
    %v7704 = vunpack.c.l.s4 1934713408
    %v7705 = vunpack.c.0.s8 %v7704
    %v7706 = vlaneseq
    %v7707 = vshrl.u32 %v7706, 7
    %v7708 = vsub.s32 %v7705, %v7707
    %v7709 = vrot.slane %v7695, %v7708
    %v7710 = vcombine.low %v7654, %v7686
    %v7711 = vcombine.high %v7654, %v7686
    %v7712 = vcombine.low %v7661, %v7693
    %v7713 = vcombine.high %v7661, %v7693
    %v7714 = vcombine.low %v7670, %v7702
    %v7715 = vcombine.high %v7670, %v7702
    %v7716 = vcombine.low %v7677, %v7709
    %v7717 = vcombine.high %v7677, %v7709
    %7718 = vmatprep.subr.mxu0 0.0
    %7719 = vmatpush1.msra.mxu0 0.0
    %7720 = vmatprep.subr.mxu0 0.0
    %7721 = vmatpush1.msra.mxu0 0.0
    %7722 = vmatprep.subr.mxu0 0.0
    %7723 = vmatpush1.msra.mxu0 0.0
    %7724 = vmatprep.subr.mxu0 0.0
    %7725 = vmatpush1.msra.mxu0 0.0
    %7726 = vmatprep.subr.mxu0 0.0
    %7727 = vmatpush1.msra.mxu0 0.0
    %7728 = vmatprep.subr.mxu0 0.0
    %7729 = vmatpush1.msra.mxu0 0.0
    %7730 = vmatprep.subr.mxu0 0.0
    %7731 = vmatpush1.msra.mxu0 0.0
    %7732 = vmatprep.subr.mxu0 0.0
    %7733 = vmatpush1.msra.mxu0 0.0
    %7734 = vmatprep.subr.mxu0 0.0
    %7735 = vmatpush1.msra.mxu0 0.0
    %7736 = vmatprep.subr.mxu0 0.0
    %7737 = vmatpush1.msra.mxu0 0.0
    %7738 = vmatprep.subr.mxu0 0.0
    %7739 = vmatpush1.msra.mxu0 0.0
    %7740 = vmatprep.subr.mxu0 0.0
    %7741 = vmatpush1.msra.mxu0 0.0
    %7742 = vmatprep.subr.mxu0 0.0
    %7743 = vmatpush1.msra.mxu0 0.0
    %7744 = vmatprep.subr.mxu0 0.0
    %7745 = vmatpush1.msra.mxu0 %v7710
    %7746 = vmatprep.subr.mxu0 0.0
    %7747 = vmatpush1.msra.mxu0 %v7574
    %7748 = vmatprep.subr.mxu0 0.0
    %7749 = vmatpush1.msra.mxu0 %v7438
    %7750 = vmatprep.subr.mxu0 0.0
    %7751 = vmatpush2.msra.mxu0 0.0
    %7752 = vmatprep.subr.mxu0 0.0
    %7753 = vmatpush2.msra.mxu0 0.0
    %7754 = vmatprep.subr.mxu0 0.0
    %7755 = vmatpush2.msra.mxu0 0.0
    %7756 = vmatprep.subr.mxu0 0.0
    %7757 = vmatpush2.msra.mxu0 0.0
    %7758 = vmatprep.subr.mxu0 0.0
    %7759 = vmatpush2.msra.mxu0 0.0
    %7760 = vmatprep.subr.mxu0 0.0
    %7761 = vmatpush2.msra.mxu0 0.0
    %7762 = vmatprep.subr.mxu0 0.0
    %7763 = vmatpush2.msra.mxu0 0.0
    %7764 = vmatprep.subr.mxu0 0.0
    %7765 = vmatpush2.msra.mxu0 0.0
    %7766 = vmatprep.subr.mxu0 0.0
    %7767 = vmatpush2.msra.mxu0 0.0
    %7768 = vmatprep.subr.mxu0 0.0
    %7769 = vmatpush2.msra.mxu0 0.0
    %7770 = vmatprep.subr.mxu0 0.0
    %7771 = vmatpush2.msra.mxu0 0.0
    %7772 = vmatprep.subr.mxu0 0.0
    %7773 = vmatpush2.msra.mxu0 0.0
    %7774 = vmatprep.subr.mxu0 0.0
    %7775 = vmatpush2.msra.mxu0 0.0
    %7776 = vmatprep.subr.mxu0 0.0
    %7777 = vmatpush2.msra.mxu0 0.0
    %7778 = vmatprep.subr.mxu0 0.0
    %7779 = vmatpush2.msra.mxu0 0.0
    %7780 = vmatprep.subr.mxu0 0.0
    %7781 = vmatpush2.msra.mxu0 0.0
    %7782 = vmatprep.mubr.f32.mxu0 0.0
    %7783 = vmatmul.mubr.f32.gmra.mxu0 %v3826
    %v7784 = vpop.f32.mrf.mxu0
    %v7785 = vadd.f32 0.0, %v7784
    %v7786 = vpop.f32.mrf.mxu0
    %7787 = vmatprep.mubr.f32.mxu0 0.0
    %7788 = vmatmul.mubr.f32.gmra.mxu0 %v3829
    %v7789 = vpop.f32.mrf.mxu0
    %v7790 = vadd.f32 0.0, %v7789
    %v7791 = vpop.f32.mrf.mxu0
    %7792 = vdwg.mxu0
    %7793 = vmatprep.subr.mxu0 0.0
    %7794 = vmatpush1.msra.mxu0 0.0
    %7795 = vmatprep.subr.mxu0 0.0
    %7796 = vmatpush1.msra.mxu0 0.0
    %7797 = vmatprep.subr.mxu0 0.0
    %7798 = vmatpush1.msra.mxu0 0.0
    %7799 = vmatprep.subr.mxu0 0.0
    %7800 = vmatpush1.msra.mxu0 0.0
    %7801 = vmatprep.subr.mxu0 0.0
    %7802 = vmatpush1.msra.mxu0 0.0
    %7803 = vmatprep.subr.mxu0 0.0
    %7804 = vmatpush1.msra.mxu0 0.0
    %7805 = vmatprep.subr.mxu0 0.0
    %7806 = vmatpush1.msra.mxu0 0.0
    %7807 = vmatprep.subr.mxu0 0.0
    %7808 = vmatpush1.msra.mxu0 0.0
    %7809 = vmatprep.subr.mxu0 0.0
    %7810 = vmatpush1.msra.mxu0 0.0
    %7811 = vmatprep.subr.mxu0 0.0
    %7812 = vmatpush1.msra.mxu0 0.0
    %7813 = vmatprep.subr.mxu0 0.0
    %7814 = vmatpush1.msra.mxu0 0.0
    %7815 = vmatprep.subr.mxu0 0.0
    %7816 = vmatpush1.msra.mxu0 0.0
    %7817 = vmatprep.subr.mxu0 0.0
    %7818 = vmatpush1.msra.mxu0 0.0
    %7819 = vmatprep.subr.mxu0 0.0
    %7820 = vmatpush1.msra.mxu0 %v7711
    %7821 = vmatprep.subr.mxu0 0.0
    %7822 = vmatpush1.msra.mxu0 %v7575
    %7823 = vmatprep.subr.mxu0 0.0
    %7824 = vmatpush1.msra.mxu0 %v7439
    %7825 = vmatprep.subr.mxu0 0.0
    %7826 = vmatpush2.msra.mxu0 0.0
    %7827 = vmatprep.subr.mxu0 0.0
    %7828 = vmatpush2.msra.mxu0 0.0
    %7829 = vmatprep.subr.mxu0 0.0
    %7830 = vmatpush2.msra.mxu0 0.0
    %7831 = vmatprep.subr.mxu0 0.0
    %7832 = vmatpush2.msra.mxu0 0.0
    %7833 = vmatprep.subr.mxu0 0.0
    %7834 = vmatpush2.msra.mxu0 0.0
    %7835 = vmatprep.subr.mxu0 0.0
    %7836 = vmatpush2.msra.mxu0 0.0
    %7837 = vmatprep.subr.mxu0 0.0
    %7838 = vmatpush2.msra.mxu0 0.0
    %7839 = vmatprep.subr.mxu0 0.0
    %7840 = vmatpush2.msra.mxu0 0.0
    %7841 = vmatprep.subr.mxu0 0.0
    %7842 = vmatpush2.msra.mxu0 0.0
    %7843 = vmatprep.subr.mxu0 0.0
    %7844 = vmatpush2.msra.mxu0 0.0
    %7845 = vmatprep.subr.mxu0 0.0
    %7846 = vmatpush2.msra.mxu0 0.0
    %7847 = vmatprep.subr.mxu0 0.0
    %7848 = vmatpush2.msra.mxu0 0.0
    %7849 = vmatprep.subr.mxu0 0.0
    %7850 = vmatpush2.msra.mxu0 0.0
    %7851 = vmatprep.subr.mxu0 0.0
    %7852 = vmatpush2.msra.mxu0 0.0
    %7853 = vmatprep.subr.mxu0 0.0
    %7854 = vmatpush2.msra.mxu0 0.0
    %7855 = vmatprep.subr.mxu0 0.0
    %7856 = vmatpush2.msra.mxu0 0.0
    %7857 = vmatprep.mubr.f32.mxu0 0.0
    %7858 = vmatmul.mubr.f32.gmra.mxu0 %v3939
    %v7859 = vpop.f32.mrf.mxu0
    %v7860 = vadd.f32 0.0, %v7859
    %v7861 = vpop.f32.mrf.mxu0
    %7862 = vmatprep.mubr.f32.mxu0 0.0
    %7863 = vmatmul.mubr.f32.gmra.mxu0 %v3942
    %v7864 = vpop.f32.mrf.mxu0
    %v7865 = vadd.f32 0.0, %v7864
    %v7866 = vpop.f32.mrf.mxu0
    %7867 = vdwg.mxu0
    %7868 = vmatprep.subr.mxu0 0.0
    %7869 = vmatpush1.msra.mxu0 0.0
    %7870 = vmatprep.subr.mxu0 0.0
    %7871 = vmatpush1.msra.mxu0 0.0
    %7872 = vmatprep.subr.mxu0 0.0
    %7873 = vmatpush1.msra.mxu0 0.0
    %7874 = vmatprep.subr.mxu0 0.0
    %7875 = vmatpush1.msra.mxu0 0.0
    %7876 = vmatprep.subr.mxu0 0.0
    %7877 = vmatpush1.msra.mxu0 0.0
    %7878 = vmatprep.subr.mxu0 0.0
    %7879 = vmatpush1.msra.mxu0 0.0
    %7880 = vmatprep.subr.mxu0 0.0
    %7881 = vmatpush1.msra.mxu0 0.0
    %7882 = vmatprep.subr.mxu0 0.0
    %7883 = vmatpush1.msra.mxu0 0.0
    %7884 = vmatprep.subr.mxu0 0.0
    %7885 = vmatpush1.msra.mxu0 0.0
    %7886 = vmatprep.subr.mxu0 0.0
    %7887 = vmatpush1.msra.mxu0 0.0
    %7888 = vmatprep.subr.mxu0 0.0
    %7889 = vmatpush1.msra.mxu0 0.0
    %7890 = vmatprep.subr.mxu0 0.0
    %7891 = vmatpush1.msra.mxu0 0.0
    %7892 = vmatprep.subr.mxu0 0.0
    %7893 = vmatpush1.msra.mxu0 0.0
    %7894 = vmatprep.subr.mxu0 0.0
    %7895 = vmatpush1.msra.mxu0 %v7712
    %7896 = vmatprep.subr.mxu0 0.0
    %7897 = vmatpush1.msra.mxu0 %v7576
    %7898 = vmatprep.subr.mxu0 0.0
    %7899 = vmatpush1.msra.mxu0 %v7440
    %7900 = vmatprep.subr.mxu0 0.0
    %7901 = vmatpush2.msra.mxu0 0.0
    %7902 = vmatprep.subr.mxu0 0.0
    %7903 = vmatpush2.msra.mxu0 0.0
    %7904 = vmatprep.subr.mxu0 0.0
    %7905 = vmatpush2.msra.mxu0 0.0
    %7906 = vmatprep.subr.mxu0 0.0
    %7907 = vmatpush2.msra.mxu0 0.0
    %7908 = vmatprep.subr.mxu0 0.0
    %7909 = vmatpush2.msra.mxu0 0.0
    %7910 = vmatprep.subr.mxu0 0.0
    %7911 = vmatpush2.msra.mxu0 0.0
    %7912 = vmatprep.subr.mxu0 0.0
    %7913 = vmatpush2.msra.mxu0 0.0
    %7914 = vmatprep.subr.mxu0 0.0
    %7915 = vmatpush2.msra.mxu0 0.0
    %7916 = vmatprep.subr.mxu0 0.0
    %7917 = vmatpush2.msra.mxu0 0.0
    %7918 = vmatprep.subr.mxu0 0.0
    %7919 = vmatpush2.msra.mxu0 0.0
    %7920 = vmatprep.subr.mxu0 0.0
    %7921 = vmatpush2.msra.mxu0 0.0
    %7922 = vmatprep.subr.mxu0 0.0
    %7923 = vmatpush2.msra.mxu0 0.0
    %7924 = vmatprep.subr.mxu0 0.0
    %7925 = vmatpush2.msra.mxu0 0.0
    %7926 = vmatprep.subr.mxu0 0.0
    %7927 = vmatpush2.msra.mxu0 0.0
    %7928 = vmatprep.subr.mxu0 0.0
    %7929 = vmatpush2.msra.mxu0 0.0
    %7930 = vmatprep.subr.mxu0 0.0
    %7931 = vmatpush2.msra.mxu0 0.0
    %7932 = vmatprep.mubr.f32.mxu0 0.0
    %7933 = vmatmul.mubr.f32.gmra.mxu0 %v4052
    %v7934 = vpop.f32.mrf.mxu0
    %v7935 = vadd.f32 0.0, %v7934
    %v7936 = vpop.f32.mrf.mxu0
    %7937 = vmatprep.mubr.f32.mxu0 0.0
    %7938 = vmatmul.mubr.f32.gmra.mxu0 %v4055
    %v7939 = vpop.f32.mrf.mxu0
    %v7940 = vadd.f32 0.0, %v7939
    %v7941 = vpop.f32.mrf.mxu0
    %7942 = vdwg.mxu0
    %7943 = vmatprep.subr.mxu0 0.0
    %7944 = vmatpush1.msra.mxu0 0.0
    %7945 = vmatprep.subr.mxu0 0.0
    %7946 = vmatpush1.msra.mxu0 0.0
    %7947 = vmatprep.subr.mxu0 0.0
    %7948 = vmatpush1.msra.mxu0 0.0
    %7949 = vmatprep.subr.mxu0 0.0
    %7950 = vmatpush1.msra.mxu0 0.0
    %7951 = vmatprep.subr.mxu0 0.0
    %7952 = vmatpush1.msra.mxu0 0.0
    %7953 = vmatprep.subr.mxu0 0.0
    %7954 = vmatpush1.msra.mxu0 0.0
    %7955 = vmatprep.subr.mxu0 0.0
    %7956 = vmatpush1.msra.mxu0 0.0
    %7957 = vmatprep.subr.mxu0 0.0
    %7958 = vmatpush1.msra.mxu0 0.0
    %7959 = vmatprep.subr.mxu0 0.0
    %7960 = vmatpush1.msra.mxu0 0.0
    %7961 = vmatprep.subr.mxu0 0.0
    %7962 = vmatpush1.msra.mxu0 0.0
    %7963 = vmatprep.subr.mxu0 0.0
    %7964 = vmatpush1.msra.mxu0 0.0
    %7965 = vmatprep.subr.mxu0 0.0
    %7966 = vmatpush1.msra.mxu0 0.0
    %7967 = vmatprep.subr.mxu0 0.0
    %7968 = vmatpush1.msra.mxu0 0.0
    %7969 = vmatprep.subr.mxu0 0.0
    %7970 = vmatpush1.msra.mxu0 %v7713
    %7971 = vmatprep.subr.mxu0 0.0
    %7972 = vmatpush1.msra.mxu0 %v7577
    %7973 = vmatprep.subr.mxu0 0.0
    %7974 = vmatpush1.msra.mxu0 %v7441
    %7975 = vmatprep.subr.mxu0 0.0
    %7976 = vmatpush2.msra.mxu0 0.0
    %7977 = vmatprep.subr.mxu0 0.0
    %7978 = vmatpush2.msra.mxu0 0.0
    %7979 = vmatprep.subr.mxu0 0.0
    %7980 = vmatpush2.msra.mxu0 0.0
    %7981 = vmatprep.subr.mxu0 0.0
    %7982 = vmatpush2.msra.mxu0 0.0
    %7983 = vmatprep.subr.mxu0 0.0
    %7984 = vmatpush2.msra.mxu0 0.0
    %7985 = vmatprep.subr.mxu0 0.0
    %7986 = vmatpush2.msra.mxu0 0.0
    %7987 = vmatprep.subr.mxu0 0.0
    %7988 = vmatpush2.msra.mxu0 0.0
    %7989 = vmatprep.subr.mxu0 0.0
    %7990 = vmatpush2.msra.mxu0 0.0
    %7991 = vmatprep.subr.mxu0 0.0
    %7992 = vmatpush2.msra.mxu0 0.0
    %7993 = vmatprep.subr.mxu0 0.0
    %7994 = vmatpush2.msra.mxu0 0.0
    %7995 = vmatprep.subr.mxu0 0.0
    %7996 = vmatpush2.msra.mxu0 0.0
    %7997 = vmatprep.subr.mxu0 0.0
    %7998 = vmatpush2.msra.mxu0 0.0
    %7999 = vmatprep.subr.mxu0 0.0
    %8000 = vmatpush2.msra.mxu0 0.0
    %8001 = vmatprep.subr.mxu0 0.0
    %8002 = vmatpush2.msra.mxu0 0.0
    %8003 = vmatprep.subr.mxu0 0.0
    %8004 = vmatpush2.msra.mxu0 0.0
    %8005 = vmatprep.subr.mxu0 0.0
    %8006 = vmatpush2.msra.mxu0 0.0
    %8007 = vmatprep.mubr.f32.mxu0 0.0
    %8008 = vmatmul.mubr.f32.gmra.mxu0 %v4165
    %v8009 = vpop.f32.mrf.mxu0
    %v8010 = vadd.f32 0.0, %v8009
    %v8011 = vpop.f32.mrf.mxu0
    %8012 = vmatprep.mubr.f32.mxu0 0.0
    %8013 = vmatmul.mubr.f32.gmra.mxu0 %v4168
    %v8014 = vpop.f32.mrf.mxu0
    %v8015 = vadd.f32 0.0, %v8014
    %v8016 = vpop.f32.mrf.mxu0
    %8017 = vdwg.mxu0
    %8018 = vmatprep.subr.mxu0 0.0
    %8019 = vmatpush1.msra.mxu0 0.0
    %8020 = vmatprep.subr.mxu0 0.0
    %8021 = vmatpush1.msra.mxu0 0.0
    %8022 = vmatprep.subr.mxu0 0.0
    %8023 = vmatpush1.msra.mxu0 0.0
    %8024 = vmatprep.subr.mxu0 0.0
    %8025 = vmatpush1.msra.mxu0 0.0
    %8026 = vmatprep.subr.mxu0 0.0
    %8027 = vmatpush1.msra.mxu0 0.0
    %8028 = vmatprep.subr.mxu0 0.0
    %8029 = vmatpush1.msra.mxu0 0.0
    %8030 = vmatprep.subr.mxu0 0.0
    %8031 = vmatpush1.msra.mxu0 0.0
    %8032 = vmatprep.subr.mxu0 0.0
    %8033 = vmatpush1.msra.mxu0 0.0
    %8034 = vmatprep.subr.mxu0 0.0
    %8035 = vmatpush1.msra.mxu0 0.0
    %8036 = vmatprep.subr.mxu0 0.0
    %8037 = vmatpush1.msra.mxu0 0.0
    %8038 = vmatprep.subr.mxu0 0.0
    %8039 = vmatpush1.msra.mxu0 0.0
    %8040 = vmatprep.subr.mxu0 0.0
    %8041 = vmatpush1.msra.mxu0 0.0
    %8042 = vmatprep.subr.mxu0 0.0
    %8043 = vmatpush1.msra.mxu0 0.0
    %8044 = vmatprep.subr.mxu0 0.0
    %8045 = vmatpush1.msra.mxu0 %v7714
    %8046 = vmatprep.subr.mxu0 0.0
    %8047 = vmatpush1.msra.mxu0 %v7578
    %8048 = vmatprep.subr.mxu0 0.0
    %8049 = vmatpush1.msra.mxu0 %v7442
    %8050 = vmatprep.subr.mxu0 0.0
    %8051 = vmatpush2.msra.mxu0 0.0
    %8052 = vmatprep.subr.mxu0 0.0
    %8053 = vmatpush2.msra.mxu0 0.0
    %8054 = vmatprep.subr.mxu0 0.0
    %8055 = vmatpush2.msra.mxu0 0.0
    %8056 = vmatprep.subr.mxu0 0.0
    %8057 = vmatpush2.msra.mxu0 0.0
    %8058 = vmatprep.subr.mxu0 0.0
    %8059 = vmatpush2.msra.mxu0 0.0
    %8060 = vmatprep.subr.mxu0 0.0
    %8061 = vmatpush2.msra.mxu0 0.0
    %8062 = vmatprep.subr.mxu0 0.0
    %8063 = vmatpush2.msra.mxu0 0.0
    %8064 = vmatprep.subr.mxu0 0.0
    %8065 = vmatpush2.msra.mxu0 0.0
    %8066 = vmatprep.subr.mxu0 0.0
    %8067 = vmatpush2.msra.mxu0 0.0
    %8068 = vmatprep.subr.mxu0 0.0
    %8069 = vmatpush2.msra.mxu0 0.0
    %8070 = vmatprep.subr.mxu0 0.0
    %8071 = vmatpush2.msra.mxu0 0.0
    %8072 = vmatprep.subr.mxu0 0.0
    %8073 = vmatpush2.msra.mxu0 0.0
    %8074 = vmatprep.subr.mxu0 0.0
    %8075 = vmatpush2.msra.mxu0 0.0
    %8076 = vmatprep.subr.mxu0 0.0
    %8077 = vmatpush2.msra.mxu0 0.0
    %8078 = vmatprep.subr.mxu0 0.0
    %8079 = vmatpush2.msra.mxu0 0.0
    %8080 = vmatprep.subr.mxu0 0.0
    %8081 = vmatpush2.msra.mxu0 0.0
    %8082 = vmatprep.mubr.f32.mxu0 0.0
    %8083 = vmatmul.mubr.f32.gmra.mxu0 %v4278
    %v8084 = vpop.f32.mrf.mxu0
    %v8085 = vadd.f32 0.0, %v8084
    %v8086 = vpop.f32.mrf.mxu0
    %8087 = vmatprep.mubr.f32.mxu0 0.0
    %8088 = vmatmul.mubr.f32.gmra.mxu0 %v4281
    %v8089 = vpop.f32.mrf.mxu0
    %v8090 = vadd.f32 0.0, %v8089
    %v8091 = vpop.f32.mrf.mxu0
    %8092 = vdwg.mxu0
    %8093 = vmatprep.subr.mxu0 0.0
    %8094 = vmatpush1.msra.mxu0 0.0
    %8095 = vmatprep.subr.mxu0 0.0
    %8096 = vmatpush1.msra.mxu0 0.0
    %8097 = vmatprep.subr.mxu0 0.0
    %8098 = vmatpush1.msra.mxu0 0.0
    %8099 = vmatprep.subr.mxu0 0.0
    %8100 = vmatpush1.msra.mxu0 0.0
    %8101 = vmatprep.subr.mxu0 0.0
    %8102 = vmatpush1.msra.mxu0 0.0
    %8103 = vmatprep.subr.mxu0 0.0
    %8104 = vmatpush1.msra.mxu0 0.0
    %8105 = vmatprep.subr.mxu0 0.0
    %8106 = vmatpush1.msra.mxu0 0.0
    %8107 = vmatprep.subr.mxu0 0.0
    %8108 = vmatpush1.msra.mxu0 0.0
    %8109 = vmatprep.subr.mxu0 0.0
    %8110 = vmatpush1.msra.mxu0 0.0
    %8111 = vmatprep.subr.mxu0 0.0
    %8112 = vmatpush1.msra.mxu0 0.0
    %8113 = vmatprep.subr.mxu0 0.0
    %8114 = vmatpush1.msra.mxu0 0.0
    %8115 = vmatprep.subr.mxu0 0.0
    %8116 = vmatpush1.msra.mxu0 0.0
    %8117 = vmatprep.subr.mxu0 0.0
    %8118 = vmatpush1.msra.mxu0 0.0
    %8119 = vmatprep.subr.mxu0 0.0
    %8120 = vmatpush1.msra.mxu0 %v7715
    %8121 = vmatprep.subr.mxu0 0.0
    %8122 = vmatpush1.msra.mxu0 %v7579
    %8123 = vmatprep.subr.mxu0 0.0
    %8124 = vmatpush1.msra.mxu0 %v7443
    %8125 = vmatprep.subr.mxu0 0.0
    %8126 = vmatpush2.msra.mxu0 0.0
    %8127 = vmatprep.subr.mxu0 0.0
    %8128 = vmatpush2.msra.mxu0 0.0
    %8129 = vmatprep.subr.mxu0 0.0
    %8130 = vmatpush2.msra.mxu0 0.0
    %8131 = vmatprep.subr.mxu0 0.0
    %8132 = vmatpush2.msra.mxu0 0.0
    %8133 = vmatprep.subr.mxu0 0.0
    %8134 = vmatpush2.msra.mxu0 0.0
    %8135 = vmatprep.subr.mxu0 0.0
    %8136 = vmatpush2.msra.mxu0 0.0
    %8137 = vmatprep.subr.mxu0 0.0
    %8138 = vmatpush2.msra.mxu0 0.0
    %8139 = vmatprep.subr.mxu0 0.0
    %8140 = vmatpush2.msra.mxu0 0.0
    %8141 = vmatprep.subr.mxu0 0.0
    %8142 = vmatpush2.msra.mxu0 0.0
    %8143 = vmatprep.subr.mxu0 0.0
    %8144 = vmatpush2.msra.mxu0 0.0
    %8145 = vmatprep.subr.mxu0 0.0
    %8146 = vmatpush2.msra.mxu0 0.0
    %8147 = vmatprep.subr.mxu0 0.0
    %8148 = vmatpush2.msra.mxu0 0.0
    %8149 = vmatprep.subr.mxu0 0.0
    %8150 = vmatpush2.msra.mxu0 0.0
    %8151 = vmatprep.subr.mxu0 0.0
    %8152 = vmatpush2.msra.mxu0 0.0
    %8153 = vmatprep.subr.mxu0 0.0
    %8154 = vmatpush2.msra.mxu0 0.0
    %8155 = vmatprep.subr.mxu0 0.0
    %8156 = vmatpush2.msra.mxu0 0.0
    %8157 = vmatprep.mubr.f32.mxu0 0.0
    %8158 = vmatmul.mubr.f32.gmra.mxu0 %v4391
    %v8159 = vpop.f32.mrf.mxu0
    %v8160 = vadd.f32 0.0, %v8159
    %v8161 = vpop.f32.mrf.mxu0
    %8162 = vmatprep.mubr.f32.mxu0 0.0
    %8163 = vmatmul.mubr.f32.gmra.mxu0 %v4394
    %v8164 = vpop.f32.mrf.mxu0
    %v8165 = vadd.f32 0.0, %v8164
    %v8166 = vpop.f32.mrf.mxu0
    %8167 = vdwg.mxu0
    %8168 = vmatprep.subr.mxu0 0.0
    %8169 = vmatpush1.msra.mxu0 0.0
    %8170 = vmatprep.subr.mxu0 0.0
    %8171 = vmatpush1.msra.mxu0 0.0
    %8172 = vmatprep.subr.mxu0 0.0
    %8173 = vmatpush1.msra.mxu0 0.0
    %8174 = vmatprep.subr.mxu0 0.0
    %8175 = vmatpush1.msra.mxu0 0.0
    %8176 = vmatprep.subr.mxu0 0.0
    %8177 = vmatpush1.msra.mxu0 0.0
    %8178 = vmatprep.subr.mxu0 0.0
    %8179 = vmatpush1.msra.mxu0 0.0
    %8180 = vmatprep.subr.mxu0 0.0
    %8181 = vmatpush1.msra.mxu0 0.0
    %8182 = vmatprep.subr.mxu0 0.0
    %8183 = vmatpush1.msra.mxu0 0.0
    %8184 = vmatprep.subr.mxu0 0.0
    %8185 = vmatpush1.msra.mxu0 0.0
    %8186 = vmatprep.subr.mxu0 0.0
    %8187 = vmatpush1.msra.mxu0 0.0
    %8188 = vmatprep.subr.mxu0 0.0
    %8189 = vmatpush1.msra.mxu0 0.0
    %8190 = vmatprep.subr.mxu0 0.0
    %8191 = vmatpush1.msra.mxu0 0.0
    %8192 = vmatprep.subr.mxu0 0.0
    %8193 = vmatpush1.msra.mxu0 0.0
    %8194 = vmatprep.subr.mxu0 0.0
    %8195 = vmatpush1.msra.mxu0 %v7716
    %8196 = vmatprep.subr.mxu0 0.0
    %8197 = vmatpush1.msra.mxu0 %v7580
    %8198 = vmatprep.subr.mxu0 0.0
    %8199 = vmatpush1.msra.mxu0 %v7444
    %8200 = vmatprep.subr.mxu0 0.0
    %8201 = vmatpush2.msra.mxu0 0.0
    %8202 = vmatprep.subr.mxu0 0.0
    %8203 = vmatpush2.msra.mxu0 0.0
    %8204 = vmatprep.subr.mxu0 0.0
    %8205 = vmatpush2.msra.mxu0 0.0
    %8206 = vmatprep.subr.mxu0 0.0
    %8207 = vmatpush2.msra.mxu0 0.0
    %8208 = vmatprep.subr.mxu0 0.0
    %8209 = vmatpush2.msra.mxu0 0.0
    %8210 = vmatprep.subr.mxu0 0.0
    %8211 = vmatpush2.msra.mxu0 0.0
    %8212 = vmatprep.subr.mxu0 0.0
    %8213 = vmatpush2.msra.mxu0 0.0
    %8214 = vmatprep.subr.mxu0 0.0
    %8215 = vmatpush2.msra.mxu0 0.0
    %8216 = vmatprep.subr.mxu0 0.0
    %8217 = vmatpush2.msra.mxu0 0.0
    %8218 = vmatprep.subr.mxu0 0.0
    %8219 = vmatpush2.msra.mxu0 0.0
    %8220 = vmatprep.subr.mxu0 0.0
    %8221 = vmatpush2.msra.mxu0 0.0
    %8222 = vmatprep.subr.mxu0 0.0
    %8223 = vmatpush2.msra.mxu0 0.0
    %8224 = vmatprep.subr.mxu0 0.0
    %8225 = vmatpush2.msra.mxu0 0.0
    %8226 = vmatprep.subr.mxu0 0.0
    %8227 = vmatpush2.msra.mxu0 0.0
    %8228 = vmatprep.subr.mxu0 0.0
    %8229 = vmatpush2.msra.mxu0 0.0
    %8230 = vmatprep.subr.mxu0 0.0
    %8231 = vmatpush2.msra.mxu0 0.0
    %8232 = vmatprep.mubr.f32.mxu0 0.0
    %8233 = vmatmul.mubr.f32.gmra.mxu0 %v4504
    %v8234 = vpop.f32.mrf.mxu0
    %v8235 = vadd.f32 0.0, %v8234
    %v8236 = vpop.f32.mrf.mxu0
    %8237 = vmatprep.mubr.f32.mxu0 0.0
    %8238 = vmatmul.mubr.f32.gmra.mxu0 %v4507
    %v8239 = vpop.f32.mrf.mxu0
    %v8240 = vadd.f32 0.0, %v8239
    %v8241 = vpop.f32.mrf.mxu0
    %8242 = vdwg.mxu0
    %8243 = vmatprep.subr.mxu0 0.0
    %8244 = vmatpush1.msra.mxu0 0.0
    %8245 = vmatprep.subr.mxu0 0.0
    %8246 = vmatpush1.msra.mxu0 0.0
    %8247 = vmatprep.subr.mxu0 0.0
    %8248 = vmatpush1.msra.mxu0 0.0
    %8249 = vmatprep.subr.mxu0 0.0
    %8250 = vmatpush1.msra.mxu0 0.0
    %8251 = vmatprep.subr.mxu0 0.0
    %8252 = vmatpush1.msra.mxu0 0.0
    %8253 = vmatprep.subr.mxu0 0.0
    %8254 = vmatpush1.msra.mxu0 0.0
    %8255 = vmatprep.subr.mxu0 0.0
    %8256 = vmatpush1.msra.mxu0 0.0
    %8257 = vmatprep.subr.mxu0 0.0
    %8258 = vmatpush1.msra.mxu0 0.0
    %8259 = vmatprep.subr.mxu0 0.0
    %8260 = vmatpush1.msra.mxu0 0.0
    %8261 = vmatprep.subr.mxu0 0.0
    %8262 = vmatpush1.msra.mxu0 0.0
    %8263 = vmatprep.subr.mxu0 0.0
    %8264 = vmatpush1.msra.mxu0 0.0
    %8265 = vmatprep.subr.mxu0 0.0
    %8266 = vmatpush1.msra.mxu0 0.0
    %8267 = vmatprep.subr.mxu0 0.0
    %8268 = vmatpush1.msra.mxu0 0.0
    %8269 = vmatprep.subr.mxu0 0.0
    %8270 = vmatpush1.msra.mxu0 %v7717
    %8271 = vmatprep.subr.mxu0 0.0
    %8272 = vmatpush1.msra.mxu0 %v7581
    %8273 = vmatprep.subr.mxu0 0.0
    %8274 = vmatpush1.msra.mxu0 %v7445
    %8275 = vmatprep.subr.mxu0 0.0
    %8276 = vmatpush2.msra.mxu0 0.0
    %8277 = vmatprep.subr.mxu0 0.0
    %8278 = vmatpush2.msra.mxu0 0.0
    %8279 = vmatprep.subr.mxu0 0.0
    %8280 = vmatpush2.msra.mxu0 0.0
    %8281 = vmatprep.subr.mxu0 0.0
    %8282 = vmatpush2.msra.mxu0 0.0
    %8283 = vmatprep.subr.mxu0 0.0
    %8284 = vmatpush2.msra.mxu0 0.0
    %8285 = vmatprep.subr.mxu0 0.0
    %8286 = vmatpush2.msra.mxu0 0.0
    %8287 = vmatprep.subr.mxu0 0.0
    %8288 = vmatpush2.msra.mxu0 0.0
    %8289 = vmatprep.subr.mxu0 0.0
    %8290 = vmatpush2.msra.mxu0 0.0
    %8291 = vmatprep.subr.mxu0 0.0
    %8292 = vmatpush2.msra.mxu0 0.0
    %8293 = vmatprep.subr.mxu0 0.0
    %8294 = vmatpush2.msra.mxu0 0.0
    %8295 = vmatprep.subr.mxu0 0.0
    %8296 = vmatpush2.msra.mxu0 0.0
    %8297 = vmatprep.subr.mxu0 0.0
    %8298 = vmatpush2.msra.mxu0 0.0
    %8299 = vmatprep.subr.mxu0 0.0
    %8300 = vmatpush2.msra.mxu0 0.0
    %8301 = vmatprep.subr.mxu0 0.0
    %8302 = vmatpush2.msra.mxu0 0.0
    %8303 = vmatprep.subr.mxu0 0.0
    %8304 = vmatpush2.msra.mxu0 0.0
    %8305 = vmatprep.subr.mxu0 0.0
    %8306 = vmatpush2.msra.mxu0 0.0
    %8307 = vmatprep.mubr.f32.mxu0 0.0
    %8308 = vmatmul.mubr.f32.gmra.mxu0 %v4617
    %v8309 = vpop.f32.mrf.mxu0
    %v8310 = vadd.f32 0.0, %v8309
    %v8311 = vpop.f32.mrf.mxu0
    %8312 = vmatprep.mubr.f32.mxu0 0.0
    %8313 = vmatmul.mubr.f32.gmra.mxu0 %v4620
    %v8314 = vpop.f32.mrf.mxu0
    %v8315 = vadd.f32 0.0, %v8314
    %v8316 = vpop.f32.mrf.mxu0
    %8317 = vdwg.mxu0
    %8318 = vxpose.xlu0.b32.start [1/16] %v7785, 128
    %8319 = vxpose.xlu0.b32.cont [2/16] %v7790, 128
    %8320 = vxpose.xlu0.b32.cont [3/16] 0.0, 128
    %8321 = vxpose.xlu0.b32.cont [4/16] 0.0, 128
    %8322 = vxpose.xlu0.b32.cont [5/16] 0.0, 128
    %8323 = vxpose.xlu0.b32.cont [6/16] 0.0, 128
    %8324 = vxpose.xlu0.b32.cont [7/16] 0.0, 128
    %8325 = vxpose.xlu0.b32.cont [8/16] 0.0, 128
    %8326 = vxpose.xlu0.b32.cont [9/16] 0.0, 128
    %8327 = vxpose.xlu0.b32.cont [10/16] 0.0, 128
    %8328 = vxpose.xlu0.b32.cont [11/16] 0.0, 128
    %8329 = vxpose.xlu0.b32.cont [12/16] 0.0, 128
    %8330 = vxpose.xlu0.b32.cont [13/16] 0.0, 128
    %8331 = vxpose.xlu0.b32.cont [14/16] 0.0, 128
    %8332 = vxpose.xlu0.b32.cont [15/16] 0.0, 128
    %8333 = vxpose.xlu0.b32.end [16/16] 0.0, 128
    %v8334 = vpop.trf.xlu0
    %v8335 = vpop.trf.xlu0
    %v8336 = vpop.trf.xlu0
    %v8337 = vpop.trf.xlu0
    %v8338 = vpop.trf.xlu0
    %v8339 = vpop.trf.xlu0
    %v8340 = vpop.trf.xlu0
    %v8341 = vpop.trf.xlu0
    %v8342 = vpop.trf.xlu0
    %v8343 = vpop.trf.xlu0
    %v8344 = vpop.trf.xlu0
    %v8345 = vpop.trf.xlu0
    %v8346 = vpop.trf.xlu0
    %v8347 = vpop.trf.xlu0
    %v8348 = vpop.trf.xlu0
    %v8349 = vpop.trf.xlu0
    %8350 = vxpose.xlu0.b32.start [1/16] %v7860, 128
    %8351 = vxpose.xlu0.b32.cont [2/16] %v7865, 128
    %8352 = vxpose.xlu0.b32.cont [3/16] 0.0, 128
    %8353 = vxpose.xlu0.b32.cont [4/16] 0.0, 128
    %8354 = vxpose.xlu0.b32.cont [5/16] 0.0, 128
    %8355 = vxpose.xlu0.b32.cont [6/16] 0.0, 128
    %8356 = vxpose.xlu0.b32.cont [7/16] 0.0, 128
    %8357 = vxpose.xlu0.b32.cont [8/16] 0.0, 128
    %8358 = vxpose.xlu0.b32.cont [9/16] 0.0, 128
    %8359 = vxpose.xlu0.b32.cont [10/16] 0.0, 128
    %8360 = vxpose.xlu0.b32.cont [11/16] 0.0, 128
    %8361 = vxpose.xlu0.b32.cont [12/16] 0.0, 128
    %8362 = vxpose.xlu0.b32.cont [13/16] 0.0, 128
    %8363 = vxpose.xlu0.b32.cont [14/16] 0.0, 128
    %8364 = vxpose.xlu0.b32.cont [15/16] 0.0, 128
    %8365 = vxpose.xlu0.b32.end [16/16] 0.0, 128
    %v8366 = vpop.trf.xlu0
    %v8367 = vpop.trf.xlu0
    %v8368 = vpop.trf.xlu0
    %v8369 = vpop.trf.xlu0
    %v8370 = vpop.trf.xlu0
    %v8371 = vpop.trf.xlu0
    %v8372 = vpop.trf.xlu0
    %v8373 = vpop.trf.xlu0
    %v8374 = vpop.trf.xlu0
    %v8375 = vpop.trf.xlu0
    %v8376 = vpop.trf.xlu0
    %v8377 = vpop.trf.xlu0
    %v8378 = vpop.trf.xlu0
    %v8379 = vpop.trf.xlu0
    %v8380 = vpop.trf.xlu0
    %v8381 = vpop.trf.xlu0
    %8382 = vxpose.xlu0.b32.start [1/16] %v7935, 128
    %8383 = vxpose.xlu0.b32.cont [2/16] %v7940, 128
    %8384 = vxpose.xlu0.b32.cont [3/16] 0.0, 128
    %8385 = vxpose.xlu0.b32.cont [4/16] 0.0, 128
    %8386 = vxpose.xlu0.b32.cont [5/16] 0.0, 128
    %8387 = vxpose.xlu0.b32.cont [6/16] 0.0, 128
    %8388 = vxpose.xlu0.b32.cont [7/16] 0.0, 128
    %8389 = vxpose.xlu0.b32.cont [8/16] 0.0, 128
    %8390 = vxpose.xlu0.b32.cont [9/16] 0.0, 128
    %8391 = vxpose.xlu0.b32.cont [10/16] 0.0, 128
    %8392 = vxpose.xlu0.b32.cont [11/16] 0.0, 128
    %8393 = vxpose.xlu0.b32.cont [12/16] 0.0, 128
    %8394 = vxpose.xlu0.b32.cont [13/16] 0.0, 128
    %8395 = vxpose.xlu0.b32.cont [14/16] 0.0, 128
    %8396 = vxpose.xlu0.b32.cont [15/16] 0.0, 128
    %8397 = vxpose.xlu0.b32.end [16/16] 0.0, 128
    %v8398 = vpop.trf.xlu0
    %v8399 = vpop.trf.xlu0
    %v8400 = vpop.trf.xlu0
    %v8401 = vpop.trf.xlu0
    %v8402 = vpop.trf.xlu0
    %v8403 = vpop.trf.xlu0
    %v8404 = vpop.trf.xlu0
    %v8405 = vpop.trf.xlu0
    %v8406 = vpop.trf.xlu0
    %v8407 = vpop.trf.xlu0
    %v8408 = vpop.trf.xlu0
    %v8409 = vpop.trf.xlu0
    %v8410 = vpop.trf.xlu0
    %v8411 = vpop.trf.xlu0
    %v8412 = vpop.trf.xlu0
    %v8413 = vpop.trf.xlu0
    %8414 = vxpose.xlu0.b32.start [1/16] %v8010, 128
    %8415 = vxpose.xlu0.b32.cont [2/16] %v8015, 128
    %8416 = vxpose.xlu0.b32.cont [3/16] 0.0, 128
    %8417 = vxpose.xlu0.b32.cont [4/16] 0.0, 128
    %8418 = vxpose.xlu0.b32.cont [5/16] 0.0, 128
    %8419 = vxpose.xlu0.b32.cont [6/16] 0.0, 128
    %8420 = vxpose.xlu0.b32.cont [7/16] 0.0, 128
    %8421 = vxpose.xlu0.b32.cont [8/16] 0.0, 128
    %8422 = vxpose.xlu0.b32.cont [9/16] 0.0, 128
    %8423 = vxpose.xlu0.b32.cont [10/16] 0.0, 128
    %8424 = vxpose.xlu0.b32.cont [11/16] 0.0, 128
    %8425 = vxpose.xlu0.b32.cont [12/16] 0.0, 128
    %8426 = vxpose.xlu0.b32.cont [13/16] 0.0, 128
    %8427 = vxpose.xlu0.b32.cont [14/16] 0.0, 128
    %8428 = vxpose.xlu0.b32.cont [15/16] 0.0, 128
    %8429 = vxpose.xlu0.b32.end [16/16] 0.0, 128
    %v8430 = vpop.trf.xlu0
    %v8431 = vpop.trf.xlu0
    %v8432 = vpop.trf.xlu0
    %v8433 = vpop.trf.xlu0
    %v8434 = vpop.trf.xlu0
    %v8435 = vpop.trf.xlu0
    %v8436 = vpop.trf.xlu0
    %v8437 = vpop.trf.xlu0
    %v8438 = vpop.trf.xlu0
    %v8439 = vpop.trf.xlu0
    %v8440 = vpop.trf.xlu0
    %v8441 = vpop.trf.xlu0
    %v8442 = vpop.trf.xlu0
    %v8443 = vpop.trf.xlu0
    %v8444 = vpop.trf.xlu0
    %v8445 = vpop.trf.xlu0
    %8446 = vxpose.xlu0.b32.start [1/16] %v8085, 128
    %8447 = vxpose.xlu0.b32.cont [2/16] %v8090, 128
    %8448 = vxpose.xlu0.b32.cont [3/16] 0.0, 128
    %8449 = vxpose.xlu0.b32.cont [4/16] 0.0, 128
    %8450 = vxpose.xlu0.b32.cont [5/16] 0.0, 128
    %8451 = vxpose.xlu0.b32.cont [6/16] 0.0, 128
    %8452 = vxpose.xlu0.b32.cont [7/16] 0.0, 128
    %8453 = vxpose.xlu0.b32.cont [8/16] 0.0, 128
    %8454 = vxpose.xlu0.b32.cont [9/16] 0.0, 128
    %8455 = vxpose.xlu0.b32.cont [10/16] 0.0, 128
    %8456 = vxpose.xlu0.b32.cont [11/16] 0.0, 128
    %8457 = vxpose.xlu0.b32.cont [12/16] 0.0, 128
    %8458 = vxpose.xlu0.b32.cont [13/16] 0.0, 128
    %8459 = vxpose.xlu0.b32.cont [14/16] 0.0, 128
    %8460 = vxpose.xlu0.b32.cont [15/16] 0.0, 128
    %8461 = vxpose.xlu0.b32.end [16/16] 0.0, 128
    %v8462 = vpop.trf.xlu0
    %v8463 = vpop.trf.xlu0
    %v8464 = vpop.trf.xlu0
    %v8465 = vpop.trf.xlu0
    %v8466 = vpop.trf.xlu0
    %v8467 = vpop.trf.xlu0
    %v8468 = vpop.trf.xlu0
    %v8469 = vpop.trf.xlu0
    %v8470 = vpop.trf.xlu0
    %v8471 = vpop.trf.xlu0
    %v8472 = vpop.trf.xlu0
    %v8473 = vpop.trf.xlu0
    %v8474 = vpop.trf.xlu0
    %v8475 = vpop.trf.xlu0
    %v8476 = vpop.trf.xlu0
    %v8477 = vpop.trf.xlu0
    %8478 = vxpose.xlu0.b32.start [1/16] %v8160, 128
    %8479 = vxpose.xlu0.b32.cont [2/16] %v8165, 128
    %8480 = vxpose.xlu0.b32.cont [3/16] 0.0, 128
    %8481 = vxpose.xlu0.b32.cont [4/16] 0.0, 128
    %8482 = vxpose.xlu0.b32.cont [5/16] 0.0, 128
    %8483 = vxpose.xlu0.b32.cont [6/16] 0.0, 128
    %8484 = vxpose.xlu0.b32.cont [7/16] 0.0, 128
    %8485 = vxpose.xlu0.b32.cont [8/16] 0.0, 128
    %8486 = vxpose.xlu0.b32.cont [9/16] 0.0, 128
    %8487 = vxpose.xlu0.b32.cont [10/16] 0.0, 128
    %8488 = vxpose.xlu0.b32.cont [11/16] 0.0, 128
    %8489 = vxpose.xlu0.b32.cont [12/16] 0.0, 128
    %8490 = vxpose.xlu0.b32.cont [13/16] 0.0, 128
    %8491 = vxpose.xlu0.b32.cont [14/16] 0.0, 128
    %8492 = vxpose.xlu0.b32.cont [15/16] 0.0, 128
    %8493 = vxpose.xlu0.b32.end [16/16] 0.0, 128
    %v8494 = vpop.trf.xlu0
    %v8495 = vpop.trf.xlu0
    %v8496 = vpop.trf.xlu0
    %v8497 = vpop.trf.xlu0
    %v8498 = vpop.trf.xlu0
    %v8499 = vpop.trf.xlu0
    %v8500 = vpop.trf.xlu0
    %v8501 = vpop.trf.xlu0
    %v8502 = vpop.trf.xlu0
    %v8503 = vpop.trf.xlu0
    %v8504 = vpop.trf.xlu0
    %v8505 = vpop.trf.xlu0
    %v8506 = vpop.trf.xlu0
    %v8507 = vpop.trf.xlu0
    %v8508 = vpop.trf.xlu0
    %v8509 = vpop.trf.xlu0
    %8510 = vxpose.xlu0.b32.start [1/16] %v8235, 128
    %8511 = vxpose.xlu0.b32.cont [2/16] %v8240, 128
    %8512 = vxpose.xlu0.b32.cont [3/16] 0.0, 128
    %8513 = vxpose.xlu0.b32.cont [4/16] 0.0, 128
    %8514 = vxpose.xlu0.b32.cont [5/16] 0.0, 128
    %8515 = vxpose.xlu0.b32.cont [6/16] 0.0, 128
    %8516 = vxpose.xlu0.b32.cont [7/16] 0.0, 128
    %8517 = vxpose.xlu0.b32.cont [8/16] 0.0, 128
    %8518 = vxpose.xlu0.b32.cont [9/16] 0.0, 128
    %8519 = vxpose.xlu0.b32.cont [10/16] 0.0, 128
    %8520 = vxpose.xlu0.b32.cont [11/16] 0.0, 128
    %8521 = vxpose.xlu0.b32.cont [12/16] 0.0, 128
    %8522 = vxpose.xlu0.b32.cont [13/16] 0.0, 128
    %8523 = vxpose.xlu0.b32.cont [14/16] 0.0, 128
    %8524 = vxpose.xlu0.b32.cont [15/16] 0.0, 128
    %8525 = vxpose.xlu0.b32.end [16/16] 0.0, 128
    %v8526 = vpop.trf.xlu0
    %v8527 = vpop.trf.xlu0
    %v8528 = vpop.trf.xlu0
    %v8529 = vpop.trf.xlu0
    %v8530 = vpop.trf.xlu0
    %v8531 = vpop.trf.xlu0
    %v8532 = vpop.trf.xlu0
    %v8533 = vpop.trf.xlu0
    %v8534 = vpop.trf.xlu0
    %v8535 = vpop.trf.xlu0
    %v8536 = vpop.trf.xlu0
    %v8537 = vpop.trf.xlu0
    %v8538 = vpop.trf.xlu0
    %v8539 = vpop.trf.xlu0
    %v8540 = vpop.trf.xlu0
    %v8541 = vpop.trf.xlu0
    %8542 = vxpose.xlu0.b32.start [1/16] %v8310, 128
    %8543 = vxpose.xlu0.b32.cont [2/16] %v8315, 128
    %8544 = vxpose.xlu0.b32.cont [3/16] 0.0, 128
    %8545 = vxpose.xlu0.b32.cont [4/16] 0.0, 128
    %8546 = vxpose.xlu0.b32.cont [5/16] 0.0, 128
    %8547 = vxpose.xlu0.b32.cont [6/16] 0.0, 128
    %8548 = vxpose.xlu0.b32.cont [7/16] 0.0, 128
    %8549 = vxpose.xlu0.b32.cont [8/16] 0.0, 128
    %8550 = vxpose.xlu0.b32.cont [9/16] 0.0, 128
    %8551 = vxpose.xlu0.b32.cont [10/16] 0.0, 128
    %8552 = vxpose.xlu0.b32.cont [11/16] 0.0, 128
    %8553 = vxpose.xlu0.b32.cont [12/16] 0.0, 128
    %8554 = vxpose.xlu0.b32.cont [13/16] 0.0, 128
    %8555 = vxpose.xlu0.b32.cont [14/16] 0.0, 128
    %8556 = vxpose.xlu0.b32.cont [15/16] 0.0, 128
    %8557 = vxpose.xlu0.b32.end [16/16] 0.0, 128
    %v8558 = vpop.trf.xlu0
    %v8559 = vpop.trf.xlu0
    %v8560 = vpop.trf.xlu0
    %v8561 = vpop.trf.xlu0
    %v8562 = vpop.trf.xlu0
    %v8563 = vpop.trf.xlu0
    %v8564 = vpop.trf.xlu0
    %v8565 = vpop.trf.xlu0
    %v8566 = vpop.trf.xlu0
    %v8567 = vpop.trf.xlu0
    %v8568 = vpop.trf.xlu0
    %v8569 = vpop.trf.xlu0
    %v8570 = vpop.trf.xlu0
    %v8571 = vpop.trf.xlu0
    %v8572 = vpop.trf.xlu0
    %v8573 = vpop.trf.xlu0
    %v8574 = vcombine.low %v8334, %v8398
    %v8576 = vunpack.c.l.s4 1983009808
    %v8577 = vunpack.c.0.s8 %v8576
    %v8578 = vlaneseq
    %v8579 = vshrl.u32 %v8578, 7
    %v8580 = vsub.s32 %v8577, %v8579
    %v8581 = vrot.slane %v8574, %v8580
    %v8582 = vcombine.low %v8366, %v8430
    %v8584 = vunpack.c.l.s4 1983009808
    %v8585 = vunpack.c.0.s8 %v8584
    %v8586 = vlaneseq
    %v8587 = vshrl.u32 %v8586, 7
    %v8588 = vsub.s32 %v8585, %v8587
    %v8589 = vrot.slane %v8582, %v8588
    %v8590 = vcombine.low %v8462, %v8526
    %v8592 = vunpack.c.l.s4 1983009808
    %v8593 = vunpack.c.0.s8 %v8592
    %v8594 = vlaneseq
    %v8595 = vshrl.u32 %v8594, 7
    %v8596 = vsub.s32 %v8593, %v8595
    %v8597 = vrot.slane %v8590, %v8596
    %v8598 = vcombine.low %v8494, %v8558
    %v8600 = vunpack.c.l.s4 1983009808
    %v8601 = vunpack.c.0.s8 %v8600
    %v8602 = vlaneseq
    %v8603 = vshrl.u32 %v8602, 7
    %v8604 = vsub.s32 %v8601, %v8603
    %v8605 = vrot.slane %v8598, %v8604
    %v8606 = vcombine.low %v8581, %v8589
    %v8607 = vcombine.high %v8581, %v8589
    %v8609 = vunpack.c.l.s4 1934713408
    %v8610 = vunpack.c.0.s8 %v8609
    %v8611 = vlaneseq
    %v8612 = vshrl.u32 %v8611, 7
    %v8613 = vsub.s32 %v8610, %v8612
    %v8614 = vrot.slane %v8606, %v8613
    %v8616 = vunpack.c.l.s4 1934713408
    %v8617 = vunpack.c.0.s8 %v8616
    %v8618 = vlaneseq
    %v8619 = vshrl.u32 %v8618, 7
    %v8620 = vsub.s32 %v8617, %v8619
    %v8621 = vrot.slane %v8607, %v8620
    %v8622 = vcombine.low %v8597, %v8605
    %v8623 = vcombine.high %v8597, %v8605
    %v8625 = vunpack.c.l.s4 1934713408
    %v8626 = vunpack.c.0.s8 %v8625
    %v8627 = vlaneseq
    %v8628 = vshrl.u32 %v8627, 7
    %v8629 = vsub.s32 %v8626, %v8628
    %v8630 = vrot.slane %v8622, %v8629
    %v8632 = vunpack.c.l.s4 1934713408
    %v8633 = vunpack.c.0.s8 %v8632
    %v8634 = vlaneseq
    %v8635 = vshrl.u32 %v8634, 7
    %v8636 = vsub.s32 %v8633, %v8635
    %v8637 = vrot.slane %v8623, %v8636
    %v8638 = vcombine.low %v8614, %v8630
    %v8639 = vcombine.high %v8614, %v8630
    %v8640 = vcombine.low %v8621, %v8637
    %v8641 = vcombine.high %v8621, %v8637
    %v8643 = vsel %vm1955, %v5910, 0
    %v8646 = vsel %vm1955, %v654, 0
    %v8649 = vsel %vm1955, %v657, 0
    %8651 = vmatprep.subr.mxu0 0.0
    %8652 = vmatpush1.xpose.msra.mxu0 0.0
    %8653 = vmatprep.subr.mxu0 0.0
    %8654 = vmatpush1.xpose.msra.mxu0 0.0
    %8655 = vmatprep.subr.mxu0 0.0
    %8656 = vmatpush1.xpose.msra.mxu0 0.0
    %8657 = vmatprep.subr.mxu0 0.0
    %8658 = vmatpush1.xpose.msra.mxu0 0.0
    %8659 = vmatprep.subr.mxu0 0.0
    %8660 = vmatpush1.xpose.msra.mxu0 0.0
    %8661 = vmatprep.subr.mxu0 0.0
    %8662 = vmatpush1.xpose.msra.mxu0 0.0
    %8663 = vmatprep.subr.mxu0 0.0
    %8664 = vmatpush1.xpose.msra.mxu0 0.0
    %8665 = vmatprep.subr.mxu0 0.0
    %8666 = vmatpush1.xpose.msra.mxu0 0.0
    %8667 = vmatprep.subr.mxu0 0.0
    %8668 = vmatpush1.xpose.msra.mxu0 0.0
    %8669 = vmatprep.subr.mxu0 0.0
    %8670 = vmatpush1.xpose.msra.mxu0 0.0
    %8671 = vmatprep.subr.mxu0 0.0
    %8672 = vmatpush1.xpose.msra.mxu0 0.0
    %8673 = vmatprep.subr.mxu0 0.0
    %8674 = vmatpush1.xpose.msra.mxu0 0.0
    %8675 = vmatprep.subr.mxu0 0.0
    %8676 = vmatpush1.xpose.msra.mxu0 0.0
    %8677 = vmatprep.subr.mxu0 0.0
    %8678 = vmatpush1.xpose.msra.mxu0 0.0
    %8679 = vmatprep.subr.mxu0 0.0
    %8680 = vmatpush1.xpose.msra.mxu0 %v8649
    %8681 = vmatprep.subr.mxu0 0.0
    %8682 = vmatpush1.xpose.msra.mxu0 %v8646
    %8683 = vmatprep.subr.mxu0 0.0
    %8684 = vmatpush2.xpose.msra.mxu0 0.0
    %8685 = vmatprep.subr.mxu0 0.0
    %8686 = vmatpush2.xpose.msra.mxu0 0.0
    %8687 = vmatprep.subr.mxu0 0.0
    %8688 = vmatpush2.xpose.msra.mxu0 0.0
    %8689 = vmatprep.subr.mxu0 0.0
    %8690 = vmatpush2.xpose.msra.mxu0 0.0
    %8691 = vmatprep.subr.mxu0 0.0
    %8692 = vmatpush2.xpose.msra.mxu0 0.0
    %8693 = vmatprep.subr.mxu0 0.0
    %8694 = vmatpush2.xpose.msra.mxu0 0.0
    %8695 = vmatprep.subr.mxu0 0.0
    %8696 = vmatpush2.xpose.msra.mxu0 0.0
    %8697 = vmatprep.subr.mxu0 0.0
    %8698 = vmatpush2.xpose.msra.mxu0 0.0
    %8699 = vmatprep.subr.mxu0 0.0
    %8700 = vmatpush2.xpose.msra.mxu0 0.0
    %8701 = vmatprep.subr.mxu0 0.0
    %8702 = vmatpush2.xpose.msra.mxu0 0.0
    %8703 = vmatprep.subr.mxu0 0.0
    %8704 = vmatpush2.xpose.msra.mxu0 0.0
    %8705 = vmatprep.subr.mxu0 0.0
    %8706 = vmatpush2.xpose.msra.mxu0 0.0
    %8707 = vmatprep.subr.mxu0 0.0
    %8708 = vmatpush2.xpose.msra.mxu0 0.0
    %8709 = vmatprep.subr.mxu0 0.0
    %8710 = vmatpush2.xpose.msra.mxu0 0.0
    %8711 = vmatprep.subr.mxu0 0.0
    %8712 = vmatpush2.xpose.msra.mxu0 0.0
    %8713 = vmatprep.subr.mxu0 0.0
    %8714 = vmatpush2.xpose.msra.mxu0 0.0
    %8715 = vmatprep.mubr.f32.mxu0 0.0
    %8716 = vmatmul.mubr.f32.gmra.mxu0 %v8643
    %v8717 = vpop.f32.mrf.mxu0
    %v8718 = vadd.f32 %v8638, %v8717
    %v8719 = vpop.f32.mrf.mxu0
    %8720 = vdwg.mxu0
    %v8722 = vsel %vm1955, %v5911, 0
    %v8725 = vsel %vm1955, %v751, 0
    %v8728 = vsel %vm1955, %v754, 0
    %8730 = vmatprep.subr.mxu0 0.0
    %8731 = vmatpush1.xpose.msra.mxu0 0.0
    %8732 = vmatprep.subr.mxu0 0.0
    %8733 = vmatpush1.xpose.msra.mxu0 0.0
    %8734 = vmatprep.subr.mxu0 0.0
    %8735 = vmatpush1.xpose.msra.mxu0 0.0
    %8736 = vmatprep.subr.mxu0 0.0
    %8737 = vmatpush1.xpose.msra.mxu0 0.0
    %8738 = vmatprep.subr.mxu0 0.0
    %8739 = vmatpush1.xpose.msra.mxu0 0.0
    %8740 = vmatprep.subr.mxu0 0.0
    %8741 = vmatpush1.xpose.msra.mxu0 0.0
    %8742 = vmatprep.subr.mxu0 0.0
    %8743 = vmatpush1.xpose.msra.mxu0 0.0
    %8744 = vmatprep.subr.mxu0 0.0
    %8745 = vmatpush1.xpose.msra.mxu0 0.0
    %8746 = vmatprep.subr.mxu0 0.0
    %8747 = vmatpush1.xpose.msra.mxu0 0.0
    %8748 = vmatprep.subr.mxu0 0.0
    %8749 = vmatpush1.xpose.msra.mxu0 0.0
    %8750 = vmatprep.subr.mxu0 0.0
    %8751 = vmatpush1.xpose.msra.mxu0 0.0
    %8752 = vmatprep.subr.mxu0 0.0
    %8753 = vmatpush1.xpose.msra.mxu0 0.0
    %8754 = vmatprep.subr.mxu0 0.0
    %8755 = vmatpush1.xpose.msra.mxu0 0.0
    %8756 = vmatprep.subr.mxu0 0.0
    %8757 = vmatpush1.xpose.msra.mxu0 0.0
    %8758 = vmatprep.subr.mxu0 0.0
    %8759 = vmatpush1.xpose.msra.mxu0 %v8728
    %8760 = vmatprep.subr.mxu0 0.0
    %8761 = vmatpush1.xpose.msra.mxu0 %v8725
    %8762 = vmatprep.subr.mxu0 0.0
    %8763 = vmatpush2.xpose.msra.mxu0 0.0
    %8764 = vmatprep.subr.mxu0 0.0
    %8765 = vmatpush2.xpose.msra.mxu0 0.0
    %8766 = vmatprep.subr.mxu0 0.0
    %8767 = vmatpush2.xpose.msra.mxu0 0.0
    %8768 = vmatprep.subr.mxu0 0.0
    %8769 = vmatpush2.xpose.msra.mxu0 0.0
    %8770 = vmatprep.subr.mxu0 0.0
    %8771 = vmatpush2.xpose.msra.mxu0 0.0
    %8772 = vmatprep.subr.mxu0 0.0
    %8773 = vmatpush2.xpose.msra.mxu0 0.0
    %8774 = vmatprep.subr.mxu0 0.0
    %8775 = vmatpush2.xpose.msra.mxu0 0.0
    %8776 = vmatprep.subr.mxu0 0.0
    %8777 = vmatpush2.xpose.msra.mxu0 0.0
    %8778 = vmatprep.subr.mxu0 0.0
    %8779 = vmatpush2.xpose.msra.mxu0 0.0
    %8780 = vmatprep.subr.mxu0 0.0
    %8781 = vmatpush2.xpose.msra.mxu0 0.0
    %8782 = vmatprep.subr.mxu0 0.0
    %8783 = vmatpush2.xpose.msra.mxu0 0.0
    %8784 = vmatprep.subr.mxu0 0.0
    %8785 = vmatpush2.xpose.msra.mxu0 0.0
    %8786 = vmatprep.subr.mxu0 0.0
    %8787 = vmatpush2.xpose.msra.mxu0 0.0
    %8788 = vmatprep.subr.mxu0 0.0
    %8789 = vmatpush2.xpose.msra.mxu0 0.0
    %8790 = vmatprep.subr.mxu0 0.0
    %8791 = vmatpush2.xpose.msra.mxu0 0.0
    %8792 = vmatprep.subr.mxu0 0.0
    %8793 = vmatpush2.xpose.msra.mxu0 0.0
    %8794 = vmatprep.mubr.f32.mxu0 0.0
    %8795 = vmatmul.mubr.f32.gmra.mxu0 %v8722
    %v8796 = vpop.f32.mrf.mxu0
    %v8797 = vadd.f32 %v8639, %v8796
    %v8798 = vpop.f32.mrf.mxu0
    %8799 = vdwg.mxu0
    %v8801 = vsel %vm1955, %v5912, 0
    %v8804 = vsel %vm1955, %v848, 0
    %v8807 = vsel %vm1955, %v851, 0
    %8809 = vmatprep.subr.mxu0 0.0
    %8810 = vmatpush1.xpose.msra.mxu0 0.0
    %8811 = vmatprep.subr.mxu0 0.0
    %8812 = vmatpush1.xpose.msra.mxu0 0.0
    %8813 = vmatprep.subr.mxu0 0.0
    %8814 = vmatpush1.xpose.msra.mxu0 0.0
    %8815 = vmatprep.subr.mxu0 0.0
    %8816 = vmatpush1.xpose.msra.mxu0 0.0
    %8817 = vmatprep.subr.mxu0 0.0
    %8818 = vmatpush1.xpose.msra.mxu0 0.0
    %8819 = vmatprep.subr.mxu0 0.0
    %8820 = vmatpush1.xpose.msra.mxu0 0.0
    %8821 = vmatprep.subr.mxu0 0.0
    %8822 = vmatpush1.xpose.msra.mxu0 0.0
    %8823 = vmatprep.subr.mxu0 0.0
    %8824 = vmatpush1.xpose.msra.mxu0 0.0
    %8825 = vmatprep.subr.mxu0 0.0
    %8826 = vmatpush1.xpose.msra.mxu0 0.0
    %8827 = vmatprep.subr.mxu0 0.0
    %8828 = vmatpush1.xpose.msra.mxu0 0.0
    %8829 = vmatprep.subr.mxu0 0.0
    %8830 = vmatpush1.xpose.msra.mxu0 0.0
    %8831 = vmatprep.subr.mxu0 0.0
    %8832 = vmatpush1.xpose.msra.mxu0 0.0
    %8833 = vmatprep.subr.mxu0 0.0
    %8834 = vmatpush1.xpose.msra.mxu0 0.0
    %8835 = vmatprep.subr.mxu0 0.0
    %8836 = vmatpush1.xpose.msra.mxu0 0.0
    %8837 = vmatprep.subr.mxu0 0.0
    %8838 = vmatpush1.xpose.msra.mxu0 %v8807
    %8839 = vmatprep.subr.mxu0 0.0
    %8840 = vmatpush1.xpose.msra.mxu0 %v8804
    %8841 = vmatprep.subr.mxu0 0.0
    %8842 = vmatpush2.xpose.msra.mxu0 0.0
    %8843 = vmatprep.subr.mxu0 0.0
    %8844 = vmatpush2.xpose.msra.mxu0 0.0
    %8845 = vmatprep.subr.mxu0 0.0
    %8846 = vmatpush2.xpose.msra.mxu0 0.0
    %8847 = vmatprep.subr.mxu0 0.0
    %8848 = vmatpush2.xpose.msra.mxu0 0.0
    %8849 = vmatprep.subr.mxu0 0.0
    %8850 = vmatpush2.xpose.msra.mxu0 0.0
    %8851 = vmatprep.subr.mxu0 0.0
    %8852 = vmatpush2.xpose.msra.mxu0 0.0
    %8853 = vmatprep.subr.mxu0 0.0
    %8854 = vmatpush2.xpose.msra.mxu0 0.0
    %8855 = vmatprep.subr.mxu0 0.0
    %8856 = vmatpush2.xpose.msra.mxu0 0.0
    %8857 = vmatprep.subr.mxu0 0.0
    %8858 = vmatpush2.xpose.msra.mxu0 0.0
    %8859 = vmatprep.subr.mxu0 0.0
    %8860 = vmatpush2.xpose.msra.mxu0 0.0
    %8861 = vmatprep.subr.mxu0 0.0
    %8862 = vmatpush2.xpose.msra.mxu0 0.0
    %8863 = vmatprep.subr.mxu0 0.0
    %8864 = vmatpush2.xpose.msra.mxu0 0.0
    %8865 = vmatprep.subr.mxu0 0.0
    %8866 = vmatpush2.xpose.msra.mxu0 0.0
    %8867 = vmatprep.subr.mxu0 0.0
    %8868 = vmatpush2.xpose.msra.mxu0 0.0
    %8869 = vmatprep.subr.mxu0 0.0
    %8870 = vmatpush2.xpose.msra.mxu0 0.0
    %8871 = vmatprep.subr.mxu0 0.0
    %8872 = vmatpush2.xpose.msra.mxu0 0.0
    %8873 = vmatprep.mubr.f32.mxu0 0.0
    %8874 = vmatmul.mubr.f32.gmra.mxu0 %v8801
    %v8875 = vpop.f32.mrf.mxu0
    %v8876 = vadd.f32 %v8640, %v8875
    %v8877 = vpop.f32.mrf.mxu0
    %8878 = vdwg.mxu0
    %v8880 = vsel %vm1955, %v5913, 0
    %v8883 = vsel %vm1955, %v945, 0
    %v8886 = vsel %vm1955, %v948, 0
    %8888 = vmatprep.subr.mxu0 0.0
    %8889 = vmatpush1.xpose.msra.mxu0 0.0
    %8890 = vmatprep.subr.mxu0 0.0
    %8891 = vmatpush1.xpose.msra.mxu0 0.0
    %8892 = vmatprep.subr.mxu0 0.0
    %8893 = vmatpush1.xpose.msra.mxu0 0.0
    %8894 = vmatprep.subr.mxu0 0.0
    %8895 = vmatpush1.xpose.msra.mxu0 0.0
    %8896 = vmatprep.subr.mxu0 0.0
    %8897 = vmatpush1.xpose.msra.mxu0 0.0
    %8898 = vmatprep.subr.mxu0 0.0
    %8899 = vmatpush1.xpose.msra.mxu0 0.0
    %8900 = vmatprep.subr.mxu0 0.0
    %8901 = vmatpush1.xpose.msra.mxu0 0.0
    %8902 = vmatprep.subr.mxu0 0.0
    %8903 = vmatpush1.xpose.msra.mxu0 0.0
    %8904 = vmatprep.subr.mxu0 0.0
    %8905 = vmatpush1.xpose.msra.mxu0 0.0
    %8906 = vmatprep.subr.mxu0 0.0
    %8907 = vmatpush1.xpose.msra.mxu0 0.0
    %8908 = vmatprep.subr.mxu0 0.0
    %8909 = vmatpush1.xpose.msra.mxu0 0.0
    %8910 = vmatprep.subr.mxu0 0.0
    %8911 = vmatpush1.xpose.msra.mxu0 0.0
    %8912 = vmatprep.subr.mxu0 0.0
    %8913 = vmatpush1.xpose.msra.mxu0 0.0
    %8914 = vmatprep.subr.mxu0 0.0
    %8915 = vmatpush1.xpose.msra.mxu0 0.0
    %8916 = vmatprep.subr.mxu0 0.0
    %8917 = vmatpush1.xpose.msra.mxu0 %v8886
    %8918 = vmatprep.subr.mxu0 0.0
    %8919 = vmatpush1.xpose.msra.mxu0 %v8883
    %8920 = vmatprep.subr.mxu0 0.0
    %8921 = vmatpush2.xpose.msra.mxu0 0.0
    %8922 = vmatprep.subr.mxu0 0.0
    %8923 = vmatpush2.xpose.msra.mxu0 0.0
    %8924 = vmatprep.subr.mxu0 0.0
    %8925 = vmatpush2.xpose.msra.mxu0 0.0
    %8926 = vmatprep.subr.mxu0 0.0
    %8927 = vmatpush2.xpose.msra.mxu0 0.0
    %8928 = vmatprep.subr.mxu0 0.0
    %8929 = vmatpush2.xpose.msra.mxu0 0.0
    %8930 = vmatprep.subr.mxu0 0.0
    %8931 = vmatpush2.xpose.msra.mxu0 0.0
    %8932 = vmatprep.subr.mxu0 0.0
    %8933 = vmatpush2.xpose.msra.mxu0 0.0
    %8934 = vmatprep.subr.mxu0 0.0
    %8935 = vmatpush2.xpose.msra.mxu0 0.0
    %8936 = vmatprep.subr.mxu0 0.0
    %8937 = vmatpush2.xpose.msra.mxu0 0.0
    %8938 = vmatprep.subr.mxu0 0.0
    %8939 = vmatpush2.xpose.msra.mxu0 0.0
    %8940 = vmatprep.subr.mxu0 0.0
    %8941 = vmatpush2.xpose.msra.mxu0 0.0
    %8942 = vmatprep.subr.mxu0 0.0
    %8943 = vmatpush2.xpose.msra.mxu0 0.0
    %8944 = vmatprep.subr.mxu0 0.0
    %8945 = vmatpush2.xpose.msra.mxu0 0.0
    %8946 = vmatprep.subr.mxu0 0.0
    %8947 = vmatpush2.xpose.msra.mxu0 0.0
    %8948 = vmatprep.subr.mxu0 0.0
    %8949 = vmatpush2.xpose.msra.mxu0 0.0
    %8950 = vmatprep.subr.mxu0 0.0
    %8951 = vmatpush2.xpose.msra.mxu0 0.0
    %8952 = vmatprep.mubr.f32.mxu0 0.0
    %8953 = vmatmul.mubr.f32.gmra.mxu0 %v8880
    %v8954 = vpop.f32.mrf.mxu0
    %v8955 = vadd.f32 %v8641, %v8954
    %v8956 = vpop.f32.mrf.mxu0
    %8957 = vdwg.mxu0
    %v8958 = vmul.f32 %v8718, 0.17677669
    %v8959 = vmul.f32 %v8797, 0.17677669
    %v8960 = vmul.f32 %v8876, 0.17677669
    %v8961 = vmul.f32 %v8955, 0.17677669
    %s8962 = scalar_lea.vmem %s5, 8
    %v8963 = vld [vmem:[%s8962] sm:$0xff]
    %v8964 = vadd.f32 %v8958, %v8963
    %v8965 = vadd.f32 %v8959, %v8963
    %v8966 = vadd.f32 %v8960, %v8963
    %v8967 = vadd.f32 %v8961, %v8963
    %v8968 = vsel %vm5346, %v8964, -inf
    %8969 = vmax.xlane.f32.xlu0 %v8968
    %v8970 = vpop.xlane.xlu0 %8969
    %v8971 = vsel %vm5346, %v8965, -inf
    %8972 = vmax.xlane.f32.xlu0 %v8971
    %v8973 = vpop.xlane.xlu0 %8972
    %v8974 = vsel %vm5346, %v8966, -inf
    %8975 = vmax.xlane.f32.xlu0 %v8974
    %v8976 = vpop.xlane.xlu0 %8975
    %v8977 = vsel %vm5346, %v8967, -inf
    %8978 = vmax.xlane.f32.xlu0 %v8977
    %v8979 = vpop.xlane.xlu0 %8978
    %v8980 = vsub.f32 %v8964, %v8970
    %v8981 = vsub.f32 %v8965, %v8973
    %v8982 = vsub.f32 %v8966, %v8976
    %v8983 = vsub.f32 %v8967, %v8979
    %v8984 = vmul.f32 %v8980, 1.442695
    %v8985 = vpow.pop %v8984
    %v8986 = vmul.f32 %v8981, 1.442695
    %v8987 = vpow.pop %v8986
    %v8988 = vmul.f32 %v8982, 1.442695
    %v8989 = vpow.pop %v8988
    %v8990 = vmul.f32 %v8983, 1.442695
    %v8991 = vpow.pop %v8990
    %v8992 = vsel %vm5346, %v8985, 0.0
    %8993 = vadd.xlane.f32.xlu0 %v8992
    %v8994 = vpop.xlane.xlu0 %8993
    %v8995 = vsel %vm5346, %v8987, 0.0
    %8996 = vadd.xlane.f32.xlu0 %v8995
    %v8997 = vpop.xlane.xlu0 %8996
    %v8998 = vsel %vm5346, %v8989, 0.0
    %8999 = vadd.xlane.f32.xlu0 %v8998
    %v9000 = vpop.xlane.xlu0 %8999
    %v9001 = vsel %vm5346, %v8991, 0.0
    %9002 = vadd.xlane.f32.xlu0 %v9001
    %v9003 = vpop.xlane.xlu0 %9002
    %v9004 = vrcp.pop %v8994
    %v9005 = vrcp.pop %v8997
    %v9006 = vrcp.pop %v9000
    %v9007 = vrcp.pop %v9003
    %v9008 = vmul.f32 %v8985, %v9004
    %v9009 = vmul.f32 %v8987, %v9005
    %v9010 = vmul.f32 %v8989, %v9006
    %v9011 = vmul.f32 %v8991, %v9007
    %v9013 = vsel %vm5346, %v9008, 0
    %9015 = vmatprep.subr.mxu0 0.0
    %9016 = vmatpush1.msra.mxu0 0.0
    %9017 = vmatprep.subr.mxu0 0.0
    %9018 = vmatpush1.msra.mxu0 0.0
    %9019 = vmatprep.subr.mxu0 0.0
    %9020 = vmatpush1.msra.mxu0 0.0
    %9021 = vmatprep.subr.mxu0 0.0
    %9022 = vmatpush1.msra.mxu0 0.0
    %9023 = vmatprep.subr.mxu0 0.0
    %9024 = vmatpush1.msra.mxu0 0.0
    %9025 = vmatprep.subr.mxu0 0.0
    %9026 = vmatpush1.msra.mxu0 0.0
    %9027 = vmatprep.subr.mxu0 0.0
    %9028 = vmatpush1.msra.mxu0 0.0
    %9029 = vmatprep.subr.mxu0 0.0
    %9030 = vmatpush1.msra.mxu0 0.0
    %9031 = vmatprep.subr.mxu0 0.0
    %9032 = vmatpush1.msra.mxu0 0.0
    %9033 = vmatprep.subr.mxu0 0.0
    %9034 = vmatpush1.msra.mxu0 0.0
    %9035 = vmatprep.subr.mxu0 0.0
    %9036 = vmatpush1.msra.mxu0 0.0
    %9037 = vmatprep.subr.mxu0 0.0
    %9038 = vmatpush1.msra.mxu0 0.0
    %9039 = vmatprep.subr.mxu0 0.0
    %9040 = vmatpush1.msra.mxu0 0.0
    %9041 = vmatprep.subr.mxu0 0.0
    %9042 = vmatpush1.msra.mxu0 0.0
    %9043 = vmatprep.subr.mxu0 0.0
    %9044 = vmatpush1.msra.mxu0 %v1109
    %9045 = vmatprep.subr.mxu0 0.0
    %9046 = vmatpush1.msra.mxu0 %v1106
    %9047 = vmatprep.subr.mxu0 0.0
    %9048 = vmatpush2.msra.mxu0 0.0
    %9049 = vmatprep.subr.mxu0 0.0
    %9050 = vmatpush2.msra.mxu0 0.0
    %9051 = vmatprep.subr.mxu0 0.0
    %9052 = vmatpush2.msra.mxu0 0.0
    %9053 = vmatprep.subr.mxu0 0.0
    %9054 = vmatpush2.msra.mxu0 0.0
    %9055 = vmatprep.subr.mxu0 0.0
    %9056 = vmatpush2.msra.mxu0 0.0
    %9057 = vmatprep.subr.mxu0 0.0
    %9058 = vmatpush2.msra.mxu0 0.0
    %9059 = vmatprep.subr.mxu0 0.0
    %9060 = vmatpush2.msra.mxu0 0.0
    %9061 = vmatprep.subr.mxu0 0.0
    %9062 = vmatpush2.msra.mxu0 0.0
    %9063 = vmatprep.subr.mxu0 0.0
    %9064 = vmatpush2.msra.mxu0 0.0
    %9065 = vmatprep.subr.mxu0 0.0
    %9066 = vmatpush2.msra.mxu0 0.0
    %9067 = vmatprep.subr.mxu0 0.0
    %9068 = vmatpush2.msra.mxu0 0.0
    %9069 = vmatprep.subr.mxu0 0.0
    %9070 = vmatpush2.msra.mxu0 0.0
    %9071 = vmatprep.subr.mxu0 0.0
    %9072 = vmatpush2.msra.mxu0 0.0
    %9073 = vmatprep.subr.mxu0 0.0
    %9074 = vmatpush2.msra.mxu0 0.0
    %9075 = vmatprep.subr.mxu0 0.0
    %9076 = vmatpush2.msra.mxu0 0.0
    %9077 = vmatprep.subr.mxu0 0.0
    %9078 = vmatpush2.msra.mxu0 0.0
    %9079 = vmatprep.mubr.f32.mxu0 0.0
    %9080 = vmatmul.mubr.f32.gmra.mxu0 %v9013
    %v9081 = vpop.f32.mrf.mxu0
    %v9082 = vadd.f32 0.0, %v9081
    %v9083 = vpop.f32.mrf.mxu0
    %9084 = vdwg.mxu0
    %v9086 = vsel %vm5346, %v9009, 0
    %9088 = vmatprep.subr.mxu0 0.0
    %9089 = vmatpush1.msra.mxu0 0.0
    %9090 = vmatprep.subr.mxu0 0.0
    %9091 = vmatpush1.msra.mxu0 0.0
    %9092 = vmatprep.subr.mxu0 0.0
    %9093 = vmatpush1.msra.mxu0 0.0
    %9094 = vmatprep.subr.mxu0 0.0
    %9095 = vmatpush1.msra.mxu0 0.0
    %9096 = vmatprep.subr.mxu0 0.0
    %9097 = vmatpush1.msra.mxu0 0.0
    %9098 = vmatprep.subr.mxu0 0.0
    %9099 = vmatpush1.msra.mxu0 0.0
    %9100 = vmatprep.subr.mxu0 0.0
    %9101 = vmatpush1.msra.mxu0 0.0
    %9102 = vmatprep.subr.mxu0 0.0
    %9103 = vmatpush1.msra.mxu0 0.0
    %9104 = vmatprep.subr.mxu0 0.0
    %9105 = vmatpush1.msra.mxu0 0.0
    %9106 = vmatprep.subr.mxu0 0.0
    %9107 = vmatpush1.msra.mxu0 0.0
    %9108 = vmatprep.subr.mxu0 0.0
    %9109 = vmatpush1.msra.mxu0 0.0
    %9110 = vmatprep.subr.mxu0 0.0
    %9111 = vmatpush1.msra.mxu0 0.0
    %9112 = vmatprep.subr.mxu0 0.0
    %9113 = vmatpush1.msra.mxu0 0.0
    %9114 = vmatprep.subr.mxu0 0.0
    %9115 = vmatpush1.msra.mxu0 0.0
    %9116 = vmatprep.subr.mxu0 0.0
    %9117 = vmatpush1.msra.mxu0 %v1206
    %9118 = vmatprep.subr.mxu0 0.0
    %9119 = vmatpush1.msra.mxu0 %v1203
    %9120 = vmatprep.subr.mxu0 0.0
    %9121 = vmatpush2.msra.mxu0 0.0
    %9122 = vmatprep.subr.mxu0 0.0
    %9123 = vmatpush2.msra.mxu0 0.0
    %9124 = vmatprep.subr.mxu0 0.0
    %9125 = vmatpush2.msra.mxu0 0.0
    %9126 = vmatprep.subr.mxu0 0.0
    %9127 = vmatpush2.msra.mxu0 0.0
    %9128 = vmatprep.subr.mxu0 0.0
    %9129 = vmatpush2.msra.mxu0 0.0
    %9130 = vmatprep.subr.mxu0 0.0
    %9131 = vmatpush2.msra.mxu0 0.0
    %9132 = vmatprep.subr.mxu0 0.0
    %9133 = vmatpush2.msra.mxu0 0.0
    %9134 = vmatprep.subr.mxu0 0.0
    %9135 = vmatpush2.msra.mxu0 0.0
    %9136 = vmatprep.subr.mxu0 0.0
    %9137 = vmatpush2.msra.mxu0 0.0
    %9138 = vmatprep.subr.mxu0 0.0
    %9139 = vmatpush2.msra.mxu0 0.0
    %9140 = vmatprep.subr.mxu0 0.0
    %9141 = vmatpush2.msra.mxu0 0.0
    %9142 = vmatprep.subr.mxu0 0.0
    %9143 = vmatpush2.msra.mxu0 0.0
    %9144 = vmatprep.subr.mxu0 0.0
    %9145 = vmatpush2.msra.mxu0 0.0
    %9146 = vmatprep.subr.mxu0 0.0
    %9147 = vmatpush2.msra.mxu0 0.0
    %9148 = vmatprep.subr.mxu0 0.0
    %9149 = vmatpush2.msra.mxu0 0.0
    %9150 = vmatprep.subr.mxu0 0.0
    %9151 = vmatpush2.msra.mxu0 0.0
    %9152 = vmatprep.mubr.f32.mxu0 0.0
    %9153 = vmatmul.mubr.f32.gmra.mxu0 %v9086
    %v9154 = vpop.f32.mrf.mxu0
    %v9155 = vadd.f32 0.0, %v9154
    %v9156 = vpop.f32.mrf.mxu0
    %9157 = vdwg.mxu0
    %v9159 = vsel %vm5346, %v9010, 0
    %9161 = vmatprep.subr.mxu0 0.0
    %9162 = vmatpush1.msra.mxu0 0.0
    %9163 = vmatprep.subr.mxu0 0.0
    %9164 = vmatpush1.msra.mxu0 0.0
    %9165 = vmatprep.subr.mxu0 0.0
    %9166 = vmatpush1.msra.mxu0 0.0
    %9167 = vmatprep.subr.mxu0 0.0
    %9168 = vmatpush1.msra.mxu0 0.0
    %9169 = vmatprep.subr.mxu0 0.0
    %9170 = vmatpush1.msra.mxu0 0.0
    %9171 = vmatprep.subr.mxu0 0.0
    %9172 = vmatpush1.msra.mxu0 0.0
    %9173 = vmatprep.subr.mxu0 0.0
    %9174 = vmatpush1.msra.mxu0 0.0
    %9175 = vmatprep.subr.mxu0 0.0
    %9176 = vmatpush1.msra.mxu0 0.0
    %9177 = vmatprep.subr.mxu0 0.0
    %9178 = vmatpush1.msra.mxu0 0.0
    %9179 = vmatprep.subr.mxu0 0.0
    %9180 = vmatpush1.msra.mxu0 0.0
    %9181 = vmatprep.subr.mxu0 0.0
    %9182 = vmatpush1.msra.mxu0 0.0
    %9183 = vmatprep.subr.mxu0 0.0
    %9184 = vmatpush1.msra.mxu0 0.0
    %9185 = vmatprep.subr.mxu0 0.0
    %9186 = vmatpush1.msra.mxu0 0.0
    %9187 = vmatprep.subr.mxu0 0.0
    %9188 = vmatpush1.msra.mxu0 0.0
    %9189 = vmatprep.subr.mxu0 0.0
    %9190 = vmatpush1.msra.mxu0 %v1303
    %9191 = vmatprep.subr.mxu0 0.0
    %9192 = vmatpush1.msra.mxu0 %v1300
    %9193 = vmatprep.subr.mxu0 0.0
    %9194 = vmatpush2.msra.mxu0 0.0
    %9195 = vmatprep.subr.mxu0 0.0
    %9196 = vmatpush2.msra.mxu0 0.0
    %9197 = vmatprep.subr.mxu0 0.0
    %9198 = vmatpush2.msra.mxu0 0.0
    %9199 = vmatprep.subr.mxu0 0.0
    %9200 = vmatpush2.msra.mxu0 0.0
    %9201 = vmatprep.subr.mxu0 0.0
    %9202 = vmatpush2.msra.mxu0 0.0
    %9203 = vmatprep.subr.mxu0 0.0
    %9204 = vmatpush2.msra.mxu0 0.0
    %9205 = vmatprep.subr.mxu0 0.0
    %9206 = vmatpush2.msra.mxu0 0.0
    %9207 = vmatprep.subr.mxu0 0.0
    %9208 = vmatpush2.msra.mxu0 0.0
    %9209 = vmatprep.subr.mxu0 0.0
    %9210 = vmatpush2.msra.mxu0 0.0
    %9211 = vmatprep.subr.mxu0 0.0
    %9212 = vmatpush2.msra.mxu0 0.0
    %9213 = vmatprep.subr.mxu0 0.0
    %9214 = vmatpush2.msra.mxu0 0.0
    %9215 = vmatprep.subr.mxu0 0.0
    %9216 = vmatpush2.msra.mxu0 0.0
    %9217 = vmatprep.subr.mxu0 0.0
    %9218 = vmatpush2.msra.mxu0 0.0
    %9219 = vmatprep.subr.mxu0 0.0
    %9220 = vmatpush2.msra.mxu0 0.0
    %9221 = vmatprep.subr.mxu0 0.0
    %9222 = vmatpush2.msra.mxu0 0.0
    %9223 = vmatprep.subr.mxu0 0.0
    %9224 = vmatpush2.msra.mxu0 0.0
    %9225 = vmatprep.mubr.f32.mxu0 0.0
    %9226 = vmatmul.mubr.f32.gmra.mxu0 %v9159
    %v9227 = vpop.f32.mrf.mxu0
    %v9228 = vadd.f32 0.0, %v9227
    %v9229 = vpop.f32.mrf.mxu0
    %9230 = vdwg.mxu0
    %v9232 = vsel %vm5346, %v9011, 0
    %9234 = vmatprep.subr.mxu0 0.0
    %9235 = vmatpush1.msra.mxu0 0.0
    %9236 = vmatprep.subr.mxu0 0.0
    %9237 = vmatpush1.msra.mxu0 0.0
    %9238 = vmatprep.subr.mxu0 0.0
    %9239 = vmatpush1.msra.mxu0 0.0
    %9240 = vmatprep.subr.mxu0 0.0
    %9241 = vmatpush1.msra.mxu0 0.0
    %9242 = vmatprep.subr.mxu0 0.0
    %9243 = vmatpush1.msra.mxu0 0.0
    %9244 = vmatprep.subr.mxu0 0.0
    %9245 = vmatpush1.msra.mxu0 0.0
    %9246 = vmatprep.subr.mxu0 0.0
    %9247 = vmatpush1.msra.mxu0 0.0
    %9248 = vmatprep.subr.mxu0 0.0
    %9249 = vmatpush1.msra.mxu0 0.0
    %9250 = vmatprep.subr.mxu0 0.0
    %9251 = vmatpush1.msra.mxu0 0.0
    %9252 = vmatprep.subr.mxu0 0.0
    %9253 = vmatpush1.msra.mxu0 0.0
    %9254 = vmatprep.subr.mxu0 0.0
    %9255 = vmatpush1.msra.mxu0 0.0
    %9256 = vmatprep.subr.mxu0 0.0
    %9257 = vmatpush1.msra.mxu0 0.0
    %9258 = vmatprep.subr.mxu0 0.0
    %9259 = vmatpush1.msra.mxu0 0.0
    %9260 = vmatprep.subr.mxu0 0.0
    %9261 = vmatpush1.msra.mxu0 0.0
    %9262 = vmatprep.subr.mxu0 0.0
    %9263 = vmatpush1.msra.mxu0 %v1400
    %9264 = vmatprep.subr.mxu0 0.0
    %9265 = vmatpush1.msra.mxu0 %v1397
    %9266 = vmatprep.subr.mxu0 0.0
    %9267 = vmatpush2.msra.mxu0 0.0
    %9268 = vmatprep.subr.mxu0 0.0
    %9269 = vmatpush2.msra.mxu0 0.0
    %9270 = vmatprep.subr.mxu0 0.0
    %9271 = vmatpush2.msra.mxu0 0.0
    %9272 = vmatprep.subr.mxu0 0.0
    %9273 = vmatpush2.msra.mxu0 0.0
    %9274 = vmatprep.subr.mxu0 0.0
    %9275 = vmatpush2.msra.mxu0 0.0
    %9276 = vmatprep.subr.mxu0 0.0
    %9277 = vmatpush2.msra.mxu0 0.0
    %9278 = vmatprep.subr.mxu0 0.0
    %9279 = vmatpush2.msra.mxu0 0.0
    %9280 = vmatprep.subr.mxu0 0.0
    %9281 = vmatpush2.msra.mxu0 0.0
    %9282 = vmatprep.subr.mxu0 0.0
    %9283 = vmatpush2.msra.mxu0 0.0
    %9284 = vmatprep.subr.mxu0 0.0
    %9285 = vmatpush2.msra.mxu0 0.0
    %9286 = vmatprep.subr.mxu0 0.0
    %9287 = vmatpush2.msra.mxu0 0.0
    %9288 = vmatprep.subr.mxu0 0.0
    %9289 = vmatpush2.msra.mxu0 0.0
    %9290 = vmatprep.subr.mxu0 0.0
    %9291 = vmatpush2.msra.mxu0 0.0
    %9292 = vmatprep.subr.mxu0 0.0
    %9293 = vmatpush2.msra.mxu0 0.0
    %9294 = vmatprep.subr.mxu0 0.0
    %9295 = vmatpush2.msra.mxu0 0.0
    %9296 = vmatprep.subr.mxu0 0.0
    %9297 = vmatpush2.msra.mxu0 0.0
    %9298 = vmatprep.mubr.f32.mxu0 0.0
    %9299 = vmatmul.mubr.f32.gmra.mxu0 %v9232
    %v9300 = vpop.f32.mrf.mxu0
    %v9301 = vadd.f32 0.0, %v9300
    %v9302 = vpop.f32.mrf.mxu0
    %9303 = vdwg.mxu0
    %v9304 = vpack.c.bf16 %v9082, %v9082
    %v9305 = vpack.c.bf16 %v9155, %v9155
    %v9306 = vpack.c.bf16 %v9228, %v9228
    %v9307 = vpack.c.bf16 %v9301, %v9301
    %v9309 = vsel %vm1955, %v9304, 0
    %9311 = vmatprep.subr.bf16.mxu0 0
    %9312 = vmatpush1.bf16.msra.mxu0 0
    %9313 = vmatprep.subr.bf16.mxu0 0
    %9314 = vmatpush1.bf16.msra.mxu0 0
    %9315 = vmatprep.subr.bf16.mxu0 0
    %9316 = vmatpush1.bf16.msra.mxu0 0
    %9317 = vmatprep.subr.bf16.mxu0 0
    %9318 = vmatpush1.bf16.msra.mxu0 0
    %9319 = vmatprep.subr.bf16.mxu0 0
    %9320 = vmatpush1.bf16.msra.mxu0 0
    %9321 = vmatprep.subr.bf16.mxu0 0
    %9322 = vmatpush1.bf16.msra.mxu0 0
    %9323 = vmatprep.subr.bf16.mxu0 0
    %9324 = vmatpush1.bf16.msra.mxu0 %v5696
    %9325 = vmatprep.subr.bf16.mxu0 0
    %9326 = vmatpush1.bf16.msra.mxu0 %v5695
    %9327 = vmatprep.subr.bf16.mxu0 0
    %9328 = vmatpush2.bf16.msra.mxu0 0
    %9329 = vmatprep.subr.bf16.mxu0 0
    %9330 = vmatpush2.bf16.msra.mxu0 0
    %9331 = vmatprep.subr.bf16.mxu0 0
    %9332 = vmatpush2.bf16.msra.mxu0 0
    %9333 = vmatprep.subr.bf16.mxu0 0
    %9334 = vmatpush2.bf16.msra.mxu0 0
    %9335 = vmatprep.subr.bf16.mxu0 0
    %9336 = vmatpush2.bf16.msra.mxu0 0
    %9337 = vmatprep.subr.bf16.mxu0 0
    %9338 = vmatpush2.bf16.msra.mxu0 0
    %9339 = vmatprep.subr.bf16.mxu0 0
    %9340 = vmatpush2.bf16.msra.mxu0 0
    %9341 = vmatprep.subr.bf16.mxu0 0
    %9342 = vmatpush2.bf16.msra.mxu0 0
    %9343 = vmatprep.mubr.bf16.mxu0 0
    %9344 = vmatmul.mubr.bf16.gmra.mxu0 %v9309
    %v9345 = vpop.f32.mrf.mxu0
    %v9346 = vadd.f32 0.0, %v9345
    %v9347 = vpop.f32.mrf.mxu0
    %v9348 = vpop.f32.mrf.mxu0
    %v9349 = vpop.f32.mrf.mxu0
    %9350 = vdwg.mxu0
    %v9352 = vsel %vm1955, %v9305, 0
    %9354 = vmatprep.subr.bf16.mxu0 0
    %9355 = vmatpush1.bf16.msra.mxu0 0
    %9356 = vmatprep.subr.bf16.mxu0 0
    %9357 = vmatpush1.bf16.msra.mxu0 0
    %9358 = vmatprep.subr.bf16.mxu0 0
    %9359 = vmatpush1.bf16.msra.mxu0 0
    %9360 = vmatprep.subr.bf16.mxu0 0
    %9361 = vmatpush1.bf16.msra.mxu0 0
    %9362 = vmatprep.subr.bf16.mxu0 0
    %9363 = vmatpush1.bf16.msra.mxu0 0
    %9364 = vmatprep.subr.bf16.mxu0 0
    %9365 = vmatpush1.bf16.msra.mxu0 0
    %9366 = vmatprep.subr.bf16.mxu0 0
    %9367 = vmatpush1.bf16.msra.mxu0 %v5751
    %9368 = vmatprep.subr.bf16.mxu0 0
    %9369 = vmatpush1.bf16.msra.mxu0 %v5750
    %9370 = vmatprep.subr.bf16.mxu0 0
    %9371 = vmatpush2.bf16.msra.mxu0 0
    %9372 = vmatprep.subr.bf16.mxu0 0
    %9373 = vmatpush2.bf16.msra.mxu0 0
    %9374 = vmatprep.subr.bf16.mxu0 0
    %9375 = vmatpush2.bf16.msra.mxu0 0
    %9376 = vmatprep.subr.bf16.mxu0 0
    %9377 = vmatpush2.bf16.msra.mxu0 0
    %9378 = vmatprep.subr.bf16.mxu0 0
    %9379 = vmatpush2.bf16.msra.mxu0 0
    %9380 = vmatprep.subr.bf16.mxu0 0
    %9381 = vmatpush2.bf16.msra.mxu0 0
    %9382 = vmatprep.subr.bf16.mxu0 0
    %9383 = vmatpush2.bf16.msra.mxu0 0
    %9384 = vmatprep.subr.bf16.mxu0 0
    %9385 = vmatpush2.bf16.msra.mxu0 0
    %9386 = vmatprep.mubr.bf16.mxu0 0
    %9387 = vmatmul.mubr.bf16.gmra.mxu0 %v9352
    %v9388 = vpop.f32.mrf.mxu0
    %v9389 = vadd.f32 0.0, %v9388
    %v9390 = vpop.f32.mrf.mxu0
    %v9391 = vpop.f32.mrf.mxu0
    %v9392 = vpop.f32.mrf.mxu0
    %9393 = vdwg.mxu0
    %v9395 = vsel %vm1955, %v9306, 0
    %9397 = vmatprep.subr.bf16.mxu0 0
    %9398 = vmatpush1.bf16.msra.mxu0 0
    %9399 = vmatprep.subr.bf16.mxu0 0
    %9400 = vmatpush1.bf16.msra.mxu0 0
    %9401 = vmatprep.subr.bf16.mxu0 0
    %9402 = vmatpush1.bf16.msra.mxu0 0
    %9403 = vmatprep.subr.bf16.mxu0 0
    %9404 = vmatpush1.bf16.msra.mxu0 0
    %9405 = vmatprep.subr.bf16.mxu0 0
    %9406 = vmatpush1.bf16.msra.mxu0 0
    %9407 = vmatprep.subr.bf16.mxu0 0
    %9408 = vmatpush1.bf16.msra.mxu0 0
    %9409 = vmatprep.subr.bf16.mxu0 0
    %9410 = vmatpush1.bf16.msra.mxu0 %v5806
    %9411 = vmatprep.subr.bf16.mxu0 0
    %9412 = vmatpush1.bf16.msra.mxu0 %v5805
    %9413 = vmatprep.subr.bf16.mxu0 0
    %9414 = vmatpush2.bf16.msra.mxu0 0
    %9415 = vmatprep.subr.bf16.mxu0 0
    %9416 = vmatpush2.bf16.msra.mxu0 0
    %9417 = vmatprep.subr.bf16.mxu0 0
    %9418 = vmatpush2.bf16.msra.mxu0 0
    %9419 = vmatprep.subr.bf16.mxu0 0
    %9420 = vmatpush2.bf16.msra.mxu0 0
    %9421 = vmatprep.subr.bf16.mxu0 0
    %9422 = vmatpush2.bf16.msra.mxu0 0
    %9423 = vmatprep.subr.bf16.mxu0 0
    %9424 = vmatpush2.bf16.msra.mxu0 0
    %9425 = vmatprep.subr.bf16.mxu0 0
    %9426 = vmatpush2.bf16.msra.mxu0 0
    %9427 = vmatprep.subr.bf16.mxu0 0
    %9428 = vmatpush2.bf16.msra.mxu0 0
    %9429 = vmatprep.mubr.bf16.mxu0 0
    %9430 = vmatmul.mubr.bf16.gmra.mxu0 %v9395
    %v9431 = vpop.f32.mrf.mxu0
    %v9432 = vadd.f32 0.0, %v9431
    %v9433 = vpop.f32.mrf.mxu0
    %v9434 = vpop.f32.mrf.mxu0
    %v9435 = vpop.f32.mrf.mxu0
    %9436 = vdwg.mxu0
    %v9438 = vsel %vm1955, %v9307, 0
    %9440 = vmatprep.subr.bf16.mxu0 0
    %9441 = vmatpush1.bf16.msra.mxu0 0
    %9442 = vmatprep.subr.bf16.mxu0 0
    %9443 = vmatpush1.bf16.msra.mxu0 0
    %9444 = vmatprep.subr.bf16.mxu0 0
    %9445 = vmatpush1.bf16.msra.mxu0 0
    %9446 = vmatprep.subr.bf16.mxu0 0
    %9447 = vmatpush1.bf16.msra.mxu0 0
    %9448 = vmatprep.subr.bf16.mxu0 0
    %9449 = vmatpush1.bf16.msra.mxu0 0
    %9450 = vmatprep.subr.bf16.mxu0 0
    %9451 = vmatpush1.bf16.msra.mxu0 0
    %9452 = vmatprep.subr.bf16.mxu0 0
    %9453 = vmatpush1.bf16.msra.mxu0 %v5861
    %9454 = vmatprep.subr.bf16.mxu0 0
    %9455 = vmatpush1.bf16.msra.mxu0 %v5860
    %9456 = vmatprep.subr.bf16.mxu0 0
    %9457 = vmatpush2.bf16.msra.mxu0 0
    %9458 = vmatprep.subr.bf16.mxu0 0
    %9459 = vmatpush2.bf16.msra.mxu0 0
    %9460 = vmatprep.subr.bf16.mxu0 0
    %9461 = vmatpush2.bf16.msra.mxu0 0
    %9462 = vmatprep.subr.bf16.mxu0 0
    %9463 = vmatpush2.bf16.msra.mxu0 0
    %9464 = vmatprep.subr.bf16.mxu0 0
    %9465 = vmatpush2.bf16.msra.mxu0 0
    %9466 = vmatprep.subr.bf16.mxu0 0
    %9467 = vmatpush2.bf16.msra.mxu0 0
    %9468 = vmatprep.subr.bf16.mxu0 0
    %9469 = vmatpush2.bf16.msra.mxu0 0
    %9470 = vmatprep.subr.bf16.mxu0 0
    %9471 = vmatpush2.bf16.msra.mxu0 0
    %9472 = vmatprep.mubr.bf16.mxu0 0
    %9473 = vmatmul.mubr.bf16.gmra.mxu0 %v9438
    %v9474 = vpop.f32.mrf.mxu0
    %v9475 = vadd.f32 0.0, %v9474
    %v9476 = vpop.f32.mrf.mxu0
    %v9477 = vpop.f32.mrf.mxu0
    %v9478 = vpop.f32.mrf.mxu0
    %9479 = vdwg.mxu0
    %v9480 = vadd.f32 %v9346, %v9389
    %v9481 = vadd.f32 %v9480, %v9432
    %v9482 = vadd.f32 %v9481, %v9475
    %v9483 = vadd.f32 %v67, %v5909
    %v9484 = vadd.f32 %v68, %v9482
    %v9485 = vld [vmem:[%s12] sm:$0x1]
    %v9486 = vld [vmem:[%s13] sm:$0x1]
    %9487 = vadd.xlane.f32.xlu0 %v9483
    %v9488 = vpop.xlane.xlu0 %9487
    %9489 = vadd.xlane.f32.xlu0 %v9484
    %v9490 = vpop.xlane.xlu0 %9489
    %v9491 = vrcp.pop 128.0
    %v9492 = vmul.f32 %v9488, %v9491
    %v9493 = vmul.f32 %v9490, %v9491
    %v9494 = vsub.f32 %v9483, %v9492
    %v9495 = vsub.f32 %v9484, %v9493
    %v9496 = vmul.f32 %v9494, %v9494
    %v9497 = vmul.f32 %v9495, %v9495
    %9498 = vadd.xlane.f32.xlu0 %v9496
    %v9499 = vpop.xlane.xlu0 %9498
    %9500 = vadd.xlane.f32.xlu0 %v9497
    %v9501 = vpop.xlane.xlu0 %9500
    %v9502 = vmul.f32 %v9499, %v9491
    %v9503 = vmul.f32 %v9501, %v9491
    %v9504 = vadd.f32 %v9502, 1e-05
    %v9505 = vadd.f32 %v9503, 1e-05
    %v9506 = vrsqrt.pop %v9504
    %v9507 = vrsqrt.pop %v9505
    %v9508 = vmul.f32 %v9494, %v9506
    %v9509 = vmul.f32 %v9495, %v9507
    %v9511 = vlaneseq
    %v9512 = vshrl.u32 %v9511, 7
    %v9513 = vsub.s32 0, %v9512
    %v9514 = vrot.slane %v9485, %v9513
    %v9516 = vmul.f32 %v9508, %v9514
    %v9517 = vmul.f32 %v9509, %v9514
    %v9519 = vlaneseq
    %v9520 = vshrl.u32 %v9519, 7
    %v9521 = vsub.s32 0, %v9520
    %v9522 = vrot.slane %v9486, %v9521
    %v9524 = vadd.f32 %v9516, %v9522
    %v9525 = vadd.f32 %v9517, %v9522
    %v9526 = vpack.c.bf16 %v9525, %v9524
    %v9527 = vld [vmem:[%s14] sm:$0xf]
    %v9528 = vld [vmem:[%s14 + $0x4] sm:$0xf]
    %v9529 = vld [vmem:[%s14 + $0x8] sm:$0xf]
    %v9530 = vld [vmem:[%s14 + $0xc] sm:$0xf]
    %v9531 = vld [vmem:[%s14 + $0x10] sm:$0xf]
    %v9532 = vld [vmem:[%s14 + $0x14] sm:$0xf]
    %v9533 = vld [vmem:[%s14 + $0x18] sm:$0xf]
    %v9534 = vld [vmem:[%s14 + $0x1c] sm:$0xf]
    %v9535 = vld [vmem:[%s14 + $0x20] sm:$0xf]
    %v9536 = vld [vmem:[%s14 + $0x24] sm:$0xf]
    %v9537 = vld [vmem:[%s14 + $0x28] sm:$0xf]
    %v9538 = vld [vmem:[%s14 + $0x2c] sm:$0xf]
    %v9539 = vld [vmem:[%s14 + $0x30] sm:$0xf]
    %v9540 = vld [vmem:[%s14 + $0x34] sm:$0xf]
    %v9541 = vld [vmem:[%s14 + $0x38] sm:$0xf]
    %v9542 = vld [vmem:[%s14 + $0x3c] sm:$0xf]
    %v9543 = vld [vmem:[%s15] sm:$0x1]
    %v9545 = vlaneseq
    %v9546 = vshrl.u32 %v9545, 7
    %v9547 = vsub.s32 0, %v9546
    %v9548 = vrot.slane %v9543, %v9547
    %v9566 = vunpack.c.l.b16 %v9527
    %v9567 = vunpack.c.l.b16 %v9528
    %v9568 = vunpack.c.l.b16 %v9529
    %v9569 = vunpack.c.l.b16 %v9530
    %v9570 = vunpack.c.l.b16 %v9531
    %v9571 = vunpack.c.l.b16 %v9532
    %v9572 = vunpack.c.l.b16 %v9533
    %v9573 = vunpack.c.l.b16 %v9534
    %v9574 = vunpack.c.l.b16 %v9535
    %v9575 = vunpack.c.l.b16 %v9536
    %v9576 = vunpack.c.l.b16 %v9537
    %v9577 = vunpack.c.l.b16 %v9538
    %v9578 = vunpack.c.l.b16 %v9539
    %v9579 = vunpack.c.l.b16 %v9540
    %v9580 = vunpack.c.l.b16 %v9541
    %v9581 = vunpack.c.l.b16 %v9542
    %v9582 = vpack.c.b16 %v9567, %v9566
    %v9583 = vpack.c.b16 %v9569, %v9568
    %v9584 = vpack.c.b16 %v9571, %v9570
    %v9585 = vpack.c.b16 %v9573, %v9572
    %v9586 = vpack.c.b16 %v9575, %v9574
    %v9587 = vpack.c.b16 %v9577, %v9576
    %v9588 = vpack.c.b16 %v9579, %v9578
    %v9589 = vpack.c.b16 %v9581, %v9580
    %9598 = vmatprep.subr.bf16.mxu0 0
    %9599 = vmatpush1.bf16.msra.mxu0 %v9589
    %9600 = vmatprep.subr.bf16.mxu0 0
    %9601 = vmatpush1.bf16.msra.mxu0 %v9588
    %9602 = vmatprep.subr.bf16.mxu0 0
    %9603 = vmatpush1.bf16.msra.mxu0 %v9587
    %9604 = vmatprep.subr.bf16.mxu0 0
    %9605 = vmatpush1.bf16.msra.mxu0 %v9586
    %9606 = vmatprep.subr.bf16.mxu0 0
    %9607 = vmatpush1.bf16.msra.mxu0 %v9585
    %9608 = vmatprep.subr.bf16.mxu0 0
    %9609 = vmatpush1.bf16.msra.mxu0 %v9584
    %9610 = vmatprep.subr.bf16.mxu0 0
    %9611 = vmatpush1.bf16.msra.mxu0 %v9583
    %9612 = vmatprep.subr.bf16.mxu0 0
    %9613 = vmatpush1.bf16.msra.mxu0 %v9582
    %9614 = vmatprep.subr.bf16.mxu0 0
    %9615 = vmatpush2.bf16.msra.mxu0 0
    %9616 = vmatprep.subr.bf16.mxu0 0
    %9617 = vmatpush2.bf16.msra.mxu0 0
    %9618 = vmatprep.subr.bf16.mxu0 0
    %9619 = vmatpush2.bf16.msra.mxu0 0
    %9620 = vmatprep.subr.bf16.mxu0 0
    %9621 = vmatpush2.bf16.msra.mxu0 0
    %9622 = vmatprep.subr.bf16.mxu0 0
    %9623 = vmatpush2.bf16.msra.mxu0 0
    %9624 = vmatprep.subr.bf16.mxu0 0
    %9625 = vmatpush2.bf16.msra.mxu0 0
    %9626 = vmatprep.subr.bf16.mxu0 0
    %9627 = vmatpush2.bf16.msra.mxu0 0
    %9628 = vmatprep.subr.bf16.mxu0 0
    %9629 = vmatpush2.bf16.msra.mxu0 0
    %9630 = vmatprep.mubr.bf16.mxu0 0
    %9631 = vmatmul.mubr.bf16.gmra.mxu0 %v9526
    %v9632 = vpop.f32.mrf.mxu0
    %v9633 = vadd.f32 %v9548, %v9632
    %v9634 = vpop.f32.mrf.mxu0
    %v9635 = vpop.f32.mrf.mxu0
    %v9636 = vadd.f32 %v9548, %v9635
    %v9637 = vpop.f32.mrf.mxu0
    %9638 = vdwg.mxu0
    %v9639 = vmax.f32 %v9633, 0.0
    %v9640 = vmax.f32 %v9636, 0.0
    %v9641 = vpack.c.bf16 %v9640, %v9639
    %v9642 = vld [vmem:[%s16] sm:$0xf]
    %v9643 = vld [vmem:[%s16 + $0x4] sm:$0xf]
    %v9644 = vld [vmem:[%s16 + $0x8] sm:$0xf]
    %v9645 = vld [vmem:[%s16 + $0xc] sm:$0xf]
    %v9646 = vld [vmem:[%s16 + $0x10] sm:$0xf]
    %v9647 = vld [vmem:[%s16 + $0x14] sm:$0xf]
    %v9648 = vld [vmem:[%s16 + $0x18] sm:$0xf]
    %v9649 = vld [vmem:[%s16 + $0x1c] sm:$0xf]
    %v9650 = vld [vmem:[%s16 + $0x20] sm:$0xf]
    %v9651 = vld [vmem:[%s16 + $0x24] sm:$0xf]
    %v9652 = vld [vmem:[%s16 + $0x28] sm:$0xf]
    %v9653 = vld [vmem:[%s16 + $0x2c] sm:$0xf]
    %v9654 = vld [vmem:[%s16 + $0x30] sm:$0xf]
    %v9655 = vld [vmem:[%s16 + $0x34] sm:$0xf]
    %v9656 = vld [vmem:[%s16 + $0x38] sm:$0xf]
    %v9657 = vld [vmem:[%s16 + $0x3c] sm:$0xf]
    %v9658 = vld [vmem:[%s17] sm:$0x1]
    %v9660 = vlaneseq
    %v9661 = vshrl.u32 %v9660, 7
    %v9662 = vsub.s32 0, %v9661
    %v9663 = vrot.slane %v9658, %v9662
    %v9681 = vunpack.c.l.b16 %v9642
    %v9682 = vunpack.c.l.b16 %v9643
    %v9683 = vunpack.c.l.b16 %v9644
    %v9684 = vunpack.c.l.b16 %v9645
    %v9685 = vunpack.c.l.b16 %v9646
    %v9686 = vunpack.c.l.b16 %v9647
    %v9687 = vunpack.c.l.b16 %v9648
    %v9688 = vunpack.c.l.b16 %v9649
    %v9689 = vunpack.c.l.b16 %v9650
    %v9690 = vunpack.c.l.b16 %v9651
    %v9691 = vunpack.c.l.b16 %v9652
    %v9692 = vunpack.c.l.b16 %v9653
    %v9693 = vunpack.c.l.b16 %v9654
    %v9694 = vunpack.c.l.b16 %v9655
    %v9695 = vunpack.c.l.b16 %v9656
    %v9696 = vunpack.c.l.b16 %v9657
    %v9697 = vpack.c.b16 %v9682, %v9681
    %v9698 = vpack.c.b16 %v9684, %v9683
    %v9699 = vpack.c.b16 %v9686, %v9685
    %v9700 = vpack.c.b16 %v9688, %v9687
    %v9701 = vpack.c.b16 %v9690, %v9689
    %v9702 = vpack.c.b16 %v9692, %v9691
    %v9703 = vpack.c.b16 %v9694, %v9693
    %v9704 = vpack.c.b16 %v9696, %v9695
    %9713 = vmatprep.subr.bf16.mxu0 0
    %9714 = vmatpush1.bf16.msra.mxu0 %v9704
    %9715 = vmatprep.subr.bf16.mxu0 0
    %9716 = vmatpush1.bf16.msra.mxu0 %v9703
    %9717 = vmatprep.subr.bf16.mxu0 0
    %9718 = vmatpush1.bf16.msra.mxu0 %v9702
    %9719 = vmatprep.subr.bf16.mxu0 0
    %9720 = vmatpush1.bf16.msra.mxu0 %v9701
    %9721 = vmatprep.subr.bf16.mxu0 0
    %9722 = vmatpush1.bf16.msra.mxu0 %v9700
    %9723 = vmatprep.subr.bf16.mxu0 0
    %9724 = vmatpush1.bf16.msra.mxu0 %v9699
    %9725 = vmatprep.subr.bf16.mxu0 0
    %9726 = vmatpush1.bf16.msra.mxu0 %v9698
    %9727 = vmatprep.subr.bf16.mxu0 0
    %9728 = vmatpush1.bf16.msra.mxu0 %v9697
    %9729 = vmatprep.subr.bf16.mxu0 0
    %9730 = vmatpush2.bf16.msra.mxu0 0
    %9731 = vmatprep.subr.bf16.mxu0 0
    %9732 = vmatpush2.bf16.msra.mxu0 0
    %9733 = vmatprep.subr.bf16.mxu0 0
    %9734 = vmatpush2.bf16.msra.mxu0 0
    %9735 = vmatprep.subr.bf16.mxu0 0
    %9736 = vmatpush2.bf16.msra.mxu0 0
    %9737 = vmatprep.subr.bf16.mxu0 0
    %9738 = vmatpush2.bf16.msra.mxu0 0
    %9739 = vmatprep.subr.bf16.mxu0 0
    %9740 = vmatpush2.bf16.msra.mxu0 0
    %9741 = vmatprep.subr.bf16.mxu0 0
    %9742 = vmatpush2.bf16.msra.mxu0 0
    %9743 = vmatprep.subr.bf16.mxu0 0
    %9744 = vmatpush2.bf16.msra.mxu0 0
    %9745 = vmatprep.mubr.bf16.mxu0 0
    %9746 = vmatmul.mubr.bf16.gmra.mxu0 %v9641
    %v9747 = vpop.f32.mrf.mxu0
    %v9748 = vadd.f32 %v9663, %v9747
    %v9749 = vpop.f32.mrf.mxu0
    %v9750 = vpop.f32.mrf.mxu0
    %v9751 = vadd.f32 %v9663, %v9750
    %v9752 = vpop.f32.mrf.mxu0
    %9753 = vdwg.mxu0
    %v9754 = vadd.f32 %v9524, %v9748
    %v9755 = vadd.f32 %v9525, %v9751
    %v9756 = vld [vmem:[%s18] sm:$0x1]
    %v9757 = vld [vmem:[%s19] sm:$0x1]
    %9758 = vadd.xlane.f32.xlu0 %v9754
    %v9759 = vpop.xlane.xlu0 %9758
    %9760 = vadd.xlane.f32.xlu0 %v9755
    %v9761 = vpop.xlane.xlu0 %9760
    %v9762 = vmul.f32 %v9759, %v9491
    %v9763 = vmul.f32 %v9761, %v9491
    %v9764 = vsub.f32 %v9754, %v9762
    %v9765 = vsub.f32 %v9755, %v9763
    %v9766 = vmul.f32 %v9764, %v9764
    %v9767 = vmul.f32 %v9765, %v9765
    %9768 = vadd.xlane.f32.xlu0 %v9766
    %v9769 = vpop.xlane.xlu0 %9768
    %9770 = vadd.xlane.f32.xlu0 %v9767
    %v9771 = vpop.xlane.xlu0 %9770
    %v9772 = vmul.f32 %v9769, %v9491
    %v9773 = vmul.f32 %v9771, %v9491
    %v9774 = vadd.f32 %v9772, 1e-05
    %v9775 = vadd.f32 %v9773, 1e-05
    %v9776 = vrsqrt.pop %v9774
    %v9777 = vrsqrt.pop %v9775
    %v9778 = vmul.f32 %v9764, %v9776
    %v9779 = vmul.f32 %v9765, %v9777
    %v9781 = vlaneseq
    %v9782 = vshrl.u32 %v9781, 7
    %v9783 = vsub.s32 0, %v9782
    %v9784 = vrot.slane %v9756, %v9783
    %v9786 = vmul.f32 %v9778, %v9784
    %v9787 = vmul.f32 %v9779, %v9784
    %v9789 = vlaneseq
    %v9790 = vshrl.u32 %v9789, 7
    %v9791 = vsub.s32 0, %v9790
    %v9792 = vrot.slane %v9757, %v9791
    %v9794 = vadd.f32 %v9786, %v9792
    %v9795 = vadd.f32 %v9787, %v9792
    %9796 = vst [vmem:[#allocation2] sm:$0xff] %v9794
    %9797 = vst [vmem:[#allocation2 + $0x8] sm:$0xff] %v9795
    // Predicated region
    $region82: #{tpu_custom_call.1} parent=1 // pred_check
      _
    $region83: #{tpu_custom_call.1} parent=1 // pred_check_branch
      %9799 = sbr.rel (0) target = $region85
    $region84: #{tpu_custom_call.1} parent=1 // pred_region
      %s9801 = ssub.s32 256, 256
      %9802 = vsyncadd [#allocation3], %s9801
      %s9803 = sshll.u32 [#allocation2], 4
      %s9804 = int_to_ptr.vmem [resolvable:$true] %s9803
      %9809 = dma.vmem_to_hbm [thread:$0]  %s9804, 256, %s20, [#allocation3], 128, 128, 8
    $region85: #{tpu_custom_call.1} parent=1 // pred_fallthru
      _
    // Predicated region
    $region86: #{tpu_custom_call.1} parent=1 // pred_check
      _
    $region87: #{tpu_custom_call.1} parent=1 // pred_check_branch
      %9811 = sbr.rel (0) target = $region89
    $region88: #{tpu_custom_call.1} parent=1 // pred_region
      %9812 = dma.done [#allocation3], 256
    $region89: #{tpu_custom_call.1} parent=1 // pred_fallthru
      _
    %9813 = vsyncpa [#allocation3], 1

</llo_original>
